<compile_context>
chip_gen: v7x
topology: tpu7x:2x2x1
jax: 0.10.0
libtpu: 0.0.40
codegen_flags: <defaults>
</compile_context>

<pallas_src>
from functools import partial

import jax
import jax.numpy as jnp
from jax.experimental import pallas as pl
from jax.experimental.pallas import tpu as pltpu


# ----------------------------- Pallas kernels --------------------------------

def _make_conv_pool_kernel(POH, POW, Cin, Cout, K):
    """conv(KxK, valid) + folded-BN affine + 2x2 max-pool + ReLU, B images/step."""
    W = POW * Cin                           # patch columns contributed by one tap
    PHASES = ((0, 0), (0, 1), (1, 0), (1, 1))

    def kernel(x_ref, w_ref, scale_ref, shift_ref, o_ref, s_ref):
        # x_ref  : [B, PH, 4*PWC]    bf16  phase-folded input (lane-dense)
        # w_ref  : [K*K*W, 128]      bf16  block-diagonal conv weight (lane-padded)
        # scale_ref, shift_ref : [1, 128] f32  folded BN affine (0 in pad lanes)
        # o_ref  : [B, POHp, 128]    bf16  pooled output (pad rows/lanes = junk)
        # s_ref  : [4*B, POHp, K*K*W] bf16 patch-matrix scratch
        B = x_ref.shape[0]
        PWC = x_ref.shape[2] // 4
        POHp = s_ref.shape[1]

        # ---- build the patch matrix with dense, static slices only ----------
        for i in range(K):
            for j in range(K):
                t = i * K + j
                for p, (dr, dc) in enumerate(PHASES):
                    a, ra = (dr + i) % 2, (dr + i) // 2
                    b, cb = (dc + j) % 2, (dc + j) // 2
                    lo = (a * 2 + b) * PWC + cb * Cin
                    s_ref[p * B:(p + 1) * B, 0:POH, t * W:(t + 1) * W] = (
                        x_ref[:, ra:ra + POH, lo:lo + W])

        # ---- one MXU matmul for all phases / images / rows ------------------
        m = 4 * B * POHp
        y = jnp.dot(s_ref[...].reshape(m, s_ref.shape[2]), w_ref[...],
                    preferred_element_type=jnp.float32)            # [m, 128]
        y = y * scale_ref[...] + shift_ref[...]                    # conv bias + BN
        y = y.reshape(4, B, POHp, 128)
        pooled = jnp.maximum(jnp.maximum(y[0], y[1]),
                             jnp.maximum(y[2], y[3]))              # 2x2 max-pool
        o_ref[...] = jnp.maximum(pooled, 0.0).astype(o_ref.dtype)  # ReLU

    return kernel


def _fc_head_kernel(x_ref, w1_ref, b1_ref, w2_ref, b2_ref, o_ref):
    """relu(x @ w1 + b1) @ w2 + b2 followed by log_softmax (all f32 math)."""
    h = jnp.dot(x_ref[...], w1_ref[...], preferred_element_type=jnp.float32)
    h = jnp.maximum(h + b1_ref[...], 0.0)                          # fc1 + ReLU
    z = jnp.dot(h.astype(jnp.bfloat16), w2_ref[...],
                preferred_element_type=jnp.float32) + b2_ref[...]  # fc2
    m = jnp.max(z, axis=-1, keepdims=True)                         # log_softmax
    lse = jnp.log(jnp.sum(jnp.exp(z - m), axis=-1, keepdims=True)) + m
    o_ref[...] = z - lse


# ----------------------------- kernel wrappers --------------------------------

_VMEM_LIMIT = 32 * 1024 * 1024


def conv_pool_block(xph, wcat, scale, shift, *, B, POH, POHp, POW, Cin, Cout, K=5):
    Np, PH, L = xph.shape
    kernel = _make_conv_pool_kernel(POH, POW, Cin, Cout, K)
    return pl.pallas_call(
        kernel,
        out_shape=jax.ShapeDtypeStruct((Np, POHp, 128), jnp.bfloat16),
        grid=(Np // B,),
        in_specs=[
            pl.BlockSpec((B, PH, L), lambda n: (n, 0, 0)),
            pl.BlockSpec(wcat.shape, lambda n: (0, 0)),            # resident weights
            pl.BlockSpec((1, 128), lambda n: (0, 0)),
            pl.BlockSpec((1, 128), lambda n: (0, 0)),
        ],
        out_specs=pl.BlockSpec((B, POHp, 128), lambda n: (n, 0, 0)),
        scratch_shapes=[pltpu.VMEM((4 * B, POHp, K * K * POW * Cin), jnp.bfloat16)],
        compiler_params=pltpu.CompilerParams(
            dimension_semantics=("parallel",),
            vmem_limit_bytes=_VMEM_LIMIT),
    )(xph, wcat, scale, shift)


def fc_head(x, w1, b1, w2, b2):
    N, Din = x.shape
    Dh, Do = w1.shape[1], w2.shape[1]
    RT = N if N <= 512 else 512                 # big row tile (v6e/v7x friendly)
    Np = ((N + RT - 1) // RT) * RT
    if Np != N:
        x = jnp.pad(x, ((0, Np - N), (0, 0)))
    out = pl.pallas_call(
        _fc_head_kernel,
        out_shape=jax.ShapeDtypeStruct((Np, Do), jnp.float32),
        grid=(Np // RT,),
        in_specs=[
            pl.BlockSpec((RT, Din), lambda n: (n, 0)),
            pl.BlockSpec((Din, Dh), lambda n: (0, 0)),
            pl.BlockSpec((1, Dh), lambda n: (0, 0)),
            pl.BlockSpec((Dh, Do), lambda n: (0, 0)),
            pl.BlockSpec((1, Do), lambda n: (0, 0)),
        ],
        out_specs=pl.BlockSpec((RT, Do), lambda n: (n, 0)),
        compiler_params=pltpu.CompilerParams(
            dimension_semantics=("parallel",),
            vmem_limit_bytes=_VMEM_LIMIT),
    )(x, w1, b1, w2, b2)
    return out[:N]


# ----------------------------- parameter prep (one-time, OUTSIDE jit) ---------

def _conv_cat_weight(w_oihw, POW, pad_to=128):
    """[Cout,Cin,K,K] -> [K*K*POW*Cin, 128] block-diag matmul operand (bf16)."""
    cout, cin, kh, kw = w_oihw.shape
    eye = jnp.eye(POW, dtype=jnp.float32)
    blocks = [jnp.kron(eye, w_oihw[:, :, i, j].T)      # [POW*Cin, POW*Cout]
              for i in range(kh) for j in range(kw)]
    w = jnp.concatenate(blocks, axis=0)
    w = jnp.pad(w, ((0, 0), (0, pad_to - POW * cout)))
    return w.astype(jnp.bfloat16)


def _fold_bn(conv_b, gamma, beta, mean, var, POW, pad_to=128, eps=1e-5):
    """Fold conv bias + inference-mode BN into [1, 128] scale/shift (0 pads)."""
    scale = gamma / jnp.sqrt(var + eps)
    shift = scale * (conv_b - mean) + beta
    c = scale.shape[0]
    sc = jnp.pad(jnp.tile(scale, POW), (0, pad_to - POW * c))
    sh = jnp.pad(jnp.tile(shift, POW), (0, pad_to - POW * c))
    return (sc.reshape(1, -1).astype(jnp.float32),
            sh.reshape(1, -1).astype(jnp.float32))


def prepare_operands(params):
    """Run once at model-load time (eagerly); NOT inside the jitted forward."""
    ops = {}
    # conv1: 1 -> 5 channels, pooled output 12x12
    ops['w1cat'] = _conv_cat_weight(params['conv1_w'], POW=12)          # [300,128]
    ops['s1'], ops['sh1'] = _fold_bn(params['conv1_b'], params['bn1_g'],
                                     params['bn1_b'], params['bn1_m'],
                                     params['bn1_v'], POW=12)
    # conv2: 5 -> 10 channels, pooled output 4x4
    ops['w2cat'] = _conv_cat_weight(params['conv2_w'], POW=4)           # [500,128]
    ops['s2'], ops['sh2'] = _fold_bn(params['conv2_b'], params['bn2_g'],
                                     params['bn2_b'], params['bn2_m'],
                                     params['bn2_v'], POW=4)
    # fc1: permute its input dim once from PyTorch's NCHW flatten (c*16+r*4+q)
    # to the kernel flatten order (r*40 + q*10 + c); pad outputs 100 -> 128.
    r, q, c = jnp.meshgrid(jnp.arange(4), jnp.arange(4), jnp.arange(10),
                           indexing='ij')
    perm = (c * 16 + r * 4 + q).reshape(-1)                             # [160]
    w1 = params['fc1_w'][:, perm].T                                     # [160,100]
    ops['fc1_w'] = jnp.pad(w1, ((0, 0), (0, 28))).astype(jnp.bfloat16)
    ops['fc1_b'] = jnp.pad(params['fc1_b'], (0, 28)).reshape(1, -1).astype(jnp.float32)
    # fc2: pad in 100->128, out 10->128; padded logits get -1e30 bias so they
    # vanish under log_softmax (kept in f32; padding sliced off in wrapper).
    ops['fc2_w'] = jnp.pad(params['fc2_w'].T, ((0, 28), (0, 118))).astype(jnp.bfloat16)
    ops['fc2_b'] = jnp.pad(params['fc2_b'], (0, 118),
                           constant_values=-1e30).reshape(1, -1).astype(jnp.float32)
    return ops


def _phase_fold(x_nhwc):
    """[N,H,W,C] -> [N, H//2, 4*(W//2)*C]; phase (a,b) at lanes (2a+b)*(W//2)*C."""
    N, H, W, C = x_nhwc.shape
    planes = [x_nhwc[:, a::2, b::2, :].reshape(N, H // 2, (W // 2) * C)
              for a in (0, 1) for b in (0, 1)]
    return jnp.concatenate(planes, axis=-1)


# ----------------------------- full forward -----------------------------------

@partial(jax.jit, static_argnames=("batch_tile",))
def torch_model_forward(x_nchw, ops, batch_tile=8):
    N = x_nchw.shape[0]
    B = max(1, min(batch_tile, N // 2))        # keep grid >= 2 when N >= 2 (v7x)
    Np = ((N + B - 1) // B) * B
    x = jnp.transpose(x_nchw, (0, 2, 3, 1)).astype(jnp.bfloat16)   # NHWC
    if Np != N:
        x = jnp.pad(x, ((0, Np - N), (0, 0), (0, 0), (0, 0)))

    # conv1 (1->5, k=5) + BN1 + ReLU + max_pool2d(2, 2)
    h1 = conv_pool_block(_phase_fold(x), ops['w1cat'], ops['s1'], ops['sh1'],
                         B=B, POH=12, POHp=16, POW=12, Cin=1, Cout=5)   # [Np,16,128]

    # conv2 (5->10, k=5) + BN2 + ReLU + max_pool2d(2, 2)
    h1v = h1[:, :12, :60].reshape(Np, 12, 12, 5)
    h2 = conv_pool_block(_phase_fold(h1v), ops['w2cat'], ops['s2'], ops['sh2'],
                         B=B, POH=4, POHp=16, POW=4, Cin=5, Cout=10)    # [Np,16,128]

    # fc1 + ReLU + fc2 + log_softmax (fused FC head); drop all padding.
    feat = h2[:, :4, :40].reshape(Np, 4 * 4 * 10)                       # [Np,160]
    logp = fc_head(feat, ops['fc1_w'], ops['fc1_b'], ops['fc2_w'], ops['fc2_b'])
    return logp[:N, :10]


# ----------------------------- pure-JAX reference ------------------------------

def _reference_forward(x, p, eps=1e-5):
    dn = ('NCHW', 'OIHW', 'NCHW')

    def conv_bn_relu(h, w, b, g, be, m, v):
        h = jax.lax.conv_general_dilated(h, w, (1, 1), 'VALID',
                                         dimension_numbers=dn)
        h = h + b.reshape(1, -1, 1, 1)
        h = (h - m.reshape(1, -1, 1, 1)) * (g / jnp.sqrt(v + eps)).reshape(1, -1, 1, 1) \
            + be.reshape(1, -1, 1, 1)
        return jnp.maximum(h, 0.0)

    def pool(h):
        return jax.lax.reduce_window(h, -jnp.inf, jax.lax.max,
                                     (1, 1, 2, 2), (1, 1, 2, 2), 'VALID')

    h = pool(conv_bn_relu(x, p['conv1_w'], p['conv1_b'], p['bn1_g'], p['bn1_b'],
                          p['bn1_m'], p['bn1_v']))
    h = pool(conv_bn_relu(h, p['conv2_w'], p['conv2_b'], p['bn2_g'], p['bn2_b'],
                          p['bn2_m'], p['bn2_v']))
    h = h.reshape(h.shape[0], -1)
    h = jnp.maximum(h @ p['fc1_w'].T + p['fc1_b'], 0.0)
    z = h @ p['fc2_w'].T + p['fc2_b']
    return jax.nn.log_softmax(z, axis=-1)


# ----------------------------- parameters & main -------------------------------

def init_params(key):
    ks = jax.random.split(key, 12)
    f32 = jnp.float32
    return {
        'conv1_w': 0.1 * jax.random.normal(ks[0], (5, 1, 5, 5), f32),
        'conv1_b': 0.1 * jax.random.normal(ks[1], (5,), f32),
        'bn1_g': 1.0 + 0.1 * jax.random.normal(ks[2], (5,), f32),
        'bn1_b': 0.1 * jax.random.normal(ks[3], (5,), f32),
        'bn1_m': 0.05 * jax.random.normal(ks[4], (5,), f32),
        'bn1_v': 0.5 + jnp.abs(0.5 * jax.random.normal(ks[5], (5,), f32)),
        'conv2_w': 0.1 * jax.random.normal(ks[6], (10, 5, 5, 5), f32),
        'conv2_b': 0.1 * jax.random.normal(ks[7], (10,), f32),
        'bn2_g': 1.0 + 0.1 * jax.random.normal(ks[8], (10,), f32),
        'bn2_b': 0.1 * jax.random.normal(ks[9], (10,), f32),
        'bn2_m': 0.05 * jax.random.normal(ks[10], (10,), f32),
        'bn2_v': 0.5 + jnp.abs(0.5 * jax.random.normal(ks[11], (10,), f32)),
        'fc1_w': 0.05 * jax.random.normal(ks[0], (100, 160), f32),   # [out, in]
        'fc1_b': 0.05 * jax.random.normal(ks[1], (100,), f32),
        'fc2_w': 0.05 * jax.random.normal(ks[2], (10, 100), f32),
        'fc2_b': 0.05 * jax.random.normal(ks[3], (10,), f32),
    }


if __name__ == "__main__":
    key = jax.random.PRNGKey(0)
    k_x, k_p = jax.random.split(key)
    # Input consistent with the module's flatten (4*4*10): [N=2, C=1, H=28, W=28]
    x = jax.random.normal(k_x, (2, 1, 28, 28), jnp.float32)
    params = init_params(k_p)

    ops = prepare_operands(params)          # one-time weight prep, outside jit
    out = jax.block_until_ready(torch_model_forward(x, ops))

    assert out.shape == (2, 10), out.shape
    assert bool(jnp.all(jnp.isfinite(out)))
    # log_softmax rows should exponentiate-sum to ~1
    assert bool(jnp.all(jnp.abs(jnp.sum(jnp.exp(out), axis=1) - 1.0) < 1e-4))
    # matches a pure-JAX f32 reference (bf16 MXU operands => loose tolerance)
    ref = _reference_forward(x, params)
    err = float(jnp.max(jnp.abs(out - ref)))
    assert err < 0.2, err
    print("KERNEL_OK")
</pallas_src>

<mosaic_0001>
module attributes {stable_mosaic.version = 11 : i64} {
  func.func @kernel(%arg0: i32, %arg1: memref<1x14x56xbf16, #tpu.memory_space<vmem>>, %arg2: memref<300x128xbf16, #tpu.memory_space<vmem>>, %arg3: memref<1x128xf32, #tpu.memory_space<vmem>>, %arg4: memref<1x128xf32, #tpu.memory_space<vmem>>, %arg5: memref<1x16x128xbf16, #tpu.memory_space<vmem>>, %arg6: memref<4x16x300xbf16, #tpu.memory_space<vmem>>) attributes {dimension_semantics = [#tpu.dimension_semantics<parallel>], iteration_bounds = array<i64: 2>, scalar_prefetch = 0 : i64, scratch_operands = 1 : i64, tpu.core_type = #tpu.core_type<tc>, window_params = [{transform_indices = @transform_0, window_bounds = array<i64: 1, 14, 56>}, {pipeline_mode = #tpu.pipeline_mode<synchronous>, transform_indices = @transform_1, window_bounds = array<i64: 300, 128>}, {pipeline_mode = #tpu.pipeline_mode<synchronous>, transform_indices = @transform_2, window_bounds = array<i64: 1, 128>}, {pipeline_mode = #tpu.pipeline_mode<synchronous>, transform_indices = @transform_3, window_bounds = array<i64: 1, 128>}, {transform_indices = @transform_4, window_bounds = array<i64: 1, 16, 128>}]} {
    %c0 = arith.constant 0 : index
    %c0_0 = arith.constant 0 : index
    %c0_1 = arith.constant 0 : index
    %0 = vector.load %arg1[%c0, %c0_0, %c0_1] : memref<1x14x56xbf16, #tpu.memory_space<vmem>>, vector<1x12x12xbf16>
    %c0_2 = arith.constant 0 : index
    %c0_3 = arith.constant 0 : index
    %c0_4 = arith.constant 0 : index
    %1 = vector.load %arg6[%c0_2, %c0_3, %c0_4] : memref<4x16x300xbf16, #tpu.memory_space<vmem>>, vector<1x12x12xbf16>
    tpu.vector_store %arg6[%c0_2, %c0_3, %c0_4], %0 {strides = array<i32>} : memref<4x16x300xbf16, #tpu.memory_space<vmem>>, vector<1x12x12xbf16>,
    %c0_5 = arith.constant 0 : index
    %c0_6 = arith.constant 0 : index
    %c14 = arith.constant 14 : index
    %2 = vector.load %arg1[%c0_5, %c0_6, %c14] : memref<1x14x56xbf16, #tpu.memory_space<vmem>>, vector<1x12x12xbf16>
    %c1 = arith.constant 1 : index
    %c0_7 = arith.constant 0 : index
    %c0_8 = arith.constant 0 : index
    %3 = vector.load %arg6[%c1, %c0_7, %c0_8] : memref<4x16x300xbf16, #tpu.memory_space<vmem>>, vector<1x12x12xbf16>
    tpu.vector_store %arg6[%c1, %c0_7, %c0_8], %2 {strides = array<i32>} : memref<4x16x300xbf16, #tpu.memory_space<vmem>>, vector<1x12x12xbf16>,
    %c0_9 = arith.constant 0 : index
    %c0_10 = arith.constant 0 : index
    %c28 = arith.constant 28 : index
    %4 = vector.load %arg1[%c0_9, %c0_10, %c28] : memref<1x14x56xbf16, #tpu.memory_space<vmem>>, vector<1x12x12xbf16>
    %c2 = arith.constant 2 : index
    %c0_11 = arith.constant 0 : index
    %c0_12 = arith.constant 0 : index
    %5 = vector.load %arg6[%c2, %c0_11, %c0_12] : memref<4x16x300xbf16, #tpu.memory_space<vmem>>, vector<1x12x12xbf16>
    tpu.vector_store %arg6[%c2, %c0_11, %c0_12], %4 {strides = array<i32>} : memref<4x16x300xbf16, #tpu.memory_space<vmem>>, vector<1x12x12xbf16>,
    %c0_13 = arith.constant 0 : index
    %c0_14 = arith.constant 0 : index
    %c42 = arith.constant 42 : index
    %6 = vector.load %arg1[%c0_13, %c0_14, %c42] : memref<1x14x56xbf16, #tpu.memory_space<vmem>>, vector<1x12x12xbf16>
    %c3 = arith.constant 3 : index
    %c0_15 = arith.constant 0 : index
    %c0_16 = arith.constant 0 : index
    %7 = vector.load %arg6[%c3, %c0_15, %c0_16] : memref<4x16x300xbf16, #tpu.memory_space<vmem>>, vector<1x12x12xbf16>
    tpu.vector_store %arg6[%c3, %c0_15, %c0_16], %6 {strides = array<i32>} : memref<4x16x300xbf16, #tpu.memory_space<vmem>>, vector<1x12x12xbf16>,
    %c0_17 = arith.constant 0 : index
    %c0_18 = arith.constant 0 : index
    %c14_19 = arith.constant 14 : index
    %8 = vector.load %arg1[%c0_17, %c0_18, %c14_19] : memref<1x14x56xbf16, #tpu.memory_space<vmem>>, vector<1x12x12xbf16>
    %c0_20 = arith.constant 0 : index
    %c0_21 = arith.constant 0 : index
    %c12 = arith.constant 12 : index
    %9 = vector.load %arg6[%c0_20, %c0_21, %c12] : memref<4x16x300xbf16, #tpu.memory_space<vmem>>, vector<1x12x12xbf16>
    tpu.vector_store %arg6[%c0_20, %c0_21, %c12], %8 {strides = array<i32>} : memref<4x16x300xbf16, #tpu.memory_space<vmem>>, vector<1x12x12xbf16>,
    %c0_22 = arith.constant 0 : index
    %c0_23 = arith.constant 0 : index
    %c1_24 = arith.constant 1 : index
    %10 = vector.load %arg1[%c0_22, %c0_23, %c1_24] : memref<1x14x56xbf16, #tpu.memory_space<vmem>>, vector<1x12x12xbf16>
    %c1_25 = arith.constant 1 : index
    %c0_26 = arith.constant 0 : index
    %c12_27 = arith.constant 12 : index
    %11 = vector.load %arg6[%c1_25, %c0_26, %c12_27] : memref<4x16x300xbf16, #tpu.memory_space<vmem>>, vector<1x12x12xbf16>
    tpu.vector_store %arg6[%c1_25, %c0_26, %c12_27], %10 {strides = array<i32>} : memref<4x16x300xbf16, #tpu.memory_space<vmem>>, vector<1x12x12xbf16>,
    %c0_28 = arith.constant 0 : index
    %c0_29 = arith.constant 0 : index
    %c42_30 = arith.constant 42 : index
    %12 = vector.load %arg1[%c0_28, %c0_29, %c42_30] : memref<1x14x56xbf16, #tpu.memory_space<vmem>>, vector<1x12x12xbf16>
    %c2_31 = arith.constant 2 : index
    %c0_32 = arith.constant 0 : index
    %c12_33 = arith.constant 12 : index
    %13 = vector.load %arg6[%c2_31, %c0_32, %c12_33] : memref<4x16x300xbf16, #tpu.memory_space<vmem>>, vector<1x12x12xbf16>
    tpu.vector_store %arg6[%c2_31, %c0_32, %c12_33], %12 {strides = array<i32>} : memref<4x16x300xbf16, #tpu.memory_space<vmem>>, vector<1x12x12xbf16>,
    %c0_34 = arith.constant 0 : index
    %c0_35 = arith.constant 0 : index
    %c29 = arith.constant 29 : index
    %14 = vector.load %arg1[%c0_34, %c0_35, %c29] : memref<1x14x56xbf16, #tpu.memory_space<vmem>>, vector<1x12x12xbf16>
    %c3_36 = arith.constant 3 : index
    %c0_37 = arith.constant 0 : index
    %c12_38 = arith.constant 12 : index
    %15 = vector.load %arg6[%c3_36, %c0_37, %c12_38] : memref<4x16x300xbf16, #tpu.memory_space<vmem>>, vector<1x12x12xbf16>
    tpu.vector_store %arg6[%c3_36, %c0_37, %c12_38], %14 {strides = array<i32>} : memref<4x16x300xbf16, #tpu.memory_space<vmem>>, vector<1x12x12xbf16>,
    %c0_39 = arith.constant 0 : index
    %c0_40 = arith.constant 0 : index
    %c1_41 = arith.constant 1 : index
    %16 = vector.load %arg1[%c0_39, %c0_40, %c1_41] : memref<1x14x56xbf16, #tpu.memory_space<vmem>>, vector<1x12x12xbf16>
    %c0_42 = arith.constant 0 : index
    %c0_43 = arith.constant 0 : index
    %c24 = arith.constant 24 : index
    %17 = vector.load %arg6[%c0_42, %c0_43, %c24] : memref<4x16x300xbf16, #tpu.memory_space<vmem>>, vector<1x12x12xbf16>
    tpu.vector_store %arg6[%c0_42, %c0_43, %c24], %16 {strides = array<i32>} : memref<4x16x300xbf16, #tpu.memory_space<vmem>>, vector<1x12x12xbf16>,
    %c0_44 = arith.constant 0 : index
    %c0_45 = arith.constant 0 : index
    %c15 = arith.constant 15 : index
    %18 = vector.load %arg1[%c0_44, %c0_45, %c15] : memref<1x14x56xbf16, #tpu.memory_space<vmem>>, vector<1x12x12xbf16>
    %c1_46 = arith.constant 1 : index
    %c0_47 = arith.constant 0 : index
    %c24_48 = arith.constant 24 : index
    %19 = vector.load %arg6[%c1_46, %c0_47, %c24_48] : memref<4x16x300xbf16, #tpu.memory_space<vmem>>, vector<1x12x12xbf16>
    tpu.vector_store %arg6[%c1_46, %c0_47, %c24_48], %18 {strides = array<i32>} : memref<4x16x300xbf16, #tpu.memory_space<vmem>>, vector<1x12x12xbf16>,
    %c0_49 = arith.constant 0 : index
    %c0_50 = arith.constant 0 : index
    %c29_51 = arith.constant 29 : index
    %20 = vector.load %arg1[%c0_49, %c0_50, %c29_51] : memref<1x14x56xbf16, #tpu.memory_space<vmem>>, vector<1x12x12xbf16>
    %c2_52 = arith.constant 2 : index
    %c0_53 = arith.constant 0 : index
    %c24_54 = arith.constant 24 : index
    %21 = vector.load %arg6[%c2_52, %c0_53, %c24_54] : memref<4x16x300xbf16, #tpu.memory_space<vmem>>, vector<1x12x12xbf16>
    tpu.vector_store %arg6[%c2_52, %c0_53, %c24_54], %20 {strides = array<i32>} : memref<4x16x300xbf16, #tpu.memory_space<vmem>>, vector<1x12x12xbf16>,
    %c0_55 = arith.constant 0 : index
    %c0_56 = arith.constant 0 : index
    %c43 = arith.constant 43 : index
    %22 = vector.load %arg1[%c0_55, %c0_56, %c43] : memref<1x14x56xbf16, #tpu.memory_space<vmem>>, vector<1x12x12xbf16>
    %c3_57 = arith.constant 3 : index
    %c0_58 = arith.constant 0 : index
    %c24_59 = arith.constant 24 : index
    %23 = vector.load %arg6[%c3_57, %c0_58, %c24_59] : memref<4x16x300xbf16, #tpu.memory_space<vmem>>, vector<1x12x12xbf16>
    tpu.vector_store %arg6[%c3_57, %c0_58, %c24_59], %22 {strides = array<i32>} : memref<4x16x300xbf16, #tpu.memory_space<vmem>>, vector<1x12x12xbf16>,
    %c0_60 = arith.constant 0 : index
    %c0_61 = arith.constant 0 : index
    %c15_62 = arith.constant 15 : index
    %24 = vector.load %arg1[%c0_60, %c0_61, %c15_62] : memref<1x14x56xbf16, #tpu.memory_space<vmem>>, vector<1x12x12xbf16>
    %c0_63 = arith.constant 0 : index
    %c0_64 = arith.constant 0 : index
    %c36 = arith.constant 36 : index
    %25 = vector.load %arg6[%c0_63, %c0_64, %c36] : memref<4x16x300xbf16, #tpu.memory_space<vmem>>, vector<1x12x12xbf16>
    tpu.vector_store %arg6[%c0_63, %c0_64, %c36], %24 {strides = array<i32>} : memref<4x16x300xbf16, #tpu.memory_space<vmem>>, vector<1x12x12xbf16>,
    %c0_65 = arith.constant 0 : index
    %c0_66 = arith.constant 0 : index
    %c2_67 = arith.constant 2 : index
    %26 = vector.load %arg1[%c0_65, %c0_66, %c2_67] : memref<1x14x56xbf16, #tpu.memory_space<vmem>>, vector<1x12x12xbf16>
    %c1_68 = arith.constant 1 : index
    %c0_69 = arith.constant 0 : index
    %c36_70 = arith.constant 36 : index
    %27 = vector.load %arg6[%c1_68, %c0_69, %c36_70] : memref<4x16x300xbf16, #tpu.memory_space<vmem>>, vector<1x12x12xbf16>
    tpu.vector_store %arg6[%c1_68, %c0_69, %c36_70], %26 {strides = array<i32>} : memref<4x16x300xbf16, #tpu.memory_space<vmem>>, vector<1x12x12xbf16>,
    %c0_71 = arith.constant 0 : index
    %c0_72 = arith.constant 0 : index
    %c43_73 = arith.constant 43 : index
    %28 = vector.load %arg1[%c0_71, %c0_72, %c43_73] : memref<1x14x56xbf16, #tpu.memory_space<vmem>>, vector<1x12x12xbf16>
    %c2_74 = arith.constant 2 : index
    %c0_75 = arith.constant 0 : index
    %c36_76 = arith.constant 36 : index
    %29 = vector.load %arg6[%c2_74, %c0_75, %c36_76] : memref<4x16x300xbf16, #tpu.memory_space<vmem>>, vector<1x12x12xbf16>
    tpu.vector_store %arg6[%c2_74, %c0_75, %c36_76], %28 {strides = array<i32>} : memref<4x16x300xbf16, #tpu.memory_space<vmem>>, vector<1x12x12xbf16>,
    %c0_77 = arith.constant 0 : index
    %c0_78 = arith.constant 0 : index
    %c30 = arith.constant 30 : index
    %30 = vector.load %arg1[%c0_77, %c0_78, %c30] : memref<1x14x56xbf16, #tpu.memory_space<vmem>>, vector<1x12x12xbf16>
    %c3_79 = arith.constant 3 : index
    %c0_80 = arith.constant 0 : index
    %c36_81 = arith.constant 36 : index
    %31 = vector.load %arg6[%c3_79, %c0_80, %c36_81] : memref<4x16x300xbf16, #tpu.memory_space<vmem>>, vector<1x12x12xbf16>
    tpu.vector_store %arg6[%c3_79, %c0_80, %c36_81], %30 {strides = array<i32>} : memref<4x16x300xbf16, #tpu.memory_space<vmem>>, vector<1x12x12xbf16>,
    %c0_82 = arith.constant 0 : index
    %c0_83 = arith.constant 0 : index
    %c2_84 = arith.constant 2 : index
    %32 = vector.load %arg1[%c0_82, %c0_83, %c2_84] : memref<1x14x56xbf16, #tpu.memory_space<vmem>>, vector<1x12x12xbf16>
    %c0_85 = arith.constant 0 : index
    %c0_86 = arith.constant 0 : index
    %c48 = arith.constant 48 : index
    %33 = vector.load %arg6[%c0_85, %c0_86, %c48] : memref<4x16x300xbf16, #tpu.memory_space<vmem>>, vector<1x12x12xbf16>
    tpu.vector_store %arg6[%c0_85, %c0_86, %c48], %32 {strides = array<i32>} : memref<4x16x300xbf16, #tpu.memory_space<vmem>>, vector<1x12x12xbf16>,
    %c0_87 = arith.constant 0 : index
    %c0_88 = arith.constant 0 : index
    %c16 = arith.constant 16 : index
    %34 = vector.load %arg1[%c0_87, %c0_88, %c16] : memref<1x14x56xbf16, #tpu.memory_space<vmem>>, vector<1x12x12xbf16>
    %c1_89 = arith.constant 1 : index
    %c0_90 = arith.constant 0 : index
    %c48_91 = arith.constant 48 : index
    %35 = vector.load %arg6[%c1_89, %c0_90, %c48_91] : memref<4x16x300xbf16, #tpu.memory_space<vmem>>, vector<1x12x12xbf16>
    tpu.vector_store %arg6[%c1_89, %c0_90, %c48_91], %34 {strides = array<i32>} : memref<4x16x300xbf16, #tpu.memory_space<vmem>>, vector<1x12x12xbf16>,
    %c0_92 = arith.constant 0 : index
    %c0_93 = arith.constant 0 : index
    %c30_94 = arith.constant 30 : index
    %36 = vector.load %arg1[%c0_92, %c0_93, %c30_94] : memref<1x14x56xbf16, #tpu.memory_space<vmem>>, vector<1x12x12xbf16>
    %c2_95 = arith.constant 2 : index
    %c0_96 = arith.constant 0 : index
    %c48_97 = arith.constant 48 : index
    %37 = vector.load %arg6[%c2_95, %c0_96, %c48_97] : memref<4x16x300xbf16, #tpu.memory_space<vmem>>, vector<1x12x12xbf16>
    tpu.vector_store %arg6[%c2_95, %c0_96, %c48_97], %36 {strides = array<i32>} : memref<4x16x300xbf16, #tpu.memory_space<vmem>>, vector<1x12x12xbf16>,
    %c0_98 = arith.constant 0 : index
    %c0_99 = arith.constant 0 : index
    %c44 = arith.constant 44 : index
    %38 = vector.load %arg1[%c0_98, %c0_99, %c44] : memref<1x14x56xbf16, #tpu.memory_space<vmem>>, vector<1x12x12xbf16>
    %c3_100 = arith.constant 3 : index
    %c0_101 = arith.constant 0 : index
    %c48_102 = arith.constant 48 : index
    %39 = vector.load %arg6[%c3_100, %c0_101, %c48_102] : memref<4x16x300xbf16, #tpu.memory_space<vmem>>, vector<1x12x12xbf16>
    tpu.vector_store %arg6[%c3_100, %c0_101, %c48_102], %38 {strides = array<i32>} : memref<4x16x300xbf16, #tpu.memory_space<vmem>>, vector<1x12x12xbf16>,
    %c0_103 = arith.constant 0 : index
    %c0_104 = arith.constant 0 : index
    %c28_105 = arith.constant 28 : index
    %40 = vector.load %arg1[%c0_103, %c0_104, %c28_105] : memref<1x14x56xbf16, #tpu.memory_space<vmem>>, vector<1x12x12xbf16>
    %c0_106 = arith.constant 0 : index
    %c0_107 = arith.constant 0 : index
    %c60 = arith.constant 60 : index
    %41 = vector.load %arg6[%c0_106, %c0_107, %c60] : memref<4x16x300xbf16, #tpu.memory_space<vmem>>, vector<1x12x12xbf16>
    tpu.vector_store %arg6[%c0_106, %c0_107, %c60], %40 {strides = array<i32>} : memref<4x16x300xbf16, #tpu.memory_space<vmem>>, vector<1x12x12xbf16>,
    %c0_108 = arith.constant 0 : index
    %c0_109 = arith.constant 0 : index
    %c42_110 = arith.constant 42 : index
    %42 = vector.load %arg1[%c0_108, %c0_109, %c42_110] : memref<1x14x56xbf16, #tpu.memory_space<vmem>>, vector<1x12x12xbf16>
    %c1_111 = arith.constant 1 : index
    %c0_112 = arith.constant 0 : index
    %c60_113 = arith.constant 60 : index
    %43 = vector.load %arg6[%c1_111, %c0_112, %c60_113] : memref<4x16x300xbf16, #tpu.memory_space<vmem>>, vector<1x12x12xbf16>
    tpu.vector_store %arg6[%c1_111, %c0_112, %c60_113], %42 {strides = array<i32>} : memref<4x16x300xbf16, #tpu.memory_space<vmem>>, vector<1x12x12xbf16>,
    %c0_114 = arith.constant 0 : index
    %c1_115 = arith.constant 1 : index
    %c0_116 = arith.constant 0 : index
    %44 = vector.load %arg1[%c0_114, %c1_115, %c0_116] : memref<1x14x56xbf16, #tpu.memory_space<vmem>>, vector<1x12x12xbf16>
    %c2_117 = arith.constant 2 : index
    %c0_118 = arith.constant 0 : index
    %c60_119 = arith.constant 60 : index
    %45 = vector.load %arg6[%c2_117, %c0_118, %c60_119] : memref<4x16x300xbf16, #tpu.memory_space<vmem>>, vector<1x12x12xbf16>
    tpu.vector_store %arg6[%c2_117, %c0_118, %c60_119], %44 {strides = array<i32>} : memref<4x16x300xbf16, #tpu.memory_space<vmem>>, vector<1x12x12xbf16>,
    %c0_120 = arith.constant 0 : index
    %c1_121 = arith.constant 1 : index
    %c14_122 = arith.constant 14 : index
    %46 = vector.load %arg1[%c0_120, %c1_121, %c14_122] : memref<1x14x56xbf16, #tpu.memory_space<vmem>>, vector<1x12x12xbf16>
    %c3_123 = arith.constant 3 : index
    %c0_124 = arith.constant 0 : index
    %c60_125 = arith.constant 60 : index
    %47 = vector.load %arg6[%c3_123, %c0_124, %c60_125] : memref<4x16x300xbf16, #tpu.memory_space<vmem>>, vector<1x12x12xbf16>
    tpu.vector_store %arg6[%c3_123, %c0_124, %c60_125], %46 {strides = array<i32>} : memref<4x16x300xbf16, #tpu.memory_space<vmem>>, vector<1x12x12xbf16>,
    %c0_126 = arith.constant 0 : index
    %c0_127 = arith.constant 0 : index
    %c42_128 = arith.constant 42 : index
    %48 = vector.load %arg1[%c0_126, %c0_127, %c42_128] : memref<1x14x56xbf16, #tpu.memory_space<vmem>>, vector<1x12x12xbf16>
    %c0_129 = arith.constant 0 : index
    %c0_130 = arith.constant 0 : index
    %c72 = arith.constant 72 : index
    %49 = vector.load %arg6[%c0_129, %c0_130, %c72] : memref<4x16x300xbf16, #tpu.memory_space<vmem>>, vector<1x12x12xbf16>
    tpu.vector_store %arg6[%c0_129, %c0_130, %c72], %48 {strides = array<i32>} : memref<4x16x300xbf16, #tpu.memory_space<vmem>>, vector<1x12x12xbf16>,
    %c0_131 = arith.constant 0 : index
    %c0_132 = arith.constant 0 : index
    %c29_133 = arith.constant 29 : index
    %50 = vector.load %arg1[%c0_131, %c0_132, %c29_133] : memref<1x14x56xbf16, #tpu.memory_space<vmem>>, vector<1x12x12xbf16>
    %c1_134 = arith.constant 1 : index
    %c0_135 = arith.constant 0 : index
    %c72_136 = arith.constant 72 : index
    %51 = vector.load %arg6[%c1_134, %c0_135, %c72_136] : memref<4x16x300xbf16, #tpu.memory_space<vmem>>, vector<1x12x12xbf16>
    tpu.vector_store %arg6[%c1_134, %c0_135, %c72_136], %50 {strides = array<i32>} : memref<4x16x300xbf16, #tpu.memory_space<vmem>>, vector<1x12x12xbf16>,
    %c0_137 = arith.constant 0 : index
    %c1_138 = arith.constant 1 : index
    %c14_139 = arith.constant 14 : index
    %52 = vector.load %arg1[%c0_137, %c1_138, %c14_139] : memref<1x14x56xbf16, #tpu.memory_space<vmem>>, vector<1x12x12xbf16>
    %c2_140 = arith.constant 2 : index
    %c0_141 = arith.constant 0 : index
    %c72_142 = arith.constant 72 : index
    %53 = vector.load %arg6[%c2_140, %c0_141, %c72_142] : memref<4x16x300xbf16, #tpu.memory_space<vmem>>, vector<1x12x12xbf16>
    tpu.vector_store %arg6[%c2_140, %c0_141, %c72_142], %52 {strides = array<i32>} : memref<4x16x300xbf16, #tpu.memory_space<vmem>>, vector<1x12x12xbf16>,
    %c0_143 = arith.constant 0 : index
    %c1_144 = arith.constant 1 : index
    %c1_145 = arith.constant 1 : index
    %54 = vector.load %arg1[%c0_143, %c1_144, %c1_145] : memref<1x14x56xbf16, #tpu.memory_space<vmem>>, vector<1x12x12xbf16>
    %c3_146 = arith.constant 3 : index
    %c0_147 = arith.constant 0 : index
    %c72_148 = arith.constant 72 : index
    %55 = vector.load %arg6[%c3_146, %c0_147, %c72_148] : memref<4x16x300xbf16, #tpu.memory_space<vmem>>, vector<1x12x12xbf16>
    tpu.vector_store %arg6[%c3_146, %c0_147, %c72_148], %54 {strides = array<i32>} : memref<4x16x300xbf16, #tpu.memory_space<vmem>>, vector<1x12x12xbf16>,
    %c0_149 = arith.constant 0 : index
    %c0_150 = arith.constant 0 : index
    %c29_151 = arith.constant 29 : index
    %56 = vector.load %arg1[%c0_149, %c0_150, %c29_151] : memref<1x14x56xbf16, #tpu.memory_space<vmem>>, vector<1x12x12xbf16>
    %c0_152 = arith.constant 0 : index
    %c0_153 = arith.constant 0 : index
    %c84 = arith.constant 84 : index
    %57 = vector.load %arg6[%c0_152, %c0_153, %c84] : memref<4x16x300xbf16, #tpu.memory_space<vmem>>, vector<1x12x12xbf16>
    tpu.vector_store %arg6[%c0_152, %c0_153, %c84], %56 {strides = array<i32>} : memref<4x16x300xbf16, #tpu.memory_space<vmem>>, vector<1x12x12xbf16>,
    %c0_154 = arith.constant 0 : index
    %c0_155 = arith.constant 0 : index
    %c43_156 = arith.constant 43 : index
    %58 = vector.load %arg1[%c0_154, %c0_155, %c43_156] : memref<1x14x56xbf16, #tpu.memory_space<vmem>>, vector<1x12x12xbf16>
    %c1_157 = arith.constant 1 : index
    %c0_158 = arith.constant 0 : index
    %c84_159 = arith.constant 84 : index
    %59 = vector.load %arg6[%c1_157, %c0_158, %c84_159] : memref<4x16x300xbf16, #tpu.memory_space<vmem>>, vector<1x12x12xbf16>
    tpu.vector_store %arg6[%c1_157, %c0_158, %c84_159], %58 {strides = array<i32>} : memref<4x16x300xbf16, #tpu.memory_space<vmem>>, vector<1x12x12xbf16>,
    %c0_160 = arith.constant 0 : index
    %c1_161 = arith.constant 1 : index
    %c1_162 = arith.constant 1 : index
    %60 = vector.load %arg1[%c0_160, %c1_161, %c1_162] : memref<1x14x56xbf16, #tpu.memory_space<vmem>>, vector<1x12x12xbf16>
    %c2_163 = arith.constant 2 : index
    %c0_164 = arith.constant 0 : index
    %c84_165 = arith.constant 84 : index
    %61 = vector.load %arg6[%c2_163, %c0_164, %c84_165] : memref<4x16x300xbf16, #tpu.memory_space<vmem>>, vector<1x12x12xbf16>
    tpu.vector_store %arg6[%c2_163, %c0_164, %c84_165], %60 {strides = array<i32>} : memref<4x16x300xbf16, #tpu.memory_space<vmem>>, vector<1x12x12xbf16>,
    %c0_166 = arith.constant 0 : index
    %c1_167 = arith.constant 1 : index
    %c15_168 = arith.constant 15 : index
    %62 = vector.load %arg1[%c0_166, %c1_167, %c15_168] : memref<1x14x56xbf16, #tpu.memory_space<vmem>>, vector<1x12x12xbf16>
    %c3_169 = arith.constant 3 : index
    %c0_170 = arith.constant 0 : index
    %c84_171 = arith.constant 84 : index
    %63 = vector.load %arg6[%c3_169, %c0_170, %c84_171] : memref<4x16x300xbf16, #tpu.memory_space<vmem>>, vector<1x12x12xbf16>
    tpu.vector_store %arg6[%c3_169, %c0_170, %c84_171], %62 {strides = array<i32>} : memref<4x16x300xbf16, #tpu.memory_space<vmem>>, vector<1x12x12xbf16>,
    %c0_172 = arith.constant 0 : index
    %c0_173 = arith.constant 0 : index
    %c43_174 = arith.constant 43 : index
    %64 = vector.load %arg1[%c0_172, %c0_173, %c43_174] : memref<1x14x56xbf16, #tpu.memory_space<vmem>>, vector<1x12x12xbf16>
    %c0_175 = arith.constant 0 : index
    %c0_176 = arith.constant 0 : index
    %c96 = arith.constant 96 : index
    %65 = vector.load %arg6[%c0_175, %c0_176, %c96] : memref<4x16x300xbf16, #tpu.memory_space<vmem>>, vector<1x12x12xbf16>
    tpu.vector_store %arg6[%c0_175, %c0_176, %c96], %64 {strides = array<i32>} : memref<4x16x300xbf16, #tpu.memory_space<vmem>>, vector<1x12x12xbf16>,
    %c0_177 = arith.constant 0 : index
    %c0_178 = arith.constant 0 : index
    %c30_179 = arith.constant 30 : index
    %66 = vector.load %arg1[%c0_177, %c0_178, %c30_179] : memref<1x14x56xbf16, #tpu.memory_space<vmem>>, vector<1x12x12xbf16>
    %c1_180 = arith.constant 1 : index
    %c0_181 = arith.constant 0 : index
    %c96_182 = arith.constant 96 : index
    %67 = vector.load %arg6[%c1_180, %c0_181, %c96_182] : memref<4x16x300xbf16, #tpu.memory_space<vmem>>, vector<1x12x12xbf16>
    tpu.vector_store %arg6[%c1_180, %c0_181, %c96_182], %66 {strides = array<i32>} : memref<4x16x300xbf16, #tpu.memory_space<vmem>>, vector<1x12x12xbf16>,
    %c0_183 = arith.constant 0 : index
    %c1_184 = arith.constant 1 : index
    %c15_185 = arith.constant 15 : index
    %68 = vector.load %arg1[%c0_183, %c1_184, %c15_185] : memref<1x14x56xbf16, #tpu.memory_space<vmem>>, vector<1x12x12xbf16>
    %c2_186 = arith.constant 2 : index
    %c0_187 = arith.constant 0 : index
    %c96_188 = arith.constant 96 : index
    %69 = vector.load %arg6[%c2_186, %c0_187, %c96_188] : memref<4x16x300xbf16, #tpu.memory_space<vmem>>, vector<1x12x12xbf16>
    tpu.vector_store %arg6[%c2_186, %c0_187, %c96_188], %68 {strides = array<i32>} : memref<4x16x300xbf16, #tpu.memory_space<vmem>>, vector<1x12x12xbf16>,
    %c0_189 = arith.constant 0 : index
    %c1_190 = arith.constant 1 : index
    %c2_191 = arith.constant 2 : index
    %70 = vector.load %arg1[%c0_189, %c1_190, %c2_191] : memref<1x14x56xbf16, #tpu.memory_space<vmem>>, vector<1x12x12xbf16>
    %c3_192 = arith.constant 3 : index
    %c0_193 = arith.constant 0 : index
    %c96_194 = arith.constant 96 : index
    %71 = vector.load %arg6[%c3_192, %c0_193, %c96_194] : memref<4x16x300xbf16, #tpu.memory_space<vmem>>, vector<1x12x12xbf16>
    tpu.vector_store %arg6[%c3_192, %c0_193, %c96_194], %70 {strides = array<i32>} : memref<4x16x300xbf16, #tpu.memory_space<vmem>>, vector<1x12x12xbf16>,
    %c0_195 = arith.constant 0 : index
    %c0_196 = arith.constant 0 : index
    %c30_197 = arith.constant 30 : index
    %72 = vector.load %arg1[%c0_195, %c0_196, %c30_197] : memref<1x14x56xbf16, #tpu.memory_space<vmem>>, vector<1x12x12xbf16>
    %c0_198 = arith.constant 0 : index
    %c0_199 = arith.constant 0 : index
    %c108 = arith.constant 108 : index
    %73 = vector.load %arg6[%c0_198, %c0_199, %c108] : memref<4x16x300xbf16, #tpu.memory_space<vmem>>, vector<1x12x12xbf16>
    tpu.vector_store %arg6[%c0_198, %c0_199, %c108], %72 {strides = array<i32>} : memref<4x16x300xbf16, #tpu.memory_space<vmem>>, vector<1x12x12xbf16>,
    %c0_200 = arith.constant 0 : index
    %c0_201 = arith.constant 0 : index
    %c44_202 = arith.constant 44 : index
    %74 = vector.load %arg1[%c0_200, %c0_201, %c44_202] : memref<1x14x56xbf16, #tpu.memory_space<vmem>>, vector<1x12x12xbf16>
    %c1_203 = arith.constant 1 : index
    %c0_204 = arith.constant 0 : index
    %c108_205 = arith.constant 108 : index
    %75 = vector.load %arg6[%c1_203, %c0_204, %c108_205] : memref<4x16x300xbf16, #tpu.memory_space<vmem>>, vector<1x12x12xbf16>
    tpu.vector_store %arg6[%c1_203, %c0_204, %c108_205], %74 {strides = array<i32>} : memref<4x16x300xbf16, #tpu.memory_space<vmem>>, vector<1x12x12xbf16>,
    %c0_206 = arith.constant 0 : index
    %c1_207 = arith.constant 1 : index
    %c2_208 = arith.constant 2 : index
    %76 = vector.load %arg1[%c0_206, %c1_207, %c2_208] : memref<1x14x56xbf16, #tpu.memory_space<vmem>>, vector<1x12x12xbf16>
    %c2_209 = arith.constant 2 : index
    %c0_210 = arith.constant 0 : index
    %c108_211 = arith.constant 108 : index
    %77 = vector.load %arg6[%c2_209, %c0_210, %c108_211] : memref<4x16x300xbf16, #tpu.memory_space<vmem>>, vector<1x12x12xbf16>
    tpu.vector_store %arg6[%c2_209, %c0_210, %c108_211], %76 {strides = array<i32>} : memref<4x16x300xbf16, #tpu.memory_space<vmem>>, vector<1x12x12xbf16>,
    %c0_212 = arith.constant 0 : index
    %c1_213 = arith.constant 1 : index
    %c16_214 = arith.constant 16 : index
    %78 = vector.load %arg1[%c0_212, %c1_213, %c16_214] : memref<1x14x56xbf16, #tpu.memory_space<vmem>>, vector<1x12x12xbf16>
    %c3_215 = arith.constant 3 : index
    %c0_216 = arith.constant 0 : index
    %c108_217 = arith.constant 108 : index
    %79 = vector.load %arg6[%c3_215, %c0_216, %c108_217] : memref<4x16x300xbf16, #tpu.memory_space<vmem>>, vector<1x12x12xbf16>
    tpu.vector_store %arg6[%c3_215, %c0_216, %c108_217], %78 {strides = array<i32>} : memref<4x16x300xbf16, #tpu.memory_space<vmem>>, vector<1x12x12xbf16>,
    %c0_218 = arith.constant 0 : index
    %c1_219 = arith.constant 1 : index
    %c0_220 = arith.constant 0 : index
    %80 = vector.load %arg1[%c0_218, %c1_219, %c0_220] : memref<1x14x56xbf16, #tpu.memory_space<vmem>>, vector<1x12x12xbf16>
    %c0_221 = arith.constant 0 : index
    %c0_222 = arith.constant 0 : index
    %c120 = arith.constant 120 : index
    %81 = vector.load %arg6[%c0_221, %c0_222, %c120] : memref<4x16x300xbf16, #tpu.memory_space<vmem>>, vector<1x12x12xbf16>
    tpu.vector_store %arg6[%c0_221, %c0_222, %c120], %80 {strides = array<i32>} : memref<4x16x300xbf16, #tpu.memory_space<vmem>>, vector<1x12x12xbf16>,
    %c0_223 = arith.constant 0 : index
    %c1_224 = arith.constant 1 : index
    %c14_225 = arith.constant 14 : index
    %82 = vector.load %arg1[%c0_223, %c1_224, %c14_225] : memref<1x14x56xbf16, #tpu.memory_space<vmem>>, vector<1x12x12xbf16>
    %c1_226 = arith.constant 1 : index
    %c0_227 = arith.constant 0 : index
    %c120_228 = arith.constant 120 : index
    %83 = vector.load %arg6[%c1_226, %c0_227, %c120_228] : memref<4x16x300xbf16, #tpu.memory_space<vmem>>, vector<1x12x12xbf16>
    tpu.vector_store %arg6[%c1_226, %c0_227, %c120_228], %82 {strides = array<i32>} : memref<4x16x300xbf16, #tpu.memory_space<vmem>>, vector<1x12x12xbf16>,
    %c0_229 = arith.constant 0 : index
    %c1_230 = arith.constant 1 : index
    %c28_231 = arith.constant 28 : index
    %84 = vector.load %arg1[%c0_229, %c1_230, %c28_231] : memref<1x14x56xbf16, #tpu.memory_space<vmem>>, vector<1x12x12xbf16>
    %c2_232 = arith.constant 2 : index
    %c0_233 = arith.constant 0 : index
    %c120_234 = arith.constant 120 : index
    %85 = vector.load %arg6[%c2_232, %c0_233, %c120_234] : memref<4x16x300xbf16, #tpu.memory_space<vmem>>, vector<1x12x12xbf16>
    tpu.vector_store %arg6[%c2_232, %c0_233, %c120_234], %84 {strides = array<i32>} : memref<4x16x300xbf16, #tpu.memory_space<vmem>>, vector<1x12x12xbf16>,
    %c0_235 = arith.constant 0 : index
    %c1_236 = arith.constant 1 : index
    %c42_237 = arith.constant 42 : index
    %86 = vector.load %arg1[%c0_235, %c1_236, %c42_237] : memref<1x14x56xbf16, #tpu.memory_space<vmem>>, vector<1x12x12xbf16>
    %c3_238 = arith.constant 3 : index
    %c0_239 = arith.constant 0 : index
    %c120_240 = arith.constant 120 : index
    %87 = vector.load %arg6[%c3_238, %c0_239, %c120_240] : memref<4x16x300xbf16, #tpu.memory_space<vmem>>, vector<1x12x12xbf16>
    tpu.vector_store %arg6[%c3_238, %c0_239, %c120_240], %86 {strides = array<i32>} : memref<4x16x300xbf16, #tpu.memory_space<vmem>>, vector<1x12x12xbf16>,
    %c0_241 = arith.constant 0 : index
    %c1_242 = arith.constant 1 : index
    %c14_243 = arith.constant 14 : index
    %88 = vector.load %arg1[%c0_241, %c1_242, %c14_243] : memref<1x14x56xbf16, #tpu.memory_space<vmem>>, vector<1x12x12xbf16>
    %c0_244 = arith.constant 0 : index
    %c0_245 = arith.constant 0 : index
    %c132 = arith.constant 132 : index
    %89 = vector.load %arg6[%c0_244, %c0_245, %c132] : memref<4x16x300xbf16, #tpu.memory_space<vmem>>, vector<1x12x12xbf16>
    tpu.vector_store %arg6[%c0_244, %c0_245, %c132], %88 {strides = array<i32>} : memref<4x16x300xbf16, #tpu.memory_space<vmem>>, vector<1x12x12xbf16>,
    %c0_246 = arith.constant 0 : index
    %c1_247 = arith.constant 1 : index
    %c1_248 = arith.constant 1 : index
    %90 = vector.load %arg1[%c0_246, %c1_247, %c1_248] : memref<1x14x56xbf16, #tpu.memory_space<vmem>>, vector<1x12x12xbf16>
    %c1_249 = arith.constant 1 : index
    %c0_250 = arith.constant 0 : index
    %c132_251 = arith.constant 132 : index
    %91 = vector.load %arg6[%c1_249, %c0_250, %c132_251] : memref<4x16x300xbf16, #tpu.memory_space<vmem>>, vector<1x12x12xbf16>
    tpu.vector_store %arg6[%c1_249, %c0_250, %c132_251], %90 {strides = array<i32>} : memref<4x16x300xbf16, #tpu.memory_space<vmem>>, vector<1x12x12xbf16>,
    %c0_252 = arith.constant 0 : index
    %c1_253 = arith.constant 1 : index
    %c42_254 = arith.constant 42 : index
    %92 = vector.load %arg1[%c0_252, %c1_253, %c42_254] : memref<1x14x56xbf16, #tpu.memory_space<vmem>>, vector<1x12x12xbf16>
    %c2_255 = arith.constant 2 : index
    %c0_256 = arith.constant 0 : index
    %c132_257 = arith.constant 132 : index
    %93 = vector.load %arg6[%c2_255, %c0_256, %c132_257] : memref<4x16x300xbf16, #tpu.memory_space<vmem>>, vector<1x12x12xbf16>
    tpu.vector_store %arg6[%c2_255, %c0_256, %c132_257], %92 {strides = array<i32>} : memref<4x16x300xbf16, #tpu.memory_space<vmem>>, vector<1x12x12xbf16>,
    %c0_258 = arith.constant 0 : index
    %c1_259 = arith.constant 1 : index
    %c29_260 = arith.constant 29 : index
    %94 = vector.load %arg1[%c0_258, %c1_259, %c29_260] : memref<1x14x56xbf16, #tpu.memory_space<vmem>>, vector<1x12x12xbf16>
    %c3_261 = arith.constant 3 : index
    %c0_262 = arith.constant 0 : index
    %c132_263 = arith.constant 132 : index
    %95 = vector.load %arg6[%c3_261, %c0_262, %c132_263] : memref<4x16x300xbf16, #tpu.memory_space<vmem>>, vector<1x12x12xbf16>
    tpu.vector_store %arg6[%c3_261, %c0_262, %c132_263], %94 {strides = array<i32>} : memref<4x16x300xbf16, #tpu.memory_space<vmem>>, vector<1x12x12xbf16>,
    %c0_264 = arith.constant 0 : index
    %c1_265 = arith.constant 1 : index
    %c1_266 = arith.constant 1 : index
    %96 = vector.load %arg1[%c0_264, %c1_265, %c1_266] : memref<1x14x56xbf16, #tpu.memory_space<vmem>>, vector<1x12x12xbf16>
    %c0_267 = arith.constant 0 : index
    %c0_268 = arith.constant 0 : index
    %c144 = arith.constant 144 : index
    %97 = vector.load %arg6[%c0_267, %c0_268, %c144] : memref<4x16x300xbf16, #tpu.memory_space<vmem>>, vector<1x12x12xbf16>
    tpu.vector_store %arg6[%c0_267, %c0_268, %c144], %96 {strides = array<i32>} : memref<4x16x300xbf16, #tpu.memory_space<vmem>>, vector<1x12x12xbf16>,
    %c0_269 = arith.constant 0 : index
    %c1_270 = arith.constant 1 : index
    %c15_271 = arith.constant 15 : index
    %98 = vector.load %arg1[%c0_269, %c1_270, %c15_271] : memref<1x14x56xbf16, #tpu.memory_space<vmem>>, vector<1x12x12xbf16>
    %c1_272 = arith.constant 1 : index
    %c0_273 = arith.constant 0 : index
    %c144_274 = arith.constant 144 : index
    %99 = vector.load %arg6[%c1_272, %c0_273, %c144_274] : memref<4x16x300xbf16, #tpu.memory_space<vmem>>, vector<1x12x12xbf16>
    tpu.vector_store %arg6[%c1_272, %c0_273, %c144_274], %98 {strides = array<i32>} : memref<4x16x300xbf16, #tpu.memory_space<vmem>>, vector<1x12x12xbf16>,
    %c0_275 = arith.constant 0 : index
    %c1_276 = arith.constant 1 : index
    %c29_277 = arith.constant 29 : index
    %100 = vector.load %arg1[%c0_275, %c1_276, %c29_277] : memref<1x14x56xbf16, #tpu.memory_space<vmem>>, vector<1x12x12xbf16>
    %c2_278 = arith.constant 2 : index
    %c0_279 = arith.constant 0 : index
    %c144_280 = arith.constant 144 : index
    %101 = vector.load %arg6[%c2_278, %c0_279, %c144_280] : memref<4x16x300xbf16, #tpu.memory_space<vmem>>, vector<1x12x12xbf16>
    tpu.vector_store %arg6[%c2_278, %c0_279, %c144_280], %100 {strides = array<i32>} : memref<4x16x300xbf16, #tpu.memory_space<vmem>>, vector<1x12x12xbf16>,
    %c0_281 = arith.constant 0 : index
    %c1_282 = arith.constant 1 : index
    %c43_283 = arith.constant 43 : index
    %102 = vector.load %arg1[%c0_281, %c1_282, %c43_283] : memref<1x14x56xbf16, #tpu.memory_space<vmem>>, vector<1x12x12xbf16>
    %c3_284 = arith.constant 3 : index
    %c0_285 = arith.constant 0 : index
    %c144_286 = arith.constant 144 : index
    %103 = vector.load %arg6[%c3_284, %c0_285, %c144_286] : memref<4x16x300xbf16, #tpu.memory_space<vmem>>, vector<1x12x12xbf16>
    tpu.vector_store %arg6[%c3_284, %c0_285, %c144_286], %102 {strides = array<i32>} : memref<4x16x300xbf16, #tpu.memory_space<vmem>>, vector<1x12x12xbf16>,
    %c0_287 = arith.constant 0 : index
    %c1_288 = arith.constant 1 : index
    %c15_289 = arith.constant 15 : index
    %104 = vector.load %arg1[%c0_287, %c1_288, %c15_289] : memref<1x14x56xbf16, #tpu.memory_space<vmem>>, vector<1x12x12xbf16>
    %c0_290 = arith.constant 0 : index
    %c0_291 = arith.constant 0 : index
    %c156 = arith.constant 156 : index
    %105 = vector.load %arg6[%c0_290, %c0_291, %c156] : memref<4x16x300xbf16, #tpu.memory_space<vmem>>, vector<1x12x12xbf16>
    tpu.vector_store %arg6[%c0_290, %c0_291, %c156], %104 {strides = array<i32>} : memref<4x16x300xbf16, #tpu.memory_space<vmem>>, vector<1x12x12xbf16>,
    %c0_292 = arith.constant 0 : index
    %c1_293 = arith.constant 1 : index
    %c2_294 = arith.constant 2 : index
    %106 = vector.load %arg1[%c0_292, %c1_293, %c2_294] : memref<1x14x56xbf16, #tpu.memory_space<vmem>>, vector<1x12x12xbf16>
    %c1_295 = arith.constant 1 : index
    %c0_296 = arith.constant 0 : index
    %c156_297 = arith.constant 156 : index
    %107 = vector.load %arg6[%c1_295, %c0_296, %c156_297] : memref<4x16x300xbf16, #tpu.memory_space<vmem>>, vector<1x12x12xbf16>
    tpu.vector_store %arg6[%c1_295, %c0_296, %c156_297], %106 {strides = array<i32>} : memref<4x16x300xbf16, #tpu.memory_space<vmem>>, vector<1x12x12xbf16>,
    %c0_298 = arith.constant 0 : index
    %c1_299 = arith.constant 1 : index
    %c43_300 = arith.constant 43 : index
    %108 = vector.load %arg1[%c0_298, %c1_299, %c43_300] : memref<1x14x56xbf16, #tpu.memory_space<vmem>>, vector<1x12x12xbf16>
    %c2_301 = arith.constant 2 : index
    %c0_302 = arith.constant 0 : index
    %c156_303 = arith.constant 156 : index
    %109 = vector.load %arg6[%c2_301, %c0_302, %c156_303] : memref<4x16x300xbf16, #tpu.memory_space<vmem>>, vector<1x12x12xbf16>
    tpu.vector_store %arg6[%c2_301, %c0_302, %c156_303], %108 {strides = array<i32>} : memref<4x16x300xbf16, #tpu.memory_space<vmem>>, vector<1x12x12xbf16>,
    %c0_304 = arith.constant 0 : index
    %c1_305 = arith.constant 1 : index
    %c30_306 = arith.constant 30 : index
    %110 = vector.load %arg1[%c0_304, %c1_305, %c30_306] : memref<1x14x56xbf16, #tpu.memory_space<vmem>>, vector<1x12x12xbf16>
    %c3_307 = arith.constant 3 : index
    %c0_308 = arith.constant 0 : index
    %c156_309 = arith.constant 156 : index
    %111 = vector.load %arg6[%c3_307, %c0_308, %c156_309] : memref<4x16x300xbf16, #tpu.memory_space<vmem>>, vector<1x12x12xbf16>
    tpu.vector_store %arg6[%c3_307, %c0_308, %c156_309], %110 {strides = array<i32>} : memref<4x16x300xbf16, #tpu.memory_space<vmem>>, vector<1x12x12xbf16>,
    %c0_310 = arith.constant 0 : index
    %c1_311 = arith.constant 1 : index
    %c2_312 = arith.constant 2 : index
    %112 = vector.load %arg1[%c0_310, %c1_311, %c2_312] : memref<1x14x56xbf16, #tpu.memory_space<vmem>>, vector<1x12x12xbf16>
    %c0_313 = arith.constant 0 : index
    %c0_314 = arith.constant 0 : index
    %c168 = arith.constant 168 : index
    %113 = vector.load %arg6[%c0_313, %c0_314, %c168] : memref<4x16x300xbf16, #tpu.memory_space<vmem>>, vector<1x12x12xbf16>
    tpu.vector_store %arg6[%c0_313, %c0_314, %c168], %112 {strides = array<i32>} : memref<4x16x300xbf16, #tpu.memory_space<vmem>>, vector<1x12x12xbf16>,
    %c0_315 = arith.constant 0 : index
    %c1_316 = arith.constant 1 : index
    %c16_317 = arith.constant 16 : index
    %114 = vector.load %arg1[%c0_315, %c1_316, %c16_317] : memref<1x14x56xbf16, #tpu.memory_space<vmem>>, vector<1x12x12xbf16>
    %c1_318 = arith.constant 1 : index
    %c0_319 = arith.constant 0 : index
    %c168_320 = arith.constant 168 : index
    %115 = vector.load %arg6[%c1_318, %c0_319, %c168_320] : memref<4x16x300xbf16, #tpu.memory_space<vmem>>, vector<1x12x12xbf16>
    tpu.vector_store %arg6[%c1_318, %c0_319, %c168_320], %114 {strides = array<i32>} : memref<4x16x300xbf16, #tpu.memory_space<vmem>>, vector<1x12x12xbf16>,
    %c0_321 = arith.constant 0 : index
    %c1_322 = arith.constant 1 : index
    %c30_323 = arith.constant 30 : index
    %116 = vector.load %arg1[%c0_321, %c1_322, %c30_323] : memref<1x14x56xbf16, #tpu.memory_space<vmem>>, vector<1x12x12xbf16>
    %c2_324 = arith.constant 2 : index
    %c0_325 = arith.constant 0 : index
    %c168_326 = arith.constant 168 : index
    %117 = vector.load %arg6[%c2_324, %c0_325, %c168_326] : memref<4x16x300xbf16, #tpu.memory_space<vmem>>, vector<1x12x12xbf16>
    tpu.vector_store %arg6[%c2_324, %c0_325, %c168_326], %116 {strides = array<i32>} : memref<4x16x300xbf16, #tpu.memory_space<vmem>>, vector<1x12x12xbf16>,
    %c0_327 = arith.constant 0 : index
    %c1_328 = arith.constant 1 : index
    %c44_329 = arith.constant 44 : index
    %118 = vector.load %arg1[%c0_327, %c1_328, %c44_329] : memref<1x14x56xbf16, #tpu.memory_space<vmem>>, vector<1x12x12xbf16>
    %c3_330 = arith.constant 3 : index
    %c0_331 = arith.constant 0 : index
    %c168_332 = arith.constant 168 : index
    %119 = vector.load %arg6[%c3_330, %c0_331, %c168_332] : memref<4x16x300xbf16, #tpu.memory_space<vmem>>, vector<1x12x12xbf16>
    tpu.vector_store %arg6[%c3_330, %c0_331, %c168_332], %118 {strides = array<i32>} : memref<4x16x300xbf16, #tpu.memory_space<vmem>>, vector<1x12x12xbf16>,
    %c0_333 = arith.constant 0 : index
    %c1_334 = arith.constant 1 : index
    %c28_335 = arith.constant 28 : index
    %120 = vector.load %arg1[%c0_333, %c1_334, %c28_335] : memref<1x14x56xbf16, #tpu.memory_space<vmem>>, vector<1x12x12xbf16>
    %c0_336 = arith.constant 0 : index
    %c0_337 = arith.constant 0 : index
    %c180 = arith.constant 180 : index
    %121 = vector.load %arg6[%c0_336, %c0_337, %c180] : memref<4x16x300xbf16, #tpu.memory_space<vmem>>, vector<1x12x12xbf16>
    tpu.vector_store %arg6[%c0_336, %c0_337, %c180], %120 {strides = array<i32>} : memref<4x16x300xbf16, #tpu.memory_space<vmem>>, vector<1x12x12xbf16>,
    %c0_338 = arith.constant 0 : index
    %c1_339 = arith.constant 1 : index
    %c42_340 = arith.constant 42 : index
    %122 = vector.load %arg1[%c0_338, %c1_339, %c42_340] : memref<1x14x56xbf16, #tpu.memory_space<vmem>>, vector<1x12x12xbf16>
    %c1_341 = arith.constant 1 : index
    %c0_342 = arith.constant 0 : index
    %c180_343 = arith.constant 180 : index
    %123 = vector.load %arg6[%c1_341, %c0_342, %c180_343] : memref<4x16x300xbf16, #tpu.memory_space<vmem>>, vector<1x12x12xbf16>
    tpu.vector_store %arg6[%c1_341, %c0_342, %c180_343], %122 {strides = array<i32>} : memref<4x16x300xbf16, #tpu.memory_space<vmem>>, vector<1x12x12xbf16>,
    %c0_344 = arith.constant 0 : index
    %c2_345 = arith.constant 2 : index
    %c0_346 = arith.constant 0 : index
    %124 = vector.load %arg1[%c0_344, %c2_345, %c0_346] : memref<1x14x56xbf16, #tpu.memory_space<vmem>>, vector<1x12x12xbf16>
    %c2_347 = arith.constant 2 : index
    %c0_348 = arith.constant 0 : index
    %c180_349 = arith.constant 180 : index
    %125 = vector.load %arg6[%c2_347, %c0_348, %c180_349] : memref<4x16x300xbf16, #tpu.memory_space<vmem>>, vector<1x12x12xbf16>
    tpu.vector_store %arg6[%c2_347, %c0_348, %c180_349], %124 {strides = array<i32>} : memref<4x16x300xbf16, #tpu.memory_space<vmem>>, vector<1x12x12xbf16>,
    %c0_350 = arith.constant 0 : index
    %c2_351 = arith.constant 2 : index
    %c14_352 = arith.constant 14 : index
    %126 = vector.load %arg1[%c0_350, %c2_351, %c14_352] : memref<1x14x56xbf16, #tpu.memory_space<vmem>>, vector<1x12x12xbf16>
    %c3_353 = arith.constant 3 : index
    %c0_354 = arith.constant 0 : index
    %c180_355 = arith.constant 180 : index
    %127 = vector.load %arg6[%c3_353, %c0_354, %c180_355] : memref<4x16x300xbf16, #tpu.memory_space<vmem>>, vector<1x12x12xbf16>
    tpu.vector_store %arg6[%c3_353, %c0_354, %c180_355], %126 {strides = array<i32>} : memref<4x16x300xbf16, #tpu.memory_space<vmem>>, vector<1x12x12xbf16>,
    %c0_356 = arith.constant 0 : index
    %c1_357 = arith.constant 1 : index
    %c42_358 = arith.constant 42 : index
    %128 = vector.load %arg1[%c0_356, %c1_357, %c42_358] : memref<1x14x56xbf16, #tpu.memory_space<vmem>>, vector<1x12x12xbf16>
    %c0_359 = arith.constant 0 : index
    %c0_360 = arith.constant 0 : index
    %c192 = arith.constant 192 : index
    %129 = vector.load %arg6[%c0_359, %c0_360, %c192] : memref<4x16x300xbf16, #tpu.memory_space<vmem>>, vector<1x12x12xbf16>
    tpu.vector_store %arg6[%c0_359, %c0_360, %c192], %128 {strides = array<i32>} : memref<4x16x300xbf16, #tpu.memory_space<vmem>>, vector<1x12x12xbf16>,
    %c0_361 = arith.constant 0 : index
    %c1_362 = arith.constant 1 : index
    %c29_363 = arith.constant 29 : index
    %130 = vector.load %arg1[%c0_361, %c1_362, %c29_363] : memref<1x14x56xbf16, #tpu.memory_space<vmem>>, vector<1x12x12xbf16>
    %c1_364 = arith.constant 1 : index
    %c0_365 = arith.constant 0 : index
    %c192_366 = arith.constant 192 : index
    %131 = vector.load %arg6[%c1_364, %c0_365, %c192_366] : memref<4x16x300xbf16, #tpu.memory_space<vmem>>, vector<1x12x12xbf16>
    tpu.vector_store %arg6[%c1_364, %c0_365, %c192_366], %130 {strides = array<i32>} : memref<4x16x300xbf16, #tpu.memory_space<vmem>>, vector<1x12x12xbf16>,
    %c0_367 = arith.constant 0 : index
    %c2_368 = arith.constant 2 : index
    %c14_369 = arith.constant 14 : index
    %132 = vector.load %arg1[%c0_367, %c2_368, %c14_369] : memref<1x14x56xbf16, #tpu.memory_space<vmem>>, vector<1x12x12xbf16>
    %c2_370 = arith.constant 2 : index
    %c0_371 = arith.constant 0 : index
    %c192_372 = arith.constant 192 : index
    %133 = vector.load %arg6[%c2_370, %c0_371, %c192_372] : memref<4x16x300xbf16, #tpu.memory_space<vmem>>, vector<1x12x12xbf16>
    tpu.vector_store %arg6[%c2_370, %c0_371, %c192_372], %132 {strides = array<i32>} : memref<4x16x300xbf16, #tpu.memory_space<vmem>>, vector<1x12x12xbf16>,
    %c0_373 = arith.constant 0 : index
    %c2_374 = arith.constant 2 : index
    %c1_375 = arith.constant 1 : index
    %134 = vector.load %arg1[%c0_373, %c2_374, %c1_375] : memref<1x14x56xbf16, #tpu.memory_space<vmem>>, vector<1x12x12xbf16>
    %c3_376 = arith.constant 3 : index
    %c0_377 = arith.constant 0 : index
    %c192_378 = arith.constant 192 : index
    %135 = vector.load %arg6[%c3_376, %c0_377, %c192_378] : memref<4x16x300xbf16, #tpu.memory_space<vmem>>, vector<1x12x12xbf16>
    tpu.vector_store %arg6[%c3_376, %c0_377, %c192_378], %134 {strides = array<i32>} : memref<4x16x300xbf16, #tpu.memory_space<vmem>>, vector<1x12x12xbf16>,
    %c0_379 = arith.constant 0 : index
    %c1_380 = arith.constant 1 : index
    %c29_381 = arith.constant 29 : index
    %136 = vector.load %arg1[%c0_379, %c1_380, %c29_381] : memref<1x14x56xbf16, #tpu.memory_space<vmem>>, vector<1x12x12xbf16>
    %c0_382 = arith.constant 0 : index
    %c0_383 = arith.constant 0 : index
    %c204 = arith.constant 204 : index
    %137 = vector.load %arg6[%c0_382, %c0_383, %c204] : memref<4x16x300xbf16, #tpu.memory_space<vmem>>, vector<1x12x12xbf16>
    tpu.vector_store %arg6[%c0_382, %c0_383, %c204], %136 {strides = array<i32>} : memref<4x16x300xbf16, #tpu.memory_space<vmem>>, vector<1x12x12xbf16>,
    %c0_384 = arith.constant 0 : index
    %c1_385 = arith.constant 1 : index
    %c43_386 = arith.constant 43 : index
    %138 = vector.load %arg1[%c0_384, %c1_385, %c43_386] : memref<1x14x56xbf16, #tpu.memory_space<vmem>>, vector<1x12x12xbf16>
    %c1_387 = arith.constant 1 : index
    %c0_388 = arith.constant 0 : index
    %c204_389 = arith.constant 204 : index
    %139 = vector.load %arg6[%c1_387, %c0_388, %c204_389] : memref<4x16x300xbf16, #tpu.memory_space<vmem>>, vector<1x12x12xbf16>
    tpu.vector_store %arg6[%c1_387, %c0_388, %c204_389], %138 {strides = array<i32>} : memref<4x16x300xbf16, #tpu.memory_space<vmem>>, vector<1x12x12xbf16>,
    %c0_390 = arith.constant 0 : index
    %c2_391 = arith.constant 2 : index
    %c1_392 = arith.constant 1 : index
    %140 = vector.load %arg1[%c0_390, %c2_391, %c1_392] : memref<1x14x56xbf16, #tpu.memory_space<vmem>>, vector<1x12x12xbf16>
    %c2_393 = arith.constant 2 : index
    %c0_394 = arith.constant 0 : index
    %c204_395 = arith.constant 204 : index
    %141 = vector.load %arg6[%c2_393, %c0_394, %c204_395] : memref<4x16x300xbf16, #tpu.memory_space<vmem>>, vector<1x12x12xbf16>
    tpu.vector_store %arg6[%c2_393, %c0_394, %c204_395], %140 {strides = array<i32>} : memref<4x16x300xbf16, #tpu.memory_space<vmem>>, vector<1x12x12xbf16>,
    %c0_396 = arith.constant 0 : index
    %c2_397 = arith.constant 2 : index
    %c15_398 = arith.constant 15 : index
    %142 = vector.load %arg1[%c0_396, %c2_397, %c15_398] : memref<1x14x56xbf16, #tpu.memory_space<vmem>>, vector<1x12x12xbf16>
    %c3_399 = arith.constant 3 : index
    %c0_400 = arith.constant 0 : index
    %c204_401 = arith.constant 204 : index
    %143 = vector.load %arg6[%c3_399, %c0_400, %c204_401] : memref<4x16x300xbf16, #tpu.memory_space<vmem>>, vector<1x12x12xbf16>
    tpu.vector_store %arg6[%c3_399, %c0_400, %c204_401], %142 {strides = array<i32>} : memref<4x16x300xbf16, #tpu.memory_space<vmem>>, vector<1x12x12xbf16>,
    %c0_402 = arith.constant 0 : index
    %c1_403 = arith.constant 1 : index
    %c43_404 = arith.constant 43 : index
    %144 = vector.load %arg1[%c0_402, %c1_403, %c43_404] : memref<1x14x56xbf16, #tpu.memory_space<vmem>>, vector<1x12x12xbf16>
    %c0_405 = arith.constant 0 : index
    %c0_406 = arith.constant 0 : index
    %c216 = arith.constant 216 : index
    %145 = vector.load %arg6[%c0_405, %c0_406, %c216] : memref<4x16x300xbf16, #tpu.memory_space<vmem>>, vector<1x12x12xbf16>
    tpu.vector_store %arg6[%c0_405, %c0_406, %c216], %144 {strides = array<i32>} : memref<4x16x300xbf16, #tpu.memory_space<vmem>>, vector<1x12x12xbf16>,
    %c0_407 = arith.constant 0 : index
    %c1_408 = arith.constant 1 : index
    %c30_409 = arith.constant 30 : index
    %146 = vector.load %arg1[%c0_407, %c1_408, %c30_409] : memref<1x14x56xbf16, #tpu.memory_space<vmem>>, vector<1x12x12xbf16>
    %c1_410 = arith.constant 1 : index
    %c0_411 = arith.constant 0 : index
    %c216_412 = arith.constant 216 : index
    %147 = vector.load %arg6[%c1_410, %c0_411, %c216_412] : memref<4x16x300xbf16, #tpu.memory_space<vmem>>, vector<1x12x12xbf16>
    tpu.vector_store %arg6[%c1_410, %c0_411, %c216_412], %146 {strides = array<i32>} : memref<4x16x300xbf16, #tpu.memory_space<vmem>>, vector<1x12x12xbf16>,
    %c0_413 = arith.constant 0 : index
    %c2_414 = arith.constant 2 : index
    %c15_415 = arith.constant 15 : index
    %148 = vector.load %arg1[%c0_413, %c2_414, %c15_415] : memref<1x14x56xbf16, #tpu.memory_space<vmem>>, vector<1x12x12xbf16>
    %c2_416 = arith.constant 2 : index
    %c0_417 = arith.constant 0 : index
    %c216_418 = arith.constant 216 : index
    %149 = vector.load %arg6[%c2_416, %c0_417, %c216_418] : memref<4x16x300xbf16, #tpu.memory_space<vmem>>, vector<1x12x12xbf16>
    tpu.vector_store %arg6[%c2_416, %c0_417, %c216_418], %148 {strides = array<i32>} : memref<4x16x300xbf16, #tpu.memory_space<vmem>>, vector<1x12x12xbf16>,
    %c0_419 = arith.constant 0 : index
    %c2_420 = arith.constant 2 : index
    %c2_421 = arith.constant 2 : index
    %150 = vector.load %arg1[%c0_419, %c2_420, %c2_421] : memref<1x14x56xbf16, #tpu.memory_space<vmem>>, vector<1x12x12xbf16>
    %c3_422 = arith.constant 3 : index
    %c0_423 = arith.constant 0 : index
    %c216_424 = arith.constant 216 : index
    %151 = vector.load %arg6[%c3_422, %c0_423, %c216_424] : memref<4x16x300xbf16, #tpu.memory_space<vmem>>, vector<1x12x12xbf16>
    tpu.vector_store %arg6[%c3_422, %c0_423, %c216_424], %150 {strides = array<i32>} : memref<4x16x300xbf16, #tpu.memory_space<vmem>>, vector<1x12x12xbf16>,
    %c0_425 = arith.constant 0 : index
    %c1_426 = arith.constant 1 : index
    %c30_427 = arith.constant 30 : index
    %152 = vector.load %arg1[%c0_425, %c1_426, %c30_427] : memref<1x14x56xbf16, #tpu.memory_space<vmem>>, vector<1x12x12xbf16>
    %c0_428 = arith.constant 0 : index
    %c0_429 = arith.constant 0 : index
    %c228 = arith.constant 228 : index
    %153 = vector.load %arg6[%c0_428, %c0_429, %c228] : memref<4x16x300xbf16, #tpu.memory_space<vmem>>, vector<1x12x12xbf16>
    tpu.vector_store %arg6[%c0_428, %c0_429, %c228], %152 {strides = array<i32>} : memref<4x16x300xbf16, #tpu.memory_space<vmem>>, vector<1x12x12xbf16>,
    %c0_430 = arith.constant 0 : index
    %c1_431 = arith.constant 1 : index
    %c44_432 = arith.constant 44 : index
    %154 = vector.load %arg1[%c0_430, %c1_431, %c44_432] : memref<1x14x56xbf16, #tpu.memory_space<vmem>>, vector<1x12x12xbf16>
    %c1_433 = arith.constant 1 : index
    %c0_434 = arith.constant 0 : index
    %c228_435 = arith.constant 228 : index
    %155 = vector.load %arg6[%c1_433, %c0_434, %c228_435] : memref<4x16x300xbf16, #tpu.memory_space<vmem>>, vector<1x12x12xbf16>
    tpu.vector_store %arg6[%c1_433, %c0_434, %c228_435], %154 {strides = array<i32>} : memref<4x16x300xbf16, #tpu.memory_space<vmem>>, vector<1x12x12xbf16>,
    %c0_436 = arith.constant 0 : index
    %c2_437 = arith.constant 2 : index
    %c2_438 = arith.constant 2 : index
    %156 = vector.load %arg1[%c0_436, %c2_437, %c2_438] : memref<1x14x56xbf16, #tpu.memory_space<vmem>>, vector<1x12x12xbf16>
    %c2_439 = arith.constant 2 : index
    %c0_440 = arith.constant 0 : index
    %c228_441 = arith.constant 228 : index
    %157 = vector.load %arg6[%c2_439, %c0_440, %c228_441] : memref<4x16x300xbf16, #tpu.memory_space<vmem>>, vector<1x12x12xbf16>
    tpu.vector_store %arg6[%c2_439, %c0_440, %c228_441], %156 {strides = array<i32>} : memref<4x16x300xbf16, #tpu.memory_space<vmem>>, vector<1x12x12xbf16>,
    %c0_442 = arith.constant 0 : index
    %c2_443 = arith.constant 2 : index
    %c16_444 = arith.constant 16 : index
    %158 = vector.load %arg1[%c0_442, %c2_443, %c16_444] : memref<1x14x56xbf16, #tpu.memory_space<vmem>>, vector<1x12x12xbf16>
    %c3_445 = arith.constant 3 : index
    %c0_446 = arith.constant 0 : index
    %c228_447 = arith.constant 228 : index
    %159 = vector.load %arg6[%c3_445, %c0_446, %c228_447] : memref<4x16x300xbf16, #tpu.memory_space<vmem>>, vector<1x12x12xbf16>
    tpu.vector_store %arg6[%c3_445, %c0_446, %c228_447], %158 {strides = array<i32>} : memref<4x16x300xbf16, #tpu.memory_space<vmem>>, vector<1x12x12xbf16>,
    %c0_448 = arith.constant 0 : index
    %c2_449 = arith.constant 2 : index
    %c0_450 = arith.constant 0 : index
    %160 = vector.load %arg1[%c0_448, %c2_449, %c0_450] : memref<1x14x56xbf16, #tpu.memory_space<vmem>>, vector<1x12x12xbf16>
    %c0_451 = arith.constant 0 : index
    %c0_452 = arith.constant 0 : index
    %c240 = arith.constant 240 : index
    %161 = vector.load %arg6[%c0_451, %c0_452, %c240] : memref<4x16x300xbf16, #tpu.memory_space<vmem>>, vector<1x12x12xbf16>
    tpu.vector_store %arg6[%c0_451, %c0_452, %c240], %160 {strides = array<i32>} : memref<4x16x300xbf16, #tpu.memory_space<vmem>>, vector<1x12x12xbf16>,
    %c0_453 = arith.constant 0 : index
    %c2_454 = arith.constant 2 : index
    %c14_455 = arith.constant 14 : index
    %162 = vector.load %arg1[%c0_453, %c2_454, %c14_455] : memref<1x14x56xbf16, #tpu.memory_space<vmem>>, vector<1x12x12xbf16>
    %c1_456 = arith.constant 1 : index
    %c0_457 = arith.constant 0 : index
    %c240_458 = arith.constant 240 : index
    %163 = vector.load %arg6[%c1_456, %c0_457, %c240_458] : memref<4x16x300xbf16, #tpu.memory_space<vmem>>, vector<1x12x12xbf16>
    tpu.vector_store %arg6[%c1_456, %c0_457, %c240_458], %162 {strides = array<i32>} : memref<4x16x300xbf16, #tpu.memory_space<vmem>>, vector<1x12x12xbf16>,
    %c0_459 = arith.constant 0 : index
    %c2_460 = arith.constant 2 : index
    %c28_461 = arith.constant 28 : index
    %164 = vector.load %arg1[%c0_459, %c2_460, %c28_461] : memref<1x14x56xbf16, #tpu.memory_space<vmem>>, vector<1x12x12xbf16>
    %c2_462 = arith.constant 2 : index
    %c0_463 = arith.constant 0 : index
    %c240_464 = arith.constant 240 : index
    %165 = vector.load %arg6[%c2_462, %c0_463, %c240_464] : memref<4x16x300xbf16, #tpu.memory_space<vmem>>, vector<1x12x12xbf16>
    tpu.vector_store %arg6[%c2_462, %c0_463, %c240_464], %164 {strides = array<i32>} : memref<4x16x300xbf16, #tpu.memory_space<vmem>>, vector<1x12x12xbf16>,
    %c0_465 = arith.constant 0 : index
    %c2_466 = arith.constant 2 : index
    %c42_467 = arith.constant 42 : index
    %166 = vector.load %arg1[%c0_465, %c2_466, %c42_467] : memref<1x14x56xbf16, #tpu.memory_space<vmem>>, vector<1x12x12xbf16>
    %c3_468 = arith.constant 3 : index
    %c0_469 = arith.constant 0 : index
    %c240_470 = arith.constant 240 : index
    %167 = vector.load %arg6[%c3_468, %c0_469, %c240_470] : memref<4x16x300xbf16, #tpu.memory_space<vmem>>, vector<1x12x12xbf16>
    tpu.vector_store %arg6[%c3_468, %c0_469, %c240_470], %166 {strides = array<i32>} : memref<4x16x300xbf16, #tpu.memory_space<vmem>>, vector<1x12x12xbf16>,
    %c0_471 = arith.constant 0 : index
    %c2_472 = arith.constant 2 : index
    %c14_473 = arith.constant 14 : index
    %168 = vector.load %arg1[%c0_471, %c2_472, %c14_473] : memref<1x14x56xbf16, #tpu.memory_space<vmem>>, vector<1x12x12xbf16>
    %c0_474 = arith.constant 0 : index
    %c0_475 = arith.constant 0 : index
    %c252 = arith.constant 252 : index
    %169 = vector.load %arg6[%c0_474, %c0_475, %c252] : memref<4x16x300xbf16, #tpu.memory_space<vmem>>, vector<1x12x12xbf16>
    tpu.vector_store %arg6[%c0_474, %c0_475, %c252], %168 {strides = array<i32>} : memref<4x16x300xbf16, #tpu.memory_space<vmem>>, vector<1x12x12xbf16>,
    %c0_476 = arith.constant 0 : index
    %c2_477 = arith.constant 2 : index
    %c1_478 = arith.constant 1 : index
    %170 = vector.load %arg1[%c0_476, %c2_477, %c1_478] : memref<1x14x56xbf16, #tpu.memory_space<vmem>>, vector<1x12x12xbf16>
    %c1_479 = arith.constant 1 : index
    %c0_480 = arith.constant 0 : index
    %c252_481 = arith.constant 252 : index
    %171 = vector.load %arg6[%c1_479, %c0_480, %c252_481] : memref<4x16x300xbf16, #tpu.memory_space<vmem>>, vector<1x12x12xbf16>
    tpu.vector_store %arg6[%c1_479, %c0_480, %c252_481], %170 {strides = array<i32>} : memref<4x16x300xbf16, #tpu.memory_space<vmem>>, vector<1x12x12xbf16>,
    %c0_482 = arith.constant 0 : index
    %c2_483 = arith.constant 2 : index
    %c42_484 = arith.constant 42 : index
    %172 = vector.load %arg1[%c0_482, %c2_483, %c42_484] : memref<1x14x56xbf16, #tpu.memory_space<vmem>>, vector<1x12x12xbf16>
    %c2_485 = arith.constant 2 : index
    %c0_486 = arith.constant 0 : index
    %c252_487 = arith.constant 252 : index
    %173 = vector.load %arg6[%c2_485, %c0_486, %c252_487] : memref<4x16x300xbf16, #tpu.memory_space<vmem>>, vector<1x12x12xbf16>
    tpu.vector_store %arg6[%c2_485, %c0_486, %c252_487], %172 {strides = array<i32>} : memref<4x16x300xbf16, #tpu.memory_space<vmem>>, vector<1x12x12xbf16>,
    %c0_488 = arith.constant 0 : index
    %c2_489 = arith.constant 2 : index
    %c29_490 = arith.constant 29 : index
    %174 = vector.load %arg1[%c0_488, %c2_489, %c29_490] : memref<1x14x56xbf16, #tpu.memory_space<vmem>>, vector<1x12x12xbf16>
    %c3_491 = arith.constant 3 : index
    %c0_492 = arith.constant 0 : index
    %c252_493 = arith.constant 252 : index
    %175 = vector.load %arg6[%c3_491, %c0_492, %c252_493] : memref<4x16x300xbf16, #tpu.memory_space<vmem>>, vector<1x12x12xbf16>
    tpu.vector_store %arg6[%c3_491, %c0_492, %c252_493], %174 {strides = array<i32>} : memref<4x16x300xbf16, #tpu.memory_space<vmem>>, vector<1x12x12xbf16>,
    %c0_494 = arith.constant 0 : index
    %c2_495 = arith.constant 2 : index
    %c1_496 = arith.constant 1 : index
    %176 = vector.load %arg1[%c0_494, %c2_495, %c1_496] : memref<1x14x56xbf16, #tpu.memory_space<vmem>>, vector<1x12x12xbf16>
    %c0_497 = arith.constant 0 : index
    %c0_498 = arith.constant 0 : index
    %c264 = arith.constant 264 : index
    %177 = vector.load %arg6[%c0_497, %c0_498, %c264] : memref<4x16x300xbf16, #tpu.memory_space<vmem>>, vector<1x12x12xbf16>
    tpu.vector_store %arg6[%c0_497, %c0_498, %c264], %176 {strides = array<i32>} : memref<4x16x300xbf16, #tpu.memory_space<vmem>>, vector<1x12x12xbf16>,
    %c0_499 = arith.constant 0 : index
    %c2_500 = arith.constant 2 : index
    %c15_501 = arith.constant 15 : index
    %178 = vector.load %arg1[%c0_499, %c2_500, %c15_501] : memref<1x14x56xbf16, #tpu.memory_space<vmem>>, vector<1x12x12xbf16>
    %c1_502 = arith.constant 1 : index
    %c0_503 = arith.constant 0 : index
    %c264_504 = arith.constant 264 : index
    %179 = vector.load %arg6[%c1_502, %c0_503, %c264_504] : memref<4x16x300xbf16, #tpu.memory_space<vmem>>, vector<1x12x12xbf16>
    tpu.vector_store %arg6[%c1_502, %c0_503, %c264_504], %178 {strides = array<i32>} : memref<4x16x300xbf16, #tpu.memory_space<vmem>>, vector<1x12x12xbf16>,
    %c0_505 = arith.constant 0 : index
    %c2_506 = arith.constant 2 : index
    %c29_507 = arith.constant 29 : index
    %180 = vector.load %arg1[%c0_505, %c2_506, %c29_507] : memref<1x14x56xbf16, #tpu.memory_space<vmem>>, vector<1x12x12xbf16>
    %c2_508 = arith.constant 2 : index
    %c0_509 = arith.constant 0 : index
    %c264_510 = arith.constant 264 : index
    %181 = vector.load %arg6[%c2_508, %c0_509, %c264_510] : memref<4x16x300xbf16, #tpu.memory_space<vmem>>, vector<1x12x12xbf16>
    tpu.vector_store %arg6[%c2_508, %c0_509, %c264_510], %180 {strides = array<i32>} : memref<4x16x300xbf16, #tpu.memory_space<vmem>>, vector<1x12x12xbf16>,
    %c0_511 = arith.constant 0 : index
    %c2_512 = arith.constant 2 : index
    %c43_513 = arith.constant 43 : index
    %182 = vector.load %arg1[%c0_511, %c2_512, %c43_513] : memref<1x14x56xbf16, #tpu.memory_space<vmem>>, vector<1x12x12xbf16>
    %c3_514 = arith.constant 3 : index
    %c0_515 = arith.constant 0 : index
    %c264_516 = arith.constant 264 : index
    %183 = vector.load %arg6[%c3_514, %c0_515, %c264_516] : memref<4x16x300xbf16, #tpu.memory_space<vmem>>, vector<1x12x12xbf16>
    tpu.vector_store %arg6[%c3_514, %c0_515, %c264_516], %182 {strides = array<i32>} : memref<4x16x300xbf16, #tpu.memory_space<vmem>>, vector<1x12x12xbf16>,
    %c0_517 = arith.constant 0 : index
    %c2_518 = arith.constant 2 : index
    %c15_519 = arith.constant 15 : index
    %184 = vector.load %arg1[%c0_517, %c2_518, %c15_519] : memref<1x14x56xbf16, #tpu.memory_space<vmem>>, vector<1x12x12xbf16>
    %c0_520 = arith.constant 0 : index
    %c0_521 = arith.constant 0 : index
    %c276 = arith.constant 276 : index
    %185 = vector.load %arg6[%c0_520, %c0_521, %c276] : memref<4x16x300xbf16, #tpu.memory_space<vmem>>, vector<1x12x12xbf16>
    tpu.vector_store %arg6[%c0_520, %c0_521, %c276], %184 {strides = array<i32>} : memref<4x16x300xbf16, #tpu.memory_space<vmem>>, vector<1x12x12xbf16>,
    %c0_522 = arith.constant 0 : index
    %c2_523 = arith.constant 2 : index
    %c2_524 = arith.constant 2 : index
    %186 = vector.load %arg1[%c0_522, %c2_523, %c2_524] : memref<1x14x56xbf16, #tpu.memory_space<vmem>>, vector<1x12x12xbf16>
    %c1_525 = arith.constant 1 : index
    %c0_526 = arith.constant 0 : index
    %c276_527 = arith.constant 276 : index
    %187 = vector.load %arg6[%c1_525, %c0_526, %c276_527] : memref<4x16x300xbf16, #tpu.memory_space<vmem>>, vector<1x12x12xbf16>
    tpu.vector_store %arg6[%c1_525, %c0_526, %c276_527], %186 {strides = array<i32>} : memref<4x16x300xbf16, #tpu.memory_space<vmem>>, vector<1x12x12xbf16>,
    %c0_528 = arith.constant 0 : index
    %c2_529 = arith.constant 2 : index
    %c43_530 = arith.constant 43 : index
    %188 = vector.load %arg1[%c0_528, %c2_529, %c43_530] : memref<1x14x56xbf16, #tpu.memory_space<vmem>>, vector<1x12x12xbf16>
    %c2_531 = arith.constant 2 : index
    %c0_532 = arith.constant 0 : index
    %c276_533 = arith.constant 276 : index
    %189 = vector.load %arg6[%c2_531, %c0_532, %c276_533] : memref<4x16x300xbf16, #tpu.memory_space<vmem>>, vector<1x12x12xbf16>
    tpu.vector_store %arg6[%c2_531, %c0_532, %c276_533], %188 {strides = array<i32>} : memref<4x16x300xbf16, #tpu.memory_space<vmem>>, vector<1x12x12xbf16>,
    %c0_534 = arith.constant 0 : index
    %c2_535 = arith.constant 2 : index
    %c30_536 = arith.constant 30 : index
    %190 = vector.load %arg1[%c0_534, %c2_535, %c30_536] : memref<1x14x56xbf16, #tpu.memory_space<vmem>>, vector<1x12x12xbf16>
    %c3_537 = arith.constant 3 : index
    %c0_538 = arith.constant 0 : index
    %c276_539 = arith.constant 276 : index
    %191 = vector.load %arg6[%c3_537, %c0_538, %c276_539] : memref<4x16x300xbf16, #tpu.memory_space<vmem>>, vector<1x12x12xbf16>
    tpu.vector_store %arg6[%c3_537, %c0_538, %c276_539], %190 {strides = array<i32>} : memref<4x16x300xbf16, #tpu.memory_space<vmem>>, vector<1x12x12xbf16>,
    %c0_540 = arith.constant 0 : index
    %c2_541 = arith.constant 2 : index
    %c2_542 = arith.constant 2 : index
    %192 = vector.load %arg1[%c0_540, %c2_541, %c2_542] : memref<1x14x56xbf16, #tpu.memory_space<vmem>>, vector<1x12x12xbf16>
    %c0_543 = arith.constant 0 : index
    %c0_544 = arith.constant 0 : index
    %c288 = arith.constant 288 : index
    %193 = vector.load %arg6[%c0_543, %c0_544, %c288] : memref<4x16x300xbf16, #tpu.memory_space<vmem>>, vector<1x12x12xbf16>
    tpu.vector_store %arg6[%c0_543, %c0_544, %c288], %192 {strides = array<i32>} : memref<4x16x300xbf16, #tpu.memory_space<vmem>>, vector<1x12x12xbf16>,
    %c0_545 = arith.constant 0 : index
    %c2_546 = arith.constant 2 : index
    %c16_547 = arith.constant 16 : index
    %194 = vector.load %arg1[%c0_545, %c2_546, %c16_547] : memref<1x14x56xbf16, #tpu.memory_space<vmem>>, vector<1x12x12xbf16>
    %c1_548 = arith.constant 1 : index
    %c0_549 = arith.constant 0 : index
    %c288_550 = arith.constant 288 : index
    %195 = vector.load %arg6[%c1_548, %c0_549, %c288_550] : memref<4x16x300xbf16, #tpu.memory_space<vmem>>, vector<1x12x12xbf16>
    tpu.vector_store %arg6[%c1_548, %c0_549, %c288_550], %194 {strides = array<i32>} : memref<4x16x300xbf16, #tpu.memory_space<vmem>>, vector<1x12x12xbf16>,
    %c0_551 = arith.constant 0 : index
    %c2_552 = arith.constant 2 : index
    %c30_553 = arith.constant 30 : index
    %196 = vector.load %arg1[%c0_551, %c2_552, %c30_553] : memref<1x14x56xbf16, #tpu.memory_space<vmem>>, vector<1x12x12xbf16>
    %c2_554 = arith.constant 2 : index
    %c0_555 = arith.constant 0 : index
    %c288_556 = arith.constant 288 : index
    %197 = vector.load %arg6[%c2_554, %c0_555, %c288_556] : memref<4x16x300xbf16, #tpu.memory_space<vmem>>, vector<1x12x12xbf16>
    tpu.vector_store %arg6[%c2_554, %c0_555, %c288_556], %196 {strides = array<i32>} : memref<4x16x300xbf16, #tpu.memory_space<vmem>>, vector<1x12x12xbf16>,
    %c0_557 = arith.constant 0 : index
    %c2_558 = arith.constant 2 : index
    %c44_559 = arith.constant 44 : index
    %198 = vector.load %arg1[%c0_557, %c2_558, %c44_559] : memref<1x14x56xbf16, #tpu.memory_space<vmem>>, vector<1x12x12xbf16>
    %c3_560 = arith.constant 3 : index
    %c0_561 = arith.constant 0 : index
    %c288_562 = arith.constant 288 : index
    %199 = vector.load %arg6[%c3_560, %c0_561, %c288_562] : memref<4x16x300xbf16, #tpu.memory_space<vmem>>, vector<1x12x12xbf16>
    tpu.vector_store %arg6[%c3_560, %c0_561, %c288_562], %198 {strides = array<i32>} : memref<4x16x300xbf16, #tpu.memory_space<vmem>>, vector<1x12x12xbf16>,
    %c0_563 = arith.constant 0 : index
    %c0_564 = arith.constant 0 : index
    %c0_565 = arith.constant 0 : index
    %200 = vector.load %arg6[%c0_563, %c0_564, %c0_565] : memref<4x16x300xbf16, #tpu.memory_space<vmem>>, vector<4x16x300xbf16>
    %201 = vector.shape_cast %200 : vector<4x16x300xbf16> to vector<64x300xbf16>
    %c0_566 = arith.constant 0 : index
    %c0_567 = arith.constant 0 : index
    %202 = vector.load %arg2[%c0_566, %c0_567] : memref<300x128xbf16, #tpu.memory_space<vmem>>, vector<300x128xbf16>
    %cst = arith.constant dense<0.000000e+00> : vector<64x128xf32>
    %203 = tpu.matmul %201, %202, %cst {dimension_numbers = #tpu.dot_dimension_numbers<[1], [0], [0], [1], [0, 0, 1, 1], [], []>} : vector<64x300xbf16>, vector<300x128xbf16>, vector<64x128xf32> -> vector<64x128xf32>
    %c0_568 = arith.constant 0 : index
    %c0_569 = arith.constant 0 : index
    %204 = vector.load %arg3[%c0_568, %c0_569] : memref<1x128xf32, #tpu.memory_space<vmem>>, vector<1x128xf32>
    %205 = vector.broadcast %204 : vector<1x128xf32> to vector<64x128xf32>
    %206 = arith.mulf %203, %205 : vector<64x128xf32>
    %c0_570 = arith.constant 0 : index
    %c0_571 = arith.constant 0 : index
    %207 = vector.load %arg4[%c0_570, %c0_571] : memref<1x128xf32, #tpu.memory_space<vmem>>, vector<1x128xf32>
    %208 = vector.broadcast %207 : vector<1x128xf32> to vector<64x128xf32>
    %209 = arith.addf %206, %208 : vector<64x128xf32>
    %210 = vector.shape_cast %209 : vector<64x128xf32> to vector<4x1x16x128xf32>
    %211 = vector.extract_strided_slice %210 {offsets = [0, 0, 0, 0], sizes = [1, 1, 16, 128], strides = [1, 1, 1, 1]} : vector<4x1x16x128xf32> to vector<1x1x16x128xf32>
    %212 = vector.shape_cast %211 : vector<1x1x16x128xf32> to vector<1x16x128xf32>
    %213 = vector.extract_strided_slice %210 {offsets = [1, 0, 0, 0], sizes = [1, 1, 16, 128], strides = [1, 1, 1, 1]} : vector<4x1x16x128xf32> to vector<1x1x16x128xf32>
    %214 = vector.shape_cast %213 : vector<1x1x16x128xf32> to vector<1x16x128xf32>
    %215 = arith.maximumf %212, %214 : vector<1x16x128xf32>
    %216 = vector.extract_strided_slice %210 {offsets = [2, 0, 0, 0], sizes = [1, 1, 16, 128], strides = [1, 1, 1, 1]} : vector<4x1x16x128xf32> to vector<1x1x16x128xf32>
    %217 = vector.shape_cast %216 : vector<1x1x16x128xf32> to vector<1x16x128xf32>
    %218 = vector.extract_strided_slice %210 {offsets = [3, 0, 0, 0], sizes = [1, 1, 16, 128], strides = [1, 1, 1, 1]} : vector<4x1x16x128xf32> to vector<1x1x16x128xf32>
    %219 = vector.shape_cast %218 : vector<1x1x16x128xf32> to vector<1x16x128xf32>
    %220 = arith.maximumf %217, %219 : vector<1x16x128xf32>
    %221 = arith.maximumf %215, %220 : vector<1x16x128xf32>
    %cst_572 = arith.constant 0.000000e+00 : f32
    %222 = vector.broadcast %cst_572 : f32 to vector<1x16x128xf32>
    %223 = arith.maximumf %221, %222 : vector<1x16x128xf32>
    %224 = arith.truncf %223 : vector<1x16x128xf32> to vector<1x16x128xbf16>
    %c0_573 = arith.constant 0 : index
    %c0_574 = arith.constant 0 : index
    %c0_575 = arith.constant 0 : index
    %225 = vector.load %arg5[%c0_573, %c0_574, %c0_575] : memref<1x16x128xbf16, #tpu.memory_space<vmem>>, vector<1x16x128xbf16>
    tpu.vector_store %arg5[%c0_573, %c0_574, %c0_575], %224 {strides = array<i32>} : memref<1x16x128xbf16, #tpu.memory_space<vmem>>, vector<1x16x128xbf16>,
    return
  }
  func.func @transform_0(%arg0: i32) -> (i32, i32, i32) {
    %c0_i32 = arith.constant 0 : i32
    %c0_i32_0 = arith.constant 0 : i32
    %c0_i32_1 = arith.constant 0 : i32
    return %arg0, %c0_i32, %c0_i32_0 : i32, i32, i32
  }
  func.func @transform_1(%arg0: i32) -> (i32, i32) {
    %c0_i32 = arith.constant 0 : i32
    %c0_i32_0 = arith.constant 0 : i32
    %c0_i32_1 = arith.constant 0 : i32
    return %c0_i32, %c0_i32_0 : i32, i32
  }
  func.func @transform_2(%arg0: i32) -> (i32, i32) {
    %c0_i32 = arith.constant 0 : i32
    %c0_i32_0 = arith.constant 0 : i32
    %c0_i32_1 = arith.constant 0 : i32
    return %c0_i32, %c0_i32_0 : i32, i32
  }
  func.func @transform_3(%arg0: i32) -> (i32, i32) {
    %c0_i32 = arith.constant 0 : i32
    %c0_i32_0 = arith.constant 0 : i32
    %c0_i32_1 = arith.constant 0 : i32
    return %c0_i32, %c0_i32_0 : i32, i32
  }
  func.func @transform_4(%arg0: i32) -> (i32, i32, i32) {
    %c0_i32 = arith.constant 0 : i32
    %c0_i32_0 = arith.constant 0 : i32
    %c0_i32_1 = arith.constant 0 : i32
    return %arg0, %c0_i32, %c0_i32_0 : i32, i32, i32
  }
}

module attributes {stable_mosaic.version = 11 : i64} {
  func.func @_fc_head_kernel(%arg0: i32, %arg1: memref<2x160xbf16, #tpu.memory_space<vmem>>, %arg2: memref<160x128xbf16, #tpu.memory_space<vmem>>, %arg3: memref<1x128xf32, #tpu.memory_space<vmem>>, %arg4: memref<128x128xbf16, #tpu.memory_space<vmem>>, %arg5: memref<1x128xf32, #tpu.memory_space<vmem>>, %arg6: memref<2x128xf32, #tpu.memory_space<vmem>>) attributes {dimension_semantics = [#tpu.dimension_semantics<parallel>], iteration_bounds = array<i64: 1>, scalar_prefetch = 0 : i64, scratch_operands = 0 : i64, tpu.core_type = #tpu.core_type<tc>, window_params = [{transform_indices = @transform_0, window_bounds = array<i64: 2, 160>}, {pipeline_mode = #tpu.pipeline_mode<synchronous>, transform_indices = @transform_1, window_bounds = array<i64: 160, 128>}, {pipeline_mode = #tpu.pipeline_mode<synchronous>, transform_indices = @transform_2, window_bounds = array<i64: 1, 128>}, {pipeline_mode = #tpu.pipeline_mode<synchronous>, transform_indices = @transform_3, window_bounds = array<i64: 128, 128>}, {pipeline_mode = #tpu.pipeline_mode<synchronous>, transform_indices = @transform_4, window_bounds = array<i64: 1, 128>}, {transform_indices = @transform_5, window_bounds = array<i64: 2, 128>}]} {
    %c0 = arith.constant 0 : index
    %c0_0 = arith.constant 0 : index
    %0 = vector.load %arg1[%c0, %c0_0] : memref<2x160xbf16, #tpu.memory_space<vmem>>, vector<2x160xbf16>
    %c0_1 = arith.constant 0 : index
    %c0_2 = arith.constant 0 : index
    %1 = vector.load %arg2[%c0_1, %c0_2] : memref<160x128xbf16, #tpu.memory_space<vmem>>, vector<160x128xbf16>
    %cst = arith.constant dense<0.000000e+00> : vector<2x128xf32>
    %2 = tpu.matmul %0, %1, %cst {dimension_numbers = #tpu.dot_dimension_numbers<[1], [0], [0], [1], [0, 0, 1, 1], [], []>} : vector<2x160xbf16>, vector<160x128xbf16>, vector<2x128xf32> -> vector<2x128xf32>
    %c0_3 = arith.constant 0 : index
    %c0_4 = arith.constant 0 : index
    %3 = vector.load %arg3[%c0_3, %c0_4] : memref<1x128xf32, #tpu.memory_space<vmem>>, vector<1x128xf32>
    %4 = vector.broadcast %3 : vector<1x128xf32> to vector<2x128xf32>
    %5 = arith.addf %2, %4 : vector<2x128xf32>
    %cst_5 = arith.constant 0.000000e+00 : f32
    %6 = vector.broadcast %cst_5 : f32 to vector<2x128xf32>
    %7 = arith.maximumf %5, %6 : vector<2x128xf32>
    %8 = arith.truncf %7 : vector<2x128xf32> to vector<2x128xbf16>
    %c0_6 = arith.constant 0 : index
    %c0_7 = arith.constant 0 : index
    %9 = vector.load %arg4[%c0_6, %c0_7] : memref<128x128xbf16, #tpu.memory_space<vmem>>, vector<128x128xbf16>
    %cst_8 = arith.constant dense<0.000000e+00> : vector<2x128xf32>
    %10 = tpu.matmul %8, %9, %cst_8 {dimension_numbers = #tpu.dot_dimension_numbers<[1], [0], [0], [1], [0, 0, 1, 1], [], []>} : vector<2x128xbf16>, vector<128x128xbf16>, vector<2x128xf32> -> vector<2x128xf32>
    %c0_9 = arith.constant 0 : index
    %c0_10 = arith.constant 0 : index
    %11 = vector.load %arg5[%c0_9, %c0_10] : memref<1x128xf32, #tpu.memory_space<vmem>>, vector<1x128xf32>
    %12 = vector.broadcast %11 : vector<1x128xf32> to vector<2x128xf32>
    %13 = arith.addf %10, %12 : vector<2x128xf32>
    %cst_11 = arith.constant dense<0xFF800000> : vector<2xf32>
    %14 = vector.multi_reduction <maximumf>, %13, %cst_11 [1] : vector<2x128xf32> to vector<2xf32>
    %15 = vector.shape_cast %14 : vector<2xf32> to vector<2x1xf32>
    %16 = vector.broadcast %15 : vector<2x1xf32> to vector<2x128xf32>
    %17 = arith.subf %13, %16 : vector<2x128xf32>
    %18 = math.exp %17 : vector<2x128xf32>
    %cst_12 = arith.constant dense<0.000000e+00> : vector<2xf32>
    %19 = vector.multi_reduction <add>, %18, %cst_12 [1] : vector<2x128xf32> to vector<2xf32>
    %20 = vector.shape_cast %19 : vector<2xf32> to vector<2x1xf32>
    %21 = math.log %20 : vector<2x1xf32>
    %22 = arith.addf %21, %15 : vector<2x1xf32>
    %23 = vector.broadcast %22 : vector<2x1xf32> to vector<2x128xf32>
    %24 = arith.subf %13, %23 : vector<2x128xf32>
    %c0_13 = arith.constant 0 : index
    %c0_14 = arith.constant 0 : index
    %25 = vector.load %arg6[%c0_13, %c0_14] : memref<2x128xf32, #tpu.memory_space<vmem>>, vector<2x128xf32>
    tpu.vector_store %arg6[%c0_13, %c0_14], %24 {strides = array<i32>} : memref<2x128xf32, #tpu.memory_space<vmem>>, vector<2x128xf32>,
    return
  }
  func.func @transform_0(%arg0: i32) -> (i32, i32) {
    %c0_i32 = arith.constant 0 : i32
    %c0_i32_0 = arith.constant 0 : i32
    return %arg0, %c0_i32 : i32, i32
  }
  func.func @transform_1(%arg0: i32) -> (i32, i32) {
    %c0_i32 = arith.constant 0 : i32
    %c0_i32_0 = arith.constant 0 : i32
    %c0_i32_1 = arith.constant 0 : i32
    return %c0_i32, %c0_i32_0 : i32, i32
  }
  func.func @transform_2(%arg0: i32) -> (i32, i32) {
    %c0_i32 = arith.constant 0 : i32
    %c0_i32_0 = arith.constant 0 : i32
    %c0_i32_1 = arith.constant 0 : i32
    return %c0_i32, %c0_i32_0 : i32, i32
  }
  func.func @transform_3(%arg0: i32) -> (i32, i32) {
    %c0_i32 = arith.constant 0 : i32
    %c0_i32_0 = arith.constant 0 : i32
    %c0_i32_1 = arith.constant 0 : i32
    return %c0_i32, %c0_i32_0 : i32, i32
  }
  func.func @transform_4(%arg0: i32) -> (i32, i32) {
    %c0_i32 = arith.constant 0 : i32
    %c0_i32_0 = arith.constant 0 : i32
    %c0_i32_1 = arith.constant 0 : i32
    return %c0_i32, %c0_i32_0 : i32, i32
  }
  func.func @transform_5(%arg0: i32) -> (i32, i32) {
    %c0_i32 = arith.constant 0 : i32
    %c0_i32_0 = arith.constant 0 : i32
    return %arg0, %c0_i32 : i32, i32
  }
}

module attributes {stable_mosaic.version = 11 : i64} {
  func.func @kernel(%arg0: i32, %arg1: memref<1x6x120xbf16, #tpu.memory_space<vmem>>, %arg2: memref<500x128xbf16, #tpu.memory_space<vmem>>, %arg3: memref<1x128xf32, #tpu.memory_space<vmem>>, %arg4: memref<1x128xf32, #tpu.memory_space<vmem>>, %arg5: memref<1x16x128xbf16, #tpu.memory_space<vmem>>, %arg6: memref<4x16x500xbf16, #tpu.memory_space<vmem>>) attributes {dimension_semantics = [#tpu.dimension_semantics<parallel>], iteration_bounds = array<i64: 2>, scalar_prefetch = 0 : i64, scratch_operands = 1 : i64, tpu.core_type = #tpu.core_type<tc>, window_params = [{transform_indices = @transform_0, window_bounds = array<i64: 1, 6, 120>}, {pipeline_mode = #tpu.pipeline_mode<synchronous>, transform_indices = @transform_1, window_bounds = array<i64: 500, 128>}, {pipeline_mode = #tpu.pipeline_mode<synchronous>, transform_indices = @transform_2, window_bounds = array<i64: 1, 128>}, {pipeline_mode = #tpu.pipeline_mode<synchronous>, transform_indices = @transform_3, window_bounds = array<i64: 1, 128>}, {transform_indices = @transform_4, window_bounds = array<i64: 1, 16, 128>}]} {
    %c0 = arith.constant 0 : index
    %c0_0 = arith.constant 0 : index
    %c0_1 = arith.constant 0 : index
    %0 = vector.load %arg1[%c0, %c0_0, %c0_1] : memref<1x6x120xbf16, #tpu.memory_space<vmem>>, vector<1x4x20xbf16>
    %c0_2 = arith.constant 0 : index
    %c0_3 = arith.constant 0 : index
    %c0_4 = arith.constant 0 : index
    %1 = vector.load %arg6[%c0_2, %c0_3, %c0_4] : memref<4x16x500xbf16, #tpu.memory_space<vmem>>, vector<1x4x20xbf16>
    tpu.vector_store %arg6[%c0_2, %c0_3, %c0_4], %0 {strides = array<i32>} : memref<4x16x500xbf16, #tpu.memory_space<vmem>>, vector<1x4x20xbf16>,
    %c0_5 = arith.constant 0 : index
    %c0_6 = arith.constant 0 : index
    %c30 = arith.constant 30 : index
    %2 = vector.load %arg1[%c0_5, %c0_6, %c30] : memref<1x6x120xbf16, #tpu.memory_space<vmem>>, vector<1x4x20xbf16>
    %c1 = arith.constant 1 : index
    %c0_7 = arith.constant 0 : index
    %c0_8 = arith.constant 0 : index
    %3 = vector.load %arg6[%c1, %c0_7, %c0_8] : memref<4x16x500xbf16, #tpu.memory_space<vmem>>, vector<1x4x20xbf16>
    tpu.vector_store %arg6[%c1, %c0_7, %c0_8], %2 {strides = array<i32>} : memref<4x16x500xbf16, #tpu.memory_space<vmem>>, vector<1x4x20xbf16>,
    %c0_9 = arith.constant 0 : index
    %c0_10 = arith.constant 0 : index
    %c60 = arith.constant 60 : index
    %4 = vector.load %arg1[%c0_9, %c0_10, %c60] : memref<1x6x120xbf16, #tpu.memory_space<vmem>>, vector<1x4x20xbf16>
    %c2 = arith.constant 2 : index
    %c0_11 = arith.constant 0 : index
    %c0_12 = arith.constant 0 : index
    %5 = vector.load %arg6[%c2, %c0_11, %c0_12] : memref<4x16x500xbf16, #tpu.memory_space<vmem>>, vector<1x4x20xbf16>
    tpu.vector_store %arg6[%c2, %c0_11, %c0_12], %4 {strides = array<i32>} : memref<4x16x500xbf16, #tpu.memory_space<vmem>>, vector<1x4x20xbf16>,
    %c0_13 = arith.constant 0 : index
    %c0_14 = arith.constant 0 : index
    %c90 = arith.constant 90 : index
    %6 = vector.load %arg1[%c0_13, %c0_14, %c90] : memref<1x6x120xbf16, #tpu.memory_space<vmem>>, vector<1x4x20xbf16>
    %c3 = arith.constant 3 : index
    %c0_15 = arith.constant 0 : index
    %c0_16 = arith.constant 0 : index
    %7 = vector.load %arg6[%c3, %c0_15, %c0_16] : memref<4x16x500xbf16, #tpu.memory_space<vmem>>, vector<1x4x20xbf16>
    tpu.vector_store %arg6[%c3, %c0_15, %c0_16], %6 {strides = array<i32>} : memref<4x16x500xbf16, #tpu.memory_space<vmem>>, vector<1x4x20xbf16>,
    %c0_17 = arith.constant 0 : index
    %c0_18 = arith.constant 0 : index
    %c30_19 = arith.constant 30 : index
    %8 = vector.load %arg1[%c0_17, %c0_18, %c30_19] : memref<1x6x120xbf16, #tpu.memory_space<vmem>>, vector<1x4x20xbf16>
    %c0_20 = arith.constant 0 : index
    %c0_21 = arith.constant 0 : index
    %c20 = arith.constant 20 : index
    %9 = vector.load %arg6[%c0_20, %c0_21, %c20] : memref<4x16x500xbf16, #tpu.memory_space<vmem>>, vector<1x4x20xbf16>
    tpu.vector_store %arg6[%c0_20, %c0_21, %c20], %8 {strides = array<i32>} : memref<4x16x500xbf16, #tpu.memory_space<vmem>>, vector<1x4x20xbf16>,
    %c0_22 = arith.constant 0 : index
    %c0_23 = arith.constant 0 : index
    %c5 = arith.constant 5 : index
    %10 = vector.load %arg1[%c0_22, %c0_23, %c5] : memref<1x6x120xbf16, #tpu.memory_space<vmem>>, vector<1x4x20xbf16>
    %c1_24 = arith.constant 1 : index
    %c0_25 = arith.constant 0 : index
    %c20_26 = arith.constant 20 : index
    %11 = vector.load %arg6[%c1_24, %c0_25, %c20_26] : memref<4x16x500xbf16, #tpu.memory_space<vmem>>, vector<1x4x20xbf16>
    tpu.vector_store %arg6[%c1_24, %c0_25, %c20_26], %10 {strides = array<i32>} : memref<4x16x500xbf16, #tpu.memory_space<vmem>>, vector<1x4x20xbf16>,
    %c0_27 = arith.constant 0 : index
    %c0_28 = arith.constant 0 : index
    %c90_29 = arith.constant 90 : index
    %12 = vector.load %arg1[%c0_27, %c0_28, %c90_29] : memref<1x6x120xbf16, #tpu.memory_space<vmem>>, vector<1x4x20xbf16>
    %c2_30 = arith.constant 2 : index
    %c0_31 = arith.constant 0 : index
    %c20_32 = arith.constant 20 : index
    %13 = vector.load %arg6[%c2_30, %c0_31, %c20_32] : memref<4x16x500xbf16, #tpu.memory_space<vmem>>, vector<1x4x20xbf16>
    tpu.vector_store %arg6[%c2_30, %c0_31, %c20_32], %12 {strides = array<i32>} : memref<4x16x500xbf16, #tpu.memory_space<vmem>>, vector<1x4x20xbf16>,
    %c0_33 = arith.constant 0 : index
    %c0_34 = arith.constant 0 : index
    %c65 = arith.constant 65 : index
    %14 = vector.load %arg1[%c0_33, %c0_34, %c65] : memref<1x6x120xbf16, #tpu.memory_space<vmem>>, vector<1x4x20xbf16>
    %c3_35 = arith.constant 3 : index
    %c0_36 = arith.constant 0 : index
    %c20_37 = arith.constant 20 : index
    %15 = vector.load %arg6[%c3_35, %c0_36, %c20_37] : memref<4x16x500xbf16, #tpu.memory_space<vmem>>, vector<1x4x20xbf16>
    tpu.vector_store %arg6[%c3_35, %c0_36, %c20_37], %14 {strides = array<i32>} : memref<4x16x500xbf16, #tpu.memory_space<vmem>>, vector<1x4x20xbf16>,
    %c0_38 = arith.constant 0 : index
    %c0_39 = arith.constant 0 : index
    %c5_40 = arith.constant 5 : index
    %16 = vector.load %arg1[%c0_38, %c0_39, %c5_40] : memref<1x6x120xbf16, #tpu.memory_space<vmem>>, vector<1x4x20xbf16>
    %c0_41 = arith.constant 0 : index
    %c0_42 = arith.constant 0 : index
    %c40 = arith.constant 40 : index
    %17 = vector.load %arg6[%c0_41, %c0_42, %c40] : memref<4x16x500xbf16, #tpu.memory_space<vmem>>, vector<1x4x20xbf16>
    tpu.vector_store %arg6[%c0_41, %c0_42, %c40], %16 {strides = array<i32>} : memref<4x16x500xbf16, #tpu.memory_space<vmem>>, vector<1x4x20xbf16>,
    %c0_43 = arith.constant 0 : index
    %c0_44 = arith.constant 0 : index
    %c35 = arith.constant 35 : index
    %18 = vector.load %arg1[%c0_43, %c0_44, %c35] : memref<1x6x120xbf16, #tpu.memory_space<vmem>>, vector<1x4x20xbf16>
    %c1_45 = arith.constant 1 : index
    %c0_46 = arith.constant 0 : index
    %c40_47 = arith.constant 40 : index
    %19 = vector.load %arg6[%c1_45, %c0_46, %c40_47] : memref<4x16x500xbf16, #tpu.memory_space<vmem>>, vector<1x4x20xbf16>
    tpu.vector_store %arg6[%c1_45, %c0_46, %c40_47], %18 {strides = array<i32>} : memref<4x16x500xbf16, #tpu.memory_space<vmem>>, vector<1x4x20xbf16>,
    %c0_48 = arith.constant 0 : index
    %c0_49 = arith.constant 0 : index
    %c65_50 = arith.constant 65 : index
    %20 = vector.load %arg1[%c0_48, %c0_49, %c65_50] : memref<1x6x120xbf16, #tpu.memory_space<vmem>>, vector<1x4x20xbf16>
    %c2_51 = arith.constant 2 : index
    %c0_52 = arith.constant 0 : index
    %c40_53 = arith.constant 40 : index
    %21 = vector.load %arg6[%c2_51, %c0_52, %c40_53] : memref<4x16x500xbf16, #tpu.memory_space<vmem>>, vector<1x4x20xbf16>
    tpu.vector_store %arg6[%c2_51, %c0_52, %c40_53], %20 {strides = array<i32>} : memref<4x16x500xbf16, #tpu.memory_space<vmem>>, vector<1x4x20xbf16>,
    %c0_54 = arith.constant 0 : index
    %c0_55 = arith.constant 0 : index
    %c95 = arith.constant 95 : index
    %22 = vector.load %arg1[%c0_54, %c0_55, %c95] : memref<1x6x120xbf16, #tpu.memory_space<vmem>>, vector<1x4x20xbf16>
    %c3_56 = arith.constant 3 : index
    %c0_57 = arith.constant 0 : index
    %c40_58 = arith.constant 40 : index
    %23 = vector.load %arg6[%c3_56, %c0_57, %c40_58] : memref<4x16x500xbf16, #tpu.memory_space<vmem>>, vector<1x4x20xbf16>
    tpu.vector_store %arg6[%c3_56, %c0_57, %c40_58], %22 {strides = array<i32>} : memref<4x16x500xbf16, #tpu.memory_space<vmem>>, vector<1x4x20xbf16>,
    %c0_59 = arith.constant 0 : index
    %c0_60 = arith.constant 0 : index
    %c35_61 = arith.constant 35 : index
    %24 = vector.load %arg1[%c0_59, %c0_60, %c35_61] : memref<1x6x120xbf16, #tpu.memory_space<vmem>>, vector<1x4x20xbf16>
    %c0_62 = arith.constant 0 : index
    %c0_63 = arith.constant 0 : index
    %c60_64 = arith.constant 60 : index
    %25 = vector.load %arg6[%c0_62, %c0_63, %c60_64] : memref<4x16x500xbf16, #tpu.memory_space<vmem>>, vector<1x4x20xbf16>
    tpu.vector_store %arg6[%c0_62, %c0_63, %c60_64], %24 {strides = array<i32>} : memref<4x16x500xbf16, #tpu.memory_space<vmem>>, vector<1x4x20xbf16>,
    %c0_65 = arith.constant 0 : index
    %c0_66 = arith.constant 0 : index
    %c10 = arith.constant 10 : index
    %26 = vector.load %arg1[%c0_65, %c0_66, %c10] : memref<1x6x120xbf16, #tpu.memory_space<vmem>>, vector<1x4x20xbf16>
    %c1_67 = arith.constant 1 : index
    %c0_68 = arith.constant 0 : index
    %c60_69 = arith.constant 60 : index
    %27 = vector.load %arg6[%c1_67, %c0_68, %c60_69] : memref<4x16x500xbf16, #tpu.memory_space<vmem>>, vector<1x4x20xbf16>
    tpu.vector_store %arg6[%c1_67, %c0_68, %c60_69], %26 {strides = array<i32>} : memref<4x16x500xbf16, #tpu.memory_space<vmem>>, vector<1x4x20xbf16>,
    %c0_70 = arith.constant 0 : index
    %c0_71 = arith.constant 0 : index
    %c95_72 = arith.constant 95 : index
    %28 = vector.load %arg1[%c0_70, %c0_71, %c95_72] : memref<1x6x120xbf16, #tpu.memory_space<vmem>>, vector<1x4x20xbf16>
    %c2_73 = arith.constant 2 : index
    %c0_74 = arith.constant 0 : index
    %c60_75 = arith.constant 60 : index
    %29 = vector.load %arg6[%c2_73, %c0_74, %c60_75] : memref<4x16x500xbf16, #tpu.memory_space<vmem>>, vector<1x4x20xbf16>
    tpu.vector_store %arg6[%c2_73, %c0_74, %c60_75], %28 {strides = array<i32>} : memref<4x16x500xbf16, #tpu.memory_space<vmem>>, vector<1x4x20xbf16>,
    %c0_76 = arith.constant 0 : index
    %c0_77 = arith.constant 0 : index
    %c70 = arith.constant 70 : index
    %30 = vector.load %arg1[%c0_76, %c0_77, %c70] : memref<1x6x120xbf16, #tpu.memory_space<vmem>>, vector<1x4x20xbf16>
    %c3_78 = arith.constant 3 : index
    %c0_79 = arith.constant 0 : index
    %c60_80 = arith.constant 60 : index
    %31 = vector.load %arg6[%c3_78, %c0_79, %c60_80] : memref<4x16x500xbf16, #tpu.memory_space<vmem>>, vector<1x4x20xbf16>
    tpu.vector_store %arg6[%c3_78, %c0_79, %c60_80], %30 {strides = array<i32>} : memref<4x16x500xbf16, #tpu.memory_space<vmem>>, vector<1x4x20xbf16>,
    %c0_81 = arith.constant 0 : index
    %c0_82 = arith.constant 0 : index
    %c10_83 = arith.constant 10 : index
    %32 = vector.load %arg1[%c0_81, %c0_82, %c10_83] : memref<1x6x120xbf16, #tpu.memory_space<vmem>>, vector<1x4x20xbf16>
    %c0_84 = arith.constant 0 : index
    %c0_85 = arith.constant 0 : index
    %c80 = arith.constant 80 : index
    %33 = vector.load %arg6[%c0_84, %c0_85, %c80] : memref<4x16x500xbf16, #tpu.memory_space<vmem>>, vector<1x4x20xbf16>
    tpu.vector_store %arg6[%c0_84, %c0_85, %c80], %32 {strides = array<i32>} : memref<4x16x500xbf16, #tpu.memory_space<vmem>>, vector<1x4x20xbf16>,
    %c0_86 = arith.constant 0 : index
    %c0_87 = arith.constant 0 : index
    %c40_88 = arith.constant 40 : index
    %34 = vector.load %arg1[%c0_86, %c0_87, %c40_88] : memref<1x6x120xbf16, #tpu.memory_space<vmem>>, vector<1x4x20xbf16>
    %c1_89 = arith.constant 1 : index
    %c0_90 = arith.constant 0 : index
    %c80_91 = arith.constant 80 : index
    %35 = vector.load %arg6[%c1_89, %c0_90, %c80_91] : memref<4x16x500xbf16, #tpu.memory_space<vmem>>, vector<1x4x20xbf16>
    tpu.vector_store %arg6[%c1_89, %c0_90, %c80_91], %34 {strides = array<i32>} : memref<4x16x500xbf16, #tpu.memory_space<vmem>>, vector<1x4x20xbf16>,
    %c0_92 = arith.constant 0 : index
    %c0_93 = arith.constant 0 : index
    %c70_94 = arith.constant 70 : index
    %36 = vector.load %arg1[%c0_92, %c0_93, %c70_94] : memref<1x6x120xbf16, #tpu.memory_space<vmem>>, vector<1x4x20xbf16>
    %c2_95 = arith.constant 2 : index
    %c0_96 = arith.constant 0 : index
    %c80_97 = arith.constant 80 : index
    %37 = vector.load %arg6[%c2_95, %c0_96, %c80_97] : memref<4x16x500xbf16, #tpu.memory_space<vmem>>, vector<1x4x20xbf16>
    tpu.vector_store %arg6[%c2_95, %c0_96, %c80_97], %36 {strides = array<i32>} : memref<4x16x500xbf16, #tpu.memory_space<vmem>>, vector<1x4x20xbf16>,
    %c0_98 = arith.constant 0 : index
    %c0_99 = arith.constant 0 : index
    %c100 = arith.constant 100 : index
    %38 = vector.load %arg1[%c0_98, %c0_99, %c100] : memref<1x6x120xbf16, #tpu.memory_space<vmem>>, vector<1x4x20xbf16>
    %c3_100 = arith.constant 3 : index
    %c0_101 = arith.constant 0 : index
    %c80_102 = arith.constant 80 : index
    %39 = vector.load %arg6[%c3_100, %c0_101, %c80_102] : memref<4x16x500xbf16, #tpu.memory_space<vmem>>, vector<1x4x20xbf16>
    tpu.vector_store %arg6[%c3_100, %c0_101, %c80_102], %38 {strides = array<i32>} : memref<4x16x500xbf16, #tpu.memory_space<vmem>>, vector<1x4x20xbf16>,
    %c0_103 = arith.constant 0 : index
    %c0_104 = arith.constant 0 : index
    %c60_105 = arith.constant 60 : index
    %40 = vector.load %arg1[%c0_103, %c0_104, %c60_105] : memref<1x6x120xbf16, #tpu.memory_space<vmem>>, vector<1x4x20xbf16>
    %c0_106 = arith.constant 0 : index
    %c0_107 = arith.constant 0 : index
    %c100_108 = arith.constant 100 : index
    %41 = vector.load %arg6[%c0_106, %c0_107, %c100_108] : memref<4x16x500xbf16, #tpu.memory_space<vmem>>, vector<1x4x20xbf16>
    tpu.vector_store %arg6[%c0_106, %c0_107, %c100_108], %40 {strides = array<i32>} : memref<4x16x500xbf16, #tpu.memory_space<vmem>>, vector<1x4x20xbf16>,
    %c0_109 = arith.constant 0 : index
    %c0_110 = arith.constant 0 : index
    %c90_111 = arith.constant 90 : index
    %42 = vector.load %arg1[%c0_109, %c0_110, %c90_111] : memref<1x6x120xbf16, #tpu.memory_space<vmem>>, vector<1x4x20xbf16>
    %c1_112 = arith.constant 1 : index
    %c0_113 = arith.constant 0 : index
    %c100_114 = arith.constant 100 : index
    %43 = vector.load %arg6[%c1_112, %c0_113, %c100_114] : memref<4x16x500xbf16, #tpu.memory_space<vmem>>, vector<1x4x20xbf16>
    tpu.vector_store %arg6[%c1_112, %c0_113, %c100_114], %42 {strides = array<i32>} : memref<4x16x500xbf16, #tpu.memory_space<vmem>>, vector<1x4x20xbf16>,
    %c0_115 = arith.constant 0 : index
    %c1_116 = arith.constant 1 : index
    %c0_117 = arith.constant 0 : index
    %44 = vector.load %arg1[%c0_115, %c1_116, %c0_117] : memref<1x6x120xbf16, #tpu.memory_space<vmem>>, vector<1x4x20xbf16>
    %c2_118 = arith.constant 2 : index
    %c0_119 = arith.constant 0 : index
    %c100_120 = arith.constant 100 : index
    %45 = vector.load %arg6[%c2_118, %c0_119, %c100_120] : memref<4x16x500xbf16, #tpu.memory_space<vmem>>, vector<1x4x20xbf16>
    tpu.vector_store %arg6[%c2_118, %c0_119, %c100_120], %44 {strides = array<i32>} : memref<4x16x500xbf16, #tpu.memory_space<vmem>>, vector<1x4x20xbf16>,
    %c0_121 = arith.constant 0 : index
    %c1_122 = arith.constant 1 : index
    %c30_123 = arith.constant 30 : index
    %46 = vector.load %arg1[%c0_121, %c1_122, %c30_123] : memref<1x6x120xbf16, #tpu.memory_space<vmem>>, vector<1x4x20xbf16>
    %c3_124 = arith.constant 3 : index
    %c0_125 = arith.constant 0 : index
    %c100_126 = arith.constant 100 : index
    %47 = vector.load %arg6[%c3_124, %c0_125, %c100_126] : memref<4x16x500xbf16, #tpu.memory_space<vmem>>, vector<1x4x20xbf16>
    tpu.vector_store %arg6[%c3_124, %c0_125, %c100_126], %46 {strides = array<i32>} : memref<4x16x500xbf16, #tpu.memory_space<vmem>>, vector<1x4x20xbf16>,
    %c0_127 = arith.constant 0 : index
    %c0_128 = arith.constant 0 : index
    %c90_129 = arith.constant 90 : index
    %48 = vector.load %arg1[%c0_127, %c0_128, %c90_129] : memref<1x6x120xbf16, #tpu.memory_space<vmem>>, vector<1x4x20xbf16>
    %c0_130 = arith.constant 0 : index
    %c0_131 = arith.constant 0 : index
    %c120 = arith.constant 120 : index
    %49 = vector.load %arg6[%c0_130, %c0_131, %c120] : memref<4x16x500xbf16, #tpu.memory_space<vmem>>, vector<1x4x20xbf16>
    tpu.vector_store %arg6[%c0_130, %c0_131, %c120], %48 {strides = array<i32>} : memref<4x16x500xbf16, #tpu.memory_space<vmem>>, vector<1x4x20xbf16>,
    %c0_132 = arith.constant 0 : index
    %c0_133 = arith.constant 0 : index
    %c65_134 = arith.constant 65 : index
    %50 = vector.load %arg1[%c0_132, %c0_133, %c65_134] : memref<1x6x120xbf16, #tpu.memory_space<vmem>>, vector<1x4x20xbf16>
    %c1_135 = arith.constant 1 : index
    %c0_136 = arith.constant 0 : index
    %c120_137 = arith.constant 120 : index
    %51 = vector.load %arg6[%c1_135, %c0_136, %c120_137] : memref<4x16x500xbf16, #tpu.memory_space<vmem>>, vector<1x4x20xbf16>
    tpu.vector_store %arg6[%c1_135, %c0_136, %c120_137], %50 {strides = array<i32>} : memref<4x16x500xbf16, #tpu.memory_space<vmem>>, vector<1x4x20xbf16>,
    %c0_138 = arith.constant 0 : index
    %c1_139 = arith.constant 1 : index
    %c30_140 = arith.constant 30 : index
    %52 = vector.load %arg1[%c0_138, %c1_139, %c30_140] : memref<1x6x120xbf16, #tpu.memory_space<vmem>>, vector<1x4x20xbf16>
    %c2_141 = arith.constant 2 : index
    %c0_142 = arith.constant 0 : index
    %c120_143 = arith.constant 120 : index
    %53 = vector.load %arg6[%c2_141, %c0_142, %c120_143] : memref<4x16x500xbf16, #tpu.memory_space<vmem>>, vector<1x4x20xbf16>
    tpu.vector_store %arg6[%c2_141, %c0_142, %c120_143], %52 {strides = array<i32>} : memref<4x16x500xbf16, #tpu.memory_space<vmem>>, vector<1x4x20xbf16>,
    %c0_144 = arith.constant 0 : index
    %c1_145 = arith.constant 1 : index
    %c5_146 = arith.constant 5 : index
    %54 = vector.load %arg1[%c0_144, %c1_145, %c5_146] : memref<1x6x120xbf16, #tpu.memory_space<vmem>>, vector<1x4x20xbf16>
    %c3_147 = arith.constant 3 : index
    %c0_148 = arith.constant 0 : index
    %c120_149 = arith.constant 120 : index
    %55 = vector.load %arg6[%c3_147, %c0_148, %c120_149] : memref<4x16x500xbf16, #tpu.memory_space<vmem>>, vector<1x4x20xbf16>
    tpu.vector_store %arg6[%c3_147, %c0_148, %c120_149], %54 {strides = array<i32>} : memref<4x16x500xbf16, #tpu.memory_space<vmem>>, vector<1x4x20xbf16>,
    %c0_150 = arith.constant 0 : index
    %c0_151 = arith.constant 0 : index
    %c65_152 = arith.constant 65 : index
    %56 = vector.load %arg1[%c0_150, %c0_151, %c65_152] : memref<1x6x120xbf16, #tpu.memory_space<vmem>>, vector<1x4x20xbf16>
    %c0_153 = arith.constant 0 : index
    %c0_154 = arith.constant 0 : index
    %c140 = arith.constant 140 : index
    %57 = vector.load %arg6[%c0_153, %c0_154, %c140] : memref<4x16x500xbf16, #tpu.memory_space<vmem>>, vector<1x4x20xbf16>
    tpu.vector_store %arg6[%c0_153, %c0_154, %c140], %56 {strides = array<i32>} : memref<4x16x500xbf16, #tpu.memory_space<vmem>>, vector<1x4x20xbf16>,
    %c0_155 = arith.constant 0 : index
    %c0_156 = arith.constant 0 : index
    %c95_157 = arith.constant 95 : index
    %58 = vector.load %arg1[%c0_155, %c0_156, %c95_157] : memref<1x6x120xbf16, #tpu.memory_space<vmem>>, vector<1x4x20xbf16>
    %c1_158 = arith.constant 1 : index
    %c0_159 = arith.constant 0 : index
    %c140_160 = arith.constant 140 : index
    %59 = vector.load %arg6[%c1_158, %c0_159, %c140_160] : memref<4x16x500xbf16, #tpu.memory_space<vmem>>, vector<1x4x20xbf16>
    tpu.vector_store %arg6[%c1_158, %c0_159, %c140_160], %58 {strides = array<i32>} : memref<4x16x500xbf16, #tpu.memory_space<vmem>>, vector<1x4x20xbf16>,
    %c0_161 = arith.constant 0 : index
    %c1_162 = arith.constant 1 : index
    %c5_163 = arith.constant 5 : index
    %60 = vector.load %arg1[%c0_161, %c1_162, %c5_163] : memref<1x6x120xbf16, #tpu.memory_space<vmem>>, vector<1x4x20xbf16>
    %c2_164 = arith.constant 2 : index
    %c0_165 = arith.constant 0 : index
    %c140_166 = arith.constant 140 : index
    %61 = vector.load %arg6[%c2_164, %c0_165, %c140_166] : memref<4x16x500xbf16, #tpu.memory_space<vmem>>, vector<1x4x20xbf16>
    tpu.vector_store %arg6[%c2_164, %c0_165, %c140_166], %60 {strides = array<i32>} : memref<4x16x500xbf16, #tpu.memory_space<vmem>>, vector<1x4x20xbf16>,
    %c0_167 = arith.constant 0 : index
    %c1_168 = arith.constant 1 : index
    %c35_169 = arith.constant 35 : index
    %62 = vector.load %arg1[%c0_167, %c1_168, %c35_169] : memref<1x6x120xbf16, #tpu.memory_space<vmem>>, vector<1x4x20xbf16>
    %c3_170 = arith.constant 3 : index
    %c0_171 = arith.constant 0 : index
    %c140_172 = arith.constant 140 : index
    %63 = vector.load %arg6[%c3_170, %c0_171, %c140_172] : memref<4x16x500xbf16, #tpu.memory_space<vmem>>, vector<1x4x20xbf16>
    tpu.vector_store %arg6[%c3_170, %c0_171, %c140_172], %62 {strides = array<i32>} : memref<4x16x500xbf16, #tpu.memory_space<vmem>>, vector<1x4x20xbf16>,
    %c0_173 = arith.constant 0 : index
    %c0_174 = arith.constant 0 : index
    %c95_175 = arith.constant 95 : index
    %64 = vector.load %arg1[%c0_173, %c0_174, %c95_175] : memref<1x6x120xbf16, #tpu.memory_space<vmem>>, vector<1x4x20xbf16>
    %c0_176 = arith.constant 0 : index
    %c0_177 = arith.constant 0 : index
    %c160 = arith.constant 160 : index
    %65 = vector.load %arg6[%c0_176, %c0_177, %c160] : memref<4x16x500xbf16, #tpu.memory_space<vmem>>, vector<1x4x20xbf16>
    tpu.vector_store %arg6[%c0_176, %c0_177, %c160], %64 {strides = array<i32>} : memref<4x16x500xbf16, #tpu.memory_space<vmem>>, vector<1x4x20xbf16>,
    %c0_178 = arith.constant 0 : index
    %c0_179 = arith.constant 0 : index
    %c70_180 = arith.constant 70 : index
    %66 = vector.load %arg1[%c0_178, %c0_179, %c70_180] : memref<1x6x120xbf16, #tpu.memory_space<vmem>>, vector<1x4x20xbf16>
    %c1_181 = arith.constant 1 : index
    %c0_182 = arith.constant 0 : index
    %c160_183 = arith.constant 160 : index
    %67 = vector.load %arg6[%c1_181, %c0_182, %c160_183] : memref<4x16x500xbf16, #tpu.memory_space<vmem>>, vector<1x4x20xbf16>
    tpu.vector_store %arg6[%c1_181, %c0_182, %c160_183], %66 {strides = array<i32>} : memref<4x16x500xbf16, #tpu.memory_space<vmem>>, vector<1x4x20xbf16>,
    %c0_184 = arith.constant 0 : index
    %c1_185 = arith.constant 1 : index
    %c35_186 = arith.constant 35 : index
    %68 = vector.load %arg1[%c0_184, %c1_185, %c35_186] : memref<1x6x120xbf16, #tpu.memory_space<vmem>>, vector<1x4x20xbf16>
    %c2_187 = arith.constant 2 : index
    %c0_188 = arith.constant 0 : index
    %c160_189 = arith.constant 160 : index
    %69 = vector.load %arg6[%c2_187, %c0_188, %c160_189] : memref<4x16x500xbf16, #tpu.memory_space<vmem>>, vector<1x4x20xbf16>
    tpu.vector_store %arg6[%c2_187, %c0_188, %c160_189], %68 {strides = array<i32>} : memref<4x16x500xbf16, #tpu.memory_space<vmem>>, vector<1x4x20xbf16>,
    %c0_190 = arith.constant 0 : index
    %c1_191 = arith.constant 1 : index
    %c10_192 = arith.constant 10 : index
    %70 = vector.load %arg1[%c0_190, %c1_191, %c10_192] : memref<1x6x120xbf16, #tpu.memory_space<vmem>>, vector<1x4x20xbf16>
    %c3_193 = arith.constant 3 : index
    %c0_194 = arith.constant 0 : index
    %c160_195 = arith.constant 160 : index
    %71 = vector.load %arg6[%c3_193, %c0_194, %c160_195] : memref<4x16x500xbf16, #tpu.memory_space<vmem>>, vector<1x4x20xbf16>
    tpu.vector_store %arg6[%c3_193, %c0_194, %c160_195], %70 {strides = array<i32>} : memref<4x16x500xbf16, #tpu.memory_space<vmem>>, vector<1x4x20xbf16>,
    %c0_196 = arith.constant 0 : index
    %c0_197 = arith.constant 0 : index
    %c70_198 = arith.constant 70 : index
    %72 = vector.load %arg1[%c0_196, %c0_197, %c70_198] : memref<1x6x120xbf16, #tpu.memory_space<vmem>>, vector<1x4x20xbf16>
    %c0_199 = arith.constant 0 : index
    %c0_200 = arith.constant 0 : index
    %c180 = arith.constant 180 : index
    %73 = vector.load %arg6[%c0_199, %c0_200, %c180] : memref<4x16x500xbf16, #tpu.memory_space<vmem>>, vector<1x4x20xbf16>
    tpu.vector_store %arg6[%c0_199, %c0_200, %c180], %72 {strides = array<i32>} : memref<4x16x500xbf16, #tpu.memory_space<vmem>>, vector<1x4x20xbf16>,
    %c0_201 = arith.constant 0 : index
    %c0_202 = arith.constant 0 : index
    %c100_203 = arith.constant 100 : index
    %74 = vector.load %arg1[%c0_201, %c0_202, %c100_203] : memref<1x6x120xbf16, #tpu.memory_space<vmem>>, vector<1x4x20xbf16>
    %c1_204 = arith.constant 1 : index
    %c0_205 = arith.constant 0 : index
    %c180_206 = arith.constant 180 : index
    %75 = vector.load %arg6[%c1_204, %c0_205, %c180_206] : memref<4x16x500xbf16, #tpu.memory_space<vmem>>, vector<1x4x20xbf16>
    tpu.vector_store %arg6[%c1_204, %c0_205, %c180_206], %74 {strides = array<i32>} : memref<4x16x500xbf16, #tpu.memory_space<vmem>>, vector<1x4x20xbf16>,
    %c0_207 = arith.constant 0 : index
    %c1_208 = arith.constant 1 : index
    %c10_209 = arith.constant 10 : index
    %76 = vector.load %arg1[%c0_207, %c1_208, %c10_209] : memref<1x6x120xbf16, #tpu.memory_space<vmem>>, vector<1x4x20xbf16>
    %c2_210 = arith.constant 2 : index
    %c0_211 = arith.constant 0 : index
    %c180_212 = arith.constant 180 : index
    %77 = vector.load %arg6[%c2_210, %c0_211, %c180_212] : memref<4x16x500xbf16, #tpu.memory_space<vmem>>, vector<1x4x20xbf16>
    tpu.vector_store %arg6[%c2_210, %c0_211, %c180_212], %76 {strides = array<i32>} : memref<4x16x500xbf16, #tpu.memory_space<vmem>>, vector<1x4x20xbf16>,
    %c0_213 = arith.constant 0 : index
    %c1_214 = arith.constant 1 : index
    %c40_215 = arith.constant 40 : index
    %78 = vector.load %arg1[%c0_213, %c1_214, %c40_215] : memref<1x6x120xbf16, #tpu.memory_space<vmem>>, vector<1x4x20xbf16>
    %c3_216 = arith.constant 3 : index
    %c0_217 = arith.constant 0 : index
    %c180_218 = arith.constant 180 : index
    %79 = vector.load %arg6[%c3_216, %c0_217, %c180_218] : memref<4x16x500xbf16, #tpu.memory_space<vmem>>, vector<1x4x20xbf16>
    tpu.vector_store %arg6[%c3_216, %c0_217, %c180_218], %78 {strides = array<i32>} : memref<4x16x500xbf16, #tpu.memory_space<vmem>>, vector<1x4x20xbf16>,
    %c0_219 = arith.constant 0 : index
    %c1_220 = arith.constant 1 : index
    %c0_221 = arith.constant 0 : index
    %80 = vector.load %arg1[%c0_219, %c1_220, %c0_221] : memref<1x6x120xbf16, #tpu.memory_space<vmem>>, vector<1x4x20xbf16>
    %c0_222 = arith.constant 0 : index
    %c0_223 = arith.constant 0 : index
    %c200 = arith.constant 200 : index
    %81 = vector.load %arg6[%c0_222, %c0_223, %c200] : memref<4x16x500xbf16, #tpu.memory_space<vmem>>, vector<1x4x20xbf16>
    tpu.vector_store %arg6[%c0_222, %c0_223, %c200], %80 {strides = array<i32>} : memref<4x16x500xbf16, #tpu.memory_space<vmem>>, vector<1x4x20xbf16>,
    %c0_224 = arith.constant 0 : index
    %c1_225 = arith.constant 1 : index
    %c30_226 = arith.constant 30 : index
    %82 = vector.load %arg1[%c0_224, %c1_225, %c30_226] : memref<1x6x120xbf16, #tpu.memory_space<vmem>>, vector<1x4x20xbf16>
    %c1_227 = arith.constant 1 : index
    %c0_228 = arith.constant 0 : index
    %c200_229 = arith.constant 200 : index
    %83 = vector.load %arg6[%c1_227, %c0_228, %c200_229] : memref<4x16x500xbf16, #tpu.memory_space<vmem>>, vector<1x4x20xbf16>
    tpu.vector_store %arg6[%c1_227, %c0_228, %c200_229], %82 {strides = array<i32>} : memref<4x16x500xbf16, #tpu.memory_space<vmem>>, vector<1x4x20xbf16>,
    %c0_230 = arith.constant 0 : index
    %c1_231 = arith.constant 1 : index
    %c60_232 = arith.constant 60 : index
    %84 = vector.load %arg1[%c0_230, %c1_231, %c60_232] : memref<1x6x120xbf16, #tpu.memory_space<vmem>>, vector<1x4x20xbf16>
    %c2_233 = arith.constant 2 : index
    %c0_234 = arith.constant 0 : index
    %c200_235 = arith.constant 200 : index
    %85 = vector.load %arg6[%c2_233, %c0_234, %c200_235] : memref<4x16x500xbf16, #tpu.memory_space<vmem>>, vector<1x4x20xbf16>
    tpu.vector_store %arg6[%c2_233, %c0_234, %c200_235], %84 {strides = array<i32>} : memref<4x16x500xbf16, #tpu.memory_space<vmem>>, vector<1x4x20xbf16>,
    %c0_236 = arith.constant 0 : index
    %c1_237 = arith.constant 1 : index
    %c90_238 = arith.constant 90 : index
    %86 = vector.load %arg1[%c0_236, %c1_237, %c90_238] : memref<1x6x120xbf16, #tpu.memory_space<vmem>>, vector<1x4x20xbf16>
    %c3_239 = arith.constant 3 : index
    %c0_240 = arith.constant 0 : index
    %c200_241 = arith.constant 200 : index
    %87 = vector.load %arg6[%c3_239, %c0_240, %c200_241] : memref<4x16x500xbf16, #tpu.memory_space<vmem>>, vector<1x4x20xbf16>
    tpu.vector_store %arg6[%c3_239, %c0_240, %c200_241], %86 {strides = array<i32>} : memref<4x16x500xbf16, #tpu.memory_space<vmem>>, vector<1x4x20xbf16>,
    %c0_242 = arith.constant 0 : index
    %c1_243 = arith.constant 1 : index
    %c30_244 = arith.constant 30 : index
    %88 = vector.load %arg1[%c0_242, %c1_243, %c30_244] : memref<1x6x120xbf16, #tpu.memory_space<vmem>>, vector<1x4x20xbf16>
    %c0_245 = arith.constant 0 : index
    %c0_246 = arith.constant 0 : index
    %c220 = arith.constant 220 : index
    %89 = vector.load %arg6[%c0_245, %c0_246, %c220] : memref<4x16x500xbf16, #tpu.memory_space<vmem>>, vector<1x4x20xbf16>
    tpu.vector_store %arg6[%c0_245, %c0_246, %c220], %88 {strides = array<i32>} : memref<4x16x500xbf16, #tpu.memory_space<vmem>>, vector<1x4x20xbf16>,
    %c0_247 = arith.constant 0 : index
    %c1_248 = arith.constant 1 : index
    %c5_249 = arith.constant 5 : index
    %90 = vector.load %arg1[%c0_247, %c1_248, %c5_249] : memref<1x6x120xbf16, #tpu.memory_space<vmem>>, vector<1x4x20xbf16>
    %c1_250 = arith.constant 1 : index
    %c0_251 = arith.constant 0 : index
    %c220_252 = arith.constant 220 : index
    %91 = vector.load %arg6[%c1_250, %c0_251, %c220_252] : memref<4x16x500xbf16, #tpu.memory_space<vmem>>, vector<1x4x20xbf16>
    tpu.vector_store %arg6[%c1_250, %c0_251, %c220_252], %90 {strides = array<i32>} : memref<4x16x500xbf16, #tpu.memory_space<vmem>>, vector<1x4x20xbf16>,
    %c0_253 = arith.constant 0 : index
    %c1_254 = arith.constant 1 : index
    %c90_255 = arith.constant 90 : index
    %92 = vector.load %arg1[%c0_253, %c1_254, %c90_255] : memref<1x6x120xbf16, #tpu.memory_space<vmem>>, vector<1x4x20xbf16>
    %c2_256 = arith.constant 2 : index
    %c0_257 = arith.constant 0 : index
    %c220_258 = arith.constant 220 : index
    %93 = vector.load %arg6[%c2_256, %c0_257, %c220_258] : memref<4x16x500xbf16, #tpu.memory_space<vmem>>, vector<1x4x20xbf16>
    tpu.vector_store %arg6[%c2_256, %c0_257, %c220_258], %92 {strides = array<i32>} : memref<4x16x500xbf16, #tpu.memory_space<vmem>>, vector<1x4x20xbf16>,
    %c0_259 = arith.constant 0 : index
    %c1_260 = arith.constant 1 : index
    %c65_261 = arith.constant 65 : index
    %94 = vector.load %arg1[%c0_259, %c1_260, %c65_261] : memref<1x6x120xbf16, #tpu.memory_space<vmem>>, vector<1x4x20xbf16>
    %c3_262 = arith.constant 3 : index
    %c0_263 = arith.constant 0 : index
    %c220_264 = arith.constant 220 : index
    %95 = vector.load %arg6[%c3_262, %c0_263, %c220_264] : memref<4x16x500xbf16, #tpu.memory_space<vmem>>, vector<1x4x20xbf16>
    tpu.vector_store %arg6[%c3_262, %c0_263, %c220_264], %94 {strides = array<i32>} : memref<4x16x500xbf16, #tpu.memory_space<vmem>>, vector<1x4x20xbf16>,
    %c0_265 = arith.constant 0 : index
    %c1_266 = arith.constant 1 : index
    %c5_267 = arith.constant 5 : index
    %96 = vector.load %arg1[%c0_265, %c1_266, %c5_267] : memref<1x6x120xbf16, #tpu.memory_space<vmem>>, vector<1x4x20xbf16>
    %c0_268 = arith.constant 0 : index
    %c0_269 = arith.constant 0 : index
    %c240 = arith.constant 240 : index
    %97 = vector.load %arg6[%c0_268, %c0_269, %c240] : memref<4x16x500xbf16, #tpu.memory_space<vmem>>, vector<1x4x20xbf16>
    tpu.vector_store %arg6[%c0_268, %c0_269, %c240], %96 {strides = array<i32>} : memref<4x16x500xbf16, #tpu.memory_space<vmem>>, vector<1x4x20xbf16>,
    %c0_270 = arith.constant 0 : index
    %c1_271 = arith.constant 1 : index
    %c35_272 = arith.constant 35 : index
    %98 = vector.load %arg1[%c0_270, %c1_271, %c35_272] : memref<1x6x120xbf16, #tpu.memory_space<vmem>>, vector<1x4x20xbf16>
    %c1_273 = arith.constant 1 : index
    %c0_274 = arith.constant 0 : index
    %c240_275 = arith.constant 240 : index
    %99 = vector.load %arg6[%c1_273, %c0_274, %c240_275] : memref<4x16x500xbf16, #tpu.memory_space<vmem>>, vector<1x4x20xbf16>
    tpu.vector_store %arg6[%c1_273, %c0_274, %c240_275], %98 {strides = array<i32>} : memref<4x16x500xbf16, #tpu.memory_space<vmem>>, vector<1x4x20xbf16>,
    %c0_276 = arith.constant 0 : index
    %c1_277 = arith.constant 1 : index
    %c65_278 = arith.constant 65 : index
    %100 = vector.load %arg1[%c0_276, %c1_277, %c65_278] : memref<1x6x120xbf16, #tpu.memory_space<vmem>>, vector<1x4x20xbf16>
    %c2_279 = arith.constant 2 : index
    %c0_280 = arith.constant 0 : index
    %c240_281 = arith.constant 240 : index
    %101 = vector.load %arg6[%c2_279, %c0_280, %c240_281] : memref<4x16x500xbf16, #tpu.memory_space<vmem>>, vector<1x4x20xbf16>
    tpu.vector_store %arg6[%c2_279, %c0_280, %c240_281], %100 {strides = array<i32>} : memref<4x16x500xbf16, #tpu.memory_space<vmem>>, vector<1x4x20xbf16>,
    %c0_282 = arith.constant 0 : index
    %c1_283 = arith.constant 1 : index
    %c95_284 = arith.constant 95 : index
    %102 = vector.load %arg1[%c0_282, %c1_283, %c95_284] : memref<1x6x120xbf16, #tpu.memory_space<vmem>>, vector<1x4x20xbf16>
    %c3_285 = arith.constant 3 : index
    %c0_286 = arith.constant 0 : index
    %c240_287 = arith.constant 240 : index
    %103 = vector.load %arg6[%c3_285, %c0_286, %c240_287] : memref<4x16x500xbf16, #tpu.memory_space<vmem>>, vector<1x4x20xbf16>
    tpu.vector_store %arg6[%c3_285, %c0_286, %c240_287], %102 {strides = array<i32>} : memref<4x16x500xbf16, #tpu.memory_space<vmem>>, vector<1x4x20xbf16>,
    %c0_288 = arith.constant 0 : index
    %c1_289 = arith.constant 1 : index
    %c35_290 = arith.constant 35 : index
    %104 = vector.load %arg1[%c0_288, %c1_289, %c35_290] : memref<1x6x120xbf16, #tpu.memory_space<vmem>>, vector<1x4x20xbf16>
    %c0_291 = arith.constant 0 : index
    %c0_292 = arith.constant 0 : index
    %c260 = arith.constant 260 : index
    %105 = vector.load %arg6[%c0_291, %c0_292, %c260] : memref<4x16x500xbf16, #tpu.memory_space<vmem>>, vector<1x4x20xbf16>
    tpu.vector_store %arg6[%c0_291, %c0_292, %c260], %104 {strides = array<i32>} : memref<4x16x500xbf16, #tpu.memory_space<vmem>>, vector<1x4x20xbf16>,
    %c0_293 = arith.constant 0 : index
    %c1_294 = arith.constant 1 : index
    %c10_295 = arith.constant 10 : index
    %106 = vector.load %arg1[%c0_293, %c1_294, %c10_295] : memref<1x6x120xbf16, #tpu.memory_space<vmem>>, vector<1x4x20xbf16>
    %c1_296 = arith.constant 1 : index
    %c0_297 = arith.constant 0 : index
    %c260_298 = arith.constant 260 : index
    %107 = vector.load %arg6[%c1_296, %c0_297, %c260_298] : memref<4x16x500xbf16, #tpu.memory_space<vmem>>, vector<1x4x20xbf16>
    tpu.vector_store %arg6[%c1_296, %c0_297, %c260_298], %106 {strides = array<i32>} : memref<4x16x500xbf16, #tpu.memory_space<vmem>>, vector<1x4x20xbf16>,
    %c0_299 = arith.constant 0 : index
    %c1_300 = arith.constant 1 : index
    %c95_301 = arith.constant 95 : index
    %108 = vector.load %arg1[%c0_299, %c1_300, %c95_301] : memref<1x6x120xbf16, #tpu.memory_space<vmem>>, vector<1x4x20xbf16>
    %c2_302 = arith.constant 2 : index
    %c0_303 = arith.constant 0 : index
    %c260_304 = arith.constant 260 : index
    %109 = vector.load %arg6[%c2_302, %c0_303, %c260_304] : memref<4x16x500xbf16, #tpu.memory_space<vmem>>, vector<1x4x20xbf16>
    tpu.vector_store %arg6[%c2_302, %c0_303, %c260_304], %108 {strides = array<i32>} : memref<4x16x500xbf16, #tpu.memory_space<vmem>>, vector<1x4x20xbf16>,
    %c0_305 = arith.constant 0 : index
    %c1_306 = arith.constant 1 : index
    %c70_307 = arith.constant 70 : index
    %110 = vector.load %arg1[%c0_305, %c1_306, %c70_307] : memref<1x6x120xbf16, #tpu.memory_space<vmem>>, vector<1x4x20xbf16>
    %c3_308 = arith.constant 3 : index
    %c0_309 = arith.constant 0 : index
    %c260_310 = arith.constant 260 : index
    %111 = vector.load %arg6[%c3_308, %c0_309, %c260_310] : memref<4x16x500xbf16, #tpu.memory_space<vmem>>, vector<1x4x20xbf16>
    tpu.vector_store %arg6[%c3_308, %c0_309, %c260_310], %110 {strides = array<i32>} : memref<4x16x500xbf16, #tpu.memory_space<vmem>>, vector<1x4x20xbf16>,
    %c0_311 = arith.constant 0 : index
    %c1_312 = arith.constant 1 : index
    %c10_313 = arith.constant 10 : index
    %112 = vector.load %arg1[%c0_311, %c1_312, %c10_313] : memref<1x6x120xbf16, #tpu.memory_space<vmem>>, vector<1x4x20xbf16>
    %c0_314 = arith.constant 0 : index
    %c0_315 = arith.constant 0 : index
    %c280 = arith.constant 280 : index
    %113 = vector.load %arg6[%c0_314, %c0_315, %c280] : memref<4x16x500xbf16, #tpu.memory_space<vmem>>, vector<1x4x20xbf16>
    tpu.vector_store %arg6[%c0_314, %c0_315, %c280], %112 {strides = array<i32>} : memref<4x16x500xbf16, #tpu.memory_space<vmem>>, vector<1x4x20xbf16>,
    %c0_316 = arith.constant 0 : index
    %c1_317 = arith.constant 1 : index
    %c40_318 = arith.constant 40 : index
    %114 = vector.load %arg1[%c0_316, %c1_317, %c40_318] : memref<1x6x120xbf16, #tpu.memory_space<vmem>>, vector<1x4x20xbf16>
    %c1_319 = arith.constant 1 : index
    %c0_320 = arith.constant 0 : index
    %c280_321 = arith.constant 280 : index
    %115 = vector.load %arg6[%c1_319, %c0_320, %c280_321] : memref<4x16x500xbf16, #tpu.memory_space<vmem>>, vector<1x4x20xbf16>
    tpu.vector_store %arg6[%c1_319, %c0_320, %c280_321], %114 {strides = array<i32>} : memref<4x16x500xbf16, #tpu.memory_space<vmem>>, vector<1x4x20xbf16>,
    %c0_322 = arith.constant 0 : index
    %c1_323 = arith.constant 1 : index
    %c70_324 = arith.constant 70 : index
    %116 = vector.load %arg1[%c0_322, %c1_323, %c70_324] : memref<1x6x120xbf16, #tpu.memory_space<vmem>>, vector<1x4x20xbf16>
    %c2_325 = arith.constant 2 : index
    %c0_326 = arith.constant 0 : index
    %c280_327 = arith.constant 280 : index
    %117 = vector.load %arg6[%c2_325, %c0_326, %c280_327] : memref<4x16x500xbf16, #tpu.memory_space<vmem>>, vector<1x4x20xbf16>
    tpu.vector_store %arg6[%c2_325, %c0_326, %c280_327], %116 {strides = array<i32>} : memref<4x16x500xbf16, #tpu.memory_space<vmem>>, vector<1x4x20xbf16>,
    %c0_328 = arith.constant 0 : index
    %c1_329 = arith.constant 1 : index
    %c100_330 = arith.constant 100 : index
    %118 = vector.load %arg1[%c0_328, %c1_329, %c100_330] : memref<1x6x120xbf16, #tpu.memory_space<vmem>>, vector<1x4x20xbf16>
    %c3_331 = arith.constant 3 : index
    %c0_332 = arith.constant 0 : index
    %c280_333 = arith.constant 280 : index
    %119 = vector.load %arg6[%c3_331, %c0_332, %c280_333] : memref<4x16x500xbf16, #tpu.memory_space<vmem>>, vector<1x4x20xbf16>
    tpu.vector_store %arg6[%c3_331, %c0_332, %c280_333], %118 {strides = array<i32>} : memref<4x16x500xbf16, #tpu.memory_space<vmem>>, vector<1x4x20xbf16>,
    %c0_334 = arith.constant 0 : index
    %c1_335 = arith.constant 1 : index
    %c60_336 = arith.constant 60 : index
    %120 = vector.load %arg1[%c0_334, %c1_335, %c60_336] : memref<1x6x120xbf16, #tpu.memory_space<vmem>>, vector<1x4x20xbf16>
    %c0_337 = arith.constant 0 : index
    %c0_338 = arith.constant 0 : index
    %c300 = arith.constant 300 : index
    %121 = vector.load %arg6[%c0_337, %c0_338, %c300] : memref<4x16x500xbf16, #tpu.memory_space<vmem>>, vector<1x4x20xbf16>
    tpu.vector_store %arg6[%c0_337, %c0_338, %c300], %120 {strides = array<i32>} : memref<4x16x500xbf16, #tpu.memory_space<vmem>>, vector<1x4x20xbf16>,
    %c0_339 = arith.constant 0 : index
    %c1_340 = arith.constant 1 : index
    %c90_341 = arith.constant 90 : index
    %122 = vector.load %arg1[%c0_339, %c1_340, %c90_341] : memref<1x6x120xbf16, #tpu.memory_space<vmem>>, vector<1x4x20xbf16>
    %c1_342 = arith.constant 1 : index
    %c0_343 = arith.constant 0 : index
    %c300_344 = arith.constant 300 : index
    %123 = vector.load %arg6[%c1_342, %c0_343, %c300_344] : memref<4x16x500xbf16, #tpu.memory_space<vmem>>, vector<1x4x20xbf16>
    tpu.vector_store %arg6[%c1_342, %c0_343, %c300_344], %122 {strides = array<i32>} : memref<4x16x500xbf16, #tpu.memory_space<vmem>>, vector<1x4x20xbf16>,
    %c0_345 = arith.constant 0 : index
    %c2_346 = arith.constant 2 : index
    %c0_347 = arith.constant 0 : index
    %124 = vector.load %arg1[%c0_345, %c2_346, %c0_347] : memref<1x6x120xbf16, #tpu.memory_space<vmem>>, vector<1x4x20xbf16>
    %c2_348 = arith.constant 2 : index
    %c0_349 = arith.constant 0 : index
    %c300_350 = arith.constant 300 : index
    %125 = vector.load %arg6[%c2_348, %c0_349, %c300_350] : memref<4x16x500xbf16, #tpu.memory_space<vmem>>, vector<1x4x20xbf16>
    tpu.vector_store %arg6[%c2_348, %c0_349, %c300_350], %124 {strides = array<i32>} : memref<4x16x500xbf16, #tpu.memory_space<vmem>>, vector<1x4x20xbf16>,
    %c0_351 = arith.constant 0 : index
    %c2_352 = arith.constant 2 : index
    %c30_353 = arith.constant 30 : index
    %126 = vector.load %arg1[%c0_351, %c2_352, %c30_353] : memref<1x6x120xbf16, #tpu.memory_space<vmem>>, vector<1x4x20xbf16>
    %c3_354 = arith.constant 3 : index
    %c0_355 = arith.constant 0 : index
    %c300_356 = arith.constant 300 : index
    %127 = vector.load %arg6[%c3_354, %c0_355, %c300_356] : memref<4x16x500xbf16, #tpu.memory_space<vmem>>, vector<1x4x20xbf16>
    tpu.vector_store %arg6[%c3_354, %c0_355, %c300_356], %126 {strides = array<i32>} : memref<4x16x500xbf16, #tpu.memory_space<vmem>>, vector<1x4x20xbf16>,
    %c0_357 = arith.constant 0 : index
    %c1_358 = arith.constant 1 : index
    %c90_359 = arith.constant 90 : index
    %128 = vector.load %arg1[%c0_357, %c1_358, %c90_359] : memref<1x6x120xbf16, #tpu.memory_space<vmem>>, vector<1x4x20xbf16>
    %c0_360 = arith.constant 0 : index
    %c0_361 = arith.constant 0 : index
    %c320 = arith.constant 320 : index
    %129 = vector.load %arg6[%c0_360, %c0_361, %c320] : memref<4x16x500xbf16, #tpu.memory_space<vmem>>, vector<1x4x20xbf16>
    tpu.vector_store %arg6[%c0_360, %c0_361, %c320], %128 {strides = array<i32>} : memref<4x16x500xbf16, #tpu.memory_space<vmem>>, vector<1x4x20xbf16>,
    %c0_362 = arith.constant 0 : index
    %c1_363 = arith.constant 1 : index
    %c65_364 = arith.constant 65 : index
    %130 = vector.load %arg1[%c0_362, %c1_363, %c65_364] : memref<1x6x120xbf16, #tpu.memory_space<vmem>>, vector<1x4x20xbf16>
    %c1_365 = arith.constant 1 : index
    %c0_366 = arith.constant 0 : index
    %c320_367 = arith.constant 320 : index
    %131 = vector.load %arg6[%c1_365, %c0_366, %c320_367] : memref<4x16x500xbf16, #tpu.memory_space<vmem>>, vector<1x4x20xbf16>
    tpu.vector_store %arg6[%c1_365, %c0_366, %c320_367], %130 {strides = array<i32>} : memref<4x16x500xbf16, #tpu.memory_space<vmem>>, vector<1x4x20xbf16>,
    %c0_368 = arith.constant 0 : index
    %c2_369 = arith.constant 2 : index
    %c30_370 = arith.constant 30 : index
    %132 = vector.load %arg1[%c0_368, %c2_369, %c30_370] : memref<1x6x120xbf16, #tpu.memory_space<vmem>>, vector<1x4x20xbf16>
    %c2_371 = arith.constant 2 : index
    %c0_372 = arith.constant 0 : index
    %c320_373 = arith.constant 320 : index
    %133 = vector.load %arg6[%c2_371, %c0_372, %c320_373] : memref<4x16x500xbf16, #tpu.memory_space<vmem>>, vector<1x4x20xbf16>
    tpu.vector_store %arg6[%c2_371, %c0_372, %c320_373], %132 {strides = array<i32>} : memref<4x16x500xbf16, #tpu.memory_space<vmem>>, vector<1x4x20xbf16>,
    %c0_374 = arith.constant 0 : index
    %c2_375 = arith.constant 2 : index
    %c5_376 = arith.constant 5 : index
    %134 = vector.load %arg1[%c0_374, %c2_375, %c5_376] : memref<1x6x120xbf16, #tpu.memory_space<vmem>>, vector<1x4x20xbf16>
    %c3_377 = arith.constant 3 : index
    %c0_378 = arith.constant 0 : index
    %c320_379 = arith.constant 320 : index
    %135 = vector.load %arg6[%c3_377, %c0_378, %c320_379] : memref<4x16x500xbf16, #tpu.memory_space<vmem>>, vector<1x4x20xbf16>
    tpu.vector_store %arg6[%c3_377, %c0_378, %c320_379], %134 {strides = array<i32>} : memref<4x16x500xbf16, #tpu.memory_space<vmem>>, vector<1x4x20xbf16>,
    %c0_380 = arith.constant 0 : index
    %c1_381 = arith.constant 1 : index
    %c65_382 = arith.constant 65 : index
    %136 = vector.load %arg1[%c0_380, %c1_381, %c65_382] : memref<1x6x120xbf16, #tpu.memory_space<vmem>>, vector<1x4x20xbf16>
    %c0_383 = arith.constant 0 : index
    %c0_384 = arith.constant 0 : index
    %c340 = arith.constant 340 : index
    %137 = vector.load %arg6[%c0_383, %c0_384, %c340] : memref<4x16x500xbf16, #tpu.memory_space<vmem>>, vector<1x4x20xbf16>
    tpu.vector_store %arg6[%c0_383, %c0_384, %c340], %136 {strides = array<i32>} : memref<4x16x500xbf16, #tpu.memory_space<vmem>>, vector<1x4x20xbf16>,
    %c0_385 = arith.constant 0 : index
    %c1_386 = arith.constant 1 : index
    %c95_387 = arith.constant 95 : index
    %138 = vector.load %arg1[%c0_385, %c1_386, %c95_387] : memref<1x6x120xbf16, #tpu.memory_space<vmem>>, vector<1x4x20xbf16>
    %c1_388 = arith.constant 1 : index
    %c0_389 = arith.constant 0 : index
    %c340_390 = arith.constant 340 : index
    %139 = vector.load %arg6[%c1_388, %c0_389, %c340_390] : memref<4x16x500xbf16, #tpu.memory_space<vmem>>, vector<1x4x20xbf16>
    tpu.vector_store %arg6[%c1_388, %c0_389, %c340_390], %138 {strides = array<i32>} : memref<4x16x500xbf16, #tpu.memory_space<vmem>>, vector<1x4x20xbf16>,
    %c0_391 = arith.constant 0 : index
    %c2_392 = arith.constant 2 : index
    %c5_393 = arith.constant 5 : index
    %140 = vector.load %arg1[%c0_391, %c2_392, %c5_393] : memref<1x6x120xbf16, #tpu.memory_space<vmem>>, vector<1x4x20xbf16>
    %c2_394 = arith.constant 2 : index
    %c0_395 = arith.constant 0 : index
    %c340_396 = arith.constant 340 : index
    %141 = vector.load %arg6[%c2_394, %c0_395, %c340_396] : memref<4x16x500xbf16, #tpu.memory_space<vmem>>, vector<1x4x20xbf16>
    tpu.vector_store %arg6[%c2_394, %c0_395, %c340_396], %140 {strides = array<i32>} : memref<4x16x500xbf16, #tpu.memory_space<vmem>>, vector<1x4x20xbf16>,
    %c0_397 = arith.constant 0 : index
    %c2_398 = arith.constant 2 : index
    %c35_399 = arith.constant 35 : index
    %142 = vector.load %arg1[%c0_397, %c2_398, %c35_399] : memref<1x6x120xbf16, #tpu.memory_space<vmem>>, vector<1x4x20xbf16>
    %c3_400 = arith.constant 3 : index
    %c0_401 = arith.constant 0 : index
    %c340_402 = arith.constant 340 : index
    %143 = vector.load %arg6[%c3_400, %c0_401, %c340_402] : memref<4x16x500xbf16, #tpu.memory_space<vmem>>, vector<1x4x20xbf16>
    tpu.vector_store %arg6[%c3_400, %c0_401, %c340_402], %142 {strides = array<i32>} : memref<4x16x500xbf16, #tpu.memory_space<vmem>>, vector<1x4x20xbf16>,
    %c0_403 = arith.constant 0 : index
    %c1_404 = arith.constant 1 : index
    %c95_405 = arith.constant 95 : index
    %144 = vector.load %arg1[%c0_403, %c1_404, %c95_405] : memref<1x6x120xbf16, #tpu.memory_space<vmem>>, vector<1x4x20xbf16>
    %c0_406 = arith.constant 0 : index
    %c0_407 = arith.constant 0 : index
    %c360 = arith.constant 360 : index
    %145 = vector.load %arg6[%c0_406, %c0_407, %c360] : memref<4x16x500xbf16, #tpu.memory_space<vmem>>, vector<1x4x20xbf16>
    tpu.vector_store %arg6[%c0_406, %c0_407, %c360], %144 {strides = array<i32>} : memref<4x16x500xbf16, #tpu.memory_space<vmem>>, vector<1x4x20xbf16>,
    %c0_408 = arith.constant 0 : index
    %c1_409 = arith.constant 1 : index
    %c70_410 = arith.constant 70 : index
    %146 = vector.load %arg1[%c0_408, %c1_409, %c70_410] : memref<1x6x120xbf16, #tpu.memory_space<vmem>>, vector<1x4x20xbf16>
    %c1_411 = arith.constant 1 : index
    %c0_412 = arith.constant 0 : index
    %c360_413 = arith.constant 360 : index
    %147 = vector.load %arg6[%c1_411, %c0_412, %c360_413] : memref<4x16x500xbf16, #tpu.memory_space<vmem>>, vector<1x4x20xbf16>
    tpu.vector_store %arg6[%c1_411, %c0_412, %c360_413], %146 {strides = array<i32>} : memref<4x16x500xbf16, #tpu.memory_space<vmem>>, vector<1x4x20xbf16>,
    %c0_414 = arith.constant 0 : index
    %c2_415 = arith.constant 2 : index
    %c35_416 = arith.constant 35 : index
    %148 = vector.load %arg1[%c0_414, %c2_415, %c35_416] : memref<1x6x120xbf16, #tpu.memory_space<vmem>>, vector<1x4x20xbf16>
    %c2_417 = arith.constant 2 : index
    %c0_418 = arith.constant 0 : index
    %c360_419 = arith.constant 360 : index
    %149 = vector.load %arg6[%c2_417, %c0_418, %c360_419] : memref<4x16x500xbf16, #tpu.memory_space<vmem>>, vector<1x4x20xbf16>
    tpu.vector_store %arg6[%c2_417, %c0_418, %c360_419], %148 {strides = array<i32>} : memref<4x16x500xbf16, #tpu.memory_space<vmem>>, vector<1x4x20xbf16>,
    %c0_420 = arith.constant 0 : index
    %c2_421 = arith.constant 2 : index
    %c10_422 = arith.constant 10 : index
    %150 = vector.load %arg1[%c0_420, %c2_421, %c10_422] : memref<1x6x120xbf16, #tpu.memory_space<vmem>>, vector<1x4x20xbf16>
    %c3_423 = arith.constant 3 : index
    %c0_424 = arith.constant 0 : index
    %c360_425 = arith.constant 360 : index
    %151 = vector.load %arg6[%c3_423, %c0_424, %c360_425] : memref<4x16x500xbf16, #tpu.memory_space<vmem>>, vector<1x4x20xbf16>
    tpu.vector_store %arg6[%c3_423, %c0_424, %c360_425], %150 {strides = array<i32>} : memref<4x16x500xbf16, #tpu.memory_space<vmem>>, vector<1x4x20xbf16>,
    %c0_426 = arith.constant 0 : index
    %c1_427 = arith.constant 1 : index
    %c70_428 = arith.constant 70 : index
    %152 = vector.load %arg1[%c0_426, %c1_427, %c70_428] : memref<1x6x120xbf16, #tpu.memory_space<vmem>>, vector<1x4x20xbf16>
    %c0_429 = arith.constant 0 : index
    %c0_430 = arith.constant 0 : index
    %c380 = arith.constant 380 : index
    %153 = vector.load %arg6[%c0_429, %c0_430, %c380] : memref<4x16x500xbf16, #tpu.memory_space<vmem>>, vector<1x4x20xbf16>
    tpu.vector_store %arg6[%c0_429, %c0_430, %c380], %152 {strides = array<i32>} : memref<4x16x500xbf16, #tpu.memory_space<vmem>>, vector<1x4x20xbf16>,
    %c0_431 = arith.constant 0 : index
    %c1_432 = arith.constant 1 : index
    %c100_433 = arith.constant 100 : index
    %154 = vector.load %arg1[%c0_431, %c1_432, %c100_433] : memref<1x6x120xbf16, #tpu.memory_space<vmem>>, vector<1x4x20xbf16>
    %c1_434 = arith.constant 1 : index
    %c0_435 = arith.constant 0 : index
    %c380_436 = arith.constant 380 : index
    %155 = vector.load %arg6[%c1_434, %c0_435, %c380_436] : memref<4x16x500xbf16, #tpu.memory_space<vmem>>, vector<1x4x20xbf16>
    tpu.vector_store %arg6[%c1_434, %c0_435, %c380_436], %154 {strides = array<i32>} : memref<4x16x500xbf16, #tpu.memory_space<vmem>>, vector<1x4x20xbf16>,
    %c0_437 = arith.constant 0 : index
    %c2_438 = arith.constant 2 : index
    %c10_439 = arith.constant 10 : index
    %156 = vector.load %arg1[%c0_437, %c2_438, %c10_439] : memref<1x6x120xbf16, #tpu.memory_space<vmem>>, vector<1x4x20xbf16>
    %c2_440 = arith.constant 2 : index
    %c0_441 = arith.constant 0 : index
    %c380_442 = arith.constant 380 : index
    %157 = vector.load %arg6[%c2_440, %c0_441, %c380_442] : memref<4x16x500xbf16, #tpu.memory_space<vmem>>, vector<1x4x20xbf16>
    tpu.vector_store %arg6[%c2_440, %c0_441, %c380_442], %156 {strides = array<i32>} : memref<4x16x500xbf16, #tpu.memory_space<vmem>>, vector<1x4x20xbf16>,
    %c0_443 = arith.constant 0 : index
    %c2_444 = arith.constant 2 : index
    %c40_445 = arith.constant 40 : index
    %158 = vector.load %arg1[%c0_443, %c2_444, %c40_445] : memref<1x6x120xbf16, #tpu.memory_space<vmem>>, vector<1x4x20xbf16>
    %c3_446 = arith.constant 3 : index
    %c0_447 = arith.constant 0 : index
    %c380_448 = arith.constant 380 : index
    %159 = vector.load %arg6[%c3_446, %c0_447, %c380_448] : memref<4x16x500xbf16, #tpu.memory_space<vmem>>, vector<1x4x20xbf16>
    tpu.vector_store %arg6[%c3_446, %c0_447, %c380_448], %158 {strides = array<i32>} : memref<4x16x500xbf16, #tpu.memory_space<vmem>>, vector<1x4x20xbf16>,
    %c0_449 = arith.constant 0 : index
    %c2_450 = arith.constant 2 : index
    %c0_451 = arith.constant 0 : index
    %160 = vector.load %arg1[%c0_449, %c2_450, %c0_451] : memref<1x6x120xbf16, #tpu.memory_space<vmem>>, vector<1x4x20xbf16>
    %c0_452 = arith.constant 0 : index
    %c0_453 = arith.constant 0 : index
    %c400 = arith.constant 400 : index
    %161 = vector.load %arg6[%c0_452, %c0_453, %c400] : memref<4x16x500xbf16, #tpu.memory_space<vmem>>, vector<1x4x20xbf16>
    tpu.vector_store %arg6[%c0_452, %c0_453, %c400], %160 {strides = array<i32>} : memref<4x16x500xbf16, #tpu.memory_space<vmem>>, vector<1x4x20xbf16>,
    %c0_454 = arith.constant 0 : index
    %c2_455 = arith.constant 2 : index
    %c30_456 = arith.constant 30 : index
    %162 = vector.load %arg1[%c0_454, %c2_455, %c30_456] : memref<1x6x120xbf16, #tpu.memory_space<vmem>>, vector<1x4x20xbf16>
    %c1_457 = arith.constant 1 : index
    %c0_458 = arith.constant 0 : index
    %c400_459 = arith.constant 400 : index
    %163 = vector.load %arg6[%c1_457, %c0_458, %c400_459] : memref<4x16x500xbf16, #tpu.memory_space<vmem>>, vector<1x4x20xbf16>
    tpu.vector_store %arg6[%c1_457, %c0_458, %c400_459], %162 {strides = array<i32>} : memref<4x16x500xbf16, #tpu.memory_space<vmem>>, vector<1x4x20xbf16>,
    %c0_460 = arith.constant 0 : index
    %c2_461 = arith.constant 2 : index
    %c60_462 = arith.constant 60 : index
    %164 = vector.load %arg1[%c0_460, %c2_461, %c60_462] : memref<1x6x120xbf16, #tpu.memory_space<vmem>>, vector<1x4x20xbf16>
    %c2_463 = arith.constant 2 : index
    %c0_464 = arith.constant 0 : index
    %c400_465 = arith.constant 400 : index
    %165 = vector.load %arg6[%c2_463, %c0_464, %c400_465] : memref<4x16x500xbf16, #tpu.memory_space<vmem>>, vector<1x4x20xbf16>
    tpu.vector_store %arg6[%c2_463, %c0_464, %c400_465], %164 {strides = array<i32>} : memref<4x16x500xbf16, #tpu.memory_space<vmem>>, vector<1x4x20xbf16>,
    %c0_466 = arith.constant 0 : index
    %c2_467 = arith.constant 2 : index
    %c90_468 = arith.constant 90 : index
    %166 = vector.load %arg1[%c0_466, %c2_467, %c90_468] : memref<1x6x120xbf16, #tpu.memory_space<vmem>>, vector<1x4x20xbf16>
    %c3_469 = arith.constant 3 : index
    %c0_470 = arith.constant 0 : index
    %c400_471 = arith.constant 400 : index
    %167 = vector.load %arg6[%c3_469, %c0_470, %c400_471] : memref<4x16x500xbf16, #tpu.memory_space<vmem>>, vector<1x4x20xbf16>
    tpu.vector_store %arg6[%c3_469, %c0_470, %c400_471], %166 {strides = array<i32>} : memref<4x16x500xbf16, #tpu.memory_space<vmem>>, vector<1x4x20xbf16>,
    %c0_472 = arith.constant 0 : index
    %c2_473 = arith.constant 2 : index
    %c30_474 = arith.constant 30 : index
    %168 = vector.load %arg1[%c0_472, %c2_473, %c30_474] : memref<1x6x120xbf16, #tpu.memory_space<vmem>>, vector<1x4x20xbf16>
    %c0_475 = arith.constant 0 : index
    %c0_476 = arith.constant 0 : index
    %c420 = arith.constant 420 : index
    %169 = vector.load %arg6[%c0_475, %c0_476, %c420] : memref<4x16x500xbf16, #tpu.memory_space<vmem>>, vector<1x4x20xbf16>
    tpu.vector_store %arg6[%c0_475, %c0_476, %c420], %168 {strides = array<i32>} : memref<4x16x500xbf16, #tpu.memory_space<vmem>>, vector<1x4x20xbf16>,
    %c0_477 = arith.constant 0 : index
    %c2_478 = arith.constant 2 : index
    %c5_479 = arith.constant 5 : index
    %170 = vector.load %arg1[%c0_477, %c2_478, %c5_479] : memref<1x6x120xbf16, #tpu.memory_space<vmem>>, vector<1x4x20xbf16>
    %c1_480 = arith.constant 1 : index
    %c0_481 = arith.constant 0 : index
    %c420_482 = arith.constant 420 : index
    %171 = vector.load %arg6[%c1_480, %c0_481, %c420_482] : memref<4x16x500xbf16, #tpu.memory_space<vmem>>, vector<1x4x20xbf16>
    tpu.vector_store %arg6[%c1_480, %c0_481, %c420_482], %170 {strides = array<i32>} : memref<4x16x500xbf16, #tpu.memory_space<vmem>>, vector<1x4x20xbf16>,
    %c0_483 = arith.constant 0 : index
    %c2_484 = arith.constant 2 : index
    %c90_485 = arith.constant 90 : index
    %172 = vector.load %arg1[%c0_483, %c2_484, %c90_485] : memref<1x6x120xbf16, #tpu.memory_space<vmem>>, vector<1x4x20xbf16>
    %c2_486 = arith.constant 2 : index
    %c0_487 = arith.constant 0 : index
    %c420_488 = arith.constant 420 : index
    %173 = vector.load %arg6[%c2_486, %c0_487, %c420_488] : memref<4x16x500xbf16, #tpu.memory_space<vmem>>, vector<1x4x20xbf16>
    tpu.vector_store %arg6[%c2_486, %c0_487, %c420_488], %172 {strides = array<i32>} : memref<4x16x500xbf16, #tpu.memory_space<vmem>>, vector<1x4x20xbf16>,
    %c0_489 = arith.constant 0 : index
    %c2_490 = arith.constant 2 : index
    %c65_491 = arith.constant 65 : index
    %174 = vector.load %arg1[%c0_489, %c2_490, %c65_491] : memref<1x6x120xbf16, #tpu.memory_space<vmem>>, vector<1x4x20xbf16>
    %c3_492 = arith.constant 3 : index
    %c0_493 = arith.constant 0 : index
    %c420_494 = arith.constant 420 : index
    %175 = vector.load %arg6[%c3_492, %c0_493, %c420_494] : memref<4x16x500xbf16, #tpu.memory_space<vmem>>, vector<1x4x20xbf16>
    tpu.vector_store %arg6[%c3_492, %c0_493, %c420_494], %174 {strides = array<i32>} : memref<4x16x500xbf16, #tpu.memory_space<vmem>>, vector<1x4x20xbf16>,
    %c0_495 = arith.constant 0 : index
    %c2_496 = arith.constant 2 : index
    %c5_497 = arith.constant 5 : index
    %176 = vector.load %arg1[%c0_495, %c2_496, %c5_497] : memref<1x6x120xbf16, #tpu.memory_space<vmem>>, vector<1x4x20xbf16>
    %c0_498 = arith.constant 0 : index
    %c0_499 = arith.constant 0 : index
    %c440 = arith.constant 440 : index
    %177 = vector.load %arg6[%c0_498, %c0_499, %c440] : memref<4x16x500xbf16, #tpu.memory_space<vmem>>, vector<1x4x20xbf16>
    tpu.vector_store %arg6[%c0_498, %c0_499, %c440], %176 {strides = array<i32>} : memref<4x16x500xbf16, #tpu.memory_space<vmem>>, vector<1x4x20xbf16>,
    %c0_500 = arith.constant 0 : index
    %c2_501 = arith.constant 2 : index
    %c35_502 = arith.constant 35 : index
    %178 = vector.load %arg1[%c0_500, %c2_501, %c35_502] : memref<1x6x120xbf16, #tpu.memory_space<vmem>>, vector<1x4x20xbf16>
    %c1_503 = arith.constant 1 : index
    %c0_504 = arith.constant 0 : index
    %c440_505 = arith.constant 440 : index
    %179 = vector.load %arg6[%c1_503, %c0_504, %c440_505] : memref<4x16x500xbf16, #tpu.memory_space<vmem>>, vector<1x4x20xbf16>
    tpu.vector_store %arg6[%c1_503, %c0_504, %c440_505], %178 {strides = array<i32>} : memref<4x16x500xbf16, #tpu.memory_space<vmem>>, vector<1x4x20xbf16>,
    %c0_506 = arith.constant 0 : index
    %c2_507 = arith.constant 2 : index
    %c65_508 = arith.constant 65 : index
    %180 = vector.load %arg1[%c0_506, %c2_507, %c65_508] : memref<1x6x120xbf16, #tpu.memory_space<vmem>>, vector<1x4x20xbf16>
    %c2_509 = arith.constant 2 : index
    %c0_510 = arith.constant 0 : index
    %c440_511 = arith.constant 440 : index
    %181 = vector.load %arg6[%c2_509, %c0_510, %c440_511] : memref<4x16x500xbf16, #tpu.memory_space<vmem>>, vector<1x4x20xbf16>
    tpu.vector_store %arg6[%c2_509, %c0_510, %c440_511], %180 {strides = array<i32>} : memref<4x16x500xbf16, #tpu.memory_space<vmem>>, vector<1x4x20xbf16>,
    %c0_512 = arith.constant 0 : index
    %c2_513 = arith.constant 2 : index
    %c95_514 = arith.constant 95 : index
    %182 = vector.load %arg1[%c0_512, %c2_513, %c95_514] : memref<1x6x120xbf16, #tpu.memory_space<vmem>>, vector<1x4x20xbf16>
    %c3_515 = arith.constant 3 : index
    %c0_516 = arith.constant 0 : index
    %c440_517 = arith.constant 440 : index
    %183 = vector.load %arg6[%c3_515, %c0_516, %c440_517] : memref<4x16x500xbf16, #tpu.memory_space<vmem>>, vector<1x4x20xbf16>
    tpu.vector_store %arg6[%c3_515, %c0_516, %c440_517], %182 {strides = array<i32>} : memref<4x16x500xbf16, #tpu.memory_space<vmem>>, vector<1x4x20xbf16>,
    %c0_518 = arith.constant 0 : index
    %c2_519 = arith.constant 2 : index
    %c35_520 = arith.constant 35 : index
    %184 = vector.load %arg1[%c0_518, %c2_519, %c35_520] : memref<1x6x120xbf16, #tpu.memory_space<vmem>>, vector<1x4x20xbf16>
    %c0_521 = arith.constant 0 : index
    %c0_522 = arith.constant 0 : index
    %c460 = arith.constant 460 : index
    %185 = vector.load %arg6[%c0_521, %c0_522, %c460] : memref<4x16x500xbf16, #tpu.memory_space<vmem>>, vector<1x4x20xbf16>
    tpu.vector_store %arg6[%c0_521, %c0_522, %c460], %184 {strides = array<i32>} : memref<4x16x500xbf16, #tpu.memory_space<vmem>>, vector<1x4x20xbf16>,
    %c0_523 = arith.constant 0 : index
    %c2_524 = arith.constant 2 : index
    %c10_525 = arith.constant 10 : index
    %186 = vector.load %arg1[%c0_523, %c2_524, %c10_525] : memref<1x6x120xbf16, #tpu.memory_space<vmem>>, vector<1x4x20xbf16>
    %c1_526 = arith.constant 1 : index
    %c0_527 = arith.constant 0 : index
    %c460_528 = arith.constant 460 : index
    %187 = vector.load %arg6[%c1_526, %c0_527, %c460_528] : memref<4x16x500xbf16, #tpu.memory_space<vmem>>, vector<1x4x20xbf16>
    tpu.vector_store %arg6[%c1_526, %c0_527, %c460_528], %186 {strides = array<i32>} : memref<4x16x500xbf16, #tpu.memory_space<vmem>>, vector<1x4x20xbf16>,
    %c0_529 = arith.constant 0 : index
    %c2_530 = arith.constant 2 : index
    %c95_531 = arith.constant 95 : index
    %188 = vector.load %arg1[%c0_529, %c2_530, %c95_531] : memref<1x6x120xbf16, #tpu.memory_space<vmem>>, vector<1x4x20xbf16>
    %c2_532 = arith.constant 2 : index
    %c0_533 = arith.constant 0 : index
    %c460_534 = arith.constant 460 : index
    %189 = vector.load %arg6[%c2_532, %c0_533, %c460_534] : memref<4x16x500xbf16, #tpu.memory_space<vmem>>, vector<1x4x20xbf16>
    tpu.vector_store %arg6[%c2_532, %c0_533, %c460_534], %188 {strides = array<i32>} : memref<4x16x500xbf16, #tpu.memory_space<vmem>>, vector<1x4x20xbf16>,
    %c0_535 = arith.constant 0 : index
    %c2_536 = arith.constant 2 : index
    %c70_537 = arith.constant 70 : index
    %190 = vector.load %arg1[%c0_535, %c2_536, %c70_537] : memref<1x6x120xbf16, #tpu.memory_space<vmem>>, vector<1x4x20xbf16>
    %c3_538 = arith.constant 3 : index
    %c0_539 = arith.constant 0 : index
    %c460_540 = arith.constant 460 : index
    %191 = vector.load %arg6[%c3_538, %c0_539, %c460_540] : memref<4x16x500xbf16, #tpu.memory_space<vmem>>, vector<1x4x20xbf16>
    tpu.vector_store %arg6[%c3_538, %c0_539, %c460_540], %190 {strides = array<i32>} : memref<4x16x500xbf16, #tpu.memory_space<vmem>>, vector<1x4x20xbf16>,
    %c0_541 = arith.constant 0 : index
    %c2_542 = arith.constant 2 : index
    %c10_543 = arith.constant 10 : index
    %192 = vector.load %arg1[%c0_541, %c2_542, %c10_543] : memref<1x6x120xbf16, #tpu.memory_space<vmem>>, vector<1x4x20xbf16>
    %c0_544 = arith.constant 0 : index
    %c0_545 = arith.constant 0 : index
    %c480 = arith.constant 480 : index
    %193 = vector.load %arg6[%c0_544, %c0_545, %c480] : memref<4x16x500xbf16, #tpu.memory_space<vmem>>, vector<1x4x20xbf16>
    tpu.vector_store %arg6[%c0_544, %c0_545, %c480], %192 {strides = array<i32>} : memref<4x16x500xbf16, #tpu.memory_space<vmem>>, vector<1x4x20xbf16>,
    %c0_546 = arith.constant 0 : index
    %c2_547 = arith.constant 2 : index
    %c40_548 = arith.constant 40 : index
    %194 = vector.load %arg1[%c0_546, %c2_547, %c40_548] : memref<1x6x120xbf16, #tpu.memory_space<vmem>>, vector<1x4x20xbf16>
    %c1_549 = arith.constant 1 : index
    %c0_550 = arith.constant 0 : index
    %c480_551 = arith.constant 480 : index
    %195 = vector.load %arg6[%c1_549, %c0_550, %c480_551] : memref<4x16x500xbf16, #tpu.memory_space<vmem>>, vector<1x4x20xbf16>
    tpu.vector_store %arg6[%c1_549, %c0_550, %c480_551], %194 {strides = array<i32>} : memref<4x16x500xbf16, #tpu.memory_space<vmem>>, vector<1x4x20xbf16>,
    %c0_552 = arith.constant 0 : index
    %c2_553 = arith.constant 2 : index
    %c70_554 = arith.constant 70 : index
    %196 = vector.load %arg1[%c0_552, %c2_553, %c70_554] : memref<1x6x120xbf16, #tpu.memory_space<vmem>>, vector<1x4x20xbf16>
    %c2_555 = arith.constant 2 : index
    %c0_556 = arith.constant 0 : index
    %c480_557 = arith.constant 480 : index
    %197 = vector.load %arg6[%c2_555, %c0_556, %c480_557] : memref<4x16x500xbf16, #tpu.memory_space<vmem>>, vector<1x4x20xbf16>
    tpu.vector_store %arg6[%c2_555, %c0_556, %c480_557], %196 {strides = array<i32>} : memref<4x16x500xbf16, #tpu.memory_space<vmem>>, vector<1x4x20xbf16>,
    %c0_558 = arith.constant 0 : index
    %c2_559 = arith.constant 2 : index
    %c100_560 = arith.constant 100 : index
    %198 = vector.load %arg1[%c0_558, %c2_559, %c100_560] : memref<1x6x120xbf16, #tpu.memory_space<vmem>>, vector<1x4x20xbf16>
    %c3_561 = arith.constant 3 : index
    %c0_562 = arith.constant 0 : index
    %c480_563 = arith.constant 480 : index
    %199 = vector.load %arg6[%c3_561, %c0_562, %c480_563] : memref<4x16x500xbf16, #tpu.memory_space<vmem>>, vector<1x4x20xbf16>
    tpu.vector_store %arg6[%c3_561, %c0_562, %c480_563], %198 {strides = array<i32>} : memref<4x16x500xbf16, #tpu.memory_space<vmem>>, vector<1x4x20xbf16>,
    %c0_564 = arith.constant 0 : index
    %c0_565 = arith.constant 0 : index
    %c0_566 = arith.constant 0 : index
    %200 = vector.load %arg6[%c0_564, %c0_565, %c0_566] : memref<4x16x500xbf16, #tpu.memory_space<vmem>>, vector<4x16x500xbf16>
    %201 = vector.shape_cast %200 : vector<4x16x500xbf16> to vector<64x500xbf16>
    %c0_567 = arith.constant 0 : index
    %c0_568 = arith.constant 0 : index
    %202 = vector.load %arg2[%c0_567, %c0_568] : memref<500x128xbf16, #tpu.memory_space<vmem>>, vector<500x128xbf16>
    %cst = arith.constant dense<0.000000e+00> : vector<64x128xf32>
    %203 = tpu.matmul %201, %202, %cst {dimension_numbers = #tpu.dot_dimension_numbers<[1], [0], [0], [1], [0, 0, 1, 1], [], []>} : vector<64x500xbf16>, vector<500x128xbf16>, vector<64x128xf32> -> vector<64x128xf32>
    %c0_569 = arith.constant 0 : index
    %c0_570 = arith.constant 0 : index
    %204 = vector.load %arg3[%c0_569, %c0_570] : memref<1x128xf32, #tpu.memory_space<vmem>>, vector<1x128xf32>
    %205 = vector.broadcast %204 : vector<1x128xf32> to vector<64x128xf32>
    %206 = arith.mulf %203, %205 : vector<64x128xf32>
    %c0_571 = arith.constant 0 : index
    %c0_572 = arith.constant 0 : index
    %207 = vector.load %arg4[%c0_571, %c0_572] : memref<1x128xf32, #tpu.memory_space<vmem>>, vector<1x128xf32>
    %208 = vector.broadcast %207 : vector<1x128xf32> to vector<64x128xf32>
    %209 = arith.addf %206, %208 : vector<64x128xf32>
    %210 = vector.shape_cast %209 : vector<64x128xf32> to vector<4x1x16x128xf32>
    %211 = vector.extract_strided_slice %210 {offsets = [0, 0, 0, 0], sizes = [1, 1, 16, 128], strides = [1, 1, 1, 1]} : vector<4x1x16x128xf32> to vector<1x1x16x128xf32>
    %212 = vector.shape_cast %211 : vector<1x1x16x128xf32> to vector<1x16x128xf32>
    %213 = vector.extract_strided_slice %210 {offsets = [1, 0, 0, 0], sizes = [1, 1, 16, 128], strides = [1, 1, 1, 1]} : vector<4x1x16x128xf32> to vector<1x1x16x128xf32>
    %214 = vector.shape_cast %213 : vector<1x1x16x128xf32> to vector<1x16x128xf32>
    %215 = arith.maximumf %212, %214 : vector<1x16x128xf32>
    %216 = vector.extract_strided_slice %210 {offsets = [2, 0, 0, 0], sizes = [1, 1, 16, 128], strides = [1, 1, 1, 1]} : vector<4x1x16x128xf32> to vector<1x1x16x128xf32>
    %217 = vector.shape_cast %216 : vector<1x1x16x128xf32> to vector<1x16x128xf32>
    %218 = vector.extract_strided_slice %210 {offsets = [3, 0, 0, 0], sizes = [1, 1, 16, 128], strides = [1, 1, 1, 1]} : vector<4x1x16x128xf32> to vector<1x1x16x128xf32>
    %219 = vector.shape_cast %218 : vector<1x1x16x128xf32> to vector<1x16x128xf32>
    %220 = arith.maximumf %217, %219 : vector<1x16x128xf32>
    %221 = arith.maximumf %215, %220 : vector<1x16x128xf32>
    %cst_573 = arith.constant 0.000000e+00 : f32
    %222 = vector.broadcast %cst_573 : f32 to vector<1x16x128xf32>
    %223 = arith.maximumf %221, %222 : vector<1x16x128xf32>
    %224 = arith.truncf %223 : vector<1x16x128xf32> to vector<1x16x128xbf16>
    %c0_574 = arith.constant 0 : index
    %c0_575 = arith.constant 0 : index
    %c0_576 = arith.constant 0 : index
    %225 = vector.load %arg5[%c0_574, %c0_575, %c0_576] : memref<1x16x128xbf16, #tpu.memory_space<vmem>>, vector<1x16x128xbf16>
    tpu.vector_store %arg5[%c0_574, %c0_575, %c0_576], %224 {strides = array<i32>} : memref<1x16x128xbf16, #tpu.memory_space<vmem>>, vector<1x16x128xbf16>,
    return
  }
  func.func @transform_0(%arg0: i32) -> (i32, i32, i32) {
    %c0_i32 = arith.constant 0 : i32
    %c0_i32_0 = arith.constant 0 : i32
    %c0_i32_1 = arith.constant 0 : i32
    return %arg0, %c0_i32, %c0_i32_0 : i32, i32, i32
  }
  func.func @transform_1(%arg0: i32) -> (i32, i32) {
    %c0_i32 = arith.constant 0 : i32
    %c0_i32_0 = arith.constant 0 : i32
    %c0_i32_1 = arith.constant 0 : i32
    return %c0_i32, %c0_i32_0 : i32, i32
  }
  func.func @transform_2(%arg0: i32) -> (i32, i32) {
    %c0_i32 = arith.constant 0 : i32
    %c0_i32_0 = arith.constant 0 : i32
    %c0_i32_1 = arith.constant 0 : i32
    return %c0_i32, %c0_i32_0 : i32, i32
  }
  func.func @transform_3(%arg0: i32) -> (i32, i32) {
    %c0_i32 = arith.constant 0 : i32
    %c0_i32_0 = arith.constant 0 : i32
    %c0_i32_1 = arith.constant 0 : i32
    return %c0_i32, %c0_i32_0 : i32, i32
  }
  func.func @transform_4(%arg0: i32) -> (i32, i32, i32) {
    %c0_i32 = arith.constant 0 : i32
    %c0_i32_0 = arith.constant 0 : i32
    %c0_i32_1 = arith.constant 0 : i32
    return %arg0, %c0_i32, %c0_i32_0 : i32, i32, i32
  }
}

</mosaic_0001>

<llo_original>
// kernel: torch_model_forward.5
$region0: #{torch_model_forward.5}
  #allocation0 [shape = 'u32[]', space=smem, size = 0x4, offset = 0x4, fixed_abs, tag = 'smem constant byte address 0x4 - core index']
  #allocation1 [shape = 'u32[144,128]{1,0:T(1,128)}', space=vmem, size = 0x12000, scoped, tag = 'internal scratch']
  %s0 = inlined_call_operand.vmem [shape: bf16[2,160], index: 0, kind: input, shape index: {}]
  %s1 = inlined_call_operand.vmem [shape: bf16[160,128], index: 1, kind: input, shape index: {}]
  %s2 = inlined_call_operand.vmem [shape: f32[1,128], index: 2, kind: input, shape index: {}]
  %s3 = inlined_call_operand.vmem [shape: bf16[128,128], index: 3, kind: input, shape index: {}]
  %s4 = inlined_call_operand.vmem [shape: f32[1,128], index: 4, kind: input, shape index: {}]
  %s5 = inlined_call_operand.hbm [shape: f32[2,128], index: 5, kind: output, shape index: {}]
  %s6 = sld [smem:[#allocation0]]
  $region30: #{torch_model_forward.5} parent=0
    _
  %s8 = ssub.s32 1, %s6
  %s9 = scalar_select 0, %s8, %s6
  $region1: #{torch_model_forward.5} parent=0
    #allocation2 [shape = 'u8[1024]{0}', space=vmem, size = 0x400, scoped, tag = 'output window, operand 0, single buffered']
    #allocation3 [shape = 's32[1]{0}', space=sflag, size = 0x4, scoped, tag = 'scoped memory for torch_model_forward.5']
    %10 = vsyncpa [#allocation3], 0
    // Predicated region
    $region2: #{torch_model_forward.5} parent=1 // pred_check
      _
    $region3: #{torch_model_forward.5} parent=1 // pred_check_branch
      %12 = sbr.rel (0) target = $region5
    $region4: #{torch_model_forward.5} parent=1 // pred_region
      _
    $region5: #{torch_model_forward.5} parent=1 // pred_fallthru
      _
    // Predicated region
    $region6: #{torch_model_forward.5} parent=1 // pred_check
      _
    $region7: #{torch_model_forward.5} parent=1 // pred_check_branch
      %14 = sbr.rel (0) target = $region9
    $region8: #{torch_model_forward.5} parent=1 // pred_region
      _
    $region9: #{torch_model_forward.5} parent=1 // pred_fallthru
      _
    // Predicated region
    $region10: #{torch_model_forward.5} parent=1 // pred_check
      _
    $region11: #{torch_model_forward.5} parent=1 // pred_check_branch
      %16 = sbr.rel (0) target = $region13
    $region12: #{torch_model_forward.5} parent=1 // pred_region
      _
    $region13: #{torch_model_forward.5} parent=1 // pred_fallthru
      _
    // Predicated region
    $region14: #{torch_model_forward.5} parent=1 // pred_check
      _
    $region15: #{torch_model_forward.5} parent=1 // pred_check_branch
      %18 = sbr.rel (0) target = $region17
    $region16: #{torch_model_forward.5} parent=1 // pred_region
      _
    $region17: #{torch_model_forward.5} parent=1 // pred_fallthru
      _
    // Predicated region
    $region18: #{torch_model_forward.5} parent=1 // pred_check
      _
    $region19: #{torch_model_forward.5} parent=1 // pred_check_branch
      %20 = sbr.rel (0) target = $region21
    $region20: #{torch_model_forward.5} parent=1 // pred_region
      _
    $region21: #{torch_model_forward.5} parent=1 // pred_fallthru
      _
    %v22 = vld [vmem:[%s0] sm:$0x3]
    %v23 = vld [vmem:[%s1] sm:$0xf]
    %v24 = vld [vmem:[%s1 + $0x4] sm:$0xf]
    %v25 = vld [vmem:[%s1 + $0x8] sm:$0xf]
    %v26 = vld [vmem:[%s1 + $0xc] sm:$0xf]
    %v27 = vld [vmem:[%s1 + $0x10] sm:$0xf]
    %v28 = vld [vmem:[%s1 + $0x14] sm:$0xf]
    %v29 = vld [vmem:[%s1 + $0x18] sm:$0xf]
    %v30 = vld [vmem:[%s1 + $0x1c] sm:$0xf]
    %v31 = vld [vmem:[%s1 + $0x20] sm:$0xf]
    %v32 = vld [vmem:[%s1 + $0x24] sm:$0xf]
    %v33 = vld [vmem:[%s1 + $0x28] sm:$0xf]
    %v34 = vld [vmem:[%s1 + $0x2c] sm:$0xf]
    %v35 = vld [vmem:[%s1 + $0x30] sm:$0xf]
    %v36 = vld [vmem:[%s1 + $0x34] sm:$0xf]
    %v37 = vld [vmem:[%s1 + $0x38] sm:$0xf]
    %v38 = vld [vmem:[%s1 + $0x3c] sm:$0xf]
    %v39 = vld [vmem:[%s1 + $0x40] sm:$0xf]
    %v40 = vld [vmem:[%s1 + $0x44] sm:$0xf]
    %v41 = vld [vmem:[%s1 + $0x48] sm:$0xf]
    %v42 = vld [vmem:[%s1 + $0x4c] sm:$0xf]
    %v43 = vld [vmem:[%s2] sm:$0x1]
    %v45 = vlaneseq
    %v46 = vshrl.u32 %v45, 7
    %v47 = vsub.s32 0, %v46
    %v48 = vrot.slane %v43, %v47
    %v52 = vunpack.c.l.s4 1966171168
    %v53 = vunpack.c.0.s8 %v52
    %v54 = vlaneseq
    %v55 = vshrl.u32 %v54, 7
    %v56 = vsub.s32 %v53, %v55
    %v57 = vrot.slane %v22, %v56
    %v58 = vcombine.high %v57, %v57
    %v60 = vunpack.c.l.s4 1966171168
    %v61 = vunpack.c.0.s8 %v60
    %v62 = vlaneseq
    %v63 = vshrl.u32 %v62, 7
    %v64 = vsub.s32 %v61, %v63
    %v65 = vrot.slane %v57, %v64
    %v67 = vunpack.c.l.s4 1966171168
    %v68 = vunpack.c.0.s8 %v67
    %v69 = vlaneseq
    %v70 = vshrl.u32 %v69, 7
    %v71 = vsub.s32 %v68, %v70
    %v72 = vrot.slane %v58, %v71
    %v94 = vunpack.c.l.b16 %v23
    %v95 = vunpack.c.l.b16 %v24
    %v96 = vunpack.c.l.b16 %v25
    %v97 = vunpack.c.l.b16 %v26
    %v98 = vunpack.c.l.b16 %v27
    %v99 = vunpack.c.l.b16 %v28
    %v100 = vunpack.c.l.b16 %v29
    %v101 = vunpack.c.l.b16 %v30
    %v102 = vunpack.c.l.b16 %v31
    %v103 = vunpack.c.l.b16 %v32
    %v104 = vunpack.c.l.b16 %v33
    %v105 = vunpack.c.l.b16 %v34
    %v106 = vunpack.c.l.b16 %v35
    %v107 = vunpack.c.l.b16 %v36
    %v108 = vunpack.c.l.b16 %v37
    %v109 = vunpack.c.l.b16 %v38
    %v110 = vunpack.c.l.b16 %v39
    %v111 = vunpack.c.l.b16 %v40
    %v112 = vunpack.c.l.b16 %v41
    %v113 = vunpack.c.l.b16 %v42
    %v114 = vpack.c.b16 %v95, %v94
    %v115 = vpack.c.b16 %v97, %v96
    %v116 = vpack.c.b16 %v99, %v98
    %v117 = vpack.c.b16 %v101, %v100
    %v118 = vpack.c.b16 %v103, %v102
    %v119 = vpack.c.b16 %v105, %v104
    %v120 = vpack.c.b16 %v107, %v106
    %v121 = vpack.c.b16 %v109, %v108
    %v122 = vpack.c.b16 %v111, %v110
    %v123 = vpack.c.b16 %v113, %v112
    %vm134 = vcmask 261120
    %v136 = vsel %vm134, %v72, 0
    %138 = vmatprep.subr.bf16.mxu0 0
    %139 = vmatpush1.bf16.msra.mxu0 %v114
    %140 = vmatprep.subr.bf16.mxu0 0
    %141 = vmatpush1.bf16.msra.mxu0 %v115
    %142 = vmatprep.subr.bf16.mxu0 0
    %143 = vmatpush1.bf16.msra.mxu0 %v116
    %144 = vmatprep.subr.bf16.mxu0 0
    %145 = vmatpush1.bf16.msra.mxu0 %v117
    %146 = vmatprep.subr.bf16.mxu0 0
    %147 = vmatpush1.bf16.msra.mxu0 %v118
    %148 = vmatprep.subr.bf16.mxu0 0
    %149 = vmatpush1.bf16.msra.mxu0 %v119
    %150 = vmatprep.subr.bf16.mxu0 0
    %151 = vmatpush1.bf16.msra.mxu0 %v120
    %152 = vmatprep.subr.bf16.mxu0 0
    %153 = vmatpush1.bf16.msra.mxu0 %v121
    %154 = vmatprep.subr.bf16.mxu0 0
    %155 = vmatpush1.bf16.msra.mxu0 %v122
    %156 = vmatprep.subr.bf16.mxu0 0
    %157 = vmatpush1.bf16.msra.mxu0 %v123
    %158 = vmatprep.subr.bf16.mxu0 0
    %159 = vmatpush1.bf16.msra.mxu0 0
    %160 = vmatprep.subr.bf16.mxu0 0
    %161 = vmatpush1.bf16.msra.mxu0 0
    %162 = vmatprep.subr.bf16.mxu0 0
    %163 = vmatpush1.bf16.msra.mxu0 0
    %164 = vmatprep.subr.bf16.mxu0 0
    %165 = vmatpush1.bf16.msra.mxu0 0
    %166 = vmatprep.subr.bf16.mxu0 0
    %167 = vmatpush1.bf16.msra.mxu0 0
    %168 = vmatprep.subr.bf16.mxu0 0
    %169 = vmatpush1.bf16.msra.mxu0 0
    %170 = vmatprep.mubr.bf16.mxu0 %v136
    %171 = vmatmul.mubr.bf16.gmra.mrb[0].mxu0 %v65
    %v172 = vpop.f32.mrb[0].mxu0
    %v173 = vadd.f32 %v48, %v172
    %v174 = vpop.f32.mrb[0].mxu0
    %v175 = vpop.f32.mrb[0].mxu0
    %v176 = vpop.f32.mrb[0].mxu0
    %177 = vdwg.mxu0
    %v178 = vmax.f32 %v173, 0.0
    %v179 = vpack.c.bf16 %v178, %v178
    %v180 = vld [vmem:[%s3] sm:$0xf]
    %v181 = vld [vmem:[%s3 + $0x4] sm:$0xf]
    %v182 = vld [vmem:[%s3 + $0x8] sm:$0xf]
    %v183 = vld [vmem:[%s3 + $0xc] sm:$0xf]
    %v184 = vld [vmem:[%s3 + $0x10] sm:$0xf]
    %v185 = vld [vmem:[%s3 + $0x14] sm:$0xf]
    %v186 = vld [vmem:[%s3 + $0x18] sm:$0xf]
    %v187 = vld [vmem:[%s3 + $0x1c] sm:$0xf]
    %v188 = vld [vmem:[%s3 + $0x20] sm:$0xf]
    %v189 = vld [vmem:[%s3 + $0x24] sm:$0xf]
    %v190 = vld [vmem:[%s3 + $0x28] sm:$0xf]
    %v191 = vld [vmem:[%s3 + $0x2c] sm:$0xf]
    %v192 = vld [vmem:[%s3 + $0x30] sm:$0xf]
    %v193 = vld [vmem:[%s3 + $0x34] sm:$0xf]
    %v194 = vld [vmem:[%s3 + $0x38] sm:$0xf]
    %v195 = vld [vmem:[%s3 + $0x3c] sm:$0xf]
    %v196 = vld [vmem:[%s4] sm:$0x1]
    %v198 = vlaneseq
    %v199 = vshrl.u32 %v198, 7
    %v200 = vsub.s32 0, %v199
    %v201 = vrot.slane %v196, %v200
    %v219 = vunpack.c.l.b16 %v180
    %v220 = vunpack.c.l.b16 %v181
    %v221 = vunpack.c.l.b16 %v182
    %v222 = vunpack.c.l.b16 %v183
    %v223 = vunpack.c.l.b16 %v184
    %v224 = vunpack.c.l.b16 %v185
    %v225 = vunpack.c.l.b16 %v186
    %v226 = vunpack.c.l.b16 %v187
    %v227 = vunpack.c.l.b16 %v188
    %v228 = vunpack.c.l.b16 %v189
    %v229 = vunpack.c.l.b16 %v190
    %v230 = vunpack.c.l.b16 %v191
    %v231 = vunpack.c.l.b16 %v192
    %v232 = vunpack.c.l.b16 %v193
    %v233 = vunpack.c.l.b16 %v194
    %v234 = vunpack.c.l.b16 %v195
    %v235 = vpack.c.b16 %v220, %v219
    %v236 = vpack.c.b16 %v222, %v221
    %v237 = vpack.c.b16 %v224, %v223
    %v238 = vpack.c.b16 %v226, %v225
    %v239 = vpack.c.b16 %v228, %v227
    %v240 = vpack.c.b16 %v230, %v229
    %v241 = vpack.c.b16 %v232, %v231
    %v242 = vpack.c.b16 %v234, %v233
    %251 = vmatprep.subr.bf16.mxu0 0
    %252 = vmatpush1.bf16.msra.mxu0 %v235
    %253 = vmatprep.subr.bf16.mxu0 0
    %254 = vmatpush1.bf16.msra.mxu0 %v236
    %255 = vmatprep.subr.bf16.mxu0 0
    %256 = vmatpush1.bf16.msra.mxu0 %v237
    %257 = vmatprep.subr.bf16.mxu0 0
    %258 = vmatpush1.bf16.msra.mxu0 %v238
    %259 = vmatprep.subr.bf16.mxu0 0
    %260 = vmatpush1.bf16.msra.mxu0 %v239
    %261 = vmatprep.subr.bf16.mxu0 0
    %262 = vmatpush1.bf16.msra.mxu0 %v240
    %263 = vmatprep.subr.bf16.mxu0 0
    %264 = vmatpush1.bf16.msra.mxu0 %v241
    %265 = vmatprep.subr.bf16.mxu0 0
    %266 = vmatpush1.bf16.msra.mxu0 %v242
    %267 = vmatprep.subr.bf16.mxu0 0
    %268 = vmatpush1.bf16.msra.mxu0 0
    %269 = vmatprep.subr.bf16.mxu0 0
    %270 = vmatpush1.bf16.msra.mxu0 0
    %271 = vmatprep.subr.bf16.mxu0 0
    %272 = vmatpush1.bf16.msra.mxu0 0
    %273 = vmatprep.subr.bf16.mxu0 0
    %274 = vmatpush1.bf16.msra.mxu0 0
    %275 = vmatprep.subr.bf16.mxu0 0
    %276 = vmatpush1.bf16.msra.mxu0 0
    %277 = vmatprep.subr.bf16.mxu0 0
    %278 = vmatpush1.bf16.msra.mxu0 0
    %279 = vmatprep.subr.bf16.mxu0 0
    %280 = vmatpush1.bf16.msra.mxu0 0
    %281 = vmatprep.subr.bf16.mxu0 0
    %282 = vmatpush1.bf16.msra.mxu0 0
    %283 = vmatprep.mubr.bf16.mxu0 0
    %284 = vmatmul.mubr.bf16.gmra.mrb[0].mxu0 %v179
    %v285 = vpop.f32.mrb[0].mxu0
    %v286 = vadd.f32 %v201, %v285
    %v287 = vpop.f32.mrb[0].mxu0
    %v288 = vpop.f32.mrb[0].mxu0
    %v289 = vpop.f32.mrb[0].mxu0
    %290 = vdwg.mxu0
    %vm291 = vcmask 1041408
    %v292 = vsel %vm291, %v286, -inf
    %293 = vmax.xlane.f32.xlu0 %v292
    %v294 = vpop.xlane.xlu0 %293
    %v295 = vsub.f32 %v286, %v294
    %v296 = vmul.f32 %v295, 1.442695
    %v297 = vpow.pop %v296
    %v298 = vsel %vm291, %v297, 0.0
    %299 = vadd.xlane.f32.xlu0 %v298
    %v300 = vpop.xlane.xlu0 %299
    %v301 = vlog2.pop %v300
    %v302 = vmul.f32 %v301, 0.6931472
    %v303 = vadd.f32 %v302, %v294
    %v304 = vsub.f32 %v286, %v303
    %305 = vst [vmem:[#allocation2] sm:$0x3] %v304
    // Predicated region
    $region22: #{torch_model_forward.5} parent=1 // pred_check
      _
    $region23: #{torch_model_forward.5} parent=1 // pred_check_branch
      %307 = sbr.rel (0) target = $region25
    $region24: #{torch_model_forward.5} parent=1 // pred_region
      %s309 = ssub.s32 32, 32
      %310 = vsyncadd [#allocation3], %s309
      %s312 = sshll.u32 [#allocation2], 4
      %s313 = int_to_ptr.vmem [resolvable:$true] %s312
      %315 = dma.vmem_to_hbm [thread:$0]  %s313, 32, %s5, [#allocation3]
    $region25: #{torch_model_forward.5} parent=1 // pred_fallthru
      _
    // Predicated region
    $region26: #{torch_model_forward.5} parent=1 // pred_check
      _
    $region27: #{torch_model_forward.5} parent=1 // pred_check_branch
      %317 = sbr.rel (0) target = $region29
    $region28: #{torch_model_forward.5} parent=1 // pred_region
      %318 = dma.done [#allocation3], 32
    $region29: #{torch_model_forward.5} parent=1 // pred_fallthru
      _
    %319 = vsyncpa [#allocation3], 1

// kernel: torch_model_forward.3
$region0: #{torch_model_forward.3}
  #allocation0 [shape = 'u32[]', space=smem, size = 0x4, offset = 0x4, fixed_abs, tag = 'smem constant byte address 0x4 - core index']
  #allocation1 [shape = 'u32[144,128]{1,0:T(1,128)}', space=vmem, size = 0x12000, scoped, tag = 'internal scratch']
  #allocation2 [shape = 'bf16[4,16,300]{2,1,0:T(16,128)(2,1)}', space=vmem, size = 0xc000, scoped, tag = 'scratch operand']
  %s0 = inlined_call_operand.vmem [shape: bf16[2,14,56], index: 0, kind: input, shape index: {}]
  %s1 = inlined_call_operand.vmem [shape: bf16[300,128], index: 1, kind: input, shape index: {}]
  %s2 = inlined_call_operand.vmem [shape: f32[1,128], index: 2, kind: input, shape index: {}]
  %s3 = inlined_call_operand.vmem [shape: f32[1,128], index: 3, kind: input, shape index: {}]
  %s4 = inlined_call_operand.vmem [shape: bf16[2,16,128], index: 4, kind: output, shape index: {}]
  %s5 = sld [smem:[#allocation0]]
  $region49: #{torch_model_forward.3} parent=0
    _
  %s7 = ssub.s32 1, %s5
  %s8 = scalar_select 0, %s7, %s5
  loop: start=0, step=1, limit=4
  $region2: #{torch_model_forward.3} parent=0 // loop_pre_header
    _
  $region3: #{torch_model_forward.3} parent=0 // loop_header
    %s10 = sphi 0, %s14
    %p11 = scmp.ge.s32.totalorder %s10, 4
    %s20 = sphi 0, %s22
    %s23 = sphi 0, %s20
    %s24 = sphi 0, %s23
    %s40 = sphi 0, %s24
    %s44 = sphi 0, %s44
    %s46 = sphi 0, %s44
    %s47 = sphi 0, %s46
    %s61 = sphi 0, %s47
    %s65 = sphi 0, %s65
    %s67 = sphi 0, %s65
    %s68 = sphi 0, %s67
    %s82 = sphi 0, %s68
    %s86 = sphi 0, %s86
    %s88 = sphi 0, %s86
    %s89 = sphi 0, %s88
    %s103 = sphi 0, %s89
    %s109 = sphi 0, %s111
    %s112 = sphi 0, %s109
    %s113 = sphi 0, %s112
    %s129 = sphi 0, %s113
  $region4: #{torch_model_forward.3} parent=0 // loop_header_branch
    %13 = sbr.rel (%p11) target = $region8
  $region5: #{torch_model_forward.3} parent=0 // loop_body
    %s15 = ssub.s32 %s10, 1
    %s16 = ssub.s32 %s10, 2
    %s17 = sadd.s32 %s10, 1
    %s18 = ssub.s32 %s10, %s17
    %p19 = scmp.eq.s32.totalorder %s18, 0
    %s21 = sadd.s32 %s20, 1
    %s22 = scalar_select %p19, %s20, %s21
    %p25 = pneg %p19
    %p26 = scmp.eq.s32.totalorder %s10, 1
    %p27 = por %p25, %p26
    %p28 = scmp.ne.s32.totalorder %s20, %s23
    %p29 = scmp.eq.s32.totalorder %s10, 0
    %p30 = por %p28, %p29
    %p31 = scmp.ne.s32.totalorder %s20, %s23
    %p32 = scmp.eq.s32.totalorder %s15, 1
    %p33 = por %p31, %p32
    %p34 = scmp.ne.s32.totalorder %s23, %s24
    %p35 = scmp.eq.s32.totalorder %s15, 0
    %p36 = por %p34, %p35
    %p37 = scmp.ne.s32.totalorder %s23, %s24
    %p38 = scmp.eq.s32.totalorder %s16, 1
    %p39 = por %p37, %p38
    %p41 = scmp.ne.s32.totalorder %s24, %s40
    %p42 = scmp.eq.s32.totalorder %s16, 0
    %p43 = por %p41, %p42
    %s45 = sadd.s32 %s44, 1
    %p48 = scmp.eq.s32.totalorder %s10, 1
    %p49 = scmp.ne.s32.totalorder %s44, %s46
    %p50 = scmp.eq.s32.totalorder %s10, 0
    %p51 = por %p49, %p50
    %p52 = scmp.ne.s32.totalorder %s44, %s46
    %p53 = scmp.eq.s32.totalorder %s15, 1
    %p54 = por %p52, %p53
    %p55 = scmp.ne.s32.totalorder %s46, %s47
    %p56 = scmp.eq.s32.totalorder %s15, 0
    %p57 = por %p55, %p56
    %p58 = scmp.ne.s32.totalorder %s46, %s47
    %p59 = scmp.eq.s32.totalorder %s16, 1
    %p60 = por %p58, %p59
    %p62 = scmp.ne.s32.totalorder %s47, %s61
    %p63 = scmp.eq.s32.totalorder %s16, 0
    %p64 = por %p62, %p63
    %s66 = sadd.s32 %s65, 1
    %p69 = scmp.eq.s32.totalorder %s10, 1
    %p70 = scmp.ne.s32.totalorder %s65, %s67
    %p71 = scmp.eq.s32.totalorder %s10, 0
    %p72 = por %p70, %p71
    %p73 = scmp.ne.s32.totalorder %s65, %s67
    %p74 = scmp.eq.s32.totalorder %s15, 1
    %p75 = por %p73, %p74
    %p76 = scmp.ne.s32.totalorder %s67, %s68
    %p77 = scmp.eq.s32.totalorder %s15, 0
    %p78 = por %p76, %p77
    %p79 = scmp.ne.s32.totalorder %s67, %s68
    %p80 = scmp.eq.s32.totalorder %s16, 1
    %p81 = por %p79, %p80
    %p83 = scmp.ne.s32.totalorder %s68, %s82
    %p84 = scmp.eq.s32.totalorder %s16, 0
    %p85 = por %p83, %p84
    %s87 = sadd.s32 %s86, 1
    %p90 = scmp.eq.s32.totalorder %s10, 1
    %p91 = scmp.ne.s32.totalorder %s86, %s88
    %p92 = scmp.eq.s32.totalorder %s10, 0
    %p93 = por %p91, %p92
    %p94 = scmp.ne.s32.totalorder %s86, %s88
    %p95 = scmp.eq.s32.totalorder %s15, 1
    %p96 = por %p94, %p95
    %p97 = scmp.ne.s32.totalorder %s88, %s89
    %p98 = scmp.eq.s32.totalorder %s15, 0
    %p99 = por %p97, %p98
    %p100 = scmp.ne.s32.totalorder %s88, %s89
    %p101 = scmp.eq.s32.totalorder %s16, 1
    %p102 = por %p100, %p101
    %p104 = scmp.ne.s32.totalorder %s89, %s103
    %p105 = scmp.eq.s32.totalorder %s16, 0
    %p106 = por %p104, %p105
    %s107 = ssub.s32 %s10, %s17
    %p108 = scmp.eq.s32.totalorder %s107, 0
    %s110 = sadd.s32 %s109, 1
    %s111 = scalar_select %p108, %s109, %s110
    %p114 = pneg %p108
    %p115 = scmp.eq.s32.totalorder %s10, 1
    %p116 = por %p114, %p115
    %p117 = scmp.ne.s32.totalorder %s109, %s112
    %p118 = scmp.eq.s32.totalorder %s10, 0
    %p119 = por %p117, %p118
    %p120 = scmp.ne.s32.totalorder %s109, %s112
    %p121 = scmp.eq.s32.totalorder %s15, 1
    %p122 = por %p120, %p121
    %p123 = scmp.ne.s32.totalorder %s112, %s113
    %p124 = scmp.eq.s32.totalorder %s15, 0
    %p125 = por %p123, %p124
    %p126 = scmp.ne.s32.totalorder %s112, %s113
    %p127 = scmp.eq.s32.totalorder %s16, 1
    %p128 = por %p126, %p127
    %p130 = scmp.ne.s32.totalorder %s113, %s129
    %p131 = scmp.eq.s32.totalorder %s16, 0
    %p132 = por %p130, %p131
    %p133 = scmp.le.s32.totalorder 1, %s10
    %p134 = scmp.lt.s32.totalorder %s10, 3
    %p135 = pnand %p133, %p134
    %p136 = pneg %p135
    // Predicated region
    $region9: #{torch_model_forward.3} parent=5 // pred_check
      _
    $region10: #{torch_model_forward.3} parent=5 // pred_check_branch
      %138 = sbr.rel (%p135) target = $region12
    $region11: #{torch_model_forward.3} parent=5 // pred_region
      %s139 = ssub.s32 %s10, 1
      // Predicated region
      $region13: #{torch_model_forward.3} parent=11 // pred_check
        %p140 = pneg %p57
      $region14: #{torch_model_forward.3} parent=11 // pred_check_branch
        %142 = sbr.rel (%p140) target = $region16
      $region15: #{torch_model_forward.3} parent=11 // pred_region
        _
      $region16: #{torch_model_forward.3} parent=11 // pred_fallthru
        _
      // Predicated region
      $region17: #{torch_model_forward.3} parent=11 // pred_check
        %p143 = pneg %p78
      $region18: #{torch_model_forward.3} parent=11 // pred_check_branch
        %145 = sbr.rel (%p143) target = $region20
      $region19: #{torch_model_forward.3} parent=11 // pred_region
        _
      $region20: #{torch_model_forward.3} parent=11 // pred_fallthru
        _
      // Predicated region
      $region21: #{torch_model_forward.3} parent=11 // pred_check
        %p146 = pneg %p99
      $region22: #{torch_model_forward.3} parent=11 // pred_check_branch
        %148 = sbr.rel (%p146) target = $region24
      $region23: #{torch_model_forward.3} parent=11 // pred_region
        _
      $region24: #{torch_model_forward.3} parent=11 // pred_fallthru
        _
    $region12: #{torch_model_forward.3} parent=5 // pred_fallthru
      _
    %p149 = scmp.lt.s32.totalorder %s10, 2
    // Predicated region
    $region25: #{torch_model_forward.3} parent=5 // pred_check
      %p150 = pneg %p149
    $region26: #{torch_model_forward.3} parent=5 // pred_check_branch
      %152 = sbr.rel (%p150) target = $region28
    $region27: #{torch_model_forward.3} parent=5 // pred_region
      // Predicated region
      $region29: #{torch_model_forward.3} parent=27 // pred_check
        %p153 = pneg %p30
      $region30: #{torch_model_forward.3} parent=27 // pred_check_branch
        %155 = sbr.rel (%p153) target = $region32
      $region31: #{torch_model_forward.3} parent=27 // pred_region
        %p156 = scmp.lt.s32.totalorder %s10, 1
        %s157 = scalar_select %p156, %s10, 1
        %s158 = smul.addr %s157, 2
        %s159 = smul.addr %s158, 4
        %s160 = scalar_lea.vmem %s0, %s159
      $region32: #{torch_model_forward.3} parent=27 // pred_fallthru
        _
    $region28: #{torch_model_forward.3} parent=5 // pred_fallthru
      _
    %p161 = scmp.le.s32.totalorder 1, %s10
    %p162 = scmp.lt.s32.totalorder %s10, 3
    %p163 = pnand %p161, %p162
    %p164 = pneg %p163
    // Predicated region
    $region33: #{torch_model_forward.3} parent=5 // pred_check
      _
    $region34: #{torch_model_forward.3} parent=5 // pred_check_branch
      %166 = sbr.rel (%p163) target = $region36
    $region35: #{torch_model_forward.3} parent=5 // pred_region
      %s167 = ssub.s32 %s10, 1
      %p168 = scmp.lt.s32.totalorder %s15, 1
      %s169 = scalar_select %p168, %s15, 1
      %s170 = smul.addr %s169, 2
      %s171 = smul.addr %s170, 4
      %s172 = scalar_lea.vmem %s0, %s171
      %p173 = pneg %p36
      %p174 = pneg %p33
      %p175 = pneg %p57
      %p176 = pneg %p54
      %p177 = pneg %p78
      %p178 = pneg %p75
      %p179 = pneg %p99
      %p180 = pneg %p96
      %p181 = pneg %p125
      %p182 = pneg %p122
      %p183 = scmp.lt.s32.totalorder %s15, 1
      %s184 = scalar_select %p183, %s15, 1
      %s185 = smul.addr %s184, 2
      %s186 = smul.addr %s185, 4
      %s187 = scalar_lea.vmem %s4, %s186
      %p188 = scmp.lt.s32.totalorder %s15, 1
      %s189 = scalar_select %p188, %s15, 1
      %s190 = smul.addr %s189, 2
      %s191 = smul.addr %s190, 4
      %s192 = scalar_lea.vmem %s0, %s191
      %p193 = scmp.lt.s32.totalorder %s15, 1
      %s194 = scalar_select %p193, %s15, 1
      %s195 = smul.addr %s194, 2
      %s196 = smul.addr %s195, 4
      %s197 = scalar_lea.vmem %s4, %s196
      %v199 = vld [vmem:[%s192] sm:$0xf]
      %v200 = vld [vmem:[%s192 + $0x4] sm:$0x3]
      %v203 = vunpack.c.l.b16 %v199
      %v204 = vunpack.c.l.b16 %v200
      %v205 = vpack.c.b16 %v204, %v203
      %vm207 = vcmask 95232
      %208 = vst.msk [vmem:[#allocation2] sm:$0x3f] %vm207, %v205
      %v209 = vld [vmem:[%s192] sm:$0xf]
      %v210 = vld [vmem:[%s192 + $0x4] sm:$0x3]
      %v213 = vunpack.c.l.b16 %v209
      %v214 = vunpack.c.l.b16 %v210
      %v215 = vpack.c.b16 %v214, %v213
      %216 = vrot.lane.b32.xlu0 %v215, 114
      %v217 = vpop.permute.xlu0 %216
      %s219 = scalar_lea.vmem [#allocation2], 24
      %220 = vst.msk [vmem:[%s219] sm:$0x3f] %vm207, %v217
      %v221 = vld [vmem:[%s192] sm:$0xf]
      %v222 = vld [vmem:[%s192 + $0x4] sm:$0x3]
      %v225 = vunpack.c.l.b16 %v221
      %v226 = vunpack.c.l.b16 %v222
      %v227 = vpack.c.b16 %v226, %v225
      %228 = vrot.lane.b32.xlu0 %v227, 100
      %v229 = vpop.permute.xlu0 %228
      %s231 = scalar_lea.vmem [#allocation2], 48
      %232 = vst.msk [vmem:[%s231] sm:$0x3f] %vm207, %v229
      %v233 = vld [vmem:[%s192] sm:$0xf]
      %v234 = vld [vmem:[%s192 + $0x4] sm:$0x3]
      %v237 = vunpack.c.l.b16 %v233
      %v238 = vunpack.c.l.b16 %v234
      %v239 = vpack.c.b16 %v238, %v237
      %240 = vrot.lane.b32.xlu0 %v239, 86
      %v241 = vpop.permute.xlu0 %240
      %s243 = scalar_lea.vmem [#allocation2], 72
      %244 = vst.msk [vmem:[%s243] sm:$0x3f] %vm207, %v241
      %v245 = vld [vmem:[%s192] sm:$0xf]
      %v246 = vld [vmem:[%s192 + $0x4] sm:$0x3]
      %v249 = vunpack.c.l.b16 %v245
      %v250 = vunpack.c.l.b16 %v246
      %v251 = vpack.c.b16 %v250, %v249
      %252 = vrot.lane.b32.xlu0 %v251, 126
      %v253 = vpop.permute.xlu0 %252
      %vm255 = vcmask 193632
      %256 = vst.msk [vmem:[#allocation2] sm:$0x3f] %vm255, %v253
      %v257 = vld [vmem:[%s192] sm:$0xf]
      %v258 = vld [vmem:[%s192 + $0x4] sm:$0x3]
      %v261 = vunpack.c.l.b16 %v257
      %v262 = vunpack.c.l.b16 %v258
      %v263 = vpack.c.b16 %v262, %v261
      %264 = vrot.lane.b32.xlu0 %v263, 11
      %v265 = vpop.permute.xlu0 %264
      %267 = vst.msk [vmem:[%s219] sm:$0x3f] %vm255, %v265
      %v268 = vld [vmem:[%s192] sm:$0xf]
      %v269 = vld [vmem:[%s192 + $0x4] sm:$0x3]
      %v272 = vunpack.c.l.b16 %v268
      %v273 = vunpack.c.l.b16 %v269
      %v274 = vpack.c.b16 %v273, %v272
      %275 = vrot.lane.b32.xlu0 %v274, 98
      %v276 = vpop.permute.xlu0 %275
      %278 = vst.msk [vmem:[%s231] sm:$0x3f] %vm255, %v276
      %v279 = vld [vmem:[%s192] sm:$0xf]
      %v280 = vld [vmem:[%s192 + $0x4] sm:$0x3]
      %v283 = vunpack.c.l.b16 %v279
      %v284 = vunpack.c.l.b16 %v280
      %v285 = vpack.c.b16 %v284, %v283
      %286 = vrot.lane.b32.xlu0 %v285, 111
      %v287 = vpop.permute.xlu0 %286
      %289 = vst.msk [vmem:[%s243] sm:$0x3f] %vm255, %v287
      %v290 = vld [vmem:[%s192] sm:$0xf]
      %v291 = vld [vmem:[%s192 + $0x4] sm:$0x3]
      %v294 = vunpack.c.l.b16 %v290
      %v295 = vunpack.c.l.b16 %v291
      %v296 = vpack.c.b16 %v295, %v294
      %297 = vrot.lane.b32.xlu0 %v296, 23
      %v298 = vpop.permute.xlu0 %297
      %vm300 = vcmask 292032
      %301 = vst.msk [vmem:[#allocation2] sm:$0x3f] %vm300, %v298
      %v302 = vld [vmem:[%s192] sm:$0xf]
      %v303 = vld [vmem:[%s192 + $0x4] sm:$0x3]
      %v306 = vunpack.c.l.b16 %v302
      %v307 = vunpack.c.l.b16 %v303
      %v308 = vpack.c.b16 %v307, %v306
      %309 = vrot.lane.b32.xlu0 %v308, 9
      %v310 = vpop.permute.xlu0 %309
      %312 = vst.msk [vmem:[%s219] sm:$0x3f] %vm300, %v310
      %v313 = vld [vmem:[%s192] sm:$0xf]
      %v314 = vld [vmem:[%s192 + $0x4] sm:$0x3]
      %v317 = vunpack.c.l.b16 %v313
      %v318 = vunpack.c.l.b16 %v314
      %v319 = vpack.c.b16 %v318, %v317
      %320 = vrot.lane.b32.xlu0 %v319, 123
      %v321 = vpop.permute.xlu0 %320
      %323 = vst.msk [vmem:[%s231] sm:$0x3f] %vm300, %v321
      %v324 = vld [vmem:[%s192] sm:$0xf]
      %v325 = vld [vmem:[%s192 + $0x4] sm:$0x3]
      %v328 = vunpack.c.l.b16 %v324
      %v329 = vunpack.c.l.b16 %v325
      %v330 = vpack.c.b16 %v329, %v328
      %331 = vrot.lane.b32.xlu0 %v330, 109
      %v332 = vpop.permute.xlu0 %331
      %334 = vst.msk [vmem:[%s243] sm:$0x3f] %vm300, %v332
      %v335 = vld [vmem:[%s192] sm:$0xf]
      %v336 = vld [vmem:[%s192 + $0x4] sm:$0x3]
      %v339 = vunpack.c.l.b16 %v335
      %v340 = vunpack.c.l.b16 %v336
      %v341 = vpack.c.b16 %v340, %v339
      %342 = vrot.lane.b32.xlu0 %v341, 21
      %v343 = vpop.permute.xlu0 %342
      %vm345 = vcmask 390432
      %346 = vst.msk [vmem:[#allocation2] sm:$0x3f] %vm345, %v343
      %v347 = vld [vmem:[%s192] sm:$0xf]
      %v348 = vld [vmem:[%s192 + $0x4] sm:$0x3]
      %v351 = vunpack.c.l.b16 %v347
      %v352 = vunpack.c.l.b16 %v348
      %v353 = vpack.c.b16 %v352, %v351
      %354 = vrot.lane.b32.xlu0 %v353, 34
      %v355 = vpop.permute.xlu0 %354
      %357 = vst.msk [vmem:[%s219] sm:$0x3f] %vm345, %v355
      %v358 = vld [vmem:[%s192] sm:$0xf]
      %v359 = vld [vmem:[%s192 + $0x4] sm:$0x3]
      %v362 = vunpack.c.l.b16 %v358
      %v363 = vunpack.c.l.b16 %v359
      %v364 = vpack.c.b16 %v363, %v362
      %365 = vrot.lane.b32.xlu0 %v364, 121
      %v366 = vpop.permute.xlu0 %365
      %368 = vst.msk [vmem:[%s231] sm:$0x3f] %vm345, %v366
      %v369 = vld [vmem:[%s192] sm:$0xf]
      %v370 = vld [vmem:[%s192 + $0x4] sm:$0x3]
      %v373 = vunpack.c.l.b16 %v369
      %v374 = vunpack.c.l.b16 %v370
      %v375 = vpack.c.b16 %v374, %v373
      %376 = vrot.lane.b32.xlu0 %v375, 6
      %v377 = vpop.permute.xlu0 %376
      %379 = vst.msk [vmem:[%s243] sm:$0x3f] %vm345, %v377
      %v380 = vld [vmem:[%s192] sm:$0xf]
      %v381 = vld [vmem:[%s192 + $0x4] sm:$0x3]
      %v384 = vunpack.c.l.b16 %v380
      %v385 = vunpack.c.l.b16 %v381
      %v386 = vpack.c.b16 %v385, %v384
      %387 = vrot.lane.b32.xlu0 %v386, 46
      %v388 = vpop.permute.xlu0 %387
      %vm390 = vcmask 488832
      %391 = vst.msk [vmem:[#allocation2] sm:$0x3f] %vm390, %v388
      %v392 = vld [vmem:[%s192] sm:$0xf]
      %v393 = vld [vmem:[%s192 + $0x4] sm:$0x3]
      %v396 = vunpack.c.l.b16 %v392
      %v397 = vunpack.c.l.b16 %v393
      %v398 = vpack.c.b16 %v397, %v396
      %399 = vrot.lane.b32.xlu0 %v398, 32
      %v400 = vpop.permute.xlu0 %399
      %402 = vst.msk [vmem:[%s219] sm:$0x3f] %vm390, %v400
      %v403 = vld [vmem:[%s192] sm:$0xf]
      %v404 = vld [vmem:[%s192 + $0x4] sm:$0x3]
      %v407 = vunpack.c.l.b16 %v403
      %v408 = vunpack.c.l.b16 %v404
      %v409 = vpack.c.b16 %v408, %v407
      %410 = vrot.lane.b32.xlu0 %v409, 18
      %v411 = vpop.permute.xlu0 %410
      %413 = vst.msk [vmem:[%s231] sm:$0x3f] %vm390, %v411
      %v414 = vld [vmem:[%s192] sm:$0xf]
      %v415 = vld [vmem:[%s192 + $0x4] sm:$0x3]
      %v418 = vunpack.c.l.b16 %v414
      %v419 = vunpack.c.l.b16 %v415
      %v420 = vpack.c.b16 %v419, %v418
      %421 = vrot.lane.b32.xlu0 %v420, 4
      %v422 = vpop.permute.xlu0 %421
      %424 = vst.msk [vmem:[%s243] sm:$0x3f] %vm390, %v422
      %v425 = vld [vmem:[%s192] sm:$0xf]
      %v426 = vld [vmem:[%s192 + $0x4] sm:$0x3]
      %v429 = vunpack.c.l.b16 %v425
      %v430 = vunpack.c.l.b16 %v426
      %v431 = vpack.c.b16 %v430, %v429
      %432 = vrot.lane.b32.xlu0 %v431, 32
      %v433 = vpop.permute.xlu0 %432
      %vm435 = vcmask 587232
      %436 = vst.msk [vmem:[#allocation2] sm:$0x3f] %vm435, %v433
      %v437 = vld [vmem:[%s192] sm:$0xf]
      %v438 = vld [vmem:[%s192 + $0x4] sm:$0x3]
      %v441 = vunpack.c.l.b16 %v437
      %v442 = vunpack.c.l.b16 %v438
      %v443 = vpack.c.b16 %v442, %v441
      %444 = vrot.lane.b32.xlu0 %v443, 18
      %v445 = vpop.permute.xlu0 %444
      %447 = vst.msk [vmem:[%s219] sm:$0x3f] %vm435, %v445
      %v448 = vld [vmem:[%s192] sm:$0xf]
      %v449 = vld [vmem:[%s192 + $0x4] sm:$0x7]
      %v452 = vunpack.c.l.b16 %v448
      %v453 = vunpack.c.l.b16 %v449
      %v454 = vpack.c.b16 %v453, %v452
      %v456 = vshrl.u32 %v454, 16
      %v458 = vshll.u32 %v454, 16
      %v460 = vrot.slane %v458, 1
      %v461 = vor.u32 %v456, %v460
      %462 = vrot.lane.b32.xlu0 %v461, 60
      %v463 = vpop.permute.xlu0 %462
      %465 = vst.msk [vmem:[%s231] sm:$0x3f] %vm435, %v463
      %v466 = vld [vmem:[%s192] sm:$0xf]
      %v467 = vld [vmem:[%s192 + $0x4] sm:$0x7]
      %v470 = vunpack.c.l.b16 %v466
      %v471 = vunpack.c.l.b16 %v467
      %v472 = vpack.c.b16 %v471, %v470
      %v474 = vshrl.u32 %v472, 16
      %v476 = vshll.u32 %v472, 16
      %v478 = vrot.slane %v476, 1
      %v479 = vor.u32 %v474, %v478
      %480 = vrot.lane.b32.xlu0 %v479, 46
      %v481 = vpop.permute.xlu0 %480
      %483 = vst.msk [vmem:[%s243] sm:$0x3f] %vm435, %v481
      %v484 = vld [vmem:[%s192] sm:$0xf]
      %v485 = vld [vmem:[%s192 + $0x4] sm:$0x3]
      %v488 = vunpack.c.l.b16 %v484
      %v489 = vunpack.c.l.b16 %v485
      %v490 = vpack.c.b16 %v489, %v488
      %491 = vrot.lane.b32.xlu0 %v490, 30
      %v492 = vpop.permute.xlu0 %491
      %vm494 = vcmask 685632
      %495 = vst.msk [vmem:[#allocation2] sm:$0x3f] %vm494, %v492
      %v496 = vld [vmem:[%s192] sm:$0xf]
      %v497 = vld [vmem:[%s192 + $0x4] sm:$0x3]
      %v500 = vunpack.c.l.b16 %v496
      %v501 = vunpack.c.l.b16 %v497
      %v502 = vpack.c.b16 %v501, %v500
      %503 = vrot.lane.b32.xlu0 %v502, 43
      %v504 = vpop.permute.xlu0 %503
      %506 = vst.msk [vmem:[%s219] sm:$0x3f] %vm494, %v504
      %v507 = vld [vmem:[%s192] sm:$0xf]
      %v508 = vld [vmem:[%s192 + $0x4] sm:$0x7]
      %v511 = vunpack.c.l.b16 %v507
      %v512 = vunpack.c.l.b16 %v508
      %v513 = vpack.c.b16 %v512, %v511
      %v515 = vshrl.u32 %v513, 16
      %v517 = vshll.u32 %v513, 16
      %v519 = vrot.slane %v517, 1
      %v520 = vor.u32 %v515, %v519
      %521 = vrot.lane.b32.xlu0 %v520, 58
      %v522 = vpop.permute.xlu0 %521
      %524 = vst.msk [vmem:[%s231] sm:$0x3f] %vm494, %v522
      %v525 = vld [vmem:[%s192] sm:$0xf]
      %v526 = vld [vmem:[%s192 + $0x4] sm:$0x7]
      %v529 = vunpack.c.l.b16 %v525
      %v530 = vunpack.c.l.b16 %v526
      %v531 = vpack.c.b16 %v530, %v529
      %v533 = vshrl.u32 %v531, 16
      %v535 = vshll.u32 %v531, 16
      %v537 = vrot.slane %v535, 1
      %v538 = vor.u32 %v533, %v537
      %539 = vrot.lane.b32.xlu0 %v538, 71
      %v540 = vpop.permute.xlu0 %539
      %542 = vst.msk [vmem:[%s243] sm:$0x3f] %vm494, %v540
      %v543 = vld [vmem:[%s192] sm:$0xf]
      %v544 = vld [vmem:[%s192 + $0x4] sm:$0x3]
      %v547 = vunpack.c.l.b16 %v543
      %v548 = vunpack.c.l.b16 %v544
      %v549 = vpack.c.b16 %v548, %v547
      %550 = vrot.lane.b32.xlu0 %v549, 55
      %v551 = vpop.permute.xlu0 %550
      %vm553 = vcmask 784032
      %554 = vst.msk [vmem:[#allocation2] sm:$0x3f] %vm553, %v551
      %v555 = vld [vmem:[%s192] sm:$0xf]
      %v556 = vld [vmem:[%s192 + $0x4] sm:$0x3]
      %v559 = vunpack.c.l.b16 %v555
      %v560 = vunpack.c.l.b16 %v556
      %v561 = vpack.c.b16 %v560, %v559
      %562 = vrot.lane.b32.xlu0 %v561, 41
      %v563 = vpop.permute.xlu0 %562
      %565 = vst.msk [vmem:[%s219] sm:$0x3f] %vm553, %v563
      %v566 = vld [vmem:[%s192] sm:$0xf]
      %v567 = vld [vmem:[%s192 + $0x4] sm:$0x7]
      %v570 = vunpack.c.l.b16 %v566
      %v571 = vunpack.c.l.b16 %v567
      %v572 = vpack.c.b16 %v571, %v570
      %v574 = vshrl.u32 %v572, 16
      %v576 = vshll.u32 %v572, 16
      %v578 = vrot.slane %v576, 1
      %v579 = vor.u32 %v574, %v578
      %580 = vrot.lane.b32.xlu0 %v579, 83
      %v581 = vpop.permute.xlu0 %580
      %583 = vst.msk [vmem:[%s231] sm:$0x3f] %vm553, %v581
      %v584 = vld [vmem:[%s192] sm:$0xf]
      %v585 = vld [vmem:[%s192 + $0x4] sm:$0x7]
      %v588 = vunpack.c.l.b16 %v584
      %v589 = vunpack.c.l.b16 %v585
      %v590 = vpack.c.b16 %v589, %v588
      %v592 = vshrl.u32 %v590, 16
      %v594 = vshll.u32 %v590, 16
      %v596 = vrot.slane %v594, 1
      %v597 = vor.u32 %v592, %v596
      %598 = vrot.lane.b32.xlu0 %v597, 69
      %v599 = vpop.permute.xlu0 %598
      %601 = vst.msk [vmem:[%s243] sm:$0x3f] %vm553, %v599
      %v602 = vld [vmem:[%s192] sm:$0xf]
      %v603 = vld [vmem:[%s192 + $0x4] sm:$0x3]
      %v606 = vunpack.c.l.b16 %v602
      %v607 = vunpack.c.l.b16 %v603
      %v608 = vpack.c.b16 %v607, %v606
      %609 = vrot.lane.b32.xlu0 %v608, 53
      %v610 = vpop.permute.xlu0 %609
      %vm612 = vcmask 882432
      %613 = vst.msk [vmem:[#allocation2] sm:$0x3f] %vm612, %v610
      %v614 = vld [vmem:[%s192] sm:$0xf]
      %v615 = vld [vmem:[%s192 + $0x4] sm:$0x3]
      %v618 = vunpack.c.l.b16 %v614
      %v619 = vunpack.c.l.b16 %v615
      %v620 = vpack.c.b16 %v619, %v618
      %621 = vrot.lane.b32.xlu0 %v620, 66
      %v622 = vpop.permute.xlu0 %621
      %624 = vst.msk [vmem:[%s219] sm:$0x3f] %vm612, %v622
      %v625 = vld [vmem:[%s192] sm:$0xf]
      %v626 = vld [vmem:[%s192 + $0x4] sm:$0x7]
      %v629 = vunpack.c.l.b16 %v625
      %v630 = vunpack.c.l.b16 %v626
      %v631 = vpack.c.b16 %v630, %v629
      %v633 = vshrl.u32 %v631, 16
      %v635 = vshll.u32 %v631, 16
      %v637 = vrot.slane %v635, 1
      %v638 = vor.u32 %v633, %v637
      %639 = vrot.lane.b32.xlu0 %v638, 81
      %v640 = vpop.permute.xlu0 %639
      %642 = vst.msk [vmem:[%s231] sm:$0x3f] %vm612, %v640
      %v643 = vld [vmem:[%s192] sm:$0xf]
      %v644 = vld [vmem:[%s192 + $0x4] sm:$0x7]
      %v647 = vunpack.c.l.b16 %v643
      %v648 = vunpack.c.l.b16 %v644
      %v649 = vpack.c.b16 %v648, %v647
      %v651 = vshrl.u32 %v649, 16
      %v653 = vshll.u32 %v649, 16
      %v655 = vrot.slane %v653, 1
      %v656 = vor.u32 %v651, %v655
      %657 = vrot.lane.b32.xlu0 %v656, 94
      %v658 = vpop.permute.xlu0 %657
      %660 = vst.msk [vmem:[%s243] sm:$0x3f] %vm612, %v658
      %v661 = vld [vmem:[%s192] sm:$0xf]
      %v662 = vld [vmem:[%s192 + $0x4] sm:$0x3]
      %v665 = vunpack.c.l.b16 %v661
      %v666 = vunpack.c.l.b16 %v662
      %v667 = vpack.c.b16 %v666, %v665
      %668 = vrot.lane.b32.xlu0 %v667, 78
      %v669 = vpop.permute.xlu0 %668
      %vm671 = vcmask 980832
      %672 = vst.msk [vmem:[#allocation2] sm:$0x3f] %vm671, %v669
      %v673 = vld [vmem:[%s192] sm:$0xf]
      %v674 = vld [vmem:[%s192 + $0x4] sm:$0x3]
      %v677 = vunpack.c.l.b16 %v673
      %v678 = vunpack.c.l.b16 %v674
      %v679 = vpack.c.b16 %v678, %v677
      %680 = vrot.lane.b32.xlu0 %v679, 64
      %v681 = vpop.permute.xlu0 %680
      %683 = vst.msk [vmem:[%s219] sm:$0x3f] %vm671, %v681
      %v684 = vld [vmem:[%s192] sm:$0xf]
      %v685 = vld [vmem:[%s192 + $0x4] sm:$0x7]
      %v688 = vunpack.c.l.b16 %v684
      %v689 = vunpack.c.l.b16 %v685
      %v690 = vpack.c.b16 %v689, %v688
      %v692 = vshrl.u32 %v690, 16
      %v694 = vshll.u32 %v690, 16
      %v696 = vrot.slane %v694, 1
      %v697 = vor.u32 %v692, %v696
      %698 = vrot.lane.b32.xlu0 %v697, 106
      %v699 = vpop.permute.xlu0 %698
      %701 = vst.msk [vmem:[%s231] sm:$0x3f] %vm671, %v699
      %v702 = vld [vmem:[%s192] sm:$0xf]
      %v703 = vld [vmem:[%s192 + $0x4] sm:$0x7]
      %v706 = vunpack.c.l.b16 %v702
      %v707 = vunpack.c.l.b16 %v703
      %v708 = vpack.c.b16 %v707, %v706
      %v710 = vshrl.u32 %v708, 16
      %v712 = vshll.u32 %v708, 16
      %v714 = vrot.slane %v712, 1
      %v715 = vor.u32 %v710, %v714
      %716 = vrot.lane.b32.xlu0 %v715, 92
      %v717 = vpop.permute.xlu0 %716
      %719 = vst.msk [vmem:[%s243] sm:$0x3f] %vm671, %v717
      %v720 = vld [vmem:[%s192] sm:$0xf]
      %v721 = vld [vmem:[%s192 + $0x4] sm:$0x7]
      %v724 = vunpack.c.l.b16 %v720
      %v725 = vunpack.c.l.b16 %v721
      %v726 = vpack.c.b16 %v725, %v724
      %v728 = vshrl.u32 %v726, 16
      %v730 = vshll.u32 %v726, 16
      %v732 = vrot.slane %v730, 1
      %v733 = vor.u32 %v728, %v732
      %734 = vrot.lane.b32.xlu0 %v733, 120
      %v735 = vpop.permute.xlu0 %734
      %vm737 = vcmask 1046464
      %738 = vst.msk [vmem:[#allocation2] sm:$0x3f] %vm737, %v735
      %vm739 = vcmask 29696
      %740 = vst.msk [vmem:[#allocation2 + $0x8] sm:$0x3f] %vm739, %v735
      %v741 = vld [vmem:[%s192] sm:$0xf]
      %v742 = vld [vmem:[%s192 + $0x4] sm:$0x7]
      %v745 = vunpack.c.l.b16 %v741
      %v746 = vunpack.c.l.b16 %v742
      %v747 = vpack.c.b16 %v746, %v745
      %v749 = vshrl.u32 %v747, 16
      %v751 = vshll.u32 %v747, 16
      %v753 = vrot.slane %v751, 1
      %v754 = vor.u32 %v749, %v753
      %755 = vrot.lane.b32.xlu0 %v754, 106
      %v756 = vpop.permute.xlu0 %755
      %758 = vst.msk [vmem:[%s219] sm:$0x3f] %vm737, %v756
      %759 = vst.msk [vmem:[%s219 + $0x8] sm:$0x3f] %vm739, %v756
      %v760 = vld [vmem:[%s192] sm:$0xf]
      %v761 = vld [vmem:[%s192 + $0x4] sm:$0x7]
      %v764 = vunpack.c.l.b16 %v760
      %v765 = vunpack.c.l.b16 %v761
      %v766 = vpack.c.b16 %v765, %v764
      %v768 = vshrl.u32 %v766, 16
      %v770 = vshll.u32 %v766, 16
      %v772 = vrot.slane %v770, 1
      %v773 = vor.u32 %v768, %v772
      %774 = vrot.lane.b32.xlu0 %v773, 92
      %v775 = vpop.permute.xlu0 %774
      %777 = vst.msk [vmem:[%s231] sm:$0x3f] %vm737, %v775
      %778 = vst.msk [vmem:[%s231 + $0x8] sm:$0x3f] %vm739, %v775
      %v779 = vld [vmem:[%s192] sm:$0xf]
      %v780 = vld [vmem:[%s192 + $0x4] sm:$0x7]
      %v783 = vunpack.c.l.b16 %v779
      %v784 = vunpack.c.l.b16 %v780
      %v785 = vpack.c.b16 %v784, %v783
      %v787 = vshrl.u32 %v785, 16
      %v789 = vshll.u32 %v785, 16
      %v791 = vrot.slane %v789, 1
      %v792 = vor.u32 %v787, %v791
      %793 = vrot.lane.b32.xlu0 %v792, 78
      %v794 = vpop.permute.xlu0 %793
      %796 = vst.msk [vmem:[%s243] sm:$0x3f] %vm737, %v794
      %797 = vst.msk [vmem:[%s243 + $0x8] sm:$0x3f] %vm739, %v794
      %v798 = vld [vmem:[%s192] sm:$0xf]
      %v799 = vld [vmem:[%s192 + $0x4] sm:$0x7]
      %v802 = vunpack.c.l.b16 %v798
      %v803 = vunpack.c.l.b16 %v799
      %v804 = vpack.c.b16 %v803, %v802
      %v806 = vshrl.u32 %v804, 16
      %v808 = vshll.u32 %v804, 16
      %v810 = vrot.slane %v808, 1
      %v811 = vor.u32 %v806, %v810
      %812 = vrot.lane.b32.xlu0 %v811, 118
      %v813 = vpop.permute.xlu0 %812
      %vm815 = vcmask 128032
      %816 = vst.msk [vmem:[#allocation2 + $0x8] sm:$0x3f] %vm815, %v813
      %v817 = vld [vmem:[%s192] sm:$0xf]
      %v818 = vld [vmem:[%s192 + $0x4] sm:$0x7]
      %v821 = vunpack.c.l.b16 %v817
      %v822 = vunpack.c.l.b16 %v818
      %v823 = vpack.c.b16 %v822, %v821
      %v825 = vshrl.u32 %v823, 16
      %v827 = vshll.u32 %v823, 16
      %v829 = vrot.slane %v827, 1
      %v830 = vor.u32 %v825, %v829
      %831 = vrot.lane.b32.xlu0 %v830, 3
      %v832 = vpop.permute.xlu0 %831
      %834 = vst.msk [vmem:[%s219 + $0x8] sm:$0x3f] %vm815, %v832
      %v835 = vld [vmem:[%s192] sm:$0xf]
      %v836 = vld [vmem:[%s192 + $0x4] sm:$0x7]
      %v839 = vunpack.c.l.b16 %v835
      %v840 = vunpack.c.l.b16 %v836
      %v841 = vpack.c.b16 %v840, %v839
      %v843 = vshrl.u32 %v841, 16
      %v845 = vshll.u32 %v841, 16
      %v847 = vrot.slane %v845, 1
      %v848 = vor.u32 %v843, %v847
      %849 = vrot.lane.b32.xlu0 %v848, 90
      %v850 = vpop.permute.xlu0 %849
      %852 = vst.msk [vmem:[%s231 + $0x8] sm:$0x3f] %vm815, %v850
      %v853 = vld [vmem:[%s192] sm:$0xf]
      %v854 = vld [vmem:[%s192 + $0x4] sm:$0x7]
      %v857 = vunpack.c.l.b16 %v853
      %v858 = vunpack.c.l.b16 %v854
      %v859 = vpack.c.b16 %v858, %v857
      %v861 = vshrl.u32 %v859, 16
      %v863 = vshll.u32 %v859, 16
      %v865 = vrot.slane %v863, 1
      %v866 = vor.u32 %v861, %v865
      %867 = vrot.lane.b32.xlu0 %v866, 103
      %v868 = vpop.permute.xlu0 %867
      %870 = vst.msk [vmem:[%s243 + $0x8] sm:$0x3f] %vm815, %v868
      %v871 = vld [vmem:[%s192] sm:$0xf]
      %v872 = vld [vmem:[%s192 + $0x4] sm:$0x7]
      %v875 = vunpack.c.l.b16 %v871
      %v876 = vunpack.c.l.b16 %v872
      %v877 = vpack.c.b16 %v876, %v875
      %v879 = vshrl.u32 %v877, 16
      %v881 = vshll.u32 %v877, 16
      %v883 = vrot.slane %v881, 1
      %v884 = vor.u32 %v879, %v883
      %885 = vrot.lane.b32.xlu0 %v884, 15
      %v886 = vpop.permute.xlu0 %885
      %vm888 = vcmask 226432
      %889 = vst.msk [vmem:[#allocation2 + $0x8] sm:$0x3f] %vm888, %v886
      %v890 = vld [vmem:[%s192] sm:$0xf]
      %v891 = vld [vmem:[%s192 + $0x4] sm:$0x7]
      %v894 = vunpack.c.l.b16 %v890
      %v895 = vunpack.c.l.b16 %v891
      %v896 = vpack.c.b16 %v895, %v894
      %v898 = vshrl.u32 %v896, 16
      %v900 = vshll.u32 %v896, 16
      %v902 = vrot.slane %v900, 1
      %v903 = vor.u32 %v898, %v902
      %904 = vrot.lane.b32.xlu0 %v903, 1
      %v905 = vpop.permute.xlu0 %904
      %907 = vst.msk [vmem:[%s219 + $0x8] sm:$0x3f] %vm888, %v905
      %v908 = vld [vmem:[%s192] sm:$0xf]
      %v909 = vld [vmem:[%s192 + $0x4] sm:$0x7]
      %v912 = vunpack.c.l.b16 %v908
      %v913 = vunpack.c.l.b16 %v909
      %v914 = vpack.c.b16 %v913, %v912
      %v916 = vshrl.u32 %v914, 16
      %v918 = vshll.u32 %v914, 16
      %v920 = vrot.slane %v918, 1
      %v921 = vor.u32 %v916, %v920
      %922 = vrot.lane.b32.xlu0 %v921, 115
      %v923 = vpop.permute.xlu0 %922
      %925 = vst.msk [vmem:[%s231 + $0x8] sm:$0x3f] %vm888, %v923
      %v926 = vld [vmem:[%s192] sm:$0xf]
      %v927 = vld [vmem:[%s192 + $0x4] sm:$0x7]
      %v930 = vunpack.c.l.b16 %v926
      %v931 = vunpack.c.l.b16 %v927
      %v932 = vpack.c.b16 %v931, %v930
      %v934 = vshrl.u32 %v932, 16
      %v936 = vshll.u32 %v932, 16
      %v938 = vrot.slane %v936, 1
      %v939 = vor.u32 %v934, %v938
      %940 = vrot.lane.b32.xlu0 %v939, 101
      %v941 = vpop.permute.xlu0 %940
      %943 = vst.msk [vmem:[%s243 + $0x8] sm:$0x3f] %vm888, %v941
      %v944 = vld [vmem:[%s192] sm:$0xf]
      %v945 = vld [vmem:[%s192 + $0x4] sm:$0x7]
      %v948 = vunpack.c.l.b16 %v944
      %v949 = vunpack.c.l.b16 %v945
      %v950 = vpack.c.b16 %v949, %v948
      %v952 = vshrl.u32 %v950, 16
      %v954 = vshll.u32 %v950, 16
      %v956 = vrot.slane %v954, 1
      %v957 = vor.u32 %v952, %v956
      %958 = vrot.lane.b32.xlu0 %v957, 13
      %v959 = vpop.permute.xlu0 %958
      %vm961 = vcmask 324832
      %962 = vst.msk [vmem:[#allocation2 + $0x8] sm:$0x3f] %vm961, %v959
      %v963 = vld [vmem:[%s192] sm:$0xf]
      %v964 = vld [vmem:[%s192 + $0x4] sm:$0x7]
      %v967 = vunpack.c.l.b16 %v963
      %v968 = vunpack.c.l.b16 %v964
      %v969 = vpack.c.b16 %v968, %v967
      %v971 = vshrl.u32 %v969, 16
      %v973 = vshll.u32 %v969, 16
      %v975 = vrot.slane %v973, 1
      %v976 = vor.u32 %v971, %v975
      %977 = vrot.lane.b32.xlu0 %v976, 26
      %v978 = vpop.permute.xlu0 %977
      %980 = vst.msk [vmem:[%s219 + $0x8] sm:$0x3f] %vm961, %v978
      %v981 = vld [vmem:[%s192] sm:$0xf]
      %v982 = vld [vmem:[%s192 + $0x4] sm:$0x7]
      %v985 = vunpack.c.l.b16 %v981
      %v986 = vunpack.c.l.b16 %v982
      %v987 = vpack.c.b16 %v986, %v985
      %v989 = vshrl.u32 %v987, 16
      %v991 = vshll.u32 %v987, 16
      %v993 = vrot.slane %v991, 1
      %v994 = vor.u32 %v989, %v993
      %995 = vrot.lane.b32.xlu0 %v994, 113
      %v996 = vpop.permute.xlu0 %995
      %998 = vst.msk [vmem:[%s231 + $0x8] sm:$0x3f] %vm961, %v996
      %v999 = vld [vmem:[%s192] sm:$0xf]
      %v1000 = vld [vmem:[%s192 + $0x4] sm:$0x7]
      %v1003 = vunpack.c.l.b16 %v999
      %v1004 = vunpack.c.l.b16 %v1000
      %v1005 = vpack.c.b16 %v1004, %v1003
      %v1007 = vshrl.u32 %v1005, 16
      %v1009 = vshll.u32 %v1005, 16
      %v1011 = vrot.slane %v1009, 1
      %v1012 = vor.u32 %v1007, %v1011
      %1013 = vrot.lane.b32.xlu0 %v1012, 126
      %v1014 = vpop.permute.xlu0 %1013
      %1016 = vst.msk [vmem:[%s243 + $0x8] sm:$0x3f] %vm961, %v1014
      %v1017 = vld [vmem:[%s192] sm:$0xf]
      %v1018 = vld [vmem:[%s192 + $0x4] sm:$0x7]
      %v1021 = vunpack.c.l.b16 %v1017
      %v1022 = vunpack.c.l.b16 %v1018
      %v1023 = vpack.c.b16 %v1022, %v1021
      %v1025 = vshrl.u32 %v1023, 16
      %v1027 = vshll.u32 %v1023, 16
      %v1029 = vrot.slane %v1027, 1
      %v1030 = vor.u32 %v1025, %v1029
      %1031 = vrot.lane.b32.xlu0 %v1030, 38
      %v1032 = vpop.permute.xlu0 %1031
      %vm1034 = vcmask 423232
      %1035 = vst.msk [vmem:[#allocation2 + $0x8] sm:$0x3f] %vm1034, %v1032
      %v1036 = vld [vmem:[%s192] sm:$0xf]
      %v1037 = vld [vmem:[%s192 + $0x4] sm:$0x7]
      %v1040 = vunpack.c.l.b16 %v1036
      %v1041 = vunpack.c.l.b16 %v1037
      %v1042 = vpack.c.b16 %v1041, %v1040
      %v1044 = vshrl.u32 %v1042, 16
      %v1046 = vshll.u32 %v1042, 16
      %v1048 = vrot.slane %v1046, 1
      %v1049 = vor.u32 %v1044, %v1048
      %1050 = vrot.lane.b32.xlu0 %v1049, 24
      %v1051 = vpop.permute.xlu0 %1050
      %1053 = vst.msk [vmem:[%s219 + $0x8] sm:$0x3f] %vm1034, %v1051
      %v1054 = vld [vmem:[%s192] sm:$0xf]
      %v1055 = vld [vmem:[%s192 + $0x4] sm:$0x7]
      %v1058 = vunpack.c.l.b16 %v1054
      %v1059 = vunpack.c.l.b16 %v1055
      %v1060 = vpack.c.b16 %v1059, %v1058
      %v1062 = vshrl.u32 %v1060, 16
      %v1064 = vshll.u32 %v1060, 16
      %v1066 = vrot.slane %v1064, 1
      %v1067 = vor.u32 %v1062, %v1066
      %1068 = vrot.lane.b32.xlu0 %v1067, 10
      %v1069 = vpop.permute.xlu0 %1068
      %1071 = vst.msk [vmem:[%s231 + $0x8] sm:$0x3f] %vm1034, %v1069
      %v1072 = vld [vmem:[%s192] sm:$0xf]
      %v1073 = vld [vmem:[%s192 + $0x4] sm:$0x7]
      %v1076 = vunpack.c.l.b16 %v1072
      %v1077 = vunpack.c.l.b16 %v1073
      %v1078 = vpack.c.b16 %v1077, %v1076
      %v1080 = vshrl.u32 %v1078, 16
      %v1082 = vshll.u32 %v1078, 16
      %v1084 = vrot.slane %v1082, 1
      %v1085 = vor.u32 %v1080, %v1084
      %1086 = vrot.lane.b32.xlu0 %v1085, 124
      %v1087 = vpop.permute.xlu0 %1086
      %1089 = vst.msk [vmem:[%s243 + $0x8] sm:$0x3f] %vm1034, %v1087
      %v1090 = vld [vmem:[%s192] sm:$0xf]
      %v1091 = vld [vmem:[%s192 + $0x4] sm:$0x7]
      %v1094 = vunpack.c.l.b16 %v1090
      %v1095 = vunpack.c.l.b16 %v1091
      %v1096 = vpack.c.b16 %v1095, %v1094
      %v1098 = vshrl.u32 %v1096, 16
      %v1100 = vshll.u32 %v1096, 16
      %v1102 = vrot.slane %v1100, 1
      %v1103 = vor.u32 %v1098, %v1102
      %1104 = vrot.lane.b32.xlu0 %v1103, 24
      %v1105 = vpop.permute.xlu0 %1104
      %vm1107 = vcmask 521632
      %1108 = vst.msk [vmem:[#allocation2 + $0x8] sm:$0x3f] %vm1107, %v1105
      %v1109 = vld [vmem:[%s192] sm:$0xf]
      %v1110 = vld [vmem:[%s192 + $0x4] sm:$0x7]
      %v1113 = vunpack.c.l.b16 %v1109
      %v1114 = vunpack.c.l.b16 %v1110
      %v1115 = vpack.c.b16 %v1114, %v1113
      %v1117 = vshrl.u32 %v1115, 16
      %v1119 = vshll.u32 %v1115, 16
      %v1121 = vrot.slane %v1119, 1
      %v1122 = vor.u32 %v1117, %v1121
      %1123 = vrot.lane.b32.xlu0 %v1122, 10
      %v1124 = vpop.permute.xlu0 %1123
      %1126 = vst.msk [vmem:[%s219 + $0x8] sm:$0x3f] %vm1107, %v1124
      %v1127 = vld [vmem:[%s192] sm:$0xe]
      %v1128 = vld [vmem:[%s192 + $0x4] sm:$0x7]
      %v1131 = vunpack.c.l.b16 %v1127
      %v1132 = vunpack.c.l.b16 %v1128
      %v1133 = vpack.c.b16 %v1132, %v1131
      %v1134 = vrot.slane %v1133, 1
      %1135 = vrot.lane.b32.xlu0 %v1134, 52
      %v1136 = vpop.permute.xlu0 %1135
      %1138 = vst.msk [vmem:[%s231 + $0x8] sm:$0x3f] %vm1107, %v1136
      %v1139 = vld [vmem:[%s192] sm:$0xe]
      %v1140 = vld [vmem:[%s192 + $0x4] sm:$0x7]
      %v1143 = vunpack.c.l.b16 %v1139
      %v1144 = vunpack.c.l.b16 %v1140
      %v1145 = vpack.c.b16 %v1144, %v1143
      %v1146 = vrot.slane %v1145, 1
      %1147 = vrot.lane.b32.xlu0 %v1146, 38
      %v1148 = vpop.permute.xlu0 %1147
      %1150 = vst.msk [vmem:[%s243 + $0x8] sm:$0x3f] %vm1107, %v1148
      %v1151 = vld [vmem:[%s192] sm:$0xf]
      %v1152 = vld [vmem:[%s192 + $0x4] sm:$0x7]
      %v1155 = vunpack.c.l.b16 %v1151
      %v1156 = vunpack.c.l.b16 %v1152
      %v1157 = vpack.c.b16 %v1156, %v1155
      %v1159 = vshrl.u32 %v1157, 16
      %v1161 = vshll.u32 %v1157, 16
      %v1163 = vrot.slane %v1161, 1
      %v1164 = vor.u32 %v1159, %v1163
      %1165 = vrot.lane.b32.xlu0 %v1164, 22
      %v1166 = vpop.permute.xlu0 %1165
      %vm1168 = vcmask 620032
      %1169 = vst.msk [vmem:[#allocation2 + $0x8] sm:$0x3f] %vm1168, %v1166
      %v1170 = vld [vmem:[%s192] sm:$0xf]
      %v1171 = vld [vmem:[%s192 + $0x4] sm:$0x7]
      %v1174 = vunpack.c.l.b16 %v1170
      %v1175 = vunpack.c.l.b16 %v1171
      %v1176 = vpack.c.b16 %v1175, %v1174
      %v1178 = vshrl.u32 %v1176, 16
      %v1180 = vshll.u32 %v1176, 16
      %v1182 = vrot.slane %v1180, 1
      %v1183 = vor.u32 %v1178, %v1182
      %1184 = vrot.lane.b32.xlu0 %v1183, 35
      %v1185 = vpop.permute.xlu0 %1184
      %1187 = vst.msk [vmem:[%s219 + $0x8] sm:$0x3f] %vm1168, %v1185
      %v1188 = vld [vmem:[%s192] sm:$0xe]
      %v1189 = vld [vmem:[%s192 + $0x4] sm:$0x7]
      %v1192 = vunpack.c.l.b16 %v1188
      %v1193 = vunpack.c.l.b16 %v1189
      %v1194 = vpack.c.b16 %v1193, %v1192
      %v1195 = vrot.slane %v1194, 1
      %1196 = vrot.lane.b32.xlu0 %v1195, 50
      %v1197 = vpop.permute.xlu0 %1196
      %1199 = vst.msk [vmem:[%s231 + $0x8] sm:$0x3f] %vm1168, %v1197
      %v1200 = vld [vmem:[%s192] sm:$0xe]
      %v1201 = vld [vmem:[%s192 + $0x4] sm:$0x7]
      %v1204 = vunpack.c.l.b16 %v1200
      %v1205 = vunpack.c.l.b16 %v1201
      %v1206 = vpack.c.b16 %v1205, %v1204
      %v1207 = vrot.slane %v1206, 1
      %1208 = vrot.lane.b32.xlu0 %v1207, 63
      %v1209 = vpop.permute.xlu0 %1208
      %1211 = vst.msk [vmem:[%s243 + $0x8] sm:$0x3f] %vm1168, %v1209
      %v1212 = vld [vmem:[%s192] sm:$0xf]
      %v1213 = vld [vmem:[%s192 + $0x4] sm:$0x7]
      %v1216 = vunpack.c.l.b16 %v1212
      %v1217 = vunpack.c.l.b16 %v1213
      %v1218 = vpack.c.b16 %v1217, %v1216
      %v1220 = vshrl.u32 %v1218, 16
      %v1222 = vshll.u32 %v1218, 16
      %v1224 = vrot.slane %v1222, 1
      %v1225 = vor.u32 %v1220, %v1224
      %1226 = vrot.lane.b32.xlu0 %v1225, 47
      %v1227 = vpop.permute.xlu0 %1226
      %vm1229 = vcmask 718432
      %1230 = vst.msk [vmem:[#allocation2 + $0x8] sm:$0x3f] %vm1229, %v1227
      %v1231 = vld [vmem:[%s192] sm:$0xf]
      %v1232 = vld [vmem:[%s192 + $0x4] sm:$0x7]
      %v1235 = vunpack.c.l.b16 %v1231
      %v1236 = vunpack.c.l.b16 %v1232
      %v1237 = vpack.c.b16 %v1236, %v1235
      %v1239 = vshrl.u32 %v1237, 16
      %v1241 = vshll.u32 %v1237, 16
      %v1243 = vrot.slane %v1241, 1
      %v1244 = vor.u32 %v1239, %v1243
      %1245 = vrot.lane.b32.xlu0 %v1244, 33
      %v1246 = vpop.permute.xlu0 %1245
      %1248 = vst.msk [vmem:[%s219 + $0x8] sm:$0x3f] %vm1229, %v1246
      %v1249 = vld [vmem:[%s192] sm:$0xe]
      %v1250 = vld [vmem:[%s192 + $0x4] sm:$0x7]
      %v1253 = vunpack.c.l.b16 %v1249
      %v1254 = vunpack.c.l.b16 %v1250
      %v1255 = vpack.c.b16 %v1254, %v1253
      %v1256 = vrot.slane %v1255, 1
      %1257 = vrot.lane.b32.xlu0 %v1256, 75
      %v1258 = vpop.permute.xlu0 %1257
      %1260 = vst.msk [vmem:[%s231 + $0x8] sm:$0x3f] %vm1229, %v1258
      %v1261 = vld [vmem:[%s192] sm:$0xe]
      %v1262 = vld [vmem:[%s192 + $0x4] sm:$0x7]
      %v1265 = vunpack.c.l.b16 %v1261
      %v1266 = vunpack.c.l.b16 %v1262
      %v1267 = vpack.c.b16 %v1266, %v1265
      %v1268 = vrot.slane %v1267, 1
      %1269 = vrot.lane.b32.xlu0 %v1268, 61
      %v1270 = vpop.permute.xlu0 %1269
      %1272 = vst.msk [vmem:[%s243 + $0x8] sm:$0x3f] %vm1229, %v1270
      %v1273 = vld [vmem:[%s192] sm:$0xf]
      %v1274 = vld [vmem:[%s192 + $0x4] sm:$0x7]
      %v1277 = vunpack.c.l.b16 %v1273
      %v1278 = vunpack.c.l.b16 %v1274
      %v1279 = vpack.c.b16 %v1278, %v1277
      %v1281 = vshrl.u32 %v1279, 16
      %v1283 = vshll.u32 %v1279, 16
      %v1285 = vrot.slane %v1283, 1
      %v1286 = vor.u32 %v1281, %v1285
      %1287 = vrot.lane.b32.xlu0 %v1286, 45
      %v1288 = vpop.permute.xlu0 %1287
      %vm1290 = vcmask 816832
      %1291 = vst.msk [vmem:[#allocation2 + $0x8] sm:$0x3f] %vm1290, %v1288
      %v1292 = vld [vmem:[%s192] sm:$0xf]
      %v1293 = vld [vmem:[%s192 + $0x4] sm:$0x7]
      %v1296 = vunpack.c.l.b16 %v1292
      %v1297 = vunpack.c.l.b16 %v1293
      %v1298 = vpack.c.b16 %v1297, %v1296
      %v1300 = vshrl.u32 %v1298, 16
      %v1302 = vshll.u32 %v1298, 16
      %v1304 = vrot.slane %v1302, 1
      %v1305 = vor.u32 %v1300, %v1304
      %1306 = vrot.lane.b32.xlu0 %v1305, 58
      %v1307 = vpop.permute.xlu0 %1306
      %1309 = vst.msk [vmem:[%s219 + $0x8] sm:$0x3f] %vm1290, %v1307
      %v1310 = vld [vmem:[%s192] sm:$0xe]
      %v1311 = vld [vmem:[%s192 + $0x4] sm:$0x7]
      %v1314 = vunpack.c.l.b16 %v1310
      %v1315 = vunpack.c.l.b16 %v1311
      %v1316 = vpack.c.b16 %v1315, %v1314
      %v1317 = vrot.slane %v1316, 1
      %1318 = vrot.lane.b32.xlu0 %v1317, 73
      %v1319 = vpop.permute.xlu0 %1318
      %1321 = vst.msk [vmem:[%s231 + $0x8] sm:$0x3f] %vm1290, %v1319
      %v1322 = vld [vmem:[%s192] sm:$0xe]
      %v1323 = vld [vmem:[%s192 + $0x4] sm:$0x7]
      %v1326 = vunpack.c.l.b16 %v1322
      %v1327 = vunpack.c.l.b16 %v1323
      %v1328 = vpack.c.b16 %v1327, %v1326
      %v1329 = vrot.slane %v1328, 1
      %1330 = vrot.lane.b32.xlu0 %v1329, 86
      %v1331 = vpop.permute.xlu0 %1330
      %1333 = vst.msk [vmem:[%s243 + $0x8] sm:$0x3f] %vm1290, %v1331
      %v1334 = vld [vmem:[%s192] sm:$0xf]
      %v1335 = vld [vmem:[%s192 + $0x4] sm:$0x7]
      %v1338 = vunpack.c.l.b16 %v1334
      %v1339 = vunpack.c.l.b16 %v1335
      %v1340 = vpack.c.b16 %v1339, %v1338
      %v1342 = vshrl.u32 %v1340, 16
      %v1344 = vshll.u32 %v1340, 16
      %v1346 = vrot.slane %v1344, 1
      %v1347 = vor.u32 %v1342, %v1346
      %1348 = vrot.lane.b32.xlu0 %v1347, 70
      %v1349 = vpop.permute.xlu0 %1348
      %vm1351 = vcmask 915232
      %1352 = vst.msk [vmem:[#allocation2 + $0x8] sm:$0x3f] %vm1351, %v1349
      %v1353 = vld [vmem:[%s192] sm:$0xf]
      %v1354 = vld [vmem:[%s192 + $0x4] sm:$0x7]
      %v1357 = vunpack.c.l.b16 %v1353
      %v1358 = vunpack.c.l.b16 %v1354
      %v1359 = vpack.c.b16 %v1358, %v1357
      %v1361 = vshrl.u32 %v1359, 16
      %v1363 = vshll.u32 %v1359, 16
      %v1365 = vrot.slane %v1363, 1
      %v1366 = vor.u32 %v1361, %v1365
      %1367 = vrot.lane.b32.xlu0 %v1366, 56
      %v1368 = vpop.permute.xlu0 %1367
      %1370 = vst.msk [vmem:[%s219 + $0x8] sm:$0x3f] %vm1351, %v1368
      %v1371 = vld [vmem:[%s192] sm:$0xe]
      %v1372 = vld [vmem:[%s192 + $0x4] sm:$0x7]
      %v1375 = vunpack.c.l.b16 %v1371
      %v1376 = vunpack.c.l.b16 %v1372
      %v1377 = vpack.c.b16 %v1376, %v1375
      %v1378 = vrot.slane %v1377, 1
      %1379 = vrot.lane.b32.xlu0 %v1378, 98
      %v1380 = vpop.permute.xlu0 %1379
      %1382 = vst.msk [vmem:[%s231 + $0x8] sm:$0x3f] %vm1351, %v1380
      %v1383 = vld [vmem:[%s192] sm:$0xe]
      %v1384 = vld [vmem:[%s192 + $0x4] sm:$0x7]
      %v1387 = vunpack.c.l.b16 %v1383
      %v1388 = vunpack.c.l.b16 %v1384
      %v1389 = vpack.c.b16 %v1388, %v1387
      %v1390 = vrot.slane %v1389, 1
      %1391 = vrot.lane.b32.xlu0 %v1390, 84
      %v1392 = vpop.permute.xlu0 %1391
      %1394 = vst.msk [vmem:[%s243 + $0x8] sm:$0x3f] %vm1351, %v1392
      %v1395 = vld [vmem:[%s192] sm:$0xe]
      %v1396 = vld [vmem:[%s192 + $0x4] sm:$0x7]
      %v1399 = vunpack.c.l.b16 %v1395
      %v1400 = vunpack.c.l.b16 %v1396
      %v1401 = vpack.c.b16 %v1400, %v1399
      %v1402 = vrot.slane %v1401, 1
      %1403 = vrot.lane.b32.xlu0 %v1402, 112
      %v1404 = vpop.permute.xlu0 %1403
      %vm1406 = vcmask 1013632
      %1407 = vst.msk [vmem:[#allocation2 + $0x8] sm:$0x3f] %vm1406, %v1404
      %v1408 = vld [vmem:[%s192] sm:$0xe]
      %v1409 = vld [vmem:[%s192 + $0x4] sm:$0x7]
      %v1412 = vunpack.c.l.b16 %v1408
      %v1413 = vunpack.c.l.b16 %v1409
      %v1414 = vpack.c.b16 %v1413, %v1412
      %v1415 = vrot.slane %v1414, 1
      %1416 = vrot.lane.b32.xlu0 %v1415, 98
      %v1417 = vpop.permute.xlu0 %1416
      %1419 = vst.msk [vmem:[%s219 + $0x8] sm:$0x3f] %vm1406, %v1417
      %v1420 = vld [vmem:[%s192] sm:$0xe]
      %v1421 = vld [vmem:[%s192 + $0x4] sm:$0x7]
      %v1424 = vunpack.c.l.b16 %v1420
      %v1425 = vunpack.c.l.b16 %v1421
      %v1426 = vpack.c.b16 %v1425, %v1424
      %v1427 = vrot.slane %v1426, 1
      %1428 = vrot.lane.b32.xlu0 %v1427, 84
      %v1429 = vpop.permute.xlu0 %1428
      %1431 = vst.msk [vmem:[%s231 + $0x8] sm:$0x3f] %vm1406, %v1429
      %v1432 = vld [vmem:[%s192] sm:$0xe]
      %v1433 = vld [vmem:[%s192 + $0x4] sm:$0x7]
      %v1436 = vunpack.c.l.b16 %v1432
      %v1437 = vunpack.c.l.b16 %v1433
      %v1438 = vpack.c.b16 %v1437, %v1436
      %v1439 = vrot.slane %v1438, 1
      %1440 = vrot.lane.b32.xlu0 %v1439, 70
      %v1441 = vpop.permute.xlu0 %1440
      %1443 = vst.msk [vmem:[%s243 + $0x8] sm:$0x3f] %vm1406, %v1441
      %v1444 = vld [vmem:[%s192] sm:$0xe]
      %v1445 = vld [vmem:[%s192 + $0x4] sm:$0x7]
      %v1448 = vunpack.c.l.b16 %v1444
      %v1449 = vunpack.c.l.b16 %v1445
      %v1450 = vpack.c.b16 %v1449, %v1448
      %v1451 = vrot.slane %v1450, 1
      %1452 = vrot.lane.b32.xlu0 %v1451, 110
      %v1453 = vpop.permute.xlu0 %1452
      %vm1455 = vcmask 1046496
      %1456 = vst.msk [vmem:[#allocation2 + $0x8] sm:$0x3f] %vm1455, %v1453
      %vm1457 = vcmask 62464
      %1458 = vst.msk [vmem:[#allocation2 + $0x10] sm:$0x3f] %vm1457, %v1453
      %v1459 = vld [vmem:[%s192] sm:$0xe]
      %v1460 = vld [vmem:[%s192 + $0x4] sm:$0x7]
      %v1463 = vunpack.c.l.b16 %v1459
      %v1464 = vunpack.c.l.b16 %v1460
      %v1465 = vpack.c.b16 %v1464, %v1463
      %v1466 = vrot.slane %v1465, 1
      %1467 = vrot.lane.b32.xlu0 %v1466, 123
      %v1468 = vpop.permute.xlu0 %1467
      %1470 = vst.msk [vmem:[%s219 + $0x8] sm:$0x3f] %vm1455, %v1468
      %1471 = vst.msk [vmem:[%s219 + $0x10] sm:$0x3f] %vm1457, %v1468
      %v1472 = vld [vmem:[%s192] sm:$0xe]
      %v1473 = vld [vmem:[%s192 + $0x4] sm:$0x7]
      %v1476 = vunpack.c.l.b16 %v1472
      %v1477 = vunpack.c.l.b16 %v1473
      %v1478 = vpack.c.b16 %v1477, %v1476
      %v1479 = vrot.slane %v1478, 1
      %1480 = vrot.lane.b32.xlu0 %v1479, 82
      %v1481 = vpop.permute.xlu0 %1480
      %1483 = vst.msk [vmem:[%s231 + $0x8] sm:$0x3f] %vm1455, %v1481
      %1484 = vst.msk [vmem:[%s231 + $0x10] sm:$0x3f] %vm1457, %v1481
      %v1485 = vld [vmem:[%s192] sm:$0xe]
      %v1486 = vld [vmem:[%s192 + $0x4] sm:$0x7]
      %v1489 = vunpack.c.l.b16 %v1485
      %v1490 = vunpack.c.l.b16 %v1486
      %v1491 = vpack.c.b16 %v1490, %v1489
      %v1492 = vrot.slane %v1491, 1
      %1493 = vrot.lane.b32.xlu0 %v1492, 95
      %v1494 = vpop.permute.xlu0 %1493
      %1496 = vst.msk [vmem:[%s243 + $0x8] sm:$0x3f] %vm1455, %v1494
      %1497 = vst.msk [vmem:[%s243 + $0x10] sm:$0x3f] %vm1457, %v1494
      %v1498 = vld [vmem:[%s192] sm:$0xe]
      %v1499 = vld [vmem:[%s192 + $0x4] sm:$0x7]
      %v1502 = vunpack.c.l.b16 %v1498
      %v1503 = vunpack.c.l.b16 %v1499
      %v1504 = vpack.c.b16 %v1503, %v1502
      %v1505 = vrot.slane %v1504, 1
      %1506 = vrot.lane.b32.xlu0 %v1505, 7
      %v1507 = vpop.permute.xlu0 %1506
      %vm1509 = vcmask 160832
      %1510 = vst.msk [vmem:[#allocation2 + $0x10] sm:$0x3f] %vm1509, %v1507
      %v1511 = vld [vmem:[%s192] sm:$0xe]
      %v1512 = vld [vmem:[%s192 + $0x4] sm:$0x7]
      %v1515 = vunpack.c.l.b16 %v1511
      %v1516 = vunpack.c.l.b16 %v1512
      %v1517 = vpack.c.b16 %v1516, %v1515
      %v1518 = vrot.slane %v1517, 1
      %1519 = vrot.lane.b32.xlu0 %v1518, 121
      %v1520 = vpop.permute.xlu0 %1519
      %1522 = vst.msk [vmem:[%s219 + $0x10] sm:$0x3f] %vm1509, %v1520
      %v1523 = vld [vmem:[%s192] sm:$0xe]
      %v1524 = vld [vmem:[%s192 + $0x4] sm:$0x7]
      %v1527 = vunpack.c.l.b16 %v1523
      %v1528 = vunpack.c.l.b16 %v1524
      %v1529 = vpack.c.b16 %v1528, %v1527
      %v1530 = vrot.slane %v1529, 1
      %1531 = vrot.lane.b32.xlu0 %v1530, 107
      %v1532 = vpop.permute.xlu0 %1531
      %1534 = vst.msk [vmem:[%s231 + $0x10] sm:$0x3f] %vm1509, %v1532
      %v1535 = vld [vmem:[%s192] sm:$0xe]
      %v1536 = vld [vmem:[%s192 + $0x4] sm:$0x7]
      %v1539 = vunpack.c.l.b16 %v1535
      %v1540 = vunpack.c.l.b16 %v1536
      %v1541 = vpack.c.b16 %v1540, %v1539
      %v1542 = vrot.slane %v1541, 1
      %1543 = vrot.lane.b32.xlu0 %v1542, 93
      %v1544 = vpop.permute.xlu0 %1543
      %1546 = vst.msk [vmem:[%s243 + $0x10] sm:$0x3f] %vm1509, %v1544
      %v1547 = vld [vmem:[%s192] sm:$0xe]
      %v1548 = vld [vmem:[%s192 + $0x4] sm:$0x7]
      %v1551 = vunpack.c.l.b16 %v1547
      %v1552 = vunpack.c.l.b16 %v1548
      %v1553 = vpack.c.b16 %v1552, %v1551
      %v1554 = vrot.slane %v1553, 1
      %1555 = vrot.lane.b32.xlu0 %v1554, 5
      %v1556 = vpop.permute.xlu0 %1555
      %vm1558 = vcmask 259232
      %1559 = vst.msk [vmem:[#allocation2 + $0x10] sm:$0x3f] %vm1558, %v1556
      %v1560 = vld [vmem:[%s192] sm:$0xe]
      %v1561 = vld [vmem:[%s192 + $0x4] sm:$0x7]
      %v1564 = vunpack.c.l.b16 %v1560
      %v1565 = vunpack.c.l.b16 %v1561
      %v1566 = vpack.c.b16 %v1565, %v1564
      %v1567 = vrot.slane %v1566, 1
      %1568 = vrot.lane.b32.xlu0 %v1567, 18
      %v1569 = vpop.permute.xlu0 %1568
      %1571 = vst.msk [vmem:[%s219 + $0x10] sm:$0x3f] %vm1558, %v1569
      %v1572 = vld [vmem:[%s192] sm:$0xe]
      %v1573 = vld [vmem:[%s192 + $0x4] sm:$0x7]
      %v1576 = vunpack.c.l.b16 %v1572
      %v1577 = vunpack.c.l.b16 %v1573
      %v1578 = vpack.c.b16 %v1577, %v1576
      %v1579 = vrot.slane %v1578, 1
      %1580 = vrot.lane.b32.xlu0 %v1579, 105
      %v1581 = vpop.permute.xlu0 %1580
      %1583 = vst.msk [vmem:[%s231 + $0x10] sm:$0x3f] %vm1558, %v1581
      %v1584 = vld [vmem:[%s192] sm:$0xe]
      %v1585 = vld [vmem:[%s192 + $0x4] sm:$0x7]
      %v1588 = vunpack.c.l.b16 %v1584
      %v1589 = vunpack.c.l.b16 %v1585
      %v1590 = vpack.c.b16 %v1589, %v1588
      %v1591 = vrot.slane %v1590, 1
      %1592 = vrot.lane.b32.xlu0 %v1591, 118
      %v1593 = vpop.permute.xlu0 %1592
      %1595 = vst.msk [vmem:[%s243 + $0x10] sm:$0x3f] %vm1558, %v1593
      %v1596 = vld [vmem:[%s192] sm:$0xe]
      %v1597 = vld [vmem:[%s192 + $0x4] sm:$0x7]
      %v1600 = vunpack.c.l.b16 %v1596
      %v1601 = vunpack.c.l.b16 %v1597
      %v1602 = vpack.c.b16 %v1601, %v1600
      %v1603 = vrot.slane %v1602, 1
      %1604 = vrot.lane.b32.xlu0 %v1603, 30
      %v1605 = vpop.permute.xlu0 %1604
      %vm1607 = vcmask 357632
      %1608 = vst.msk [vmem:[#allocation2 + $0x10] sm:$0x3f] %vm1607, %v1605
      %v1609 = vld [vmem:[%s192] sm:$0xe]
      %v1610 = vld [vmem:[%s192 + $0x4] sm:$0x7]
      %v1613 = vunpack.c.l.b16 %v1609
      %v1614 = vunpack.c.l.b16 %v1610
      %v1615 = vpack.c.b16 %v1614, %v1613
      %v1616 = vrot.slane %v1615, 1
      %1617 = vrot.lane.b32.xlu0 %v1616, 16
      %v1618 = vpop.permute.xlu0 %1617
      %1620 = vst.msk [vmem:[%s219 + $0x10] sm:$0x3f] %vm1607, %v1618
      %v1621 = vld [vmem:[%s192] sm:$0xe]
      %v1622 = vld [vmem:[%s192 + $0x4] sm:$0x7]
      %v1625 = vunpack.c.l.b16 %v1621
      %v1626 = vunpack.c.l.b16 %v1622
      %v1627 = vpack.c.b16 %v1626, %v1625
      %v1628 = vrot.slane %v1627, 1
      %1629 = vrot.lane.b32.xlu0 %v1628, 2
      %v1630 = vpop.permute.xlu0 %1629
      %1632 = vst.msk [vmem:[%s231 + $0x10] sm:$0x3f] %vm1607, %v1630
      %v1633 = vld [vmem:[%s192] sm:$0xe]
      %v1634 = vld [vmem:[%s192 + $0x4] sm:$0x7]
      %v1637 = vunpack.c.l.b16 %v1633
      %v1638 = vunpack.c.l.b16 %v1634
      %v1639 = vpack.c.b16 %v1638, %v1637
      %v1640 = vrot.slane %v1639, 1
      %1641 = vrot.lane.b32.xlu0 %v1640, 116
      %v1642 = vpop.permute.xlu0 %1641
      %1644 = vst.msk [vmem:[%s243 + $0x10] sm:$0x3f] %vm1607, %v1642
      %v1645 = vld [vmem:[#allocation2] sm:$0xff]
      %v1646 = vld [vmem:[#allocation2 + $0x8] sm:$0xff]
      %v1647 = vld [vmem:[#allocation2 + $0x10] sm:$0xff]
      %v1648 = vld [vmem:[#allocation2 + $0x18] sm:$0xff]
      %v1649 = vld [vmem:[#allocation2 + $0x20] sm:$0xff]
      %v1650 = vld [vmem:[#allocation2 + $0x28] sm:$0xff]
      %v1651 = vld [vmem:[#allocation2 + $0x30] sm:$0xff]
      %v1652 = vld [vmem:[#allocation2 + $0x38] sm:$0xff]
      %v1653 = vld [vmem:[#allocation2 + $0x40] sm:$0xff]
      %v1654 = vld [vmem:[#allocation2 + $0x48] sm:$0xff]
      %v1655 = vld [vmem:[#allocation2 + $0x50] sm:$0xff]
      %v1656 = vld [vmem:[#allocation2 + $0x58] sm:$0xff]
      %v1657 = vld [vmem:[%s1] sm:$0xf]
      %v1658 = vld [vmem:[%s1 + $0x4] sm:$0xf]
      %v1659 = vld [vmem:[%s1 + $0x8] sm:$0xf]
      %v1660 = vld [vmem:[%s1 + $0xc] sm:$0xf]
      %v1661 = vld [vmem:[%s1 + $0x10] sm:$0xf]
      %v1662 = vld [vmem:[%s1 + $0x14] sm:$0xf]
      %v1663 = vld [vmem:[%s1 + $0x18] sm:$0xf]
      %v1664 = vld [vmem:[%s1 + $0x1c] sm:$0xf]
      %v1665 = vld [vmem:[%s1 + $0x20] sm:$0xf]
      %v1666 = vld [vmem:[%s1 + $0x24] sm:$0xf]
      %v1667 = vld [vmem:[%s1 + $0x28] sm:$0xf]
      %v1668 = vld [vmem:[%s1 + $0x2c] sm:$0xf]
      %v1669 = vld [vmem:[%s1 + $0x30] sm:$0xf]
      %v1670 = vld [vmem:[%s1 + $0x34] sm:$0xf]
      %v1671 = vld [vmem:[%s1 + $0x38] sm:$0xf]
      %v1672 = vld [vmem:[%s1 + $0x3c] sm:$0xf]
      %v1673 = vld [vmem:[%s1 + $0x40] sm:$0xf]
      %v1674 = vld [vmem:[%s1 + $0x44] sm:$0xf]
      %v1675 = vld [vmem:[%s1 + $0x48] sm:$0xf]
      %v1676 = vld [vmem:[%s1 + $0x4c] sm:$0xf]
      %v1677 = vld [vmem:[%s1 + $0x50] sm:$0xf]
      %v1678 = vld [vmem:[%s1 + $0x54] sm:$0xf]
      %v1679 = vld [vmem:[%s1 + $0x58] sm:$0xf]
      %v1680 = vld [vmem:[%s1 + $0x5c] sm:$0xf]
      %v1681 = vld [vmem:[%s1 + $0x60] sm:$0xf]
      %v1682 = vld [vmem:[%s1 + $0x64] sm:$0xf]
      %v1683 = vld [vmem:[%s1 + $0x68] sm:$0xf]
      %v1684 = vld [vmem:[%s1 + $0x6c] sm:$0xf]
      %v1685 = vld [vmem:[%s1 + $0x70] sm:$0xf]
      %v1686 = vld [vmem:[%s1 + $0x74] sm:$0xf]
      %v1687 = vld [vmem:[%s1 + $0x78] sm:$0xf]
      %v1688 = vld [vmem:[%s1 + $0x7c] sm:$0xf]
      %v1689 = vld [vmem:[%s1 + $0x80] sm:$0xf]
      %v1690 = vld [vmem:[%s1 + $0x84] sm:$0xf]
      %v1691 = vld [vmem:[%s1 + $0x88] sm:$0xf]
      %v1692 = vld [vmem:[%s1 + $0x8c] sm:$0xf]
      %v1693 = vld [vmem:[%s1 + $0x90] sm:$0xf]
      %v1694 = vld [vmem:[%s1 + $0x94] sm:$0x3]
      %v1733 = vunpack.c.l.b16 %v1657
      %v1734 = vunpack.c.l.b16 %v1658
      %v1735 = vunpack.c.l.b16 %v1659
      %v1736 = vunpack.c.l.b16 %v1660
      %v1737 = vunpack.c.l.b16 %v1661
      %v1738 = vunpack.c.l.b16 %v1662
      %v1739 = vunpack.c.l.b16 %v1663
      %v1740 = vunpack.c.l.b16 %v1664
      %v1741 = vunpack.c.l.b16 %v1665
      %v1742 = vunpack.c.l.b16 %v1666
      %v1743 = vunpack.c.l.b16 %v1667
      %v1744 = vunpack.c.l.b16 %v1668
      %v1745 = vunpack.c.l.b16 %v1669
      %v1746 = vunpack.c.l.b16 %v1670
      %v1747 = vunpack.c.l.b16 %v1671
      %v1748 = vunpack.c.l.b16 %v1672
      %v1749 = vunpack.c.l.b16 %v1673
      %v1750 = vunpack.c.l.b16 %v1674
      %v1751 = vunpack.c.l.b16 %v1675
      %v1752 = vunpack.c.l.b16 %v1676
      %v1753 = vunpack.c.l.b16 %v1677
      %v1754 = vunpack.c.l.b16 %v1678
      %v1755 = vunpack.c.l.b16 %v1679
      %v1756 = vunpack.c.l.b16 %v1680
      %v1757 = vunpack.c.l.b16 %v1681
      %v1758 = vunpack.c.l.b16 %v1682
      %v1759 = vunpack.c.l.b16 %v1683
      %v1760 = vunpack.c.l.b16 %v1684
      %v1761 = vunpack.c.l.b16 %v1685
      %v1762 = vunpack.c.l.b16 %v1686
      %v1763 = vunpack.c.l.b16 %v1687
      %v1764 = vunpack.c.l.b16 %v1688
      %v1765 = vunpack.c.l.b16 %v1689
      %v1766 = vunpack.c.l.b16 %v1690
      %v1767 = vunpack.c.l.b16 %v1691
      %v1768 = vunpack.c.l.b16 %v1692
      %v1769 = vunpack.c.l.b16 %v1693
      %v1770 = vunpack.c.l.b16 %v1694
      %v1771 = vpack.c.b16 %v1734, %v1733
      %v1772 = vpack.c.b16 %v1736, %v1735
      %v1773 = vpack.c.b16 %v1738, %v1737
      %v1774 = vpack.c.b16 %v1740, %v1739
      %v1775 = vpack.c.b16 %v1742, %v1741
      %v1776 = vpack.c.b16 %v1744, %v1743
      %v1777 = vpack.c.b16 %v1746, %v1745
      %v1778 = vpack.c.b16 %v1748, %v1747
      %v1779 = vpack.c.b16 %v1750, %v1749
      %v1780 = vpack.c.b16 %v1752, %v1751
      %v1781 = vpack.c.b16 %v1754, %v1753
      %v1782 = vpack.c.b16 %v1756, %v1755
      %v1783 = vpack.c.b16 %v1758, %v1757
      %v1784 = vpack.c.b16 %v1760, %v1759
      %v1785 = vpack.c.b16 %v1762, %v1761
      %v1786 = vpack.c.b16 %v1764, %v1763
      %v1787 = vpack.c.b16 %v1766, %v1765
      %v1788 = vpack.c.b16 %v1768, %v1767
      %v1789 = vpack.c.b16 %v1770, %v1769
      %vm1808 = vcmask 359424
      %v1810 = vsel %vm1808, %v1647, 0
      %v1813 = vsel %vm1808, %v1650, 0
      %v1816 = vsel %vm1808, %v1653, 0
      %v1819 = vsel %vm1808, %v1656, 0
      %vm1821 = vcmask 1045504
      %v1823 = vsel %vm1821, %v1789, 0
      %1825 = vmatprep.subr.bf16.mxu0 0
      %1826 = vmatpush1.bf16.msra.mxu0 %v1771
      %1827 = vmatprep.subr.bf16.mxu0 0
      %1828 = vmatpush1.bf16.msra.mxu0 %v1772
      %1829 = vmatprep.subr.bf16.mxu0 0
      %1830 = vmatpush1.bf16.msra.mxu0 %v1773
      %1831 = vmatprep.subr.bf16.mxu0 0
      %1832 = vmatpush1.bf16.msra.mxu0 %v1774
      %1833 = vmatprep.subr.bf16.mxu0 0
      %1834 = vmatpush1.bf16.msra.mxu0 %v1775
      %1835 = vmatprep.subr.bf16.mxu0 0
      %1836 = vmatpush1.bf16.msra.mxu0 %v1776
      %1837 = vmatprep.subr.bf16.mxu0 0
      %1838 = vmatpush1.bf16.msra.mxu0 %v1777
      %1839 = vmatprep.subr.bf16.mxu0 0
      %1840 = vmatpush1.bf16.msra.mxu0 %v1778
      %1841 = vmatprep.subr.bf16.mxu0 0
      %1842 = vmatpush1.bf16.msra.mxu0 %v1779
      %1843 = vmatprep.subr.bf16.mxu0 0
      %1844 = vmatpush1.bf16.msra.mxu0 %v1780
      %1845 = vmatprep.subr.bf16.mxu0 0
      %1846 = vmatpush1.bf16.msra.mxu0 %v1781
      %1847 = vmatprep.subr.bf16.mxu0 0
      %1848 = vmatpush1.bf16.msra.mxu0 %v1782
      %1849 = vmatprep.subr.bf16.mxu0 0
      %1850 = vmatpush1.bf16.msra.mxu0 %v1783
      %1851 = vmatprep.subr.bf16.mxu0 0
      %1852 = vmatpush1.bf16.msra.mxu0 %v1784
      %1853 = vmatprep.subr.bf16.mxu0 0
      %1854 = vmatpush1.bf16.msra.mxu0 %v1785
      %1855 = vmatprep.subr.bf16.mxu0 0
      %1856 = vmatpush1.bf16.msra.mxu0 %v1786
      %1857 = vmatprep.mubr.bf16.mxu0 %v1646
      %1858 = vmatmul.mubr.bf16.gmra.mrb[0].mxu0 %v1645
      %v1859 = vpop.f32.mrb[0].mxu0
      %v1860 = vadd.f32 0.0, %v1859
      %v1861 = vpop.f32.mrb[0].mxu0
      %v1862 = vpop.f32.mrb[0].mxu0
      %v1863 = vadd.f32 0.0, %v1862
      %v1864 = vpop.f32.mrb[0].mxu0
      %1865 = vmatprep.mubr.bf16.mxu0 %v1649
      %1866 = vmatmul.mubr.bf16.gmra.mrb[0].mxu0 %v1648
      %v1867 = vpop.f32.mrb[0].mxu0
      %v1868 = vadd.f32 0.0, %v1867
      %v1869 = vpop.f32.mrb[0].mxu0
      %v1870 = vpop.f32.mrb[0].mxu0
      %v1871 = vadd.f32 0.0, %v1870
      %v1872 = vpop.f32.mrb[0].mxu0
      %1873 = vmatprep.mubr.bf16.mxu0 %v1652
      %1874 = vmatmul.mubr.bf16.gmra.mrb[0].mxu0 %v1651
      %v1875 = vpop.f32.mrb[0].mxu0
      %v1876 = vadd.f32 0.0, %v1875
      %v1877 = vpop.f32.mrb[0].mxu0
      %v1878 = vpop.f32.mrb[0].mxu0
      %v1879 = vadd.f32 0.0, %v1878
      %v1880 = vpop.f32.mrb[0].mxu0
      %1881 = vmatprep.mubr.bf16.mxu0 %v1655
      %1882 = vmatmul.mubr.bf16.gmra.mrb[0].mxu0 %v1654
      %v1883 = vpop.f32.mrb[0].mxu0
      %v1884 = vadd.f32 0.0, %v1883
      %v1885 = vpop.f32.mrb[0].mxu0
      %v1886 = vpop.f32.mrb[0].mxu0
      %v1887 = vadd.f32 0.0, %v1886
      %v1888 = vpop.f32.mrb[0].mxu0
      %1889 = vdwg.mxu0
      %1890 = vmatprep.subr.bf16.mxu0 0
      %1891 = vmatpush1.bf16.msra.mxu0 %v1787
      %1892 = vmatprep.subr.bf16.mxu0 0
      %1893 = vmatpush1.bf16.msra.mxu0 %v1788
      %1894 = vmatprep.subr.bf16.mxu0 0
      %1895 = vmatpush1.bf16.msra.mxu0 %v1823
      %1896 = vmatprep.subr.bf16.mxu0 0
      %1897 = vmatpush1.bf16.msra.mxu0 0
      %1898 = vmatprep.subr.bf16.mxu0 0
      %1899 = vmatpush1.bf16.msra.mxu0 0
      %1900 = vmatprep.subr.bf16.mxu0 0
      %1901 = vmatpush1.bf16.msra.mxu0 0
      %1902 = vmatprep.subr.bf16.mxu0 0
      %1903 = vmatpush1.bf16.msra.mxu0 0
      %1904 = vmatprep.subr.bf16.mxu0 0
      %1905 = vmatpush1.bf16.msra.mxu0 0
      %1906 = vmatprep.subr.bf16.mxu0 0
      %1907 = vmatpush1.bf16.msra.mxu0 0
      %1908 = vmatprep.subr.bf16.mxu0 0
      %1909 = vmatpush1.bf16.msra.mxu0 0
      %1910 = vmatprep.subr.bf16.mxu0 0
      %1911 = vmatpush1.bf16.msra.mxu0 0
      %1912 = vmatprep.subr.bf16.mxu0 0
      %1913 = vmatpush1.bf16.msra.mxu0 0
      %1914 = vmatprep.subr.bf16.mxu0 0
      %1915 = vmatpush1.bf16.msra.mxu0 0
      %1916 = vmatprep.subr.bf16.mxu0 0
      %1917 = vmatpush1.bf16.msra.mxu0 0
      %1918 = vmatprep.subr.bf16.mxu0 0
      %1919 = vmatpush1.bf16.msra.mxu0 0
      %1920 = vmatprep.subr.bf16.mxu0 0
      %1921 = vmatpush1.bf16.msra.mxu0 0
      %1922 = vmatprep.mubr.bf16.mxu0 0
      %1923 = vmatmul.mubr.bf16.gmra.mrb[0].mxu0 %v1810
      %v1924 = vpop.f32.mrb[0].mxu0
      %v1925 = vadd.f32 %v1860, %v1924
      %v1926 = vpop.f32.mrb[0].mxu0
      %v1927 = vpop.f32.mrb[0].mxu0
      %v1928 = vadd.f32 %v1863, %v1927
      %v1929 = vpop.f32.mrb[0].mxu0
      %1930 = vmatprep.mubr.bf16.mxu0 0
      %1931 = vmatmul.mubr.bf16.gmra.mrb[0].mxu0 %v1813
      %v1932 = vpop.f32.mrb[0].mxu0
      %v1933 = vadd.f32 %v1868, %v1932
      %v1934 = vpop.f32.mrb[0].mxu0
      %v1935 = vpop.f32.mrb[0].mxu0
      %v1936 = vadd.f32 %v1871, %v1935
      %v1937 = vpop.f32.mrb[0].mxu0
      %1938 = vmatprep.mubr.bf16.mxu0 0
      %1939 = vmatmul.mubr.bf16.gmra.mrb[0].mxu0 %v1816
      %v1940 = vpop.f32.mrb[0].mxu0
      %v1941 = vadd.f32 %v1876, %v1940
      %v1942 = vpop.f32.mrb[0].mxu0
      %v1943 = vpop.f32.mrb[0].mxu0
      %v1944 = vadd.f32 %v1879, %v1943
      %v1945 = vpop.f32.mrb[0].mxu0
      %1946 = vmatprep.mubr.bf16.mxu0 0
      %1947 = vmatmul.mubr.bf16.gmra.mrb[0].mxu0 %v1819
      %v1948 = vpop.f32.mrb[0].mxu0
      %v1949 = vadd.f32 %v1884, %v1948
      %v1950 = vpop.f32.mrb[0].mxu0
      %v1951 = vpop.f32.mrb[0].mxu0
      %v1952 = vadd.f32 %v1887, %v1951
      %v1953 = vpop.f32.mrb[0].mxu0
      %1954 = vdwg.mxu0
      %v1955 = vld [vmem:[%s2] sm:$0x1]
      %v1957 = vlaneseq
      %v1958 = vshrl.u32 %v1957, 7
      %v1959 = vsub.s32 0, %v1958
      %v1960 = vrot.slane %v1955, %v1959
      %v1962 = vmul.f32 %v1925, %v1960
      %v1963 = vmul.f32 %v1928, %v1960
      %v1964 = vmul.f32 %v1933, %v1960
      %v1965 = vmul.f32 %v1936, %v1960
      %v1966 = vmul.f32 %v1941, %v1960
      %v1967 = vmul.f32 %v1944, %v1960
      %v1968 = vmul.f32 %v1949, %v1960
      %v1969 = vmul.f32 %v1952, %v1960
      %v1970 = vld [vmem:[%s3] sm:$0x1]
      %v1972 = vlaneseq
      %v1973 = vshrl.u32 %v1972, 7
      %v1974 = vsub.s32 0, %v1973
      %v1975 = vrot.slane %v1970, %v1974
      %v1977 = vadd.f32 %v1962, %v1975
      %v1978 = vadd.f32 %v1963, %v1975
      %v1979 = vadd.f32 %v1964, %v1975
      %v1980 = vadd.f32 %v1965, %v1975
      %v1981 = vadd.f32 %v1966, %v1975
      %v1982 = vadd.f32 %v1967, %v1975
      %v1983 = vadd.f32 %v1968, %v1975
      %v1984 = vadd.f32 %v1969, %v1975
      %v1985 = vmax.f32 %v1977, %v1979
      %v1986 = vmax.f32 %v1978, %v1980
      %v1987 = vmax.f32 %v1981, %v1983
      %v1988 = vmax.f32 %v1982, %v1984
      %v1989 = vmax.f32 %v1985, %v1987
      %v1990 = vmax.f32 %v1986, %v1988
      %v1991 = vmax.f32 %v1989, 0.0
      %v1992 = vmax.f32 %v1990, 0.0
      %v1993 = vpack.c.bf16 %v1992, %v1991
      %v1995 = vunpack.c.l.b16 %v1993
      %v1996 = vunpack.c.h.b16 %v1993
      %v1997 = vpack.c.b16 %v1995, %v1995
      %v1998 = vpack.c.b16 %v1996, %v1996
      %2001 = vst [vmem:[%s197] sm:$0xf] %v1997
      %2002 = vst [vmem:[%s197 + $0x4] sm:$0xf] %v1998
      %p2003 = scmp.lt.s32.totalorder %s15, 1
      %s2004 = scalar_select %p2003, %s15, 1
      %s2005 = smul.addr %s2004, 2
      %s2006 = smul.addr %s2005, 4
      %s2007 = scalar_lea.vmem %s4, %s2006
      // Predicated region
      $region37: #{torch_model_forward.3} parent=35 // pred_check
        %p2008 = pneg %p122
      $region38: #{torch_model_forward.3} parent=35 // pred_check_branch
        %2010 = sbr.rel (%p2008) target = $region40
      $region39: #{torch_model_forward.3} parent=35 // pred_region
        _
      $region40: #{torch_model_forward.3} parent=35 // pred_fallthru
        _
    $region36: #{torch_model_forward.3} parent=5 // pred_fallthru
      _
    %p2011 = scmp.le.s32.totalorder 2, %s10
    // Predicated region
    $region41: #{torch_model_forward.3} parent=5 // pred_check
      %p2012 = pneg %p2011
    $region42: #{torch_model_forward.3} parent=5 // pred_check_branch
      %2014 = sbr.rel (%p2012) target = $region44
    $region43: #{torch_model_forward.3} parent=5 // pred_region
      %s2015 = ssub.s32 %s10, 2
      // Predicated region
      $region45: #{torch_model_forward.3} parent=43 // pred_check
        %p2016 = pneg %p128
      $region46: #{torch_model_forward.3} parent=43 // pred_check_branch
        %2018 = sbr.rel (%p2016) target = $region48
      $region47: #{torch_model_forward.3} parent=43 // pred_region
        %p2019 = scmp.lt.s32.totalorder %s16, 1
        %s2020 = scalar_select %p2019, %s16, 1
        %s2021 = smul.addr %s2020, 2
        %s2022 = smul.addr %s2021, 4
        %s2023 = scalar_lea.vmem %s4, %s2022
      $region48: #{torch_model_forward.3} parent=43 // pred_fallthru
        _
    $region44: #{torch_model_forward.3} parent=5 // pred_fallthru
      _
  $region6: #{torch_model_forward.3} parent=0 // loop_footer
    %s14 = sadd.s32 1, %s10
  $region7: #{torch_model_forward.3} parent=0 // loop_footer_branch
    %9 = sbr.rel target = $region3
  $region8: #{torch_model_forward.3} parent=0 // loop_exit
    _

// kernel: torch_model_forward.4
$region0: #{torch_model_forward.4}
  #allocation0 [shape = 'u32[]', space=smem, size = 0x4, offset = 0x4, fixed_abs, tag = 'smem constant byte address 0x4 - core index']
  #allocation1 [shape = 'u32[144,128]{1,0:T(1,128)}', space=vmem, size = 0x12000, scoped, tag = 'internal scratch']
  #allocation2 [shape = 'bf16[4,16,500]{2,1,0:T(16,128)(2,1)}', space=vmem, size = 0x10000, scoped, tag = 'scratch operand']
  %s0 = inlined_call_operand.vmem [shape: bf16[2,6,120], index: 0, kind: input, shape index: {}]
  %s1 = inlined_call_operand.vmem [shape: bf16[500,128], index: 1, kind: input, shape index: {}]
  %s2 = inlined_call_operand.vmem [shape: f32[1,128], index: 2, kind: input, shape index: {}]
  %s3 = inlined_call_operand.vmem [shape: f32[1,128], index: 3, kind: input, shape index: {}]
  %s4 = inlined_call_operand.vmem [shape: bf16[2,16,128], index: 4, kind: output, shape index: {}]
  %s5 = sld [smem:[#allocation0]]
  $region49: #{torch_model_forward.4} parent=0
    _
  %s7 = ssub.s32 1, %s5
  %s8 = scalar_select 0, %s7, %s5
  loop: start=0, step=1, limit=4
  $region2: #{torch_model_forward.4} parent=0 // loop_pre_header
    _
  $region3: #{torch_model_forward.4} parent=0 // loop_header
    %s10 = sphi 0, %s14
    %p11 = scmp.ge.s32.totalorder %s10, 4
    %s20 = sphi 0, %s22
    %s23 = sphi 0, %s20
    %s24 = sphi 0, %s23
    %s40 = sphi 0, %s24
    %s44 = sphi 0, %s44
    %s46 = sphi 0, %s44
    %s47 = sphi 0, %s46
    %s61 = sphi 0, %s47
    %s65 = sphi 0, %s65
    %s67 = sphi 0, %s65
    %s68 = sphi 0, %s67
    %s82 = sphi 0, %s68
    %s86 = sphi 0, %s86
    %s88 = sphi 0, %s86
    %s89 = sphi 0, %s88
    %s103 = sphi 0, %s89
    %s109 = sphi 0, %s111
    %s112 = sphi 0, %s109
    %s113 = sphi 0, %s112
    %s129 = sphi 0, %s113
  $region4: #{torch_model_forward.4} parent=0 // loop_header_branch
    %13 = sbr.rel (%p11) target = $region8
  $region5: #{torch_model_forward.4} parent=0 // loop_body
    %s15 = ssub.s32 %s10, 1
    %s16 = ssub.s32 %s10, 2
    %s17 = sadd.s32 %s10, 1
    %s18 = ssub.s32 %s10, %s17
    %p19 = scmp.eq.s32.totalorder %s18, 0
    %s21 = sadd.s32 %s20, 1
    %s22 = scalar_select %p19, %s20, %s21
    %p25 = pneg %p19
    %p26 = scmp.eq.s32.totalorder %s10, 1
    %p27 = por %p25, %p26
    %p28 = scmp.ne.s32.totalorder %s20, %s23
    %p29 = scmp.eq.s32.totalorder %s10, 0
    %p30 = por %p28, %p29
    %p31 = scmp.ne.s32.totalorder %s20, %s23
    %p32 = scmp.eq.s32.totalorder %s15, 1
    %p33 = por %p31, %p32
    %p34 = scmp.ne.s32.totalorder %s23, %s24
    %p35 = scmp.eq.s32.totalorder %s15, 0
    %p36 = por %p34, %p35
    %p37 = scmp.ne.s32.totalorder %s23, %s24
    %p38 = scmp.eq.s32.totalorder %s16, 1
    %p39 = por %p37, %p38
    %p41 = scmp.ne.s32.totalorder %s24, %s40
    %p42 = scmp.eq.s32.totalorder %s16, 0
    %p43 = por %p41, %p42
    %s45 = sadd.s32 %s44, 1
    %p48 = scmp.eq.s32.totalorder %s10, 1
    %p49 = scmp.ne.s32.totalorder %s44, %s46
    %p50 = scmp.eq.s32.totalorder %s10, 0
    %p51 = por %p49, %p50
    %p52 = scmp.ne.s32.totalorder %s44, %s46
    %p53 = scmp.eq.s32.totalorder %s15, 1
    %p54 = por %p52, %p53
    %p55 = scmp.ne.s32.totalorder %s46, %s47
    %p56 = scmp.eq.s32.totalorder %s15, 0
    %p57 = por %p55, %p56
    %p58 = scmp.ne.s32.totalorder %s46, %s47
    %p59 = scmp.eq.s32.totalorder %s16, 1
    %p60 = por %p58, %p59
    %p62 = scmp.ne.s32.totalorder %s47, %s61
    %p63 = scmp.eq.s32.totalorder %s16, 0
    %p64 = por %p62, %p63
    %s66 = sadd.s32 %s65, 1
    %p69 = scmp.eq.s32.totalorder %s10, 1
    %p70 = scmp.ne.s32.totalorder %s65, %s67
    %p71 = scmp.eq.s32.totalorder %s10, 0
    %p72 = por %p70, %p71
    %p73 = scmp.ne.s32.totalorder %s65, %s67
    %p74 = scmp.eq.s32.totalorder %s15, 1
    %p75 = por %p73, %p74
    %p76 = scmp.ne.s32.totalorder %s67, %s68
    %p77 = scmp.eq.s32.totalorder %s15, 0
    %p78 = por %p76, %p77
    %p79 = scmp.ne.s32.totalorder %s67, %s68
    %p80 = scmp.eq.s32.totalorder %s16, 1
    %p81 = por %p79, %p80
    %p83 = scmp.ne.s32.totalorder %s68, %s82
    %p84 = scmp.eq.s32.totalorder %s16, 0
    %p85 = por %p83, %p84
    %s87 = sadd.s32 %s86, 1
    %p90 = scmp.eq.s32.totalorder %s10, 1
    %p91 = scmp.ne.s32.totalorder %s86, %s88
    %p92 = scmp.eq.s32.totalorder %s10, 0
    %p93 = por %p91, %p92
    %p94 = scmp.ne.s32.totalorder %s86, %s88
    %p95 = scmp.eq.s32.totalorder %s15, 1
    %p96 = por %p94, %p95
    %p97 = scmp.ne.s32.totalorder %s88, %s89
    %p98 = scmp.eq.s32.totalorder %s15, 0
    %p99 = por %p97, %p98
    %p100 = scmp.ne.s32.totalorder %s88, %s89
    %p101 = scmp.eq.s32.totalorder %s16, 1
    %p102 = por %p100, %p101
    %p104 = scmp.ne.s32.totalorder %s89, %s103
    %p105 = scmp.eq.s32.totalorder %s16, 0
    %p106 = por %p104, %p105
    %s107 = ssub.s32 %s10, %s17
    %p108 = scmp.eq.s32.totalorder %s107, 0
    %s110 = sadd.s32 %s109, 1
    %s111 = scalar_select %p108, %s109, %s110
    %p114 = pneg %p108
    %p115 = scmp.eq.s32.totalorder %s10, 1
    %p116 = por %p114, %p115
    %p117 = scmp.ne.s32.totalorder %s109, %s112
    %p118 = scmp.eq.s32.totalorder %s10, 0
    %p119 = por %p117, %p118
    %p120 = scmp.ne.s32.totalorder %s109, %s112
    %p121 = scmp.eq.s32.totalorder %s15, 1
    %p122 = por %p120, %p121
    %p123 = scmp.ne.s32.totalorder %s112, %s113
    %p124 = scmp.eq.s32.totalorder %s15, 0
    %p125 = por %p123, %p124
    %p126 = scmp.ne.s32.totalorder %s112, %s113
    %p127 = scmp.eq.s32.totalorder %s16, 1
    %p128 = por %p126, %p127
    %p130 = scmp.ne.s32.totalorder %s113, %s129
    %p131 = scmp.eq.s32.totalorder %s16, 0
    %p132 = por %p130, %p131
    %p133 = scmp.le.s32.totalorder 1, %s10
    %p134 = scmp.lt.s32.totalorder %s10, 3
    %p135 = pnand %p133, %p134
    %p136 = pneg %p135
    // Predicated region
    $region9: #{torch_model_forward.4} parent=5 // pred_check
      _
    $region10: #{torch_model_forward.4} parent=5 // pred_check_branch
      %138 = sbr.rel (%p135) target = $region12
    $region11: #{torch_model_forward.4} parent=5 // pred_region
      %s139 = ssub.s32 %s10, 1
      // Predicated region
      $region13: #{torch_model_forward.4} parent=11 // pred_check
        %p140 = pneg %p57
      $region14: #{torch_model_forward.4} parent=11 // pred_check_branch
        %142 = sbr.rel (%p140) target = $region16
      $region15: #{torch_model_forward.4} parent=11 // pred_region
        _
      $region16: #{torch_model_forward.4} parent=11 // pred_fallthru
        _
      // Predicated region
      $region17: #{torch_model_forward.4} parent=11 // pred_check
        %p143 = pneg %p78
      $region18: #{torch_model_forward.4} parent=11 // pred_check_branch
        %145 = sbr.rel (%p143) target = $region20
      $region19: #{torch_model_forward.4} parent=11 // pred_region
        _
      $region20: #{torch_model_forward.4} parent=11 // pred_fallthru
        _
      // Predicated region
      $region21: #{torch_model_forward.4} parent=11 // pred_check
        %p146 = pneg %p99
      $region22: #{torch_model_forward.4} parent=11 // pred_check_branch
        %148 = sbr.rel (%p146) target = $region24
      $region23: #{torch_model_forward.4} parent=11 // pred_region
        _
      $region24: #{torch_model_forward.4} parent=11 // pred_fallthru
        _
    $region12: #{torch_model_forward.4} parent=5 // pred_fallthru
      _
    %p149 = scmp.lt.s32.totalorder %s10, 2
    // Predicated region
    $region25: #{torch_model_forward.4} parent=5 // pred_check
      %p150 = pneg %p149
    $region26: #{torch_model_forward.4} parent=5 // pred_check_branch
      %152 = sbr.rel (%p150) target = $region28
    $region27: #{torch_model_forward.4} parent=5 // pred_region
      // Predicated region
      $region29: #{torch_model_forward.4} parent=27 // pred_check
        %p153 = pneg %p30
      $region30: #{torch_model_forward.4} parent=27 // pred_check_branch
        %155 = sbr.rel (%p153) target = $region32
      $region31: #{torch_model_forward.4} parent=27 // pred_region
        %p156 = scmp.lt.s32.totalorder %s10, 1
        %s157 = scalar_select %p156, %s10, 1
        %s158 = smul.addr %s157, 4
        %s159 = scalar_lea.vmem %s0, %s158
      $region32: #{torch_model_forward.4} parent=27 // pred_fallthru
        _
    $region28: #{torch_model_forward.4} parent=5 // pred_fallthru
      _
    %p160 = scmp.le.s32.totalorder 1, %s10
    %p161 = scmp.lt.s32.totalorder %s10, 3
    %p162 = pnand %p160, %p161
    %p163 = pneg %p162
    // Predicated region
    $region33: #{torch_model_forward.4} parent=5 // pred_check
      _
    $region34: #{torch_model_forward.4} parent=5 // pred_check_branch
      %165 = sbr.rel (%p162) target = $region36
    $region35: #{torch_model_forward.4} parent=5 // pred_region
      %s166 = ssub.s32 %s10, 1
      %p167 = scmp.lt.s32.totalorder %s15, 1
      %s168 = scalar_select %p167, %s15, 1
      %s169 = smul.addr %s168, 4
      %s170 = scalar_lea.vmem %s0, %s169
      %p171 = pneg %p36
      %p172 = pneg %p33
      %p173 = pneg %p57
      %p174 = pneg %p54
      %p175 = pneg %p78
      %p176 = pneg %p75
      %p177 = pneg %p99
      %p178 = pneg %p96
      %p179 = pneg %p125
      %p180 = pneg %p122
      %p181 = scmp.lt.s32.totalorder %s15, 1
      %s182 = scalar_select %p181, %s15, 1
      %s183 = smul.addr %s182, 2
      %s184 = smul.addr %s183, 4
      %s185 = scalar_lea.vmem %s4, %s184
      %p186 = scmp.lt.s32.totalorder %s15, 1
      %s187 = scalar_select %p186, %s15, 1
      %s188 = smul.addr %s187, 4
      %s189 = scalar_lea.vmem %s0, %s188
      %p190 = scmp.lt.s32.totalorder %s15, 1
      %s191 = scalar_select %p190, %s15, 1
      %s192 = smul.addr %s191, 2
      %s193 = smul.addr %s192, 4
      %s194 = scalar_lea.vmem %s4, %s193
      %v196 = vld [vmem:[%s189] sm:$0x3]
      %vm197 = vcmask 156672
      %198 = vst.msk [vmem:[#allocation2] sm:$0x3] %vm197, %v196
      %v199 = vld [vmem:[%s189] sm:$0x3]
      %v201 = vunpack.c.l.b16 %v199
      %v202 = vpack.c.b16 %v201, %v201
      %203 = vrot.lane.b32.xlu0 %v202, 98
      %v204 = vpop.permute.xlu0 %203
      %s206 = scalar_lea.vmem [#allocation2], 32
      %207 = vst.msk [vmem:[%s206] sm:$0x3] %vm197, %v204
      %v208 = vld [vmem:[%s189] sm:$0x3]
      %v210 = vunpack.c.l.b16 %v208
      %v211 = vpack.c.b16 %v210, %v210
      %212 = vrot.lane.b32.xlu0 %v211, 68
      %v213 = vpop.permute.xlu0 %212
      %s215 = scalar_lea.vmem [#allocation2], 64
      %216 = vst.msk [vmem:[%s215] sm:$0x3] %vm197, %v213
      %v217 = vld [vmem:[%s189] sm:$0x3]
      %v219 = vunpack.c.l.b16 %v217
      %v220 = vpack.c.b16 %v219, %v219
      %221 = vrot.lane.b32.xlu0 %v220, 38
      %v222 = vpop.permute.xlu0 %221
      %s224 = scalar_lea.vmem [#allocation2], 96
      %225 = vst.msk [vmem:[%s224] sm:$0x3] %vm197, %v222
      %v226 = vld [vmem:[%s189] sm:$0x3]
      %v228 = vunpack.c.l.b16 %v226
      %v229 = vpack.c.b16 %v228, %v228
      %230 = vrot.lane.b32.xlu0 %v229, 118
      %v231 = vpop.permute.xlu0 %230
      %vm233 = vcmask 320672
      %234 = vst.msk [vmem:[#allocation2] sm:$0x3] %vm233, %v231
      %v235 = vld [vmem:[%s189] sm:$0x3]
      %v237 = vunpack.c.l.b16 %v235
      %v238 = vpack.c.b16 %v237, %v237
      %239 = vrot.lane.b32.xlu0 %v238, 15
      %v240 = vpop.permute.xlu0 %239
      %242 = vst.msk [vmem:[%s206] sm:$0x3] %vm233, %v240
      %v243 = vld [vmem:[%s189] sm:$0x3]
      %v245 = vunpack.c.l.b16 %v243
      %v246 = vpack.c.b16 %v245, %v245
      %247 = vrot.lane.b32.xlu0 %v246, 58
      %v248 = vpop.permute.xlu0 %247
      %250 = vst.msk [vmem:[%s215] sm:$0x3] %vm233, %v248
      %v251 = vld [vmem:[%s189] sm:$0x3]
      %v253 = vunpack.c.l.b16 %v251
      %v254 = vpack.c.b16 %v253, %v253
      %255 = vrot.lane.b32.xlu0 %v254, 83
      %v256 = vpop.permute.xlu0 %255
      %258 = vst.msk [vmem:[%s224] sm:$0x3] %vm233, %v256
      %v259 = vld [vmem:[%s189] sm:$0x3]
      %v261 = vunpack.c.l.b16 %v259
      %v262 = vpack.c.b16 %v261, %v261
      %263 = vrot.lane.b32.xlu0 %v262, 35
      %v264 = vpop.permute.xlu0 %263
      %vm266 = vcmask 484672
      %267 = vst.msk [vmem:[#allocation2] sm:$0x3] %vm266, %v264
      %v268 = vld [vmem:[%s189] sm:$0x3]
      %v270 = vunpack.c.l.b16 %v268
      %v271 = vpack.c.b16 %v270, %v270
      %272 = vrot.lane.b32.xlu0 %v271, 5
      %v273 = vpop.permute.xlu0 %272
      %275 = vst.msk [vmem:[%s206] sm:$0x3] %vm266, %v273
      %v276 = vld [vmem:[%s189] sm:$0x3]
      %v278 = vunpack.c.l.b16 %v276
      %v279 = vpack.c.b16 %v278, %v278
      %280 = vrot.lane.b32.xlu0 %v279, 103
      %v281 = vpop.permute.xlu0 %280
      %283 = vst.msk [vmem:[%s215] sm:$0x3] %vm266, %v281
      %v284 = vld [vmem:[%s189] sm:$0x3]
      %v286 = vunpack.c.l.b16 %v284
      %v287 = vpack.c.b16 %v286, %v286
      %288 = vrot.lane.b32.xlu0 %v287, 73
      %v289 = vpop.permute.xlu0 %288
      %291 = vst.msk [vmem:[%s224] sm:$0x3] %vm266, %v289
      %v292 = vld [vmem:[%s189] sm:$0x3]
      %v294 = vunpack.c.l.b16 %v292
      %v295 = vpack.c.b16 %v294, %v294
      %296 = vrot.lane.b32.xlu0 %v295, 25
      %v297 = vpop.permute.xlu0 %296
      %vm299 = vcmask 648672
      %300 = vst.msk [vmem:[#allocation2] sm:$0x3] %vm299, %v297
      %v301 = vld [vmem:[%s189] sm:$0x3]
      %v303 = vunpack.c.l.b16 %v301
      %v304 = vpack.c.b16 %v303, %v303
      %305 = vrot.lane.b32.xlu0 %v304, 50
      %v306 = vpop.permute.xlu0 %305
      %308 = vst.msk [vmem:[%s206] sm:$0x3] %vm299, %v306
      %v309 = vld [vmem:[%s189] sm:$0x3]
      %v311 = vunpack.c.l.b16 %v309
      %v312 = vpack.c.b16 %v311, %v311
      %313 = vrot.lane.b32.xlu0 %v312, 93
      %v314 = vpop.permute.xlu0 %313
      %316 = vst.msk [vmem:[%s215] sm:$0x3] %vm299, %v314
      %v317 = vld [vmem:[%s189] sm:$0x3]
      %v319 = vunpack.c.l.b16 %v317
      %v320 = vpack.c.b16 %v319, %v319
      %321 = vrot.lane.b32.xlu0 %v320, 118
      %v322 = vpop.permute.xlu0 %321
      %324 = vst.msk [vmem:[%s224] sm:$0x3] %vm299, %v322
      %v325 = vld [vmem:[%s189] sm:$0x3]
      %v327 = vunpack.c.l.b16 %v325
      %v328 = vpack.c.b16 %v327, %v327
      %329 = vrot.lane.b32.xlu0 %v328, 70
      %v330 = vpop.permute.xlu0 %329
      %vm332 = vcmask 812672
      %333 = vst.msk [vmem:[#allocation2] sm:$0x3] %vm332, %v330
      %v334 = vld [vmem:[%s189] sm:$0x3]
      %v336 = vunpack.c.l.b16 %v334
      %v337 = vpack.c.b16 %v336, %v336
      %338 = vrot.lane.b32.xlu0 %v337, 40
      %v339 = vpop.permute.xlu0 %338
      %341 = vst.msk [vmem:[%s206] sm:$0x3] %vm332, %v339
      %v342 = vld [vmem:[%s189] sm:$0x3]
      %v344 = vunpack.c.l.b16 %v342
      %v345 = vpack.c.b16 %v344, %v344
      %346 = vrot.lane.b32.xlu0 %v345, 10
      %v347 = vpop.permute.xlu0 %346
      %349 = vst.msk [vmem:[%s215] sm:$0x3] %vm332, %v347
      %v350 = vld [vmem:[%s189] sm:$0x3]
      %v352 = vunpack.c.l.b16 %v350
      %v353 = vpack.c.b16 %v352, %v352
      %354 = vrot.lane.b32.xlu0 %v353, 108
      %v355 = vpop.permute.xlu0 %354
      %357 = vst.msk [vmem:[%s224] sm:$0x3] %vm332, %v355
      %v358 = vld [vmem:[%s189] sm:$0x3]
      %v360 = vunpack.c.l.b16 %v358
      %v361 = vpack.c.b16 %v360, %v360
      %362 = vrot.lane.b32.xlu0 %v361, 40
      %v363 = vpop.permute.xlu0 %362
      %vm365 = vcmask 976672
      %366 = vst.msk [vmem:[#allocation2] sm:$0x3] %vm365, %v363
      %v367 = vld [vmem:[%s189] sm:$0x3]
      %v369 = vunpack.c.l.b16 %v367
      %v370 = vpack.c.b16 %v369, %v369
      %371 = vrot.lane.b32.xlu0 %v370, 10
      %v372 = vpop.permute.xlu0 %371
      %374 = vst.msk [vmem:[%s206] sm:$0x3] %vm365, %v372
      %v375 = vld [vmem:[%s189] sm:$0x7]
      %v377 = vunpack.c.l.b16 %v375
      %v378 = vpack.c.b16 %v377, %v377
      %v380 = vshrl.u32 %v378, 16
      %v382 = vshll.u32 %v378, 16
      %v384 = vrot.slane %v382, 1
      %v385 = vor.u32 %v380, %v384
      %386 = vrot.lane.b32.xlu0 %v385, 100
      %v387 = vpop.permute.xlu0 %386
      %389 = vst.msk [vmem:[%s215] sm:$0x3] %vm365, %v387
      %v390 = vld [vmem:[%s189] sm:$0x7]
      %v392 = vunpack.c.l.b16 %v390
      %v393 = vpack.c.b16 %v392, %v392
      %v395 = vshrl.u32 %v393, 16
      %v397 = vshll.u32 %v393, 16
      %v399 = vrot.slane %v397, 1
      %v400 = vor.u32 %v395, %v399
      %401 = vrot.lane.b32.xlu0 %v400, 70
      %v402 = vpop.permute.xlu0 %401
      %404 = vst.msk [vmem:[%s224] sm:$0x3] %vm365, %v402
      %v405 = vld [vmem:[%s189] sm:$0x3]
      %v407 = vunpack.c.l.b16 %v405
      %v408 = vpack.c.b16 %v407, %v407
      %409 = vrot.lane.b32.xlu0 %v408, 30
      %v410 = vpop.permute.xlu0 %409
      %vm412 = vcmask 1042368
      %413 = vst.msk [vmem:[#allocation2] sm:$0x3] %vm412, %v410
      %vm414 = vcmask 91136
      %415 = vst.msk [vmem:[#allocation2 + $0x8] sm:$0x3] %vm414, %v410
      %v416 = vld [vmem:[%s189] sm:$0x3]
      %v418 = vunpack.c.l.b16 %v416
      %v419 = vpack.c.b16 %v418, %v418
      %420 = vrot.lane.b32.xlu0 %v419, 55
      %v421 = vpop.permute.xlu0 %420
      %423 = vst.msk [vmem:[%s206] sm:$0x3] %vm412, %v421
      %424 = vst.msk [vmem:[%s206 + $0x8] sm:$0x3] %vm414, %v421
      %v425 = vld [vmem:[%s189] sm:$0x7]
      %v427 = vunpack.c.l.b16 %v425
      %v428 = vpack.c.b16 %v427, %v427
      %v430 = vshrl.u32 %v428, 16
      %v432 = vshll.u32 %v428, 16
      %v434 = vrot.slane %v432, 1
      %v435 = vor.u32 %v430, %v434
      %436 = vrot.lane.b32.xlu0 %v435, 90
      %v437 = vpop.permute.xlu0 %436
      %439 = vst.msk [vmem:[%s215] sm:$0x3] %vm412, %v437
      %440 = vst.msk [vmem:[%s215 + $0x8] sm:$0x3] %vm414, %v437
      %v441 = vld [vmem:[%s189] sm:$0x7]
      %v443 = vunpack.c.l.b16 %v441
      %v444 = vpack.c.b16 %v443, %v443
      %v446 = vshrl.u32 %v444, 16
      %v448 = vshll.u32 %v444, 16
      %v450 = vrot.slane %v448, 1
      %v451 = vor.u32 %v446, %v450
      %452 = vrot.lane.b32.xlu0 %v451, 115
      %v453 = vpop.permute.xlu0 %452
      %455 = vst.msk [vmem:[%s224] sm:$0x3] %vm412, %v453
      %456 = vst.msk [vmem:[%s224 + $0x8] sm:$0x3] %vm414, %v453
      %v457 = vld [vmem:[%s189] sm:$0x3]
      %v459 = vunpack.c.l.b16 %v457
      %v460 = vpack.c.b16 %v459, %v459
      %461 = vrot.lane.b32.xlu0 %v460, 75
      %v462 = vpop.permute.xlu0 %461
      %vm464 = vcmask 255072
      %465 = vst.msk [vmem:[#allocation2 + $0x8] sm:$0x3] %vm464, %v462
      %v466 = vld [vmem:[%s189] sm:$0x3]
      %v468 = vunpack.c.l.b16 %v466
      %v469 = vpack.c.b16 %v468, %v468
      %470 = vrot.lane.b32.xlu0 %v469, 45
      %v471 = vpop.permute.xlu0 %470
      %473 = vst.msk [vmem:[%s206 + $0x8] sm:$0x3] %vm464, %v471
      %v474 = vld [vmem:[%s189] sm:$0x7]
      %v476 = vunpack.c.l.b16 %v474
      %v477 = vpack.c.b16 %v476, %v476
      %v479 = vshrl.u32 %v477, 16
      %v481 = vshll.u32 %v477, 16
      %v483 = vrot.slane %v481, 1
      %v484 = vor.u32 %v479, %v483
      %485 = vrot.lane.b32.xlu0 %v484, 7
      %v486 = vpop.permute.xlu0 %485
      %488 = vst.msk [vmem:[%s215 + $0x8] sm:$0x3] %vm464, %v486
      %v489 = vld [vmem:[%s189] sm:$0x7]
      %v491 = vunpack.c.l.b16 %v489
      %v492 = vpack.c.b16 %v491, %v491
      %v494 = vshrl.u32 %v492, 16
      %v496 = vshll.u32 %v492, 16
      %v498 = vrot.slane %v496, 1
      %v499 = vor.u32 %v494, %v498
      %500 = vrot.lane.b32.xlu0 %v499, 105
      %v501 = vpop.permute.xlu0 %500
      %503 = vst.msk [vmem:[%s224 + $0x8] sm:$0x3] %vm464, %v501
      %v504 = vld [vmem:[%s189] sm:$0x3]
      %v506 = vunpack.c.l.b16 %v504
      %v507 = vpack.c.b16 %v506, %v506
      %508 = vrot.lane.b32.xlu0 %v507, 65
      %v509 = vpop.permute.xlu0 %508
      %vm511 = vcmask 419072
      %512 = vst.msk [vmem:[#allocation2 + $0x8] sm:$0x3] %vm511, %v509
      %v513 = vld [vmem:[%s189] sm:$0x3]
      %v515 = vunpack.c.l.b16 %v513
      %v516 = vpack.c.b16 %v515, %v515
      %517 = vrot.lane.b32.xlu0 %v516, 90
      %v518 = vpop.permute.xlu0 %517
      %520 = vst.msk [vmem:[%s206 + $0x8] sm:$0x3] %vm511, %v518
      %v521 = vld [vmem:[%s189] sm:$0x7]
      %v523 = vunpack.c.l.b16 %v521
      %v524 = vpack.c.b16 %v523, %v523
      %v526 = vshrl.u32 %v524, 16
      %v528 = vshll.u32 %v524, 16
      %v530 = vrot.slane %v528, 1
      %v531 = vor.u32 %v526, %v530
      %532 = vrot.lane.b32.xlu0 %v531, 125
      %v533 = vpop.permute.xlu0 %532
      %535 = vst.msk [vmem:[%s215 + $0x8] sm:$0x3] %vm511, %v533
      %v536 = vld [vmem:[%s189] sm:$0x7]
      %v538 = vunpack.c.l.b16 %v536
      %v539 = vpack.c.b16 %v538, %v538
      %v541 = vshrl.u32 %v539, 16
      %v543 = vshll.u32 %v539, 16
      %v545 = vrot.slane %v543, 1
      %v546 = vor.u32 %v541, %v545
      %547 = vrot.lane.b32.xlu0 %v546, 22
      %v548 = vpop.permute.xlu0 %547
      %550 = vst.msk [vmem:[%s224 + $0x8] sm:$0x3] %vm511, %v548
      %v551 = vld [vmem:[%s189] sm:$0x3]
      %v553 = vunpack.c.l.b16 %v551
      %v554 = vpack.c.b16 %v553, %v553
      %555 = vrot.lane.b32.xlu0 %v554, 110
      %v556 = vpop.permute.xlu0 %555
      %vm558 = vcmask 583072
      %559 = vst.msk [vmem:[#allocation2 + $0x8] sm:$0x3] %vm558, %v556
      %v560 = vld [vmem:[%s189] sm:$0x3]
      %v562 = vunpack.c.l.b16 %v560
      %v563 = vpack.c.b16 %v562, %v562
      %564 = vrot.lane.b32.xlu0 %v563, 80
      %v565 = vpop.permute.xlu0 %564
      %567 = vst.msk [vmem:[%s206 + $0x8] sm:$0x3] %vm558, %v565
      %v568 = vld [vmem:[%s189] sm:$0x7]
      %v570 = vunpack.c.l.b16 %v568
      %v571 = vpack.c.b16 %v570, %v570
      %v573 = vshrl.u32 %v571, 16
      %v575 = vshll.u32 %v571, 16
      %v577 = vrot.slane %v575, 1
      %v578 = vor.u32 %v573, %v577
      %579 = vrot.lane.b32.xlu0 %v578, 42
      %v580 = vpop.permute.xlu0 %579
      %582 = vst.msk [vmem:[%s215 + $0x8] sm:$0x3] %vm558, %v580
      %v583 = vld [vmem:[%s189] sm:$0x7]
      %v585 = vunpack.c.l.b16 %v583
      %v586 = vpack.c.b16 %v585, %v585
      %v588 = vshrl.u32 %v586, 16
      %v590 = vshll.u32 %v586, 16
      %v592 = vrot.slane %v590, 1
      %v593 = vor.u32 %v588, %v592
      %594 = vrot.lane.b32.xlu0 %v593, 12
      %v595 = vpop.permute.xlu0 %594
      %597 = vst.msk [vmem:[%s224 + $0x8] sm:$0x3] %vm558, %v595
      %v598 = vld [vmem:[%s189] sm:$0x7]
      %v600 = vunpack.c.l.b16 %v598
      %v601 = vpack.c.b16 %v600, %v600
      %v603 = vshrl.u32 %v601, 16
      %v605 = vshll.u32 %v601, 16
      %v607 = vrot.slane %v605, 1
      %v608 = vor.u32 %v603, %v607
      %609 = vrot.lane.b32.xlu0 %v608, 72
      %v610 = vpop.permute.xlu0 %609
      %vm612 = vcmask 747072
      %613 = vst.msk [vmem:[#allocation2 + $0x8] sm:$0x3] %vm612, %v610
      %v614 = vld [vmem:[%s189] sm:$0x7]
      %v616 = vunpack.c.l.b16 %v614
      %v617 = vpack.c.b16 %v616, %v616
      %v619 = vshrl.u32 %v617, 16
      %v621 = vshll.u32 %v617, 16
      %v623 = vrot.slane %v621, 1
      %v624 = vor.u32 %v619, %v623
      %625 = vrot.lane.b32.xlu0 %v624, 42
      %v626 = vpop.permute.xlu0 %625
      %628 = vst.msk [vmem:[%s206 + $0x8] sm:$0x3] %vm612, %v626
      %v629 = vld [vmem:[%s189] sm:$0x7]
      %v631 = vunpack.c.l.b16 %v629
      %v632 = vpack.c.b16 %v631, %v631
      %v634 = vshrl.u32 %v632, 16
      %v636 = vshll.u32 %v632, 16
      %v638 = vrot.slane %v636, 1
      %v639 = vor.u32 %v634, %v638
      %640 = vrot.lane.b32.xlu0 %v639, 12
      %v641 = vpop.permute.xlu0 %640
      %643 = vst.msk [vmem:[%s215 + $0x8] sm:$0x3] %vm612, %v641
      %v644 = vld [vmem:[%s189] sm:$0x7]
      %v646 = vunpack.c.l.b16 %v644
      %v647 = vpack.c.b16 %v646, %v646
      %v649 = vshrl.u32 %v647, 16
      %v651 = vshll.u32 %v647, 16
      %v653 = vrot.slane %v651, 1
      %v654 = vor.u32 %v649, %v653
      %655 = vrot.lane.b32.xlu0 %v654, 110
      %v656 = vpop.permute.xlu0 %655
      %658 = vst.msk [vmem:[%s224 + $0x8] sm:$0x3] %vm612, %v656
      %v659 = vld [vmem:[%s189] sm:$0x7]
      %v661 = vunpack.c.l.b16 %v659
      %v662 = vpack.c.b16 %v661, %v661
      %v664 = vshrl.u32 %v662, 16
      %v666 = vshll.u32 %v662, 16
      %v668 = vrot.slane %v666, 1
      %v669 = vor.u32 %v664, %v668
      %670 = vrot.lane.b32.xlu0 %v669, 62
      %v671 = vpop.permute.xlu0 %670
      %vm673 = vcmask 911072
      %674 = vst.msk [vmem:[#allocation2 + $0x8] sm:$0x3] %vm673, %v671
      %v675 = vld [vmem:[%s189] sm:$0x7]
      %v677 = vunpack.c.l.b16 %v675
      %v678 = vpack.c.b16 %v677, %v677
      %v680 = vshrl.u32 %v678, 16
      %v682 = vshll.u32 %v678, 16
      %v684 = vrot.slane %v682, 1
      %v685 = vor.u32 %v680, %v684
      %686 = vrot.lane.b32.xlu0 %v685, 87
      %v687 = vpop.permute.xlu0 %686
      %689 = vst.msk [vmem:[%s206 + $0x8] sm:$0x3] %vm673, %v687
      %v690 = vld [vmem:[%s189] sm:$0x7]
      %v692 = vunpack.c.l.b16 %v690
      %v693 = vpack.c.b16 %v692, %v692
      %v695 = vshrl.u32 %v693, 16
      %v697 = vshll.u32 %v693, 16
      %v699 = vrot.slane %v697, 1
      %v700 = vor.u32 %v695, %v699
      %701 = vrot.lane.b32.xlu0 %v700, 2
      %v702 = vpop.permute.xlu0 %701
      %704 = vst.msk [vmem:[%s215 + $0x8] sm:$0x3] %vm673, %v702
      %v705 = vld [vmem:[%s189] sm:$0x7]
      %v707 = vunpack.c.l.b16 %v705
      %v708 = vpack.c.b16 %v707, %v707
      %v710 = vshrl.u32 %v708, 16
      %v712 = vshll.u32 %v708, 16
      %v714 = vrot.slane %v712, 1
      %v715 = vor.u32 %v710, %v714
      %716 = vrot.lane.b32.xlu0 %v715, 27
      %v717 = vpop.permute.xlu0 %716
      %719 = vst.msk [vmem:[%s224 + $0x8] sm:$0x3] %vm673, %v717
      %v720 = vld [vmem:[%s189] sm:$0x7]
      %v722 = vunpack.c.l.b16 %v720
      %v723 = vpack.c.b16 %v722, %v722
      %v725 = vshrl.u32 %v723, 16
      %v727 = vshll.u32 %v723, 16
      %v729 = vrot.slane %v727, 1
      %v730 = vor.u32 %v725, %v729
      %731 = vrot.lane.b32.xlu0 %v730, 107
      %v732 = vpop.permute.xlu0 %731
      %vm734 = vcmask 1042304
      %735 = vst.msk [vmem:[#allocation2 + $0x8] sm:$0x3] %vm734, %v732
      %vm736 = vcmask 25600
      %737 = vst.msk [vmem:[#allocation2 + $0x10] sm:$0x3] %vm736, %v732
      %v738 = vld [vmem:[%s189] sm:$0x7]
      %v740 = vunpack.c.l.b16 %v738
      %v741 = vpack.c.b16 %v740, %v740
      %v743 = vshrl.u32 %v741, 16
      %v745 = vshll.u32 %v741, 16
      %v747 = vrot.slane %v745, 1
      %v748 = vor.u32 %v743, %v747
      %749 = vrot.lane.b32.xlu0 %v748, 77
      %v750 = vpop.permute.xlu0 %749
      %752 = vst.msk [vmem:[%s206 + $0x8] sm:$0x3] %vm734, %v750
      %753 = vst.msk [vmem:[%s206 + $0x10] sm:$0x3] %vm736, %v750
      %v754 = vld [vmem:[%s189] sm:$0x7]
      %v756 = vunpack.c.l.b16 %v754
      %v757 = vpack.c.b16 %v756, %v756
      %v759 = vshrl.u32 %v757, 16
      %v761 = vshll.u32 %v757, 16
      %v763 = vrot.slane %v761, 1
      %v764 = vor.u32 %v759, %v763
      %765 = vrot.lane.b32.xlu0 %v764, 47
      %v766 = vpop.permute.xlu0 %765
      %768 = vst.msk [vmem:[%s215 + $0x8] sm:$0x3] %vm734, %v766
      %769 = vst.msk [vmem:[%s215 + $0x10] sm:$0x3] %vm736, %v766
      %v770 = vld [vmem:[%s189] sm:$0x7]
      %v772 = vunpack.c.l.b16 %v770
      %v773 = vpack.c.b16 %v772, %v772
      %v775 = vshrl.u32 %v773, 16
      %v777 = vshll.u32 %v773, 16
      %v779 = vrot.slane %v777, 1
      %v780 = vor.u32 %v775, %v779
      %781 = vrot.lane.b32.xlu0 %v780, 17
      %v782 = vpop.permute.xlu0 %781
      %784 = vst.msk [vmem:[%s224 + $0x8] sm:$0x3] %vm734, %v782
      %785 = vst.msk [vmem:[%s224 + $0x10] sm:$0x3] %vm736, %v782
      %v786 = vld [vmem:[%s189] sm:$0x7]
      %v788 = vunpack.c.l.b16 %v786
      %v789 = vpack.c.b16 %v788, %v788
      %v791 = vshrl.u32 %v789, 16
      %v793 = vshll.u32 %v789, 16
      %v795 = vrot.slane %v793, 1
      %v796 = vor.u32 %v791, %v795
      %797 = vrot.lane.b32.xlu0 %v796, 97
      %v798 = vpop.permute.xlu0 %797
      %vm800 = vcmask 189472
      %801 = vst.msk [vmem:[#allocation2 + $0x10] sm:$0x3] %vm800, %v798
      %v802 = vld [vmem:[%s189] sm:$0x7]
      %v804 = vunpack.c.l.b16 %v802
      %v805 = vpack.c.b16 %v804, %v804
      %v807 = vshrl.u32 %v805, 16
      %v809 = vshll.u32 %v805, 16
      %v811 = vrot.slane %v809, 1
      %v812 = vor.u32 %v807, %v811
      %813 = vrot.lane.b32.xlu0 %v812, 122
      %v814 = vpop.permute.xlu0 %813
      %816 = vst.msk [vmem:[%s206 + $0x10] sm:$0x3] %vm800, %v814
      %v817 = vld [vmem:[%s189] sm:$0x7]
      %v819 = vunpack.c.l.b16 %v817
      %v820 = vpack.c.b16 %v819, %v819
      %v822 = vshrl.u32 %v820, 16
      %v824 = vshll.u32 %v820, 16
      %v826 = vrot.slane %v824, 1
      %v827 = vor.u32 %v822, %v826
      %828 = vrot.lane.b32.xlu0 %v827, 37
      %v829 = vpop.permute.xlu0 %828
      %831 = vst.msk [vmem:[%s215 + $0x10] sm:$0x3] %vm800, %v829
      %v832 = vld [vmem:[%s189] sm:$0x7]
      %v834 = vunpack.c.l.b16 %v832
      %v835 = vpack.c.b16 %v834, %v834
      %v837 = vshrl.u32 %v835, 16
      %v839 = vshll.u32 %v835, 16
      %v841 = vrot.slane %v839, 1
      %v842 = vor.u32 %v837, %v841
      %843 = vrot.lane.b32.xlu0 %v842, 62
      %v844 = vpop.permute.xlu0 %843
      %846 = vst.msk [vmem:[%s224 + $0x10] sm:$0x3] %vm800, %v844
      %v847 = vld [vmem:[%s189] sm:$0x7]
      %v849 = vunpack.c.l.b16 %v847
      %v850 = vpack.c.b16 %v849, %v849
      %v852 = vshrl.u32 %v850, 16
      %v854 = vshll.u32 %v850, 16
      %v856 = vrot.slane %v854, 1
      %v857 = vor.u32 %v852, %v856
      %858 = vrot.lane.b32.xlu0 %v857, 14
      %v859 = vpop.permute.xlu0 %858
      %vm861 = vcmask 353472
      %862 = vst.msk [vmem:[#allocation2 + $0x10] sm:$0x3] %vm861, %v859
      %v863 = vld [vmem:[%s189] sm:$0x7]
      %v865 = vunpack.c.l.b16 %v863
      %v866 = vpack.c.b16 %v865, %v865
      %v868 = vshrl.u32 %v866, 16
      %v870 = vshll.u32 %v866, 16
      %v872 = vrot.slane %v870, 1
      %v873 = vor.u32 %v868, %v872
      %874 = vrot.lane.b32.xlu0 %v873, 112
      %v875 = vpop.permute.xlu0 %874
      %877 = vst.msk [vmem:[%s206 + $0x10] sm:$0x3] %vm861, %v875
      %v878 = vld [vmem:[%s189] sm:$0x7]
      %v880 = vunpack.c.l.b16 %v878
      %v881 = vpack.c.b16 %v880, %v880
      %v883 = vshrl.u32 %v881, 16
      %v885 = vshll.u32 %v881, 16
      %v887 = vrot.slane %v885, 1
      %v888 = vor.u32 %v883, %v887
      %889 = vrot.lane.b32.xlu0 %v888, 82
      %v890 = vpop.permute.xlu0 %889
      %892 = vst.msk [vmem:[%s215 + $0x10] sm:$0x3] %vm861, %v890
      %v893 = vld [vmem:[%s189] sm:$0x7]
      %v895 = vunpack.c.l.b16 %v893
      %v896 = vpack.c.b16 %v895, %v895
      %v898 = vshrl.u32 %v896, 16
      %v900 = vshll.u32 %v896, 16
      %v902 = vrot.slane %v900, 1
      %v903 = vor.u32 %v898, %v902
      %904 = vrot.lane.b32.xlu0 %v903, 52
      %v905 = vpop.permute.xlu0 %904
      %907 = vst.msk [vmem:[%s224 + $0x10] sm:$0x3] %vm861, %v905
      %v908 = vld [vmem:[%s189] sm:$0x7]
      %v910 = vunpack.c.l.b16 %v908
      %v911 = vpack.c.b16 %v910, %v910
      %v913 = vshrl.u32 %v911, 16
      %v915 = vshll.u32 %v911, 16
      %v917 = vrot.slane %v915, 1
      %v918 = vor.u32 %v913, %v917
      %919 = vrot.lane.b32.xlu0 %v918, 112
      %v920 = vpop.permute.xlu0 %919
      %vm922 = vcmask 517472
      %923 = vst.msk [vmem:[#allocation2 + $0x10] sm:$0x3] %vm922, %v920
      %v924 = vld [vmem:[%s189] sm:$0x7]
      %v926 = vunpack.c.l.b16 %v924
      %v927 = vpack.c.b16 %v926, %v926
      %v929 = vshrl.u32 %v927, 16
      %v931 = vshll.u32 %v927, 16
      %v933 = vrot.slane %v931, 1
      %v934 = vor.u32 %v929, %v933
      %935 = vrot.lane.b32.xlu0 %v934, 82
      %v936 = vpop.permute.xlu0 %935
      %938 = vst.msk [vmem:[%s206 + $0x10] sm:$0x3] %vm922, %v936
      %v939 = vld [vmem:[%s189] sm:$0x6]
      %v941 = vunpack.c.l.b16 %v939
      %v942 = vpack.c.b16 %v941, %v941
      %v943 = vrot.slane %v942, 1
      %944 = vrot.lane.b32.xlu0 %v943, 44
      %v945 = vpop.permute.xlu0 %944
      %947 = vst.msk [vmem:[%s215 + $0x10] sm:$0x3] %vm922, %v945
      %v948 = vld [vmem:[%s189] sm:$0x6]
      %v950 = vunpack.c.l.b16 %v948
      %v951 = vpack.c.b16 %v950, %v950
      %v952 = vrot.slane %v951, 1
      %953 = vrot.lane.b32.xlu0 %v952, 14
      %v954 = vpop.permute.xlu0 %953
      %956 = vst.msk [vmem:[%s224 + $0x10] sm:$0x3] %vm922, %v954
      %v957 = vld [vmem:[%s189] sm:$0x7]
      %v959 = vunpack.c.l.b16 %v957
      %v960 = vpack.c.b16 %v959, %v959
      %v962 = vshrl.u32 %v960, 16
      %v964 = vshll.u32 %v960, 16
      %v966 = vrot.slane %v964, 1
      %v967 = vor.u32 %v962, %v966
      %968 = vrot.lane.b32.xlu0 %v967, 102
      %v969 = vpop.permute.xlu0 %968
      %vm971 = vcmask 681472
      %972 = vst.msk [vmem:[#allocation2 + $0x10] sm:$0x3] %vm971, %v969
      %v973 = vld [vmem:[%s189] sm:$0x7]
      %v975 = vunpack.c.l.b16 %v973
      %v976 = vpack.c.b16 %v975, %v975
      %v978 = vshrl.u32 %v976, 16
      %v980 = vshll.u32 %v976, 16
      %v982 = vrot.slane %v980, 1
      %v983 = vor.u32 %v978, %v982
      %984 = vrot.lane.b32.xlu0 %v983, 127
      %v985 = vpop.permute.xlu0 %984
      %987 = vst.msk [vmem:[%s206 + $0x10] sm:$0x3] %vm971, %v985
      %v988 = vld [vmem:[%s189] sm:$0x6]
      %v990 = vunpack.c.l.b16 %v988
      %v991 = vpack.c.b16 %v990, %v990
      %v992 = vrot.slane %v991, 1
      %993 = vrot.lane.b32.xlu0 %v992, 34
      %v994 = vpop.permute.xlu0 %993
      %996 = vst.msk [vmem:[%s215 + $0x10] sm:$0x3] %vm971, %v994
      %v997 = vld [vmem:[%s189] sm:$0x6]
      %v999 = vunpack.c.l.b16 %v997
      %v1000 = vpack.c.b16 %v999, %v999
      %v1001 = vrot.slane %v1000, 1
      %1002 = vrot.lane.b32.xlu0 %v1001, 59
      %v1003 = vpop.permute.xlu0 %1002
      %1005 = vst.msk [vmem:[%s224 + $0x10] sm:$0x3] %vm971, %v1003
      %v1006 = vld [vmem:[%s189] sm:$0x7]
      %v1008 = vunpack.c.l.b16 %v1006
      %v1009 = vpack.c.b16 %v1008, %v1008
      %v1011 = vshrl.u32 %v1009, 16
      %v1013 = vshll.u32 %v1009, 16
      %v1015 = vrot.slane %v1013, 1
      %v1016 = vor.u32 %v1011, %v1015
      %1017 = vrot.lane.b32.xlu0 %v1016, 19
      %v1018 = vpop.permute.xlu0 %1017
      %vm1020 = vcmask 845472
      %1021 = vst.msk [vmem:[#allocation2 + $0x10] sm:$0x3] %vm1020, %v1018
      %v1022 = vld [vmem:[%s189] sm:$0x7]
      %v1024 = vunpack.c.l.b16 %v1022
      %v1025 = vpack.c.b16 %v1024, %v1024
      %v1027 = vshrl.u32 %v1025, 16
      %v1029 = vshll.u32 %v1025, 16
      %v1031 = vrot.slane %v1029, 1
      %v1032 = vor.u32 %v1027, %v1031
      %1033 = vrot.lane.b32.xlu0 %v1032, 117
      %v1034 = vpop.permute.xlu0 %1033
      %1036 = vst.msk [vmem:[%s206 + $0x10] sm:$0x3] %vm1020, %v1034
      %v1037 = vld [vmem:[%s189] sm:$0x6]
      %v1039 = vunpack.c.l.b16 %v1037
      %v1040 = vpack.c.b16 %v1039, %v1039
      %v1041 = vrot.slane %v1040, 1
      %1042 = vrot.lane.b32.xlu0 %v1041, 79
      %v1043 = vpop.permute.xlu0 %1042
      %1045 = vst.msk [vmem:[%s215 + $0x10] sm:$0x3] %vm1020, %v1043
      %v1046 = vld [vmem:[%s189] sm:$0x6]
      %v1048 = vunpack.c.l.b16 %v1046
      %v1049 = vpack.c.b16 %v1048, %v1048
      %v1050 = vrot.slane %v1049, 1
      %1051 = vrot.lane.b32.xlu0 %v1050, 49
      %v1052 = vpop.permute.xlu0 %1051
      %1054 = vst.msk [vmem:[%s224 + $0x10] sm:$0x3] %vm1020, %v1052
      %v1055 = vld [vmem:[%s189] sm:$0x7]
      %v1057 = vunpack.c.l.b16 %v1055
      %v1058 = vpack.c.b16 %v1057, %v1057
      %v1060 = vshrl.u32 %v1058, 16
      %v1062 = vshll.u32 %v1058, 16
      %v1064 = vrot.slane %v1062, 1
      %v1065 = vor.u32 %v1060, %v1064
      %1066 = vrot.lane.b32.xlu0 %v1065, 9
      %v1067 = vpop.permute.xlu0 %1066
      %vm1069 = vcmask 1009472
      %1070 = vst.msk [vmem:[#allocation2 + $0x10] sm:$0x3] %vm1069, %v1067
      %v1071 = vld [vmem:[%s189] sm:$0x7]
      %v1073 = vunpack.c.l.b16 %v1071
      %v1074 = vpack.c.b16 %v1073, %v1073
      %v1076 = vshrl.u32 %v1074, 16
      %v1078 = vshll.u32 %v1074, 16
      %v1080 = vrot.slane %v1078, 1
      %v1081 = vor.u32 %v1076, %v1080
      %1082 = vrot.lane.b32.xlu0 %v1081, 34
      %v1083 = vpop.permute.xlu0 %1082
      %1085 = vst.msk [vmem:[%s206 + $0x10] sm:$0x3] %vm1069, %v1083
      %v1086 = vld [vmem:[%s189] sm:$0x6]
      %v1088 = vunpack.c.l.b16 %v1086
      %v1089 = vpack.c.b16 %v1088, %v1088
      %v1090 = vrot.slane %v1089, 1
      %1091 = vrot.lane.b32.xlu0 %v1090, 69
      %v1092 = vpop.permute.xlu0 %1091
      %1094 = vst.msk [vmem:[%s215 + $0x10] sm:$0x3] %vm1069, %v1092
      %v1095 = vld [vmem:[%s189] sm:$0x6]
      %v1097 = vunpack.c.l.b16 %v1095
      %v1098 = vpack.c.b16 %v1097, %v1097
      %v1099 = vrot.slane %v1098, 1
      %1100 = vrot.lane.b32.xlu0 %v1099, 94
      %v1101 = vpop.permute.xlu0 %1100
      %1103 = vst.msk [vmem:[%s224 + $0x10] sm:$0x3] %vm1069, %v1101
      %v1104 = vld [vmem:[%s189] sm:$0x7]
      %v1106 = vunpack.c.l.b16 %v1104
      %v1107 = vpack.c.b16 %v1106, %v1106
      %v1109 = vshrl.u32 %v1107, 16
      %v1111 = vshll.u32 %v1107, 16
      %v1113 = vrot.slane %v1111, 1
      %v1114 = vor.u32 %v1109, %v1113
      %1115 = vrot.lane.b32.xlu0 %v1114, 54
      %v1116 = vpop.permute.xlu0 %1115
      %vm1118 = vcmask 1042400
      %1119 = vst.msk [vmem:[#allocation2 + $0x10] sm:$0x3] %vm1118, %v1116
      %vm1120 = vcmask 123904
      %1121 = vst.msk [vmem:[#allocation2 + $0x18] sm:$0x3] %vm1120, %v1116
      %v1122 = vld [vmem:[%s189] sm:$0x7]
      %v1124 = vunpack.c.l.b16 %v1122
      %v1125 = vpack.c.b16 %v1124, %v1124
      %v1127 = vshrl.u32 %v1125, 16
      %v1129 = vshll.u32 %v1125, 16
      %v1131 = vrot.slane %v1129, 1
      %v1132 = vor.u32 %v1127, %v1131
      %1133 = vrot.lane.b32.xlu0 %v1132, 24
      %v1134 = vpop.permute.xlu0 %1133
      %1136 = vst.msk [vmem:[%s206 + $0x10] sm:$0x3] %vm1118, %v1134
      %1137 = vst.msk [vmem:[%s206 + $0x18] sm:$0x3] %vm1120, %v1134
      %v1138 = vld [vmem:[%s189] sm:$0x6]
      %v1140 = vunpack.c.l.b16 %v1138
      %v1141 = vpack.c.b16 %v1140, %v1140
      %v1142 = vrot.slane %v1141, 1
      %1143 = vrot.lane.b32.xlu0 %v1142, 114
      %v1144 = vpop.permute.xlu0 %1143
      %1146 = vst.msk [vmem:[%s215 + $0x10] sm:$0x3] %vm1118, %v1144
      %1147 = vst.msk [vmem:[%s215 + $0x18] sm:$0x3] %vm1120, %v1144
      %v1148 = vld [vmem:[%s189] sm:$0x6]
      %v1150 = vunpack.c.l.b16 %v1148
      %v1151 = vpack.c.b16 %v1150, %v1150
      %v1152 = vrot.slane %v1151, 1
      %1153 = vrot.lane.b32.xlu0 %v1152, 84
      %v1154 = vpop.permute.xlu0 %1153
      %1156 = vst.msk [vmem:[%s224 + $0x10] sm:$0x3] %vm1118, %v1154
      %1157 = vst.msk [vmem:[%s224 + $0x18] sm:$0x3] %vm1120, %v1154
      %v1158 = vld [vmem:[%s189] sm:$0x6]
      %v1160 = vunpack.c.l.b16 %v1158
      %v1161 = vpack.c.b16 %v1160, %v1160
      %v1162 = vrot.slane %v1161, 1
      %1163 = vrot.lane.b32.xlu0 %v1162, 16
      %v1164 = vpop.permute.xlu0 %1163
      %vm1166 = vcmask 287872
      %1167 = vst.msk [vmem:[#allocation2 + $0x18] sm:$0x3] %vm1166, %v1164
      %v1168 = vld [vmem:[%s189] sm:$0x6]
      %v1170 = vunpack.c.l.b16 %v1168
      %v1171 = vpack.c.b16 %v1170, %v1170
      %v1172 = vrot.slane %v1171, 1
      %1173 = vrot.lane.b32.xlu0 %v1172, 114
      %v1174 = vpop.permute.xlu0 %1173
      %1176 = vst.msk [vmem:[%s206 + $0x18] sm:$0x3] %vm1166, %v1174
      %v1177 = vld [vmem:[%s189] sm:$0x6]
      %v1179 = vunpack.c.l.b16 %v1177
      %v1180 = vpack.c.b16 %v1179, %v1179
      %v1181 = vrot.slane %v1180, 1
      %1182 = vrot.lane.b32.xlu0 %v1181, 84
      %v1183 = vpop.permute.xlu0 %1182
      %1185 = vst.msk [vmem:[%s215 + $0x18] sm:$0x3] %vm1166, %v1183
      %v1186 = vld [vmem:[%s189] sm:$0x6]
      %v1188 = vunpack.c.l.b16 %v1186
      %v1189 = vpack.c.b16 %v1188, %v1188
      %v1190 = vrot.slane %v1189, 1
      %1191 = vrot.lane.b32.xlu0 %v1190, 54
      %v1192 = vpop.permute.xlu0 %1191
      %1194 = vst.msk [vmem:[%s224 + $0x18] sm:$0x3] %vm1166, %v1192
      %v1195 = vld [vmem:[%s189] sm:$0x6]
      %v1197 = vunpack.c.l.b16 %v1195
      %v1198 = vpack.c.b16 %v1197, %v1197
      %v1199 = vrot.slane %v1198, 1
      %1200 = vrot.lane.b32.xlu0 %v1199, 6
      %v1201 = vpop.permute.xlu0 %1200
      %vm1203 = vcmask 451872
      %1204 = vst.msk [vmem:[#allocation2 + $0x18] sm:$0x3] %vm1203, %v1201
      %v1205 = vld [vmem:[%s189] sm:$0x6]
      %v1207 = vunpack.c.l.b16 %v1205
      %v1208 = vpack.c.b16 %v1207, %v1207
      %v1209 = vrot.slane %v1208, 1
      %1210 = vrot.lane.b32.xlu0 %v1209, 31
      %v1211 = vpop.permute.xlu0 %1210
      %1213 = vst.msk [vmem:[%s206 + $0x18] sm:$0x3] %vm1203, %v1211
      %v1214 = vld [vmem:[%s189] sm:$0x6]
      %v1216 = vunpack.c.l.b16 %v1214
      %v1217 = vpack.c.b16 %v1216, %v1216
      %v1218 = vrot.slane %v1217, 1
      %1219 = vrot.lane.b32.xlu0 %v1218, 74
      %v1220 = vpop.permute.xlu0 %1219
      %1222 = vst.msk [vmem:[%s215 + $0x18] sm:$0x3] %vm1203, %v1220
      %v1223 = vld [vmem:[%s189] sm:$0x6]
      %v1225 = vunpack.c.l.b16 %v1223
      %v1226 = vpack.c.b16 %v1225, %v1225
      %v1227 = vrot.slane %v1226, 1
      %1228 = vrot.lane.b32.xlu0 %v1227, 99
      %v1229 = vpop.permute.xlu0 %1228
      %1231 = vst.msk [vmem:[%s224 + $0x18] sm:$0x3] %vm1203, %v1229
      %v1232 = vld [vmem:[%s189] sm:$0x6]
      %v1234 = vunpack.c.l.b16 %v1232
      %v1235 = vpack.c.b16 %v1234, %v1234
      %v1236 = vrot.slane %v1235, 1
      %1237 = vrot.lane.b32.xlu0 %v1236, 51
      %v1238 = vpop.permute.xlu0 %1237
      %vm1240 = vcmask 615872
      %1241 = vst.msk [vmem:[#allocation2 + $0x18] sm:$0x3] %vm1240, %v1238
      %v1242 = vld [vmem:[%s189] sm:$0x6]
      %v1244 = vunpack.c.l.b16 %v1242
      %v1245 = vpack.c.b16 %v1244, %v1244
      %v1246 = vrot.slane %v1245, 1
      %1247 = vrot.lane.b32.xlu0 %v1246, 21
      %v1248 = vpop.permute.xlu0 %1247
      %1250 = vst.msk [vmem:[%s206 + $0x18] sm:$0x3] %vm1240, %v1248
      %v1251 = vld [vmem:[%s189] sm:$0x6]
      %v1253 = vunpack.c.l.b16 %v1251
      %v1254 = vpack.c.b16 %v1253, %v1253
      %v1255 = vrot.slane %v1254, 1
      %1256 = vrot.lane.b32.xlu0 %v1255, 119
      %v1257 = vpop.permute.xlu0 %1256
      %1259 = vst.msk [vmem:[%s215 + $0x18] sm:$0x3] %vm1240, %v1257
      %v1260 = vld [vmem:[%s189] sm:$0x6]
      %v1262 = vunpack.c.l.b16 %v1260
      %v1263 = vpack.c.b16 %v1262, %v1262
      %v1264 = vrot.slane %v1263, 1
      %1265 = vrot.lane.b32.xlu0 %v1264, 89
      %v1266 = vpop.permute.xlu0 %1265
      %1268 = vst.msk [vmem:[%s224 + $0x18] sm:$0x3] %vm1240, %v1266
      %v1269 = vld [vmem:[%s189] sm:$0x6]
      %v1271 = vunpack.c.l.b16 %v1269
      %v1272 = vpack.c.b16 %v1271, %v1271
      %v1273 = vrot.slane %v1272, 1
      %1274 = vrot.lane.b32.xlu0 %v1273, 41
      %v1275 = vpop.permute.xlu0 %1274
      %vm1277 = vcmask 779872
      %1278 = vst.msk [vmem:[#allocation2 + $0x18] sm:$0x3] %vm1277, %v1275
      %v1279 = vld [vmem:[%s189] sm:$0x6]
      %v1281 = vunpack.c.l.b16 %v1279
      %v1282 = vpack.c.b16 %v1281, %v1281
      %v1283 = vrot.slane %v1282, 1
      %1284 = vrot.lane.b32.xlu0 %v1283, 66
      %v1285 = vpop.permute.xlu0 %1284
      %1287 = vst.msk [vmem:[%s206 + $0x18] sm:$0x3] %vm1277, %v1285
      %v1288 = vld [vmem:[%s189] sm:$0x6]
      %v1290 = vunpack.c.l.b16 %v1288
      %v1291 = vpack.c.b16 %v1290, %v1290
      %v1292 = vrot.slane %v1291, 1
      %1293 = vrot.lane.b32.xlu0 %v1292, 109
      %v1294 = vpop.permute.xlu0 %1293
      %1296 = vst.msk [vmem:[%s215 + $0x18] sm:$0x3] %vm1277, %v1294
      %v1297 = vld [vmem:[%s189] sm:$0x6]
      %v1299 = vunpack.c.l.b16 %v1297
      %v1300 = vpack.c.b16 %v1299, %v1299
      %v1301 = vrot.slane %v1300, 1
      %1302 = vrot.lane.b32.xlu0 %v1301, 6
      %v1303 = vpop.permute.xlu0 %1302
      %1305 = vst.msk [vmem:[%s224 + $0x18] sm:$0x3] %vm1277, %v1303
      %v1306 = vld [vmem:[%s189] sm:$0x6]
      %v1308 = vunpack.c.l.b16 %v1306
      %v1309 = vpack.c.b16 %v1308, %v1308
      %v1310 = vrot.slane %v1309, 1
      %1311 = vrot.lane.b32.xlu0 %v1310, 86
      %v1312 = vpop.permute.xlu0 %1311
      %vm1314 = vcmask 943872
      %1315 = vst.msk [vmem:[#allocation2 + $0x18] sm:$0x3] %vm1314, %v1312
      %v1316 = vld [vmem:[%s189] sm:$0x6]
      %v1318 = vunpack.c.l.b16 %v1316
      %v1319 = vpack.c.b16 %v1318, %v1318
      %v1320 = vrot.slane %v1319, 1
      %1321 = vrot.lane.b32.xlu0 %v1320, 56
      %v1322 = vpop.permute.xlu0 %1321
      %1324 = vst.msk [vmem:[%s206 + $0x18] sm:$0x3] %vm1314, %v1322
      %v1325 = vld [vmem:[%s189] sm:$0x6]
      %v1327 = vunpack.c.l.b16 %v1325
      %v1328 = vpack.c.b16 %v1327, %v1327
      %v1329 = vrot.slane %v1328, 1
      %1330 = vrot.lane.b32.xlu0 %v1329, 26
      %v1331 = vpop.permute.xlu0 %1330
      %1333 = vst.msk [vmem:[%s215 + $0x18] sm:$0x3] %vm1314, %v1331
      %v1334 = vld [vmem:[%s189] sm:$0x6]
      %v1336 = vunpack.c.l.b16 %v1334
      %v1337 = vpack.c.b16 %v1336, %v1336
      %v1338 = vrot.slane %v1337, 1
      %1339 = vrot.lane.b32.xlu0 %v1338, 124
      %v1340 = vpop.permute.xlu0 %1339
      %1342 = vst.msk [vmem:[%s224 + $0x18] sm:$0x3] %vm1314, %v1340
      %v1343 = vld [vmem:[#allocation2] sm:$0xff]
      %v1344 = vld [vmem:[#allocation2 + $0x8] sm:$0xff]
      %v1345 = vld [vmem:[#allocation2 + $0x10] sm:$0xff]
      %v1346 = vld [vmem:[#allocation2 + $0x18] sm:$0xff]
      %v1347 = vld [vmem:[#allocation2 + $0x20] sm:$0xff]
      %v1348 = vld [vmem:[#allocation2 + $0x28] sm:$0xff]
      %v1349 = vld [vmem:[#allocation2 + $0x30] sm:$0xff]
      %v1350 = vld [vmem:[#allocation2 + $0x38] sm:$0xff]
      %v1351 = vld [vmem:[#allocation2 + $0x40] sm:$0xff]
      %v1352 = vld [vmem:[#allocation2 + $0x48] sm:$0xff]
      %v1353 = vld [vmem:[#allocation2 + $0x50] sm:$0xff]
      %v1354 = vld [vmem:[#allocation2 + $0x58] sm:$0xff]
      %v1355 = vld [vmem:[#allocation2 + $0x60] sm:$0xff]
      %v1356 = vld [vmem:[#allocation2 + $0x68] sm:$0xff]
      %v1357 = vld [vmem:[#allocation2 + $0x70] sm:$0xff]
      %v1358 = vld [vmem:[#allocation2 + $0x78] sm:$0xff]
      %v1359 = vld [vmem:[%s1] sm:$0xf]
      %v1360 = vld [vmem:[%s1 + $0x4] sm:$0xf]
      %v1361 = vld [vmem:[%s1 + $0x8] sm:$0xf]
      %v1362 = vld [vmem:[%s1 + $0xc] sm:$0xf]
      %v1363 = vld [vmem:[%s1 + $0x10] sm:$0xf]
      %v1364 = vld [vmem:[%s1 + $0x14] sm:$0xf]
      %v1365 = vld [vmem:[%s1 + $0x18] sm:$0xf]
      %v1366 = vld [vmem:[%s1 + $0x1c] sm:$0xf]
      %v1367 = vld [vmem:[%s1 + $0x20] sm:$0xf]
      %v1368 = vld [vmem:[%s1 + $0x24] sm:$0xf]
      %v1369 = vld [vmem:[%s1 + $0x28] sm:$0xf]
      %v1370 = vld [vmem:[%s1 + $0x2c] sm:$0xf]
      %v1371 = vld [vmem:[%s1 + $0x30] sm:$0xf]
      %v1372 = vld [vmem:[%s1 + $0x34] sm:$0xf]
      %v1373 = vld [vmem:[%s1 + $0x38] sm:$0xf]
      %v1374 = vld [vmem:[%s1 + $0x3c] sm:$0xf]
      %v1375 = vld [vmem:[%s1 + $0x40] sm:$0xf]
      %v1376 = vld [vmem:[%s1 + $0x44] sm:$0xf]
      %v1377 = vld [vmem:[%s1 + $0x48] sm:$0xf]
      %v1378 = vld [vmem:[%s1 + $0x4c] sm:$0xf]
      %v1379 = vld [vmem:[%s1 + $0x50] sm:$0xf]
      %v1380 = vld [vmem:[%s1 + $0x54] sm:$0xf]
      %v1381 = vld [vmem:[%s1 + $0x58] sm:$0xf]
      %v1382 = vld [vmem:[%s1 + $0x5c] sm:$0xf]
      %v1383 = vld [vmem:[%s1 + $0x60] sm:$0xf]
      %v1384 = vld [vmem:[%s1 + $0x64] sm:$0xf]
      %v1385 = vld [vmem:[%s1 + $0x68] sm:$0xf]
      %v1386 = vld [vmem:[%s1 + $0x6c] sm:$0xf]
      %v1387 = vld [vmem:[%s1 + $0x70] sm:$0xf]
      %v1388 = vld [vmem:[%s1 + $0x74] sm:$0xf]
      %v1389 = vld [vmem:[%s1 + $0x78] sm:$0xf]
      %v1390 = vld [vmem:[%s1 + $0x7c] sm:$0xf]
      %v1391 = vld [vmem:[%s1 + $0x80] sm:$0xf]
      %v1392 = vld [vmem:[%s1 + $0x84] sm:$0xf]
      %v1393 = vld [vmem:[%s1 + $0x88] sm:$0xf]
      %v1394 = vld [vmem:[%s1 + $0x8c] sm:$0xf]
      %v1395 = vld [vmem:[%s1 + $0x90] sm:$0xf]
      %v1396 = vld [vmem:[%s1 + $0x94] sm:$0xf]
      %v1397 = vld [vmem:[%s1 + $0x98] sm:$0xf]
      %v1398 = vld [vmem:[%s1 + $0x9c] sm:$0xf]
      %v1399 = vld [vmem:[%s1 + $0xa0] sm:$0xf]
      %v1400 = vld [vmem:[%s1 + $0xa4] sm:$0xf]
      %v1401 = vld [vmem:[%s1 + $0xa8] sm:$0xf]
      %v1402 = vld [vmem:[%s1 + $0xac] sm:$0xf]
      %v1403 = vld [vmem:[%s1 + $0xb0] sm:$0xf]
      %v1404 = vld [vmem:[%s1 + $0xb4] sm:$0xf]
      %v1405 = vld [vmem:[%s1 + $0xb8] sm:$0xf]
      %v1406 = vld [vmem:[%s1 + $0xbc] sm:$0xf]
      %v1407 = vld [vmem:[%s1 + $0xc0] sm:$0xf]
      %v1408 = vld [vmem:[%s1 + $0xc4] sm:$0xf]
      %v1409 = vld [vmem:[%s1 + $0xc8] sm:$0xf]
      %v1410 = vld [vmem:[%s1 + $0xcc] sm:$0xf]
      %v1411 = vld [vmem:[%s1 + $0xd0] sm:$0xf]
      %v1412 = vld [vmem:[%s1 + $0xd4] sm:$0xf]
      %v1413 = vld [vmem:[%s1 + $0xd8] sm:$0xf]
      %v1414 = vld [vmem:[%s1 + $0xdc] sm:$0xf]
      %v1415 = vld [vmem:[%s1 + $0xe0] sm:$0xf]
      %v1416 = vld [vmem:[%s1 + $0xe4] sm:$0xf]
      %v1417 = vld [vmem:[%s1 + $0xe8] sm:$0xf]
      %v1418 = vld [vmem:[%s1 + $0xec] sm:$0xf]
      %v1419 = vld [vmem:[%s1 + $0xf0] sm:$0xf]
      %v1420 = vld [vmem:[%s1 + $0xf4] sm:$0xf]
      %v1421 = vld [vmem:[%s1 + $0xf8] sm:$0x3]
      %v1485 = vunpack.c.l.b16 %v1359
      %v1486 = vunpack.c.l.b16 %v1360
      %v1487 = vunpack.c.l.b16 %v1361
      %v1488 = vunpack.c.l.b16 %v1362
      %v1489 = vunpack.c.l.b16 %v1363
      %v1490 = vunpack.c.l.b16 %v1364
      %v1491 = vunpack.c.l.b16 %v1365
      %v1492 = vunpack.c.l.b16 %v1366
      %v1493 = vunpack.c.l.b16 %v1367
      %v1494 = vunpack.c.l.b16 %v1368
      %v1495 = vunpack.c.l.b16 %v1369
      %v1496 = vunpack.c.l.b16 %v1370
      %v1497 = vunpack.c.l.b16 %v1371
      %v1498 = vunpack.c.l.b16 %v1372
      %v1499 = vunpack.c.l.b16 %v1373
      %v1500 = vunpack.c.l.b16 %v1374
      %v1501 = vunpack.c.l.b16 %v1375
      %v1502 = vunpack.c.l.b16 %v1376
      %v1503 = vunpack.c.l.b16 %v1377
      %v1504 = vunpack.c.l.b16 %v1378
      %v1505 = vunpack.c.l.b16 %v1379
      %v1506 = vunpack.c.l.b16 %v1380
      %v1507 = vunpack.c.l.b16 %v1381
      %v1508 = vunpack.c.l.b16 %v1382
      %v1509 = vunpack.c.l.b16 %v1383
      %v1510 = vunpack.c.l.b16 %v1384
      %v1511 = vunpack.c.l.b16 %v1385
      %v1512 = vunpack.c.l.b16 %v1386
      %v1513 = vunpack.c.l.b16 %v1387
      %v1514 = vunpack.c.l.b16 %v1388
      %v1515 = vunpack.c.l.b16 %v1389
      %v1516 = vunpack.c.l.b16 %v1390
      %v1517 = vunpack.c.l.b16 %v1391
      %v1518 = vunpack.c.l.b16 %v1392
      %v1519 = vunpack.c.l.b16 %v1393
      %v1520 = vunpack.c.l.b16 %v1394
      %v1521 = vunpack.c.l.b16 %v1395
      %v1522 = vunpack.c.l.b16 %v1396
      %v1523 = vunpack.c.l.b16 %v1397
      %v1524 = vunpack.c.l.b16 %v1398
      %v1525 = vunpack.c.l.b16 %v1399
      %v1526 = vunpack.c.l.b16 %v1400
      %v1527 = vunpack.c.l.b16 %v1401
      %v1528 = vunpack.c.l.b16 %v1402
      %v1529 = vunpack.c.l.b16 %v1403
      %v1530 = vunpack.c.l.b16 %v1404
      %v1531 = vunpack.c.l.b16 %v1405
      %v1532 = vunpack.c.l.b16 %v1406
      %v1533 = vunpack.c.l.b16 %v1407
      %v1534 = vunpack.c.l.b16 %v1408
      %v1535 = vunpack.c.l.b16 %v1409
      %v1536 = vunpack.c.l.b16 %v1410
      %v1537 = vunpack.c.l.b16 %v1411
      %v1538 = vunpack.c.l.b16 %v1412
      %v1539 = vunpack.c.l.b16 %v1413
      %v1540 = vunpack.c.l.b16 %v1414
      %v1541 = vunpack.c.l.b16 %v1415
      %v1542 = vunpack.c.l.b16 %v1416
      %v1543 = vunpack.c.l.b16 %v1417
      %v1544 = vunpack.c.l.b16 %v1418
      %v1545 = vunpack.c.l.b16 %v1419
      %v1546 = vunpack.c.l.b16 %v1420
      %v1547 = vunpack.c.l.b16 %v1421
      %v1548 = vpack.c.b16 %v1486, %v1485
      %v1549 = vpack.c.b16 %v1488, %v1487
      %v1550 = vpack.c.b16 %v1490, %v1489
      %v1551 = vpack.c.b16 %v1492, %v1491
      %v1552 = vpack.c.b16 %v1494, %v1493
      %v1553 = vpack.c.b16 %v1496, %v1495
      %v1554 = vpack.c.b16 %v1498, %v1497
      %v1555 = vpack.c.b16 %v1500, %v1499
      %v1556 = vpack.c.b16 %v1502, %v1501
      %v1557 = vpack.c.b16 %v1504, %v1503
      %v1558 = vpack.c.b16 %v1506, %v1505
      %v1559 = vpack.c.b16 %v1508, %v1507
      %v1560 = vpack.c.b16 %v1510, %v1509
      %v1561 = vpack.c.b16 %v1512, %v1511
      %v1562 = vpack.c.b16 %v1514, %v1513
      %v1563 = vpack.c.b16 %v1516, %v1515
      %v1564 = vpack.c.b16 %v1518, %v1517
      %v1565 = vpack.c.b16 %v1520, %v1519
      %v1566 = vpack.c.b16 %v1522, %v1521
      %v1567 = vpack.c.b16 %v1524, %v1523
      %v1568 = vpack.c.b16 %v1526, %v1525
      %v1569 = vpack.c.b16 %v1528, %v1527
      %v1570 = vpack.c.b16 %v1530, %v1529
      %v1571 = vpack.c.b16 %v1532, %v1531
      %v1572 = vpack.c.b16 %v1534, %v1533
      %v1573 = vpack.c.b16 %v1536, %v1535
      %v1574 = vpack.c.b16 %v1538, %v1537
      %v1575 = vpack.c.b16 %v1540, %v1539
      %v1576 = vpack.c.b16 %v1542, %v1541
      %v1577 = vpack.c.b16 %v1544, %v1543
      %v1578 = vpack.c.b16 %v1546, %v1545
      %v1579 = vpack.c.b16 %v1547, %v1547
      %vm1611 = vcmask 949248
      %v1613 = vsel %vm1611, %v1346, 0
      %v1616 = vsel %vm1611, %v1350, 0
      %v1619 = vsel %vm1611, %v1354, 0
      %v1622 = vsel %vm1611, %v1358, 0
      %vm1624 = vcmask 1041408
      %v1626 = vsel %vm1624, %v1579, 0
      %1628 = vmatprep.subr.bf16.mxu0 0
      %1629 = vmatpush1.bf16.msra.mxu0 %v1548
      %1630 = vmatprep.subr.bf16.mxu0 0
      %1631 = vmatpush1.bf16.msra.mxu0 %v1549
      %1632 = vmatprep.subr.bf16.mxu0 0
      %1633 = vmatpush1.bf16.msra.mxu0 %v1550
      %1634 = vmatprep.subr.bf16.mxu0 0
      %1635 = vmatpush1.bf16.msra.mxu0 %v1551
      %1636 = vmatprep.subr.bf16.mxu0 0
      %1637 = vmatpush1.bf16.msra.mxu0 %v1552
      %1638 = vmatprep.subr.bf16.mxu0 0
      %1639 = vmatpush1.bf16.msra.mxu0 %v1553
      %1640 = vmatprep.subr.bf16.mxu0 0
      %1641 = vmatpush1.bf16.msra.mxu0 %v1554
      %1642 = vmatprep.subr.bf16.mxu0 0
      %1643 = vmatpush1.bf16.msra.mxu0 %v1555
      %1644 = vmatprep.subr.bf16.mxu0 0
      %1645 = vmatpush1.bf16.msra.mxu0 %v1556
      %1646 = vmatprep.subr.bf16.mxu0 0
      %1647 = vmatpush1.bf16.msra.mxu0 %v1557
      %1648 = vmatprep.subr.bf16.mxu0 0
      %1649 = vmatpush1.bf16.msra.mxu0 %v1558
      %1650 = vmatprep.subr.bf16.mxu0 0
      %1651 = vmatpush1.bf16.msra.mxu0 %v1559
      %1652 = vmatprep.subr.bf16.mxu0 0
      %1653 = vmatpush1.bf16.msra.mxu0 %v1560
      %1654 = vmatprep.subr.bf16.mxu0 0
      %1655 = vmatpush1.bf16.msra.mxu0 %v1561
      %1656 = vmatprep.subr.bf16.mxu0 0
      %1657 = vmatpush1.bf16.msra.mxu0 %v1562
      %1658 = vmatprep.subr.bf16.mxu0 0
      %1659 = vmatpush1.bf16.msra.mxu0 %v1563
      %1660 = vmatprep.mubr.bf16.mxu0 %v1344
      %1661 = vmatmul.mubr.bf16.gmra.mrb[0].mxu0 %v1343
      %v1662 = vpop.f32.mrb[0].mxu0
      %v1663 = vadd.f32 0.0, %v1662
      %v1664 = vpop.f32.mrb[0].mxu0
      %v1665 = vpop.f32.mrb[0].mxu0
      %v1666 = vadd.f32 0.0, %v1665
      %v1667 = vpop.f32.mrb[0].mxu0
      %1668 = vmatprep.mubr.bf16.mxu0 %v1348
      %1669 = vmatmul.mubr.bf16.gmra.mrb[0].mxu0 %v1347
      %v1670 = vpop.f32.mrb[0].mxu0
      %v1671 = vadd.f32 0.0, %v1670
      %v1672 = vpop.f32.mrb[0].mxu0
      %v1673 = vpop.f32.mrb[0].mxu0
      %v1674 = vadd.f32 0.0, %v1673
      %v1675 = vpop.f32.mrb[0].mxu0
      %1676 = vmatprep.mubr.bf16.mxu0 %v1352
      %1677 = vmatmul.mubr.bf16.gmra.mrb[0].mxu0 %v1351
      %v1678 = vpop.f32.mrb[0].mxu0
      %v1679 = vadd.f32 0.0, %v1678
      %v1680 = vpop.f32.mrb[0].mxu0
      %v1681 = vpop.f32.mrb[0].mxu0
      %v1682 = vadd.f32 0.0, %v1681
      %v1683 = vpop.f32.mrb[0].mxu0
      %1684 = vmatprep.mubr.bf16.mxu0 %v1356
      %1685 = vmatmul.mubr.bf16.gmra.mrb[0].mxu0 %v1355
      %v1686 = vpop.f32.mrb[0].mxu0
      %v1687 = vadd.f32 0.0, %v1686
      %v1688 = vpop.f32.mrb[0].mxu0
      %v1689 = vpop.f32.mrb[0].mxu0
      %v1690 = vadd.f32 0.0, %v1689
      %v1691 = vpop.f32.mrb[0].mxu0
      %1692 = vdwg.mxu0
      %1693 = vmatprep.subr.bf16.mxu0 0
      %1694 = vmatpush1.bf16.msra.mxu0 %v1564
      %1695 = vmatprep.subr.bf16.mxu0 0
      %1696 = vmatpush1.bf16.msra.mxu0 %v1565
      %1697 = vmatprep.subr.bf16.mxu0 0
      %1698 = vmatpush1.bf16.msra.mxu0 %v1566
      %1699 = vmatprep.subr.bf16.mxu0 0
      %1700 = vmatpush1.bf16.msra.mxu0 %v1567
      %1701 = vmatprep.subr.bf16.mxu0 0
      %1702 = vmatpush1.bf16.msra.mxu0 %v1568
      %1703 = vmatprep.subr.bf16.mxu0 0
      %1704 = vmatpush1.bf16.msra.mxu0 %v1569
      %1705 = vmatprep.subr.bf16.mxu0 0
      %1706 = vmatpush1.bf16.msra.mxu0 %v1570
      %1707 = vmatprep.subr.bf16.mxu0 0
      %1708 = vmatpush1.bf16.msra.mxu0 %v1571
      %1709 = vmatprep.subr.bf16.mxu0 0
      %1710 = vmatpush1.bf16.msra.mxu0 %v1572
      %1711 = vmatprep.subr.bf16.mxu0 0
      %1712 = vmatpush1.bf16.msra.mxu0 %v1573
      %1713 = vmatprep.subr.bf16.mxu0 0
      %1714 = vmatpush1.bf16.msra.mxu0 %v1574
      %1715 = vmatprep.subr.bf16.mxu0 0
      %1716 = vmatpush1.bf16.msra.mxu0 %v1575
      %1717 = vmatprep.subr.bf16.mxu0 0
      %1718 = vmatpush1.bf16.msra.mxu0 %v1576
      %1719 = vmatprep.subr.bf16.mxu0 0
      %1720 = vmatpush1.bf16.msra.mxu0 %v1577
      %1721 = vmatprep.subr.bf16.mxu0 0
      %1722 = vmatpush1.bf16.msra.mxu0 %v1578
      %1723 = vmatprep.subr.bf16.mxu0 0
      %1724 = vmatpush1.bf16.msra.mxu0 %v1626
      %1725 = vmatprep.mubr.bf16.mxu0 %v1613
      %1726 = vmatmul.mubr.bf16.gmra.mrb[0].mxu0 %v1345
      %v1727 = vpop.f32.mrb[0].mxu0
      %v1728 = vadd.f32 %v1663, %v1727
      %v1729 = vpop.f32.mrb[0].mxu0
      %v1730 = vpop.f32.mrb[0].mxu0
      %v1731 = vadd.f32 %v1666, %v1730
      %v1732 = vpop.f32.mrb[0].mxu0
      %1733 = vmatprep.mubr.bf16.mxu0 %v1616
      %1734 = vmatmul.mubr.bf16.gmra.mrb[0].mxu0 %v1349
      %v1735 = vpop.f32.mrb[0].mxu0
      %v1736 = vadd.f32 %v1671, %v1735
      %v1737 = vpop.f32.mrb[0].mxu0
      %v1738 = vpop.f32.mrb[0].mxu0
      %v1739 = vadd.f32 %v1674, %v1738
      %v1740 = vpop.f32.mrb[0].mxu0
      %1741 = vmatprep.mubr.bf16.mxu0 %v1619
      %1742 = vmatmul.mubr.bf16.gmra.mrb[0].mxu0 %v1353
      %v1743 = vpop.f32.mrb[0].mxu0
      %v1744 = vadd.f32 %v1679, %v1743
      %v1745 = vpop.f32.mrb[0].mxu0
      %v1746 = vpop.f32.mrb[0].mxu0
      %v1747 = vadd.f32 %v1682, %v1746
      %v1748 = vpop.f32.mrb[0].mxu0
      %1749 = vmatprep.mubr.bf16.mxu0 %v1622
      %1750 = vmatmul.mubr.bf16.gmra.mrb[0].mxu0 %v1357
      %v1751 = vpop.f32.mrb[0].mxu0
      %v1752 = vadd.f32 %v1687, %v1751
      %v1753 = vpop.f32.mrb[0].mxu0
      %v1754 = vpop.f32.mrb[0].mxu0
      %v1755 = vadd.f32 %v1690, %v1754
      %v1756 = vpop.f32.mrb[0].mxu0
      %1757 = vdwg.mxu0
      %v1758 = vld [vmem:[%s2] sm:$0x1]
      %v1760 = vlaneseq
      %v1761 = vshrl.u32 %v1760, 7
      %v1762 = vsub.s32 0, %v1761
      %v1763 = vrot.slane %v1758, %v1762
      %v1765 = vmul.f32 %v1728, %v1763
      %v1766 = vmul.f32 %v1731, %v1763
      %v1767 = vmul.f32 %v1736, %v1763
      %v1768 = vmul.f32 %v1739, %v1763
      %v1769 = vmul.f32 %v1744, %v1763
      %v1770 = vmul.f32 %v1747, %v1763
      %v1771 = vmul.f32 %v1752, %v1763
      %v1772 = vmul.f32 %v1755, %v1763
      %v1773 = vld [vmem:[%s3] sm:$0x1]
      %v1775 = vlaneseq
      %v1776 = vshrl.u32 %v1775, 7
      %v1777 = vsub.s32 0, %v1776
      %v1778 = vrot.slane %v1773, %v1777
      %v1780 = vadd.f32 %v1765, %v1778
      %v1781 = vadd.f32 %v1766, %v1778
      %v1782 = vadd.f32 %v1767, %v1778
      %v1783 = vadd.f32 %v1768, %v1778
      %v1784 = vadd.f32 %v1769, %v1778
      %v1785 = vadd.f32 %v1770, %v1778
      %v1786 = vadd.f32 %v1771, %v1778
      %v1787 = vadd.f32 %v1772, %v1778
      %v1788 = vmax.f32 %v1780, %v1782
      %v1789 = vmax.f32 %v1781, %v1783
      %v1790 = vmax.f32 %v1784, %v1786
      %v1791 = vmax.f32 %v1785, %v1787
      %v1792 = vmax.f32 %v1788, %v1790
      %v1793 = vmax.f32 %v1789, %v1791
      %v1794 = vmax.f32 %v1792, 0.0
      %v1795 = vmax.f32 %v1793, 0.0
      %v1796 = vpack.c.bf16 %v1795, %v1794
      %v1798 = vunpack.c.l.b16 %v1796
      %v1799 = vunpack.c.h.b16 %v1796
      %v1800 = vpack.c.b16 %v1798, %v1798
      %v1801 = vpack.c.b16 %v1799, %v1799
      %1804 = vst [vmem:[%s194] sm:$0xf] %v1800
      %1805 = vst [vmem:[%s194 + $0x4] sm:$0xf] %v1801
      %p1806 = scmp.lt.s32.totalorder %s15, 1
      %s1807 = scalar_select %p1806, %s15, 1
      %s1808 = smul.addr %s1807, 2
      %s1809 = smul.addr %s1808, 4
      %s1810 = scalar_lea.vmem %s4, %s1809
      // Predicated region
      $region37: #{torch_model_forward.4} parent=35 // pred_check
        %p1811 = pneg %p122
      $region38: #{torch_model_forward.4} parent=35 // pred_check_branch
        %1813 = sbr.rel (%p1811) target = $region40
      $region39: #{torch_model_forward.4} parent=35 // pred_region
        _
      $region40: #{torch_model_forward.4} parent=35 // pred_fallthru
        _
    $region36: #{torch_model_forward.4} parent=5 // pred_fallthru
      _
    %p1814 = scmp.le.s32.totalorder 2, %s10
    // Predicated region
    $region41: #{torch_model_forward.4} parent=5 // pred_check
      %p1815 = pneg %p1814
    $region42: #{torch_model_forward.4} parent=5 // pred_check_branch
      %1817 = sbr.rel (%p1815) target = $region44
    $region43: #{torch_model_forward.4} parent=5 // pred_region
      %s1818 = ssub.s32 %s10, 2
      // Predicated region
      $region45: #{torch_model_forward.4} parent=43 // pred_check
        %p1819 = pneg %p128
      $region46: #{torch_model_forward.4} parent=43 // pred_check_branch
        %1821 = sbr.rel (%p1819) target = $region48
      $region47: #{torch_model_forward.4} parent=43 // pred_region
        %p1822 = scmp.lt.s32.totalorder %s16, 1
        %s1823 = scalar_select %p1822, %s16, 1
        %s1824 = smul.addr %s1823, 2
        %s1825 = smul.addr %s1824, 4
        %s1826 = scalar_lea.vmem %s4, %s1825
      $region48: #{torch_model_forward.4} parent=43 // pred_fallthru
        _
    $region44: #{torch_model_forward.4} parent=5 // pred_fallthru
      _
  $region6: #{torch_model_forward.4} parent=0 // loop_footer
    %s14 = sadd.s32 1, %s10
  $region7: #{torch_model_forward.4} parent=0 // loop_footer_branch
    %9 = sbr.rel target = $region3
  $region8: #{torch_model_forward.4} parent=0 // loop_exit
    _

</llo_original>
